<compile_context>
chip_gen: v6e
topology: v6e:2x2x1
jax: 0.10.0
libtpu: 0.0.40
codegen_flags: <defaults>
</compile_context>

<pallas_src>
import math
import functools

import jax
import jax.numpy as jnp
from jax.experimental import pallas as pl
from jax.experimental.pallas import tpu as pltpu


# ----------------------------------------------------------------------------
# Trace-time constant builders.
# ----------------------------------------------------------------------------
def _interp_matrix_1d(n_in):
    """(2*n_in, n_in) bilinear interpolation matrix, align_corners=True."""
    n_out = 2 * n_in
    if n_in == 1:
        return jnp.ones((n_out, 1), jnp.float32)
    pos = jnp.arange(n_out, dtype=jnp.float32) * (n_in - 1) / (n_out - 1)
    lo = jnp.clip(jnp.floor(pos).astype(jnp.int32), 0, n_in - 2)
    frac = pos - lo.astype(jnp.float32)
    rows = jnp.arange(n_out)
    U = jnp.zeros((n_out, n_in), jnp.float32)
    U = U.at[rows, lo].add(1.0 - frac)
    U = U.at[rows, lo + 1].add(frac)
    return U


def _interp_pairs(n_in):
    """Static (lo, frac) pairs per output row (Python scalars, H direction)."""
    n_out = 2 * n_in
    if n_in == 1:
        return tuple((0, 0.0) for _ in range(n_out))
    pairs = []
    for o in range(n_out):
        src = o * (n_in - 1) / (n_out - 1)
        lo = min(int(math.floor(src)), n_in - 2)
        pairs.append((lo, float(src - lo)))
    return tuple(pairs)


def _fold_weights(p):
    """Fold depthwise (Cin,3,3) + pointwise (Cout,Cin) into (9, Cout, Cin) bf16.

    Tap index = (dy+1)*3 + (dx+1); must match the tap loop inside the kernel."""
    wdw, wpw = p["wdw"], p["wpw"]
    wf = wpw[None, :, :] * jnp.transpose(wdw, (1, 2, 0)).reshape(9, 1, -1)
    return wf.astype(jnp.bfloat16)


# ----------------------------------------------------------------------------
# Fused decoder kernel: one grid step == one image.
# ----------------------------------------------------------------------------
def _up_block(x_low, skip, uw, wf_ref, bias, h_pairs, Hl, Wl):
    """One decoder stage on a single image; activations are (C, H*W) lane-flat."""
    f32 = jnp.float32
    Wo, Ho = 2 * Wl, 2 * Hl
    S = Ho * Wo

    # ---- separable bilinear 2x upsample (align_corners=True) ----
    # W pass: one small MXU matmul per input row (static lane window).
    xw = [jnp.dot(x_low[:, h * Wl:(h + 1) * Wl], uw,
                  preferred_element_type=f32) for h in range(Hl)]
    # H pass: static two-row lerp per output row (VPU), then lane concat.
    rows = []
    for lo, frac in h_pairs:
        if frac == 0.0:
            rows.append(xw[lo])
        else:
            rows.append((1.0 - frac) * xw[lo] + frac * xw[lo + 1])
    x_up = jnp.concatenate(rows, axis=1)                       # (Cl, S)

    # ---- channel concat [skip, upsampled] ----
    xcat = jnp.concatenate([skip, x_up], axis=0)               # (Ccat, S)

    # ---- folded depthwise(3x3, SAME) + pointwise conv as 9 MXU matmuls ----
    lane = jax.lax.broadcasted_iota(jnp.int32, (1, S), 1)
    xpos = lane % Wo
    left_ok = xpos >= 1
    right_ok = xpos < Wo - 1
    top_ok = lane >= Wo
    bot_ok = lane < S - Wo

    Cout = wf_ref.shape[1]
    acc = jnp.zeros((Cout, S), f32)
    tap = 0
    for dy in (-1, 0, 1):
        for dx in (-1, 0, 1):
            shift = dy * Wo + dx
            # t[:, j] = xcat[:, j + shift]  (circular; wrapped lanes masked off)
            t = xcat if shift == 0 else pltpu.roll(xcat, (-shift) % S, axis=1)
            ok = None
            if dx == 1:
                ok = right_ok
            elif dx == -1:
                ok = left_ok
            if dy == 1:
                ok = bot_ok if ok is None else jnp.logical_and(ok, bot_ok)
            elif dy == -1:
                ok = top_ok if ok is None else jnp.logical_and(ok, top_ok)
            if ok is not None:
                t = jnp.where(ok, t, jnp.zeros_like(t))
            acc = acc + jnp.dot(wf_ref[tap], t.astype(jnp.bfloat16),
                                preferred_element_type=f32)
            tap += 1

    y = acc + bias
    return y * jax.nn.sigmoid(y)                                # SiLU


def _decoder_kernel(x4_ref, x3_ref, x2_ref, x1_ref,
                    uw1_ref, uw2_ref, uw3_ref,
                    wf1_ref, b1_ref, wf2_ref, b2_ref, wf3_ref, b3_ref,
                    xc_ref, xb_ref, xa_ref, *, dims, h_pairs):
    (H4, W4), (H3, W3), (H2, W2) = dims
    xc = _up_block(x4_ref[0], x3_ref[0], uw1_ref[...], wf1_ref, b1_ref[...],
                   h_pairs[0], H4, W4)
    xc_ref[0] = xc
    xb = _up_block(xc, x2_ref[0], uw2_ref[...], wf2_ref, b2_ref[...],
                   h_pairs[1], H3, W3)
    xb_ref[0] = xb
    xa = _up_block(xb, x1_ref[0], uw3_ref[...], wf3_ref, b3_ref[...],
                   h_pairs[2], H2, W2)
    xa_ref[0] = xa


# ----------------------------------------------------------------------------
# Wrapper.
# ----------------------------------------------------------------------------
def _const_spec(arr):
    nd = arr.ndim
    return pl.BlockSpec(arr.shape, lambda n, _nd=nd: (0,) * _nd)


def _vmem_limit_bytes():
    # ~96 MiB on v5e/v6e (128 MiB physical), ~48 MiB on v7x (64 MiB physical).
    try:
        cap = pltpu.get_tpu_info().vmem_capacity_bytes
    except Exception:
        cap = 64 * 1024 * 1024
    return int(min(cap * 3 // 4, 100 * 1024 * 1024))


def decoder_full_forward(params, x1, x2, x3, x4):
    """Inputs/outputs NCHW (like the PyTorch module). Returns (xa, xb, xc, xd)."""
    N, C4, H4, W4 = x4.shape
    _, C3, H3, W3 = x3.shape
    _, C2, H2, W2 = x2.shape
    _, C1, H1, W1 = x1.shape
    assert (H3, W3) == (2 * H4, 2 * W4)
    assert (H2, W2) == (2 * H3, 2 * W3)
    assert (H1, W1) == (2 * H2, 2 * W2)
    S4, S3, S2, S1 = H4 * W4, H3 * W3, H2 * W2, H1 * W1

    # Small separable interp weights (W direction) + static H lerp pairs.
    uw1 = _interp_matrix_1d(W4).T          # (W4, W3)
    uw2 = _interp_matrix_1d(W3).T          # (W3, W2)
    uw3 = _interp_matrix_1d(W2).T          # (W2, W1)
    h_pairs = (_interp_pairs(H4), _interp_pairs(H3), _interp_pairs(H2))

    wf1, b1 = _fold_weights(params[0]), params[0]["b"].reshape(-1, 1)
    wf2, b2 = _fold_weights(params[1]), params[1]["b"].reshape(-1, 1)
    wf3, b3 = _fold_weights(params[2]), params[2]["b"].reshape(-1, 1)
    Cc, Cb, Ca = wf1.shape[1], wf2.shape[1], wf3.shape[1]

    # Free bitcasts: NCHW -> (N, C, H*W), lane-dense spatial axis.
    x4f = x4.reshape(N, C4, S4)
    x3f = x3.reshape(N, C3, S3)
    x2f = x2.reshape(N, C2, S2)
    x1f = x1.reshape(N, C1, S1)

    kernel = functools.partial(
        _decoder_kernel,
        dims=((H4, W4), (H3, W3), (H2, W2)),
        h_pairs=h_pairs)

    xc_f, xb_f, xa_f = pl.pallas_call(
        kernel,
        out_shape=(jax.ShapeDtypeStruct((N, Cc, S3), jnp.float32),
                   jax.ShapeDtypeStruct((N, Cb, S2), jnp.float32),
                   jax.ShapeDtypeStruct((N, Ca, S1), jnp.float32)),
        grid=(N,),
        in_specs=[
            pl.BlockSpec((1, C4, S4), lambda n: (n, 0, 0)),
            pl.BlockSpec((1, C3, S3), lambda n: (n, 0, 0)),
            pl.BlockSpec((1, C2, S2), lambda n: (n, 0, 0)),
            pl.BlockSpec((1, C1, S1), lambda n: (n, 0, 0)),
            _const_spec(uw1), _const_spec(uw2), _const_spec(uw3),
            _const_spec(wf1), _const_spec(b1),
            _const_spec(wf2), _const_spec(b2),
            _const_spec(wf3), _const_spec(b3),
        ],
        out_specs=(
            pl.BlockSpec((1, Cc, S3), lambda n: (n, 0, 0)),
            pl.BlockSpec((1, Cb, S2), lambda n: (n, 0, 0)),
            pl.BlockSpec((1, Ca, S1), lambda n: (n, 0, 0)),
        ),
        compiler_params=pltpu.CompilerParams(
            dimension_semantics=("parallel",),
            vmem_limit_bytes=_vmem_limit_bytes()),
    )(x4f, x3f, x2f, x1f, uw1, uw2, uw3, wf1, b1, wf2, b2, wf3, b3)

    # Free bitcasts back to NCHW.
    xc = xc_f.reshape(N, Cc, H3, W3)
    xb = xb_f.reshape(N, Cb, H2, W2)
    xa = xa_f.reshape(N, Ca, H1, W1)
    return xa, xb, xc, x4


# ----------------------------------------------------------------------------
# Parameters (PyTorch-style shapes: depthwise (C,3,3), pointwise (Cout,C)).
# ----------------------------------------------------------------------------
def init_decoder_params(in_ch, out_ch=None, bilinear=True, key=None):
    factor = 2 if bilinear else 1
    if out_ch is None:
        out_ch = in_ch // (4 * factor)
    block_chans = [
        (in_ch + in_ch // factor, in_ch // factor),                        # up1
        (in_ch // factor + in_ch // (2 * factor), in_ch // (2 * factor)),  # up2
        (in_ch // (2 * factor) + out_ch, out_ch),                          # up3
    ]
    params = []
    for ci, co in block_chans:
        key, k1, k2, k3 = jax.random.split(key, 4)
        params.append({
            "wdw": jax.random.normal(k1, (ci, 3, 3), jnp.float32) / 3.0,
            "wpw": jax.random.normal(k2, (co, ci), jnp.float32) / math.sqrt(ci),
            "b": jax.random.normal(k3, (co,), jnp.float32) * 0.01,
        })
    return params


# ----------------------------------------------------------------------------
# Pure-JAX reference (independent code path) for a numerical sanity check.
# ----------------------------------------------------------------------------
def _bilinear_up_ref(x):
    N, C, H, W = x.shape

    def grid1d(n_in):
        n_out = 2 * n_in
        pos = jnp.arange(n_out, dtype=jnp.float32) * (n_in - 1) / (n_out - 1)
        lo = jnp.clip(jnp.floor(pos).astype(jnp.int32), 0, n_in - 2)
        return lo, lo + 1, pos - lo.astype(jnp.float32)

    ylo, yhi, fy = grid1d(H)
    xlo, xhi, fx = grid1d(W)
    fy = fy[None, None, :, None]
    fx = fx[None, None, None, :]
    x_yl, x_yh = x[:, :, ylo, :], x[:, :, yhi, :]
    top = x_yl[:, :, :, xlo] * (1.0 - fx) + x_yl[:, :, :, xhi] * fx
    bot = x_yh[:, :, :, xlo] * (1.0 - fx) + x_yh[:, :, :, xhi] * fx
    return top * (1.0 - fy) + bot * fy


def _reference_forward(params, x1, x2, x3, x4):
    def block(x_low, skip, p):
        x_up = _bilinear_up_ref(x_low)
        x = jnp.concatenate([skip, x_up], axis=1)
        dw = jax.lax.conv_general_dilated(
            x, p["wdw"][:, None, :, :], (1, 1), "SAME",
            dimension_numbers=("NCHW", "OIHW", "NCHW"),
            feature_group_count=x.shape[1],
            precision=jax.lax.Precision.HIGHEST)
        y = jnp.einsum("nchw,oc->nohw", dw, p["wpw"],
                       precision=jax.lax.Precision.HIGHEST)
        y = y + p["b"][None, :, None, None]
        return y * jax.nn.sigmoid(y)

    xc = block(x4, x3, params[0])
    xb = block(xc, x2, params[1])
    xa = block(xb, x1, params[2])
    return xa, xb, xc, x4


if __name__ == "__main__":
    key = jax.random.PRNGKey(0)
    in_ch = 32                       # channels of the deepest map x4
    factor = 2                       # bilinear=True
    out_ch = in_ch // (4 * factor)   # 4
    N, H4 = 2, 4                     # batch, spatial of x4

    key, kp, k1, k2, k3, k4 = jax.random.split(key, 6)
    params = init_decoder_params(in_ch, bilinear=True, key=kp)

    # NCHW inputs, same layout as the PyTorch reference.
    x4 = jax.random.normal(k4, (N, in_ch, H4, H4), jnp.float32)
    x3 = jax.random.normal(k3, (N, in_ch // factor, 2 * H4, 2 * H4), jnp.float32)
    x2 = jax.random.normal(k2, (N, in_ch // (2 * factor), 4 * H4, 4 * H4),
                           jnp.float32)
    x1 = jax.random.normal(k1, (N, out_ch, 8 * H4, 8 * H4), jnp.float32)

    fwd = jax.jit(decoder_full_forward)
    xa, xb, xc, xd = fwd(params, x1, x2, x3, x4)
    jax.block_until_ready((xa, xb, xc, xd))

    assert xa.shape == (N, out_ch, 32, 32)
    assert xb.shape == (N, in_ch // (2 * factor), 16, 16)
    assert xc.shape == (N, in_ch // factor, 8, 8)
    assert xd.shape == (N, in_ch, 4, 4)

    ra, rb, rc, rd = _reference_forward(params, x1, x2, x3, x4)
    # bf16 MXU operands in the conv => slightly looser tolerance than pure f32.
    for got, want in ((xa, ra), (xb, rb), (xc, rc), (xd, rd)):
        err = float(jnp.max(jnp.abs(got - want)))
        assert jnp.allclose(got, want, atol=5e-2, rtol=5e-2), err

    print("KERNEL_OK")
</pallas_src>

<mosaic_0001>
module attributes {stable_mosaic.version = 11 : i64} {
  func.func private @main(%arg0: i32) attributes {dimension_semantics = [#tpu.dimension_semantics<core_parallel>], iteration_bounds = array<i64: 2>, tpu.core_type = #tpu.core_type<sc_scalar_subcore>, window_params = []} {
    return
  }
}

module attributes {stable_mosaic.version = 11 : i64} {
  func.func private @main(%arg0: i32) attributes {dimension_semantics = [#tpu.dimension_semantics<core_parallel>], iteration_bounds = array<i64: 2>, tpu.core_type = #tpu.core_type<sc_scalar_subcore>, window_params = []} {
    return
  }
}

module attributes {stable_mosaic.version = 11 : i64} {
  func.func @_decoder_kernel(%arg0: i32, %arg1: memref<1x32x16xf32, #tpu.memory_space<vmem>>, %arg2: memref<1x16x64xf32, #tpu.memory_space<vmem>>, %arg3: memref<1x8x256xf32, #tpu.memory_space<vmem>>, %arg4: memref<1x4x1024xf32, #tpu.memory_space<vmem>>, %arg5: memref<4x8xf32, #tpu.memory_space<vmem>>, %arg6: memref<8x16xf32, #tpu.memory_space<vmem>>, %arg7: memref<16x32xf32, #tpu.memory_space<vmem>>, %arg8: memref<9x16x48xbf16, #tpu.memory_space<vmem>>, %arg9: memref<16x1xf32, #tpu.memory_space<vmem>>, %arg10: memref<9x8x24xbf16, #tpu.memory_space<vmem>>, %arg11: memref<8x1xf32, #tpu.memory_space<vmem>>, %arg12: memref<9x4x12xbf16, #tpu.memory_space<vmem>>, %arg13: memref<4x1xf32, #tpu.memory_space<vmem>>, %arg14: memref<1x16x64xf32, #tpu.memory_space<vmem>>, %arg15: memref<1x8x256xf32, #tpu.memory_space<vmem>>, %arg16: memref<1x4x1024xf32, #tpu.memory_space<vmem>>) attributes {dimension_semantics = [#tpu.dimension_semantics<parallel>], iteration_bounds = array<i64: 2>, scalar_prefetch = 0 : i64, scratch_operands = 0 : i64, tpu.core_type = #tpu.core_type<tc>, window_params = [{transform_indices = @transform_0, window_bounds = array<i64: 1, 32, 16>}, {transform_indices = @transform_1, window_bounds = array<i64: 1, 16, 64>}, {transform_indices = @transform_2, window_bounds = array<i64: 1, 8, 256>}, {transform_indices = @transform_3, window_bounds = array<i64: 1, 4, 1024>}, {pipeline_mode = #tpu.pipeline_mode<synchronous>, transform_indices = @transform_4, window_bounds = array<i64: 4, 8>}, {pipeline_mode = #tpu.pipeline_mode<synchronous>, transform_indices = @transform_5, window_bounds = array<i64: 8, 16>}, {pipeline_mode = #tpu.pipeline_mode<synchronous>, transform_indices = @transform_6, window_bounds = array<i64: 16, 32>}, {pipeline_mode = #tpu.pipeline_mode<synchronous>, transform_indices = @transform_7, window_bounds = array<i64: 9, 16, 48>}, {pipeline_mode = #tpu.pipeline_mode<synchronous>, transform_indices = @transform_8, window_bounds = array<i64: 16, 1>}, {pipeline_mode = #tpu.pipeline_mode<synchronous>, transform_indices = @transform_9, window_bounds = array<i64: 9, 8, 24>}, {pipeline_mode = #tpu.pipeline_mode<synchronous>, transform_indices = @transform_10, window_bounds = array<i64: 8, 1>}, {pipeline_mode = #tpu.pipeline_mode<synchronous>, transform_indices = @transform_11, window_bounds = array<i64: 9, 4, 12>}, {pipeline_mode = #tpu.pipeline_mode<synchronous>, transform_indices = @transform_12, window_bounds = array<i64: 4, 1>}, {transform_indices = @transform_13, window_bounds = array<i64: 1, 16, 64>}, {transform_indices = @transform_14, window_bounds = array<i64: 1, 8, 256>}, {transform_indices = @transform_15, window_bounds = array<i64: 1, 4, 1024>}]} {
    %c0 = arith.constant 0 : index
    %c0_0 = arith.constant 0 : index
    %c0_1 = arith.constant 0 : index
    %0 = vector.load %arg1[%c0, %c0_0, %c0_1] : memref<1x32x16xf32, #tpu.memory_space<vmem>>, vector<1x32x16xf32>
    %1 = vector.shape_cast %0 : vector<1x32x16xf32> to vector<32x16xf32>
    %c0_2 = arith.constant 0 : index
    %c0_3 = arith.constant 0 : index
    %c0_4 = arith.constant 0 : index
    %2 = vector.load %arg2[%c0_2, %c0_3, %c0_4] : memref<1x16x64xf32, #tpu.memory_space<vmem>>, vector<1x16x64xf32>
    %3 = vector.shape_cast %2 : vector<1x16x64xf32> to vector<16x64xf32>
    %c0_5 = arith.constant 0 : index
    %c0_6 = arith.constant 0 : index
    %4 = vector.load %arg5[%c0_5, %c0_6] : memref<4x8xf32, #tpu.memory_space<vmem>>, vector<4x8xf32>
    %c0_7 = arith.constant 0 : index
    %c0_8 = arith.constant 0 : index
    %5 = vector.load %arg9[%c0_7, %c0_8] : memref<16x1xf32, #tpu.memory_space<vmem>>, vector<16x1xf32>
    %6 = vector.extract_strided_slice %1 {offsets = [0, 0], sizes = [32, 4], strides = [1, 1]} : vector<32x16xf32> to vector<32x4xf32>
    %cst = arith.constant dense<0.000000e+00> : vector<32x8xf32>
    %7 = tpu.matmul %6, %4, %cst {dimension_numbers = #tpu.dot_dimension_numbers<[1], [0], [0], [1], [0, 0, 1, 1], [], []>} : vector<32x4xf32>, vector<4x8xf32>, vector<32x8xf32> -> vector<32x8xf32>
    %8 = vector.extract_strided_slice %1 {offsets = [0, 4], sizes = [32, 4], strides = [1, 1]} : vector<32x16xf32> to vector<32x4xf32>
    %cst_9 = arith.constant dense<0.000000e+00> : vector<32x8xf32>
    %9 = tpu.matmul %8, %4, %cst_9 {dimension_numbers = #tpu.dot_dimension_numbers<[1], [0], [0], [1], [0, 0, 1, 1], [], []>} : vector<32x4xf32>, vector<4x8xf32>, vector<32x8xf32> -> vector<32x8xf32>
    %10 = vector.extract_strided_slice %1 {offsets = [0, 8], sizes = [32, 4], strides = [1, 1]} : vector<32x16xf32> to vector<32x4xf32>
    %cst_10 = arith.constant dense<0.000000e+00> : vector<32x8xf32>
    %11 = tpu.matmul %10, %4, %cst_10 {dimension_numbers = #tpu.dot_dimension_numbers<[1], [0], [0], [1], [0, 0, 1, 1], [], []>} : vector<32x4xf32>, vector<4x8xf32>, vector<32x8xf32> -> vector<32x8xf32>
    %12 = vector.extract_strided_slice %1 {offsets = [0, 12], sizes = [32, 4], strides = [1, 1]} : vector<32x16xf32> to vector<32x4xf32>
    %cst_11 = arith.constant dense<0.000000e+00> : vector<32x8xf32>
    %13 = tpu.matmul %12, %4, %cst_11 {dimension_numbers = #tpu.dot_dimension_numbers<[1], [0], [0], [1], [0, 0, 1, 1], [], []>} : vector<32x4xf32>, vector<4x8xf32>, vector<32x8xf32> -> vector<32x8xf32>
    %cst_12 = arith.constant 0.571428597 : f32
    %14 = vector.broadcast %cst_12 : f32 to vector<32x8xf32>
    %15 = arith.mulf %14, %7 : vector<32x8xf32>
    %cst_13 = arith.constant 0.428571433 : f32
    %16 = vector.broadcast %cst_13 : f32 to vector<32x8xf32>
    %17 = arith.mulf %16, %9 : vector<32x8xf32>
    %18 = arith.addf %15, %17 : vector<32x8xf32>
    %cst_14 = arith.constant 0.142857149 : f32
    %19 = vector.broadcast %cst_14 : f32 to vector<32x8xf32>
    %20 = arith.mulf %19, %7 : vector<32x8xf32>
    %cst_15 = arith.constant 0.857142865 : f32
    %21 = vector.broadcast %cst_15 : f32 to vector<32x8xf32>
    %22 = arith.mulf %21, %9 : vector<32x8xf32>
    %23 = arith.addf %20, %22 : vector<32x8xf32>
    %cst_16 = arith.constant 0.714285731 : f32
    %24 = vector.broadcast %cst_16 : f32 to vector<32x8xf32>
    %25 = arith.mulf %24, %9 : vector<32x8xf32>
    %cst_17 = arith.constant 0.285714298 : f32
    %26 = vector.broadcast %cst_17 : f32 to vector<32x8xf32>
    %27 = arith.mulf %26, %11 : vector<32x8xf32>
    %28 = arith.addf %25, %27 : vector<32x8xf32>
    %cst_18 = arith.constant 0.285714298 : f32
    %29 = vector.broadcast %cst_18 : f32 to vector<32x8xf32>
    %30 = arith.mulf %29, %9 : vector<32x8xf32>
    %cst_19 = arith.constant 0.714285731 : f32
    %31 = vector.broadcast %cst_19 : f32 to vector<32x8xf32>
    %32 = arith.mulf %31, %11 : vector<32x8xf32>
    %33 = arith.addf %30, %32 : vector<32x8xf32>
    %cst_20 = arith.constant 0.857142865 : f32
    %34 = vector.broadcast %cst_20 : f32 to vector<32x8xf32>
    %35 = arith.mulf %34, %11 : vector<32x8xf32>
    %cst_21 = arith.constant 0.142857149 : f32
    %36 = vector.broadcast %cst_21 : f32 to vector<32x8xf32>
    %37 = arith.mulf %36, %13 : vector<32x8xf32>
    %38 = arith.addf %35, %37 : vector<32x8xf32>
    %cst_22 = arith.constant 0.428571433 : f32
    %39 = vector.broadcast %cst_22 : f32 to vector<32x8xf32>
    %40 = arith.mulf %39, %11 : vector<32x8xf32>
    %cst_23 = arith.constant 0.571428597 : f32
    %41 = vector.broadcast %cst_23 : f32 to vector<32x8xf32>
    %42 = arith.mulf %41, %13 : vector<32x8xf32>
    %43 = arith.addf %40, %42 : vector<32x8xf32>
    %cst_24 = arith.constant 0.000000e+00 : f32
    %44 = vector.broadcast %cst_24 : f32 to vector<32x8xf32>
    %45 = arith.mulf %44, %11 : vector<32x8xf32>
    %cst_25 = arith.constant 1.000000e+00 : f32
    %46 = vector.broadcast %cst_25 : f32 to vector<32x8xf32>
    %47 = arith.mulf %46, %13 : vector<32x8xf32>
    %48 = arith.addf %45, %47 : vector<32x8xf32>
    %49 = tpu.concatenate %7, %18, %23, %28, %33, %38, %43, %48 in 1 : vector<32x8xf32>, vector<32x8xf32>, vector<32x8xf32>, vector<32x8xf32>, vector<32x8xf32>, vector<32x8xf32>, vector<32x8xf32>, vector<32x8xf32> -> vector<32x64xf32>
    %50 = tpu.concatenate %3, %49 in 0 : vector<16x64xf32>, vector<32x64xf32> -> vector<48x64xf32>
    %51 = tpu.iota {dimensions = array<i32: 1>} : vector<1x64xi32>
    %c8_i32 = arith.constant 8 : i32
    %c0_i32 = arith.constant 0 : i32
    %52 = arith.cmpi eq, %c8_i32, %c0_i32 : i32
    %c1_i32 = arith.constant 1 : i32
    %53 = arith.select %52, %c1_i32, %c8_i32 : i32
    %54 = vector.broadcast %53 : i32 to vector<1x64xi32>
    %55 = arith.remsi %51, %54 : vector<1x64xi32>
    %c0_i32_26 = arith.constant 0 : i32
    %56 = vector.broadcast %c0_i32_26 : i32 to vector<1x64xi32>
    %57 = arith.cmpi ne, %55, %56 : vector<1x64xi32>
    %c0_i32_27 = arith.constant 0 : i32
    %58 = vector.broadcast %c0_i32_27 : i32 to vector<1x64xi32>
    %59 = arith.cmpi slt, %55, %58 : vector<1x64xi32>
    %c0_i32_28 = arith.constant 0 : i32
    %60 = arith.cmpi slt, %53, %c0_i32_28 : i32
    %61 = vector.broadcast %60 : i1 to vector<1x64xi1>
    %62 = vector.broadcast %61 : vector<1x64xi1> to vector<1x64xi1>
    %63 = arith.xori %59, %62 : vector<1x64xi1>
    %64 = arith.andi %63, %57 : vector<1x64xi1>
    %65 = vector.broadcast %53 : i32 to vector<1x64xi32>
    %66 = arith.addi %55, %65 : vector<1x64xi32>
    %67 = arith.select %64, %66, %55 : vector<1x64xi1>, vector<1x64xi32>
    %c1_i32_29 = arith.constant 1 : i32
    %68 = vector.broadcast %c1_i32_29 : i32 to vector<1x64xi32>
    %69 = arith.cmpi sge, %67, %68 : vector<1x64xi32>
    %c7_i32 = arith.constant 7 : i32
    %70 = vector.broadcast %c7_i32 : i32 to vector<1x64xi32>
    %71 = arith.cmpi slt, %67, %70 : vector<1x64xi32>
    %c8_i32_30 = arith.constant 8 : i32
    %72 = vector.broadcast %c8_i32_30 : i32 to vector<1x64xi32>
    %73 = arith.cmpi sge, %51, %72 : vector<1x64xi32>
    %c56_i32 = arith.constant 56 : i32
    %74 = vector.broadcast %c56_i32 : i32 to vector<1x64xi32>
    %75 = arith.cmpi slt, %51, %74 : vector<1x64xi32>
    %cst_31 = arith.constant 0.000000e+00 : f32
    %76 = vector.broadcast %cst_31 : f32 to vector<16x64xf32>
    %c9_i32 = arith.constant 9 : i32
    %77 = tpu.dynamic_rotate %50 by %c9_i32 dim 1 : vector<48x64xf32>, i32 -> vector<48x64xf32>
    %78 = arith.andi %69, %73 : vector<1x64xi1>
    %cst_32 = arith.constant 0.000000e+00 : f32
    %79 = vector.broadcast %cst_32 : f32 to vector<48x64xf32>
    %80 = vector.shape_cast %78 : vector<1x64xi1> to vector<1x64xi1>
    %81 = vector.broadcast %80 : vector<1x64xi1> to vector<48x64xi1>
    %82 = arith.select %81, %77, %79 : vector<48x64xi1>, vector<48x64xf32>
    %c0_33 = arith.constant 0 : index
    %c0_34 = arith.constant 0 : index
    %c0_35 = arith.constant 0 : index
    %83 = vector.load %arg8[%c0_33, %c0_34, %c0_35] : memref<9x16x48xbf16, #tpu.memory_space<vmem>>, vector<1x16x48xbf16>
    %84 = vector.shape_cast %83 : vector<1x16x48xbf16> to vector<16x48xbf16>
    %85 = arith.truncf %82 : vector<48x64xf32> to vector<48x64xbf16>
    %cst_36 = arith.constant dense<0.000000e+00> : vector<16x64xf32>
    %86 = tpu.matmul %84, %85, %cst_36 {dimension_numbers = #tpu.dot_dimension_numbers<[1], [0], [0], [1], [0, 0, 1, 1], [], []>} : vector<16x48xbf16>, vector<48x64xbf16>, vector<16x64xf32> -> vector<16x64xf32>
    %87 = arith.addf %76, %86 : vector<16x64xf32>
    %c8_i32_37 = arith.constant 8 : i32
    %88 = tpu.dynamic_rotate %50 by %c8_i32_37 dim 1 : vector<48x64xf32>, i32 -> vector<48x64xf32>
    %cst_38 = arith.constant 0.000000e+00 : f32
    %89 = vector.broadcast %cst_38 : f32 to vector<48x64xf32>
    %90 = vector.shape_cast %73 : vector<1x64xi1> to vector<1x64xi1>
    %91 = vector.broadcast %90 : vector<1x64xi1> to vector<48x64xi1>
    %92 = arith.select %91, %88, %89 : vector<48x64xi1>, vector<48x64xf32>
    %c1 = arith.constant 1 : index
    %c0_39 = arith.constant 0 : index
    %c0_40 = arith.constant 0 : index
    %93 = vector.load %arg8[%c1, %c0_39, %c0_40] : memref<9x16x48xbf16, #tpu.memory_space<vmem>>, vector<1x16x48xbf16>
    %94 = vector.shape_cast %93 : vector<1x16x48xbf16> to vector<16x48xbf16>
    %95 = arith.truncf %92 : vector<48x64xf32> to vector<48x64xbf16>
    %cst_41 = arith.constant dense<0.000000e+00> : vector<16x64xf32>
    %96 = tpu.matmul %94, %95, %cst_41 {dimension_numbers = #tpu.dot_dimension_numbers<[1], [0], [0], [1], [0, 0, 1, 1], [], []>} : vector<16x48xbf16>, vector<48x64xbf16>, vector<16x64xf32> -> vector<16x64xf32>
    %97 = arith.addf %87, %96 : vector<16x64xf32>
    %c7_i32_42 = arith.constant 7 : i32
    %98 = tpu.dynamic_rotate %50 by %c7_i32_42 dim 1 : vector<48x64xf32>, i32 -> vector<48x64xf32>
    %99 = arith.andi %71, %73 : vector<1x64xi1>
    %cst_43 = arith.constant 0.000000e+00 : f32
    %100 = vector.broadcast %cst_43 : f32 to vector<48x64xf32>
    %101 = vector.shape_cast %99 : vector<1x64xi1> to vector<1x64xi1>
    %102 = vector.broadcast %101 : vector<1x64xi1> to vector<48x64xi1>
    %103 = arith.select %102, %98, %100 : vector<48x64xi1>, vector<48x64xf32>
    %c2 = arith.constant 2 : index
    %c0_44 = arith.constant 0 : index
    %c0_45 = arith.constant 0 : index
    %104 = vector.load %arg8[%c2, %c0_44, %c0_45] : memref<9x16x48xbf16, #tpu.memory_space<vmem>>, vector<1x16x48xbf16>
    %105 = vector.shape_cast %104 : vector<1x16x48xbf16> to vector<16x48xbf16>
    %106 = arith.truncf %103 : vector<48x64xf32> to vector<48x64xbf16>
    %cst_46 = arith.constant dense<0.000000e+00> : vector<16x64xf32>
    %107 = tpu.matmul %105, %106, %cst_46 {dimension_numbers = #tpu.dot_dimension_numbers<[1], [0], [0], [1], [0, 0, 1, 1], [], []>} : vector<16x48xbf16>, vector<48x64xbf16>, vector<16x64xf32> -> vector<16x64xf32>
    %108 = arith.addf %97, %107 : vector<16x64xf32>
    %c1_i32_47 = arith.constant 1 : i32
    %109 = tpu.dynamic_rotate %50 by %c1_i32_47 dim 1 : vector<48x64xf32>, i32 -> vector<48x64xf32>
    %cst_48 = arith.constant 0.000000e+00 : f32
    %110 = vector.broadcast %cst_48 : f32 to vector<48x64xf32>
    %111 = vector.shape_cast %69 : vector<1x64xi1> to vector<1x64xi1>
    %112 = vector.broadcast %111 : vector<1x64xi1> to vector<48x64xi1>
    %113 = arith.select %112, %109, %110 : vector<48x64xi1>, vector<48x64xf32>
    %c3 = arith.constant 3 : index
    %c0_49 = arith.constant 0 : index
    %c0_50 = arith.constant 0 : index
    %114 = vector.load %arg8[%c3, %c0_49, %c0_50] : memref<9x16x48xbf16, #tpu.memory_space<vmem>>, vector<1x16x48xbf16>
    %115 = vector.shape_cast %114 : vector<1x16x48xbf16> to vector<16x48xbf16>
    %116 = arith.truncf %113 : vector<48x64xf32> to vector<48x64xbf16>
    %cst_51 = arith.constant dense<0.000000e+00> : vector<16x64xf32>
    %117 = tpu.matmul %115, %116, %cst_51 {dimension_numbers = #tpu.dot_dimension_numbers<[1], [0], [0], [1], [0, 0, 1, 1], [], []>} : vector<16x48xbf16>, vector<48x64xbf16>, vector<16x64xf32> -> vector<16x64xf32>
    %118 = arith.addf %108, %117 : vector<16x64xf32>
    %c4 = arith.constant 4 : index
    %c0_52 = arith.constant 0 : index
    %c0_53 = arith.constant 0 : index
    %119 = vector.load %arg8[%c4, %c0_52, %c0_53] : memref<9x16x48xbf16, #tpu.memory_space<vmem>>, vector<1x16x48xbf16>
    %120 = vector.shape_cast %119 : vector<1x16x48xbf16> to vector<16x48xbf16>
    %121 = arith.truncf %50 : vector<48x64xf32> to vector<48x64xbf16>
    %cst_54 = arith.constant dense<0.000000e+00> : vector<16x64xf32>
    %122 = tpu.matmul %120, %121, %cst_54 {dimension_numbers = #tpu.dot_dimension_numbers<[1], [0], [0], [1], [0, 0, 1, 1], [], []>} : vector<16x48xbf16>, vector<48x64xbf16>, vector<16x64xf32> -> vector<16x64xf32>
    %123 = arith.addf %118, %122 : vector<16x64xf32>
    %c63_i32 = arith.constant 63 : i32
    %124 = tpu.dynamic_rotate %50 by %c63_i32 dim 1 : vector<48x64xf32>, i32 -> vector<48x64xf32>
    %cst_55 = arith.constant 0.000000e+00 : f32
    %125 = vector.broadcast %cst_55 : f32 to vector<48x64xf32>
    %126 = vector.shape_cast %71 : vector<1x64xi1> to vector<1x64xi1>
    %127 = vector.broadcast %126 : vector<1x64xi1> to vector<48x64xi1>
    %128 = arith.select %127, %124, %125 : vector<48x64xi1>, vector<48x64xf32>
    %c5 = arith.constant 5 : index
    %c0_56 = arith.constant 0 : index
    %c0_57 = arith.constant 0 : index
    %129 = vector.load %arg8[%c5, %c0_56, %c0_57] : memref<9x16x48xbf16, #tpu.memory_space<vmem>>, vector<1x16x48xbf16>
    %130 = vector.shape_cast %129 : vector<1x16x48xbf16> to vector<16x48xbf16>
    %131 = arith.truncf %128 : vector<48x64xf32> to vector<48x64xbf16>
    %cst_58 = arith.constant dense<0.000000e+00> : vector<16x64xf32>
    %132 = tpu.matmul %130, %131, %cst_58 {dimension_numbers = #tpu.dot_dimension_numbers<[1], [0], [0], [1], [0, 0, 1, 1], [], []>} : vector<16x48xbf16>, vector<48x64xbf16>, vector<16x64xf32> -> vector<16x64xf32>
    %133 = arith.addf %123, %132 : vector<16x64xf32>
    %c57_i32 = arith.constant 57 : i32
    %134 = tpu.dynamic_rotate %50 by %c57_i32 dim 1 : vector<48x64xf32>, i32 -> vector<48x64xf32>
    %135 = arith.andi %69, %75 : vector<1x64xi1>
    %cst_59 = arith.constant 0.000000e+00 : f32
    %136 = vector.broadcast %cst_59 : f32 to vector<48x64xf32>
    %137 = vector.shape_cast %135 : vector<1x64xi1> to vector<1x64xi1>
    %138 = vector.broadcast %137 : vector<1x64xi1> to vector<48x64xi1>
    %139 = arith.select %138, %134, %136 : vector<48x64xi1>, vector<48x64xf32>
    %c6 = arith.constant 6 : index
    %c0_60 = arith.constant 0 : index
    %c0_61 = arith.constant 0 : index
    %140 = vector.load %arg8[%c6, %c0_60, %c0_61] : memref<9x16x48xbf16, #tpu.memory_space<vmem>>, vector<1x16x48xbf16>
    %141 = vector.shape_cast %140 : vector<1x16x48xbf16> to vector<16x48xbf16>
    %142 = arith.truncf %139 : vector<48x64xf32> to vector<48x64xbf16>
    %cst_62 = arith.constant dense<0.000000e+00> : vector<16x64xf32>
    %143 = tpu.matmul %141, %142, %cst_62 {dimension_numbers = #tpu.dot_dimension_numbers<[1], [0], [0], [1], [0, 0, 1, 1], [], []>} : vector<16x48xbf16>, vector<48x64xbf16>, vector<16x64xf32> -> vector<16x64xf32>
    %144 = arith.addf %133, %143 : vector<16x64xf32>
    %c56_i32_63 = arith.constant 56 : i32
    %145 = tpu.dynamic_rotate %50 by %c56_i32_63 dim 1 : vector<48x64xf32>, i32 -> vector<48x64xf32>
    %cst_64 = arith.constant 0.000000e+00 : f32
    %146 = vector.broadcast %cst_64 : f32 to vector<48x64xf32>
    %147 = vector.shape_cast %75 : vector<1x64xi1> to vector<1x64xi1>
    %148 = vector.broadcast %147 : vector<1x64xi1> to vector<48x64xi1>
    %149 = arith.select %148, %145, %146 : vector<48x64xi1>, vector<48x64xf32>
    %c7 = arith.constant 7 : index
    %c0_65 = arith.constant 0 : index
    %c0_66 = arith.constant 0 : index
    %150 = vector.load %arg8[%c7, %c0_65, %c0_66] : memref<9x16x48xbf16, #tpu.memory_space<vmem>>, vector<1x16x48xbf16>
    %151 = vector.shape_cast %150 : vector<1x16x48xbf16> to vector<16x48xbf16>
    %152 = arith.truncf %149 : vector<48x64xf32> to vector<48x64xbf16>
    %cst_67 = arith.constant dense<0.000000e+00> : vector<16x64xf32>
    %153 = tpu.matmul %151, %152, %cst_67 {dimension_numbers = #tpu.dot_dimension_numbers<[1], [0], [0], [1], [0, 0, 1, 1], [], []>} : vector<16x48xbf16>, vector<48x64xbf16>, vector<16x64xf32> -> vector<16x64xf32>
    %154 = arith.addf %144, %153 : vector<16x64xf32>
    %c55_i32 = arith.constant 55 : i32
    %155 = tpu.dynamic_rotate %50 by %c55_i32 dim 1 : vector<48x64xf32>, i32 -> vector<48x64xf32>
    %156 = arith.andi %71, %75 : vector<1x64xi1>
    %cst_68 = arith.constant 0.000000e+00 : f32
    %157 = vector.broadcast %cst_68 : f32 to vector<48x64xf32>
    %158 = vector.shape_cast %156 : vector<1x64xi1> to vector<1x64xi1>
    %159 = vector.broadcast %158 : vector<1x64xi1> to vector<48x64xi1>
    %160 = arith.select %159, %155, %157 : vector<48x64xi1>, vector<48x64xf32>
    %c8 = arith.constant 8 : index
    %c0_69 = arith.constant 0 : index
    %c0_70 = arith.constant 0 : index
    %161 = vector.load %arg8[%c8, %c0_69, %c0_70] : memref<9x16x48xbf16, #tpu.memory_space<vmem>>, vector<1x16x48xbf16>
    %162 = vector.shape_cast %161 : vector<1x16x48xbf16> to vector<16x48xbf16>
    %163 = arith.truncf %160 : vector<48x64xf32> to vector<48x64xbf16>
    %cst_71 = arith.constant dense<0.000000e+00> : vector<16x64xf32>
    %164 = tpu.matmul %162, %163, %cst_71 {dimension_numbers = #tpu.dot_dimension_numbers<[1], [0], [0], [1], [0, 0, 1, 1], [], []>} : vector<16x48xbf16>, vector<48x64xbf16>, vector<16x64xf32> -> vector<16x64xf32>
    %165 = arith.addf %154, %164 : vector<16x64xf32>
    %166 = vector.broadcast %5 : vector<16x1xf32> to vector<16x64xf32>
    %167 = arith.addf %165, %166 : vector<16x64xf32>
    %168 = arith.negf %167 : vector<16x64xf32>
    %169 = math.exp %168 : vector<16x64xf32>
    %cst_72 = arith.constant 1.000000e+00 : f32
    %170 = vector.broadcast %cst_72 : f32 to vector<16x64xf32>
    %171 = arith.addf %170, %169 : vector<16x64xf32>
    %172 = arith.divf %170, %171 : vector<16x64xf32>
    %173 = arith.mulf %167, %172 : vector<16x64xf32>
    %c0_73 = arith.constant 0 : index
    %c0_74 = arith.constant 0 : index
    %c0_75 = arith.constant 0 : index
    %174 = vector.load %arg14[%c0_73, %c0_74, %c0_75] : memref<1x16x64xf32, #tpu.memory_space<vmem>>, vector<1x16x64xf32>
    %175 = vector.shape_cast %174 : vector<1x16x64xf32> to vector<16x64xf32>
    %176 = vector.shape_cast %173 : vector<16x64xf32> to vector<1x16x64xf32>
    tpu.vector_store %arg14[%c0_73, %c0_74, %c0_75], %176 {strides = array<i32>} : memref<1x16x64xf32, #tpu.memory_space<vmem>>, vector<1x16x64xf32>,
    %c0_76 = arith.constant 0 : index
    %c0_77 = arith.constant 0 : index
    %c0_78 = arith.constant 0 : index
    %177 = vector.load %arg3[%c0_76, %c0_77, %c0_78] : memref<1x8x256xf32, #tpu.memory_space<vmem>>, vector<1x8x256xf32>
    %178 = vector.shape_cast %177 : vector<1x8x256xf32> to vector<8x256xf32>
    %c0_79 = arith.constant 0 : index
    %c0_80 = arith.constant 0 : index
    %179 = vector.load %arg6[%c0_79, %c0_80] : memref<8x16xf32, #tpu.memory_space<vmem>>, vector<8x16xf32>
    %c0_81 = arith.constant 0 : index
    %c0_82 = arith.constant 0 : index
    %180 = vector.load %arg11[%c0_81, %c0_82] : memref<8x1xf32, #tpu.memory_space<vmem>>, vector<8x1xf32>
    %181 = vector.extract_strided_slice %173 {offsets = [0, 0], sizes = [16, 8], strides = [1, 1]} : vector<16x64xf32> to vector<16x8xf32>
    %cst_83 = arith.constant dense<0.000000e+00> : vector<16x16xf32>
    %182 = tpu.matmul %181, %179, %cst_83 {dimension_numbers = #tpu.dot_dimension_numbers<[1], [0], [0], [1], [0, 0, 1, 1], [], []>} : vector<16x8xf32>, vector<8x16xf32>, vector<16x16xf32> -> vector<16x16xf32>
    %183 = vector.extract_strided_slice %173 {offsets = [0, 8], sizes = [16, 8], strides = [1, 1]} : vector<16x64xf32> to vector<16x8xf32>
    %cst_84 = arith.constant dense<0.000000e+00> : vector<16x16xf32>
    %184 = tpu.matmul %183, %179, %cst_84 {dimension_numbers = #tpu.dot_dimension_numbers<[1], [0], [0], [1], [0, 0, 1, 1], [], []>} : vector<16x8xf32>, vector<8x16xf32>, vector<16x16xf32> -> vector<16x16xf32>
    %185 = vector.extract_strided_slice %173 {offsets = [0, 16], sizes = [16, 8], strides = [1, 1]} : vector<16x64xf32> to vector<16x8xf32>
    %cst_85 = arith.constant dense<0.000000e+00> : vector<16x16xf32>
    %186 = tpu.matmul %185, %179, %cst_85 {dimension_numbers = #tpu.dot_dimension_numbers<[1], [0], [0], [1], [0, 0, 1, 1], [], []>} : vector<16x8xf32>, vector<8x16xf32>, vector<16x16xf32> -> vector<16x16xf32>
    %187 = vector.extract_strided_slice %173 {offsets = [0, 24], sizes = [16, 8], strides = [1, 1]} : vector<16x64xf32> to vector<16x8xf32>
    %cst_86 = arith.constant dense<0.000000e+00> : vector<16x16xf32>
    %188 = tpu.matmul %187, %179, %cst_86 {dimension_numbers = #tpu.dot_dimension_numbers<[1], [0], [0], [1], [0, 0, 1, 1], [], []>} : vector<16x8xf32>, vector<8x16xf32>, vector<16x16xf32> -> vector<16x16xf32>
    %189 = vector.extract_strided_slice %173 {offsets = [0, 32], sizes = [16, 8], strides = [1, 1]} : vector<16x64xf32> to vector<16x8xf32>
    %cst_87 = arith.constant dense<0.000000e+00> : vector<16x16xf32>
    %190 = tpu.matmul %189, %179, %cst_87 {dimension_numbers = #tpu.dot_dimension_numbers<[1], [0], [0], [1], [0, 0, 1, 1], [], []>} : vector<16x8xf32>, vector<8x16xf32>, vector<16x16xf32> -> vector<16x16xf32>
    %191 = vector.extract_strided_slice %173 {offsets = [0, 40], sizes = [16, 8], strides = [1, 1]} : vector<16x64xf32> to vector<16x8xf32>
    %cst_88 = arith.constant dense<0.000000e+00> : vector<16x16xf32>
    %192 = tpu.matmul %191, %179, %cst_88 {dimension_numbers = #tpu.dot_dimension_numbers<[1], [0], [0], [1], [0, 0, 1, 1], [], []>} : vector<16x8xf32>, vector<8x16xf32>, vector<16x16xf32> -> vector<16x16xf32>
    %193 = vector.extract_strided_slice %173 {offsets = [0, 48], sizes = [16, 8], strides = [1, 1]} : vector<16x64xf32> to vector<16x8xf32>
    %cst_89 = arith.constant dense<0.000000e+00> : vector<16x16xf32>
    %194 = tpu.matmul %193, %179, %cst_89 {dimension_numbers = #tpu.dot_dimension_numbers<[1], [0], [0], [1], [0, 0, 1, 1], [], []>} : vector<16x8xf32>, vector<8x16xf32>, vector<16x16xf32> -> vector<16x16xf32>
    %195 = vector.extract_strided_slice %173 {offsets = [0, 56], sizes = [16, 8], strides = [1, 1]} : vector<16x64xf32> to vector<16x8xf32>
    %cst_90 = arith.constant dense<0.000000e+00> : vector<16x16xf32>
    %196 = tpu.matmul %195, %179, %cst_90 {dimension_numbers = #tpu.dot_dimension_numbers<[1], [0], [0], [1], [0, 0, 1, 1], [], []>} : vector<16x8xf32>, vector<8x16xf32>, vector<16x16xf32> -> vector<16x16xf32>
    %cst_91 = arith.constant 0.533333361 : f32
    %197 = vector.broadcast %cst_91 : f32 to vector<16x16xf32>
    %198 = arith.mulf %197, %182 : vector<16x16xf32>
    %cst_92 = arith.constant 0.466666669 : f32
    %199 = vector.broadcast %cst_92 : f32 to vector<16x16xf32>
    %200 = arith.mulf %199, %184 : vector<16x16xf32>
    %201 = arith.addf %198, %200 : vector<16x16xf32>
    %cst_93 = arith.constant 0.0666666701 : f32
    %202 = vector.broadcast %cst_93 : f32 to vector<16x16xf32>
    %203 = arith.mulf %202, %182 : vector<16x16xf32>
    %cst_94 = arith.constant 0.933333337 : f32
    %204 = vector.broadcast %cst_94 : f32 to vector<16x16xf32>
    %205 = arith.mulf %204, %184 : vector<16x16xf32>
    %206 = arith.addf %203, %205 : vector<16x16xf32>
    %cst_95 = arith.constant 6.000000e-01 : f32
    %207 = vector.broadcast %cst_95 : f32 to vector<16x16xf32>
    %208 = arith.mulf %207, %184 : vector<16x16xf32>
    %cst_96 = arith.constant 4.000000e-01 : f32
    %209 = vector.broadcast %cst_96 : f32 to vector<16x16xf32>
    %210 = arith.mulf %209, %186 : vector<16x16xf32>
    %211 = arith.addf %208, %210 : vector<16x16xf32>
    %cst_97 = arith.constant 0.13333334 : f32
    %212 = vector.broadcast %cst_97 : f32 to vector<16x16xf32>
    %213 = arith.mulf %212, %184 : vector<16x16xf32>
    %cst_98 = arith.constant 0.866666674 : f32
    %214 = vector.broadcast %cst_98 : f32 to vector<16x16xf32>
    %215 = arith.mulf %214, %186 : vector<16x16xf32>
    %216 = arith.addf %213, %215 : vector<16x16xf32>
    %cst_99 = arith.constant 0.666666686 : f32
    %217 = vector.broadcast %cst_99 : f32 to vector<16x16xf32>
    %218 = arith.mulf %217, %186 : vector<16x16xf32>
    %cst_100 = arith.constant 0.333333343 : f32
    %219 = vector.broadcast %cst_100 : f32 to vector<16x16xf32>
    %220 = arith.mulf %219, %188 : vector<16x16xf32>
    %221 = arith.addf %218, %220 : vector<16x16xf32>
    %cst_101 = arith.constant 2.000000e-01 : f32
    %222 = vector.broadcast %cst_101 : f32 to vector<16x16xf32>
    %223 = arith.mulf %222, %186 : vector<16x16xf32>
    %cst_102 = arith.constant 8.000000e-01 : f32
    %224 = vector.broadcast %cst_102 : f32 to vector<16x16xf32>
    %225 = arith.mulf %224, %188 : vector<16x16xf32>
    %226 = arith.addf %223, %225 : vector<16x16xf32>
    %cst_103 = arith.constant 0.733333349 : f32
    %227 = vector.broadcast %cst_103 : f32 to vector<16x16xf32>
    %228 = arith.mulf %227, %188 : vector<16x16xf32>
    %cst_104 = arith.constant 0.266666681 : f32
    %229 = vector.broadcast %cst_104 : f32 to vector<16x16xf32>
    %230 = arith.mulf %229, %190 : vector<16x16xf32>
    %231 = arith.addf %228, %230 : vector<16x16xf32>
    %cst_105 = arith.constant 0.266666681 : f32
    %232 = vector.broadcast %cst_105 : f32 to vector<16x16xf32>
    %233 = arith.mulf %232, %188 : vector<16x16xf32>
    %cst_106 = arith.constant 0.733333349 : f32
    %234 = vector.broadcast %cst_106 : f32 to vector<16x16xf32>
    %235 = arith.mulf %234, %190 : vector<16x16xf32>
    %236 = arith.addf %233, %235 : vector<16x16xf32>
    %cst_107 = arith.constant 8.000000e-01 : f32
    %237 = vector.broadcast %cst_107 : f32 to vector<16x16xf32>
    %238 = arith.mulf %237, %190 : vector<16x16xf32>
    %cst_108 = arith.constant 2.000000e-01 : f32
    %239 = vector.broadcast %cst_108 : f32 to vector<16x16xf32>
    %240 = arith.mulf %239, %192 : vector<16x16xf32>
    %241 = arith.addf %238, %240 : vector<16x16xf32>
    %cst_109 = arith.constant 0.333333343 : f32
    %242 = vector.broadcast %cst_109 : f32 to vector<16x16xf32>
    %243 = arith.mulf %242, %190 : vector<16x16xf32>
    %cst_110 = arith.constant 0.666666686 : f32
    %244 = vector.broadcast %cst_110 : f32 to vector<16x16xf32>
    %245 = arith.mulf %244, %192 : vector<16x16xf32>
    %246 = arith.addf %243, %245 : vector<16x16xf32>
    %cst_111 = arith.constant 0.866666674 : f32
    %247 = vector.broadcast %cst_111 : f32 to vector<16x16xf32>
    %248 = arith.mulf %247, %192 : vector<16x16xf32>
    %cst_112 = arith.constant 0.13333334 : f32
    %249 = vector.broadcast %cst_112 : f32 to vector<16x16xf32>
    %250 = arith.mulf %249, %194 : vector<16x16xf32>
    %251 = arith.addf %248, %250 : vector<16x16xf32>
    %cst_113 = arith.constant 4.000000e-01 : f32
    %252 = vector.broadcast %cst_113 : f32 to vector<16x16xf32>
    %253 = arith.mulf %252, %192 : vector<16x16xf32>
    %cst_114 = arith.constant 6.000000e-01 : f32
    %254 = vector.broadcast %cst_114 : f32 to vector<16x16xf32>
    %255 = arith.mulf %254, %194 : vector<16x16xf32>
    %256 = arith.addf %253, %255 : vector<16x16xf32>
    %cst_115 = arith.constant 0.933333337 : f32
    %257 = vector.broadcast %cst_115 : f32 to vector<16x16xf32>
    %258 = arith.mulf %257, %194 : vector<16x16xf32>
    %cst_116 = arith.constant 0.0666666701 : f32
    %259 = vector.broadcast %cst_116 : f32 to vector<16x16xf32>
    %260 = arith.mulf %259, %196 : vector<16x16xf32>
    %261 = arith.addf %258, %260 : vector<16x16xf32>
    %cst_117 = arith.constant 0.466666669 : f32
    %262 = vector.broadcast %cst_117 : f32 to vector<16x16xf32>
    %263 = arith.mulf %262, %194 : vector<16x16xf32>
    %cst_118 = arith.constant 0.533333361 : f32
    %264 = vector.broadcast %cst_118 : f32 to vector<16x16xf32>
    %265 = arith.mulf %264, %196 : vector<16x16xf32>
    %266 = arith.addf %263, %265 : vector<16x16xf32>
    %cst_119 = arith.constant 0.000000e+00 : f32
    %267 = vector.broadcast %cst_119 : f32 to vector<16x16xf32>
    %268 = arith.mulf %267, %194 : vector<16x16xf32>
    %cst_120 = arith.constant 1.000000e+00 : f32
    %269 = vector.broadcast %cst_120 : f32 to vector<16x16xf32>
    %270 = arith.mulf %269, %196 : vector<16x16xf32>
    %271 = arith.addf %268, %270 : vector<16x16xf32>
    %272 = tpu.concatenate %182, %201, %206, %211, %216, %221, %226, %231, %236, %241, %246, %251, %256, %261, %266, %271 in 1 : vector<16x16xf32>, vector<16x16xf32>, vector<16x16xf32>, vector<16x16xf32>, vector<16x16xf32>, vector<16x16xf32>, vector<16x16xf32>, vector<16x16xf32>, vector<16x16xf32>, vector<16x16xf32>, vector<16x16xf32>, vector<16x16xf32>, vector<16x16xf32>, vector<16x16xf32>, vector<16x16xf32>, vector<16x16xf32> -> vector<16x256xf32>
    %273 = tpu.concatenate %178, %272 in 0 : vector<8x256xf32>, vector<16x256xf32> -> vector<24x256xf32>
    %274 = tpu.iota {dimensions = array<i32: 1>} : vector<1x256xi32>
    %c16_i32 = arith.constant 16 : i32
    %c0_i32_121 = arith.constant 0 : i32
    %275 = arith.cmpi eq, %c16_i32, %c0_i32_121 : i32
    %c1_i32_122 = arith.constant 1 : i32
    %276 = arith.select %275, %c1_i32_122, %c16_i32 : i32
    %277 = vector.broadcast %276 : i32 to vector<1x256xi32>
    %278 = arith.remsi %274, %277 : vector<1x256xi32>
    %c0_i32_123 = arith.constant 0 : i32
    %279 = vector.broadcast %c0_i32_123 : i32 to vector<1x256xi32>
    %280 = arith.cmpi ne, %278, %279 : vector<1x256xi32>
    %c0_i32_124 = arith.constant 0 : i32
    %281 = vector.broadcast %c0_i32_124 : i32 to vector<1x256xi32>
    %282 = arith.cmpi slt, %278, %281 : vector<1x256xi32>
    %c0_i32_125 = arith.constant 0 : i32
    %283 = arith.cmpi slt, %276, %c0_i32_125 : i32
    %284 = vector.broadcast %283 : i1 to vector<1x256xi1>
    %285 = vector.broadcast %284 : vector<1x256xi1> to vector<1x256xi1>
    %286 = arith.xori %282, %285 : vector<1x256xi1>
    %287 = arith.andi %286, %280 : vector<1x256xi1>
    %288 = vector.broadcast %276 : i32 to vector<1x256xi32>
    %289 = arith.addi %278, %288 : vector<1x256xi32>
    %290 = arith.select %287, %289, %278 : vector<1x256xi1>, vector<1x256xi32>
    %c1_i32_126 = arith.constant 1 : i32
    %291 = vector.broadcast %c1_i32_126 : i32 to vector<1x256xi32>
    %292 = arith.cmpi sge, %290, %291 : vector<1x256xi32>
    %c15_i32 = arith.constant 15 : i32
    %293 = vector.broadcast %c15_i32 : i32 to vector<1x256xi32>
    %294 = arith.cmpi slt, %290, %293 : vector<1x256xi32>
    %c16_i32_127 = arith.constant 16 : i32
    %295 = vector.broadcast %c16_i32_127 : i32 to vector<1x256xi32>
    %296 = arith.cmpi sge, %274, %295 : vector<1x256xi32>
    %c240_i32 = arith.constant 240 : i32
    %297 = vector.broadcast %c240_i32 : i32 to vector<1x256xi32>
    %298 = arith.cmpi slt, %274, %297 : vector<1x256xi32>
    %cst_128 = arith.constant 0.000000e+00 : f32
    %299 = vector.broadcast %cst_128 : f32 to vector<8x256xf32>
    %c17_i32 = arith.constant 17 : i32
    %300 = tpu.dynamic_rotate %273 by %c17_i32 dim 1 : vector<24x256xf32>, i32 -> vector<24x256xf32>
    %301 = arith.andi %292, %296 : vector<1x256xi1>
    %cst_129 = arith.constant 0.000000e+00 : f32
    %302 = vector.broadcast %cst_129 : f32 to vector<24x256xf32>
    %303 = vector.shape_cast %301 : vector<1x256xi1> to vector<1x256xi1>
    %304 = vector.broadcast %303 : vector<1x256xi1> to vector<24x256xi1>
    %305 = arith.select %304, %300, %302 : vector<24x256xi1>, vector<24x256xf32>
    %c0_130 = arith.constant 0 : index
    %c0_131 = arith.constant 0 : index
    %c0_132 = arith.constant 0 : index
    %306 = vector.load %arg10[%c0_130, %c0_131, %c0_132] : memref<9x8x24xbf16, #tpu.memory_space<vmem>>, vector<1x8x24xbf16>
    %307 = vector.shape_cast %306 : vector<1x8x24xbf16> to vector<8x24xbf16>
    %308 = arith.truncf %305 : vector<24x256xf32> to vector<24x256xbf16>
    %cst_133 = arith.constant dense<0.000000e+00> : vector<8x256xf32>
    %309 = tpu.matmul %307, %308, %cst_133 {dimension_numbers = #tpu.dot_dimension_numbers<[1], [0], [0], [1], [0, 0, 1, 1], [], []>} : vector<8x24xbf16>, vector<24x256xbf16>, vector<8x256xf32> -> vector<8x256xf32>
    %310 = arith.addf %299, %309 : vector<8x256xf32>
    %c16_i32_134 = arith.constant 16 : i32
    %311 = tpu.dynamic_rotate %273 by %c16_i32_134 dim 1 : vector<24x256xf32>, i32 -> vector<24x256xf32>
    %cst_135 = arith.constant 0.000000e+00 : f32
    %312 = vector.broadcast %cst_135 : f32 to vector<24x256xf32>
    %313 = vector.shape_cast %296 : vector<1x256xi1> to vector<1x256xi1>
    %314 = vector.broadcast %313 : vector<1x256xi1> to vector<24x256xi1>
    %315 = arith.select %314, %311, %312 : vector<24x256xi1>, vector<24x256xf32>
    %c1_136 = arith.constant 1 : index
    %c0_137 = arith.constant 0 : index
    %c0_138 = arith.constant 0 : index
    %316 = vector.load %arg10[%c1_136, %c0_137, %c0_138] : memref<9x8x24xbf16, #tpu.memory_space<vmem>>, vector<1x8x24xbf16>
    %317 = vector.shape_cast %316 : vector<1x8x24xbf16> to vector<8x24xbf16>
    %318 = arith.truncf %315 : vector<24x256xf32> to vector<24x256xbf16>
    %cst_139 = arith.constant dense<0.000000e+00> : vector<8x256xf32>
    %319 = tpu.matmul %317, %318, %cst_139 {dimension_numbers = #tpu.dot_dimension_numbers<[1], [0], [0], [1], [0, 0, 1, 1], [], []>} : vector<8x24xbf16>, vector<24x256xbf16>, vector<8x256xf32> -> vector<8x256xf32>
    %320 = arith.addf %310, %319 : vector<8x256xf32>
    %c15_i32_140 = arith.constant 15 : i32
    %321 = tpu.dynamic_rotate %273 by %c15_i32_140 dim 1 : vector<24x256xf32>, i32 -> vector<24x256xf32>
    %322 = arith.andi %294, %296 : vector<1x256xi1>
    %cst_141 = arith.constant 0.000000e+00 : f32
    %323 = vector.broadcast %cst_141 : f32 to vector<24x256xf32>
    %324 = vector.shape_cast %322 : vector<1x256xi1> to vector<1x256xi1>
    %325 = vector.broadcast %324 : vector<1x256xi1> to vector<24x256xi1>
    %326 = arith.select %325, %321, %323 : vector<24x256xi1>, vector<24x256xf32>
    %c2_142 = arith.constant 2 : index
    %c0_143 = arith.constant 0 : index
    %c0_144 = arith.constant 0 : index
    %327 = vector.load %arg10[%c2_142, %c0_143, %c0_144] : memref<9x8x24xbf16, #tpu.memory_space<vmem>>, vector<1x8x24xbf16>
    %328 = vector.shape_cast %327 : vector<1x8x24xbf16> to vector<8x24xbf16>
    %329 = arith.truncf %326 : vector<24x256xf32> to vector<24x256xbf16>
    %cst_145 = arith.constant dense<0.000000e+00> : vector<8x256xf32>
    %330 = tpu.matmul %328, %329, %cst_145 {dimension_numbers = #tpu.dot_dimension_numbers<[1], [0], [0], [1], [0, 0, 1, 1], [], []>} : vector<8x24xbf16>, vector<24x256xbf16>, vector<8x256xf32> -> vector<8x256xf32>
    %331 = arith.addf %320, %330 : vector<8x256xf32>
    %c1_i32_146 = arith.constant 1 : i32
    %332 = tpu.dynamic_rotate %273 by %c1_i32_146 dim 1 : vector<24x256xf32>, i32 -> vector<24x256xf32>
    %cst_147 = arith.constant 0.000000e+00 : f32
    %333 = vector.broadcast %cst_147 : f32 to vector<24x256xf32>
    %334 = vector.shape_cast %292 : vector<1x256xi1> to vector<1x256xi1>
    %335 = vector.broadcast %334 : vector<1x256xi1> to vector<24x256xi1>
    %336 = arith.select %335, %332, %333 : vector<24x256xi1>, vector<24x256xf32>
    %c3_148 = arith.constant 3 : index
    %c0_149 = arith.constant 0 : index
    %c0_150 = arith.constant 0 : index
    %337 = vector.load %arg10[%c3_148, %c0_149, %c0_150] : memref<9x8x24xbf16, #tpu.memory_space<vmem>>, vector<1x8x24xbf16>
    %338 = vector.shape_cast %337 : vector<1x8x24xbf16> to vector<8x24xbf16>
    %339 = arith.truncf %336 : vector<24x256xf32> to vector<24x256xbf16>
    %cst_151 = arith.constant dense<0.000000e+00> : vector<8x256xf32>
    %340 = tpu.matmul %338, %339, %cst_151 {dimension_numbers = #tpu.dot_dimension_numbers<[1], [0], [0], [1], [0, 0, 1, 1], [], []>} : vector<8x24xbf16>, vector<24x256xbf16>, vector<8x256xf32> -> vector<8x256xf32>
    %341 = arith.addf %331, %340 : vector<8x256xf32>
    %c4_152 = arith.constant 4 : index
    %c0_153 = arith.constant 0 : index
    %c0_154 = arith.constant 0 : index
    %342 = vector.load %arg10[%c4_152, %c0_153, %c0_154] : memref<9x8x24xbf16, #tpu.memory_space<vmem>>, vector<1x8x24xbf16>
    %343 = vector.shape_cast %342 : vector<1x8x24xbf16> to vector<8x24xbf16>
    %344 = arith.truncf %273 : vector<24x256xf32> to vector<24x256xbf16>
    %cst_155 = arith.constant dense<0.000000e+00> : vector<8x256xf32>
    %345 = tpu.matmul %343, %344, %cst_155 {dimension_numbers = #tpu.dot_dimension_numbers<[1], [0], [0], [1], [0, 0, 1, 1], [], []>} : vector<8x24xbf16>, vector<24x256xbf16>, vector<8x256xf32> -> vector<8x256xf32>
    %346 = arith.addf %341, %345 : vector<8x256xf32>
    %c255_i32 = arith.constant 255 : i32
    %347 = tpu.dynamic_rotate %273 by %c255_i32 dim 1 : vector<24x256xf32>, i32 -> vector<24x256xf32>
    %cst_156 = arith.constant 0.000000e+00 : f32
    %348 = vector.broadcast %cst_156 : f32 to vector<24x256xf32>
    %349 = vector.shape_cast %294 : vector<1x256xi1> to vector<1x256xi1>
    %350 = vector.broadcast %349 : vector<1x256xi1> to vector<24x256xi1>
    %351 = arith.select %350, %347, %348 : vector<24x256xi1>, vector<24x256xf32>
    %c5_157 = arith.constant 5 : index
    %c0_158 = arith.constant 0 : index
    %c0_159 = arith.constant 0 : index
    %352 = vector.load %arg10[%c5_157, %c0_158, %c0_159] : memref<9x8x24xbf16, #tpu.memory_space<vmem>>, vector<1x8x24xbf16>
    %353 = vector.shape_cast %352 : vector<1x8x24xbf16> to vector<8x24xbf16>
    %354 = arith.truncf %351 : vector<24x256xf32> to vector<24x256xbf16>
    %cst_160 = arith.constant dense<0.000000e+00> : vector<8x256xf32>
    %355 = tpu.matmul %353, %354, %cst_160 {dimension_numbers = #tpu.dot_dimension_numbers<[1], [0], [0], [1], [0, 0, 1, 1], [], []>} : vector<8x24xbf16>, vector<24x256xbf16>, vector<8x256xf32> -> vector<8x256xf32>
    %356 = arith.addf %346, %355 : vector<8x256xf32>
    %c241_i32 = arith.constant 241 : i32
    %357 = tpu.dynamic_rotate %273 by %c241_i32 dim 1 : vector<24x256xf32>, i32 -> vector<24x256xf32>
    %358 = arith.andi %292, %298 : vector<1x256xi1>
    %cst_161 = arith.constant 0.000000e+00 : f32
    %359 = vector.broadcast %cst_161 : f32 to vector<24x256xf32>
    %360 = vector.shape_cast %358 : vector<1x256xi1> to vector<1x256xi1>
    %361 = vector.broadcast %360 : vector<1x256xi1> to vector<24x256xi1>
    %362 = arith.select %361, %357, %359 : vector<24x256xi1>, vector<24x256xf32>
    %c6_162 = arith.constant 6 : index
    %c0_163 = arith.constant 0 : index
    %c0_164 = arith.constant 0 : index
    %363 = vector.load %arg10[%c6_162, %c0_163, %c0_164] : memref<9x8x24xbf16, #tpu.memory_space<vmem>>, vector<1x8x24xbf16>
    %364 = vector.shape_cast %363 : vector<1x8x24xbf16> to vector<8x24xbf16>
    %365 = arith.truncf %362 : vector<24x256xf32> to vector<24x256xbf16>
    %cst_165 = arith.constant dense<0.000000e+00> : vector<8x256xf32>
    %366 = tpu.matmul %364, %365, %cst_165 {dimension_numbers = #tpu.dot_dimension_numbers<[1], [0], [0], [1], [0, 0, 1, 1], [], []>} : vector<8x24xbf16>, vector<24x256xbf16>, vector<8x256xf32> -> vector<8x256xf32>
    %367 = arith.addf %356, %366 : vector<8x256xf32>
    %c240_i32_166 = arith.constant 240 : i32
    %368 = tpu.dynamic_rotate %273 by %c240_i32_166 dim 1 : vector<24x256xf32>, i32 -> vector<24x256xf32>
    %cst_167 = arith.constant 0.000000e+00 : f32
    %369 = vector.broadcast %cst_167 : f32 to vector<24x256xf32>
    %370 = vector.shape_cast %298 : vector<1x256xi1> to vector<1x256xi1>
    %371 = vector.broadcast %370 : vector<1x256xi1> to vector<24x256xi1>
    %372 = arith.select %371, %368, %369 : vector<24x256xi1>, vector<24x256xf32>
    %c7_168 = arith.constant 7 : index
    %c0_169 = arith.constant 0 : index
    %c0_170 = arith.constant 0 : index
    %373 = vector.load %arg10[%c7_168, %c0_169, %c0_170] : memref<9x8x24xbf16, #tpu.memory_space<vmem>>, vector<1x8x24xbf16>
    %374 = vector.shape_cast %373 : vector<1x8x24xbf16> to vector<8x24xbf16>
    %375 = arith.truncf %372 : vector<24x256xf32> to vector<24x256xbf16>
    %cst_171 = arith.constant dense<0.000000e+00> : vector<8x256xf32>
    %376 = tpu.matmul %374, %375, %cst_171 {dimension_numbers = #tpu.dot_dimension_numbers<[1], [0], [0], [1], [0, 0, 1, 1], [], []>} : vector<8x24xbf16>, vector<24x256xbf16>, vector<8x256xf32> -> vector<8x256xf32>
    %377 = arith.addf %367, %376 : vector<8x256xf32>
    %c239_i32 = arith.constant 239 : i32
    %378 = tpu.dynamic_rotate %273 by %c239_i32 dim 1 : vector<24x256xf32>, i32 -> vector<24x256xf32>
    %379 = arith.andi %294, %298 : vector<1x256xi1>
    %cst_172 = arith.constant 0.000000e+00 : f32
    %380 = vector.broadcast %cst_172 : f32 to vector<24x256xf32>
    %381 = vector.shape_cast %379 : vector<1x256xi1> to vector<1x256xi1>
    %382 = vector.broadcast %381 : vector<1x256xi1> to vector<24x256xi1>
    %383 = arith.select %382, %378, %380 : vector<24x256xi1>, vector<24x256xf32>
    %c8_173 = arith.constant 8 : index
    %c0_174 = arith.constant 0 : index
    %c0_175 = arith.constant 0 : index
    %384 = vector.load %arg10[%c8_173, %c0_174, %c0_175] : memref<9x8x24xbf16, #tpu.memory_space<vmem>>, vector<1x8x24xbf16>
    %385 = vector.shape_cast %384 : vector<1x8x24xbf16> to vector<8x24xbf16>
    %386 = arith.truncf %383 : vector<24x256xf32> to vector<24x256xbf16>
    %cst_176 = arith.constant dense<0.000000e+00> : vector<8x256xf32>
    %387 = tpu.matmul %385, %386, %cst_176 {dimension_numbers = #tpu.dot_dimension_numbers<[1], [0], [0], [1], [0, 0, 1, 1], [], []>} : vector<8x24xbf16>, vector<24x256xbf16>, vector<8x256xf32> -> vector<8x256xf32>
    %388 = arith.addf %377, %387 : vector<8x256xf32>
    %389 = vector.broadcast %180 : vector<8x1xf32> to vector<8x256xf32>
    %390 = arith.addf %388, %389 : vector<8x256xf32>
    %391 = arith.negf %390 : vector<8x256xf32>
    %392 = math.exp %391 : vector<8x256xf32>
    %cst_177 = arith.constant 1.000000e+00 : f32
    %393 = vector.broadcast %cst_177 : f32 to vector<8x256xf32>
    %394 = arith.addf %393, %392 : vector<8x256xf32>
    %395 = arith.divf %393, %394 : vector<8x256xf32>
    %396 = arith.mulf %390, %395 : vector<8x256xf32>
    %c0_178 = arith.constant 0 : index
    %c0_179 = arith.constant 0 : index
    %c0_180 = arith.constant 0 : index
    %397 = vector.load %arg15[%c0_178, %c0_179, %c0_180] : memref<1x8x256xf32, #tpu.memory_space<vmem>>, vector<1x8x256xf32>
    %398 = vector.shape_cast %397 : vector<1x8x256xf32> to vector<8x256xf32>
    %399 = vector.shape_cast %396 : vector<8x256xf32> to vector<1x8x256xf32>
    tpu.vector_store %arg15[%c0_178, %c0_179, %c0_180], %399 {strides = array<i32>} : memref<1x8x256xf32, #tpu.memory_space<vmem>>, vector<1x8x256xf32>,
    %c0_181 = arith.constant 0 : index
    %c0_182 = arith.constant 0 : index
    %c0_183 = arith.constant 0 : index
    %400 = vector.load %arg4[%c0_181, %c0_182, %c0_183] : memref<1x4x1024xf32, #tpu.memory_space<vmem>>, vector<1x4x1024xf32>
    %401 = vector.shape_cast %400 : vector<1x4x1024xf32> to vector<4x1024xf32>
    %c0_184 = arith.constant 0 : index
    %c0_185 = arith.constant 0 : index
    %402 = vector.load %arg7[%c0_184, %c0_185] : memref<16x32xf32, #tpu.memory_space<vmem>>, vector<16x32xf32>
    %c0_186 = arith.constant 0 : index
    %c0_187 = arith.constant 0 : index
    %403 = vector.load %arg13[%c0_186, %c0_187] : memref<4x1xf32, #tpu.memory_space<vmem>>, vector<4x1xf32>
    %404 = vector.extract_strided_slice %396 {offsets = [0, 0], sizes = [8, 16], strides = [1, 1]} : vector<8x256xf32> to vector<8x16xf32>
    %cst_188 = arith.constant dense<0.000000e+00> : vector<8x32xf32>
    %405 = tpu.matmul %404, %402, %cst_188 {dimension_numbers = #tpu.dot_dimension_numbers<[1], [0], [0], [1], [0, 0, 1, 1], [], []>} : vector<8x16xf32>, vector<16x32xf32>, vector<8x32xf32> -> vector<8x32xf32>
    %406 = vector.extract_strided_slice %396 {offsets = [0, 16], sizes = [8, 16], strides = [1, 1]} : vector<8x256xf32> to vector<8x16xf32>
    %cst_189 = arith.constant dense<0.000000e+00> : vector<8x32xf32>
    %407 = tpu.matmul %406, %402, %cst_189 {dimension_numbers = #tpu.dot_dimension_numbers<[1], [0], [0], [1], [0, 0, 1, 1], [], []>} : vector<8x16xf32>, vector<16x32xf32>, vector<8x32xf32> -> vector<8x32xf32>
    %408 = vector.extract_strided_slice %396 {offsets = [0, 32], sizes = [8, 16], strides = [1, 1]} : vector<8x256xf32> to vector<8x16xf32>
    %cst_190 = arith.constant dense<0.000000e+00> : vector<8x32xf32>
    %409 = tpu.matmul %408, %402, %cst_190 {dimension_numbers = #tpu.dot_dimension_numbers<[1], [0], [0], [1], [0, 0, 1, 1], [], []>} : vector<8x16xf32>, vector<16x32xf32>, vector<8x32xf32> -> vector<8x32xf32>
    %410 = vector.extract_strided_slice %396 {offsets = [0, 48], sizes = [8, 16], strides = [1, 1]} : vector<8x256xf32> to vector<8x16xf32>
    %cst_191 = arith.constant dense<0.000000e+00> : vector<8x32xf32>
    %411 = tpu.matmul %410, %402, %cst_191 {dimension_numbers = #tpu.dot_dimension_numbers<[1], [0], [0], [1], [0, 0, 1, 1], [], []>} : vector<8x16xf32>, vector<16x32xf32>, vector<8x32xf32> -> vector<8x32xf32>
    %412 = vector.extract_strided_slice %396 {offsets = [0, 64], sizes = [8, 16], strides = [1, 1]} : vector<8x256xf32> to vector<8x16xf32>
    %cst_192 = arith.constant dense<0.000000e+00> : vector<8x32xf32>
    %413 = tpu.matmul %412, %402, %cst_192 {dimension_numbers = #tpu.dot_dimension_numbers<[1], [0], [0], [1], [0, 0, 1, 1], [], []>} : vector<8x16xf32>, vector<16x32xf32>, vector<8x32xf32> -> vector<8x32xf32>
    %414 = vector.extract_strided_slice %396 {offsets = [0, 80], sizes = [8, 16], strides = [1, 1]} : vector<8x256xf32> to vector<8x16xf32>
    %cst_193 = arith.constant dense<0.000000e+00> : vector<8x32xf32>
    %415 = tpu.matmul %414, %402, %cst_193 {dimension_numbers = #tpu.dot_dimension_numbers<[1], [0], [0], [1], [0, 0, 1, 1], [], []>} : vector<8x16xf32>, vector<16x32xf32>, vector<8x32xf32> -> vector<8x32xf32>
    %416 = vector.extract_strided_slice %396 {offsets = [0, 96], sizes = [8, 16], strides = [1, 1]} : vector<8x256xf32> to vector<8x16xf32>
    %cst_194 = arith.constant dense<0.000000e+00> : vector<8x32xf32>
    %417 = tpu.matmul %416, %402, %cst_194 {dimension_numbers = #tpu.dot_dimension_numbers<[1], [0], [0], [1], [0, 0, 1, 1], [], []>} : vector<8x16xf32>, vector<16x32xf32>, vector<8x32xf32> -> vector<8x32xf32>
    %418 = vector.extract_strided_slice %396 {offsets = [0, 112], sizes = [8, 16], strides = [1, 1]} : vector<8x256xf32> to vector<8x16xf32>
    %cst_195 = arith.constant dense<0.000000e+00> : vector<8x32xf32>
    %419 = tpu.matmul %418, %402, %cst_195 {dimension_numbers = #tpu.dot_dimension_numbers<[1], [0], [0], [1], [0, 0, 1, 1], [], []>} : vector<8x16xf32>, vector<16x32xf32>, vector<8x32xf32> -> vector<8x32xf32>
    %420 = vector.extract_strided_slice %396 {offsets = [0, 128], sizes = [8, 16], strides = [1, 1]} : vector<8x256xf32> to vector<8x16xf32>
    %cst_196 = arith.constant dense<0.000000e+00> : vector<8x32xf32>
    %421 = tpu.matmul %420, %402, %cst_196 {dimension_numbers = #tpu.dot_dimension_numbers<[1], [0], [0], [1], [0, 0, 1, 1], [], []>} : vector<8x16xf32>, vector<16x32xf32>, vector<8x32xf32> -> vector<8x32xf32>
    %422 = vector.extract_strided_slice %396 {offsets = [0, 144], sizes = [8, 16], strides = [1, 1]} : vector<8x256xf32> to vector<8x16xf32>
    %cst_197 = arith.constant dense<0.000000e+00> : vector<8x32xf32>
    %423 = tpu.matmul %422, %402, %cst_197 {dimension_numbers = #tpu.dot_dimension_numbers<[1], [0], [0], [1], [0, 0, 1, 1], [], []>} : vector<8x16xf32>, vector<16x32xf32>, vector<8x32xf32> -> vector<8x32xf32>
    %424 = vector.extract_strided_slice %396 {offsets = [0, 160], sizes = [8, 16], strides = [1, 1]} : vector<8x256xf32> to vector<8x16xf32>
    %cst_198 = arith.constant dense<0.000000e+00> : vector<8x32xf32>
    %425 = tpu.matmul %424, %402, %cst_198 {dimension_numbers = #tpu.dot_dimension_numbers<[1], [0], [0], [1], [0, 0, 1, 1], [], []>} : vector<8x16xf32>, vector<16x32xf32>, vector<8x32xf32> -> vector<8x32xf32>
    %426 = vector.extract_strided_slice %396 {offsets = [0, 176], sizes = [8, 16], strides = [1, 1]} : vector<8x256xf32> to vector<8x16xf32>
    %cst_199 = arith.constant dense<0.000000e+00> : vector<8x32xf32>
    %427 = tpu.matmul %426, %402, %cst_199 {dimension_numbers = #tpu.dot_dimension_numbers<[1], [0], [0], [1], [0, 0, 1, 1], [], []>} : vector<8x16xf32>, vector<16x32xf32>, vector<8x32xf32> -> vector<8x32xf32>
    %428 = vector.extract_strided_slice %396 {offsets = [0, 192], sizes = [8, 16], strides = [1, 1]} : vector<8x256xf32> to vector<8x16xf32>
    %cst_200 = arith.constant dense<0.000000e+00> : vector<8x32xf32>
    %429 = tpu.matmul %428, %402, %cst_200 {dimension_numbers = #tpu.dot_dimension_numbers<[1], [0], [0], [1], [0, 0, 1, 1], [], []>} : vector<8x16xf32>, vector<16x32xf32>, vector<8x32xf32> -> vector<8x32xf32>
    %430 = vector.extract_strided_slice %396 {offsets = [0, 208], sizes = [8, 16], strides = [1, 1]} : vector<8x256xf32> to vector<8x16xf32>
    %cst_201 = arith.constant dense<0.000000e+00> : vector<8x32xf32>
    %431 = tpu.matmul %430, %402, %cst_201 {dimension_numbers = #tpu.dot_dimension_numbers<[1], [0], [0], [1], [0, 0, 1, 1], [], []>} : vector<8x16xf32>, vector<16x32xf32>, vector<8x32xf32> -> vector<8x32xf32>
    %432 = vector.extract_strided_slice %396 {offsets = [0, 224], sizes = [8, 16], strides = [1, 1]} : vector<8x256xf32> to vector<8x16xf32>
    %cst_202 = arith.constant dense<0.000000e+00> : vector<8x32xf32>
    %433 = tpu.matmul %432, %402, %cst_202 {dimension_numbers = #tpu.dot_dimension_numbers<[1], [0], [0], [1], [0, 0, 1, 1], [], []>} : vector<8x16xf32>, vector<16x32xf32>, vector<8x32xf32> -> vector<8x32xf32>
    %434 = vector.extract_strided_slice %396 {offsets = [0, 240], sizes = [8, 16], strides = [1, 1]} : vector<8x256xf32> to vector<8x16xf32>
    %cst_203 = arith.constant dense<0.000000e+00> : vector<8x32xf32>
    %435 = tpu.matmul %434, %402, %cst_203 {dimension_numbers = #tpu.dot_dimension_numbers<[1], [0], [0], [1], [0, 0, 1, 1], [], []>} : vector<8x16xf32>, vector<16x32xf32>, vector<8x32xf32> -> vector<8x32xf32>
    %cst_204 = arith.constant 5.161290e-01 : f32
    %436 = vector.broadcast %cst_204 : f32 to vector<8x32xf32>
    %437 = arith.mulf %436, %405 : vector<8x32xf32>
    %cst_205 = arith.constant 0.483870953 : f32
    %438 = vector.broadcast %cst_205 : f32 to vector<8x32xf32>
    %439 = arith.mulf %438, %407 : vector<8x32xf32>
    %440 = arith.addf %437, %439 : vector<8x32xf32>
    %cst_206 = arith.constant 0.0322580636 : f32
    %441 = vector.broadcast %cst_206 : f32 to vector<8x32xf32>
    %442 = arith.mulf %441, %405 : vector<8x32xf32>
    %cst_207 = arith.constant 0.967741906 : f32
    %443 = vector.broadcast %cst_207 : f32 to vector<8x32xf32>
    %444 = arith.mulf %443, %407 : vector<8x32xf32>
    %445 = arith.addf %442, %444 : vector<8x32xf32>
    %cst_208 = arith.constant 0.54838711 : f32
    %446 = vector.broadcast %cst_208 : f32 to vector<8x32xf32>
    %447 = arith.mulf %446, %407 : vector<8x32xf32>
    %cst_209 = arith.constant 0.45161289 : f32
    %448 = vector.broadcast %cst_209 : f32 to vector<8x32xf32>
    %449 = arith.mulf %448, %409 : vector<8x32xf32>
    %450 = arith.addf %447, %449 : vector<8x32xf32>
    %cst_210 = arith.constant 0.0645161271 : f32
    %451 = vector.broadcast %cst_210 : f32 to vector<8x32xf32>
    %452 = arith.mulf %451, %407 : vector<8x32xf32>
    %cst_211 = arith.constant 0.935483872 : f32
    %453 = vector.broadcast %cst_211 : f32 to vector<8x32xf32>
    %454 = arith.mulf %453, %409 : vector<8x32xf32>
    %455 = arith.addf %452, %454 : vector<8x32xf32>
    %cst_212 = arith.constant 0.580645144 : f32
    %456 = vector.broadcast %cst_212 : f32 to vector<8x32xf32>
    %457 = arith.mulf %456, %409 : vector<8x32xf32>
    %cst_213 = arith.constant 0.419354826 : f32
    %458 = vector.broadcast %cst_213 : f32 to vector<8x32xf32>
    %459 = arith.mulf %458, %411 : vector<8x32xf32>
    %460 = arith.addf %457, %459 : vector<8x32xf32>
    %cst_214 = arith.constant 0.0967741906 : f32
    %461 = vector.broadcast %cst_214 : f32 to vector<8x32xf32>
    %462 = arith.mulf %461, %409 : vector<8x32xf32>
    %cst_215 = arith.constant 0.903225779 : f32
    %463 = vector.broadcast %cst_215 : f32 to vector<8x32xf32>
    %464 = arith.mulf %463, %411 : vector<8x32xf32>
    %465 = arith.addf %462, %464 : vector<8x32xf32>
    %cst_216 = arith.constant 0.612903237 : f32
    %466 = vector.broadcast %cst_216 : f32 to vector<8x32xf32>
    %467 = arith.mulf %466, %411 : vector<8x32xf32>
    %cst_217 = arith.constant 0.387096763 : f32
    %468 = vector.broadcast %cst_217 : f32 to vector<8x32xf32>
    %469 = arith.mulf %468, %413 : vector<8x32xf32>
    %470 = arith.addf %467, %469 : vector<8x32xf32>
    %cst_218 = arith.constant 0.129032254 : f32
    %471 = vector.broadcast %cst_218 : f32 to vector<8x32xf32>
    %472 = arith.mulf %471, %411 : vector<8x32xf32>
    %cst_219 = arith.constant 0.870967745 : f32
    %473 = vector.broadcast %cst_219 : f32 to vector<8x32xf32>
    %474 = arith.mulf %473, %413 : vector<8x32xf32>
    %475 = arith.addf %472, %474 : vector<8x32xf32>
    %cst_220 = arith.constant 0.645161271 : f32
    %476 = vector.broadcast %cst_220 : f32 to vector<8x32xf32>
    %477 = arith.mulf %476, %413 : vector<8x32xf32>
    %cst_221 = arith.constant 0.354838699 : f32
    %478 = vector.broadcast %cst_221 : f32 to vector<8x32xf32>
    %479 = arith.mulf %478, %415 : vector<8x32xf32>
    %480 = arith.addf %477, %479 : vector<8x32xf32>
    %cst_222 = arith.constant 0.161290318 : f32
    %481 = vector.broadcast %cst_222 : f32 to vector<8x32xf32>
    %482 = arith.mulf %481, %413 : vector<8x32xf32>
    %cst_223 = arith.constant 0.838709652 : f32
    %483 = vector.broadcast %cst_223 : f32 to vector<8x32xf32>
    %484 = arith.mulf %483, %415 : vector<8x32xf32>
    %485 = arith.addf %482, %484 : vector<8x32xf32>
    %cst_224 = arith.constant 0.677419364 : f32
    %486 = vector.broadcast %cst_224 : f32 to vector<8x32xf32>
    %487 = arith.mulf %486, %415 : vector<8x32xf32>
    %cst_225 = arith.constant 0.322580636 : f32
    %488 = vector.broadcast %cst_225 : f32 to vector<8x32xf32>
    %489 = arith.mulf %488, %417 : vector<8x32xf32>
    %490 = arith.addf %487, %489 : vector<8x32xf32>
    %cst_226 = arith.constant 0.193548381 : f32
    %491 = vector.broadcast %cst_226 : f32 to vector<8x32xf32>
    %492 = arith.mulf %491, %415 : vector<8x32xf32>
    %cst_227 = arith.constant 0.806451618 : f32
    %493 = vector.broadcast %cst_227 : f32 to vector<8x32xf32>
    %494 = arith.mulf %493, %417 : vector<8x32xf32>
    %495 = arith.addf %492, %494 : vector<8x32xf32>
    %cst_228 = arith.constant 0.709677398 : f32
    %496 = vector.broadcast %cst_228 : f32 to vector<8x32xf32>
    %497 = arith.mulf %496, %417 : vector<8x32xf32>
    %cst_229 = arith.constant 0.290322572 : f32
    %498 = vector.broadcast %cst_229 : f32 to vector<8x32xf32>
    %499 = arith.mulf %498, %419 : vector<8x32xf32>
    %500 = arith.addf %497, %499 : vector<8x32xf32>
    %cst_230 = arith.constant 0.225806445 : f32
    %501 = vector.broadcast %cst_230 : f32 to vector<8x32xf32>
    %502 = arith.mulf %501, %417 : vector<8x32xf32>
    %cst_231 = arith.constant 0.774193525 : f32
    %503 = vector.broadcast %cst_231 : f32 to vector<8x32xf32>
    %504 = arith.mulf %503, %419 : vector<8x32xf32>
    %505 = arith.addf %502, %504 : vector<8x32xf32>
    %cst_232 = arith.constant 0.741935492 : f32
    %506 = vector.broadcast %cst_232 : f32 to vector<8x32xf32>
    %507 = arith.mulf %506, %419 : vector<8x32xf32>
    %cst_233 = arith.constant 0.258064508 : f32
    %508 = vector.broadcast %cst_233 : f32 to vector<8x32xf32>
    %509 = arith.mulf %508, %421 : vector<8x32xf32>
    %510 = arith.addf %507, %509 : vector<8x32xf32>
    %cst_234 = arith.constant 0.258064508 : f32
    %511 = vector.broadcast %cst_234 : f32 to vector<8x32xf32>
    %512 = arith.mulf %511, %419 : vector<8x32xf32>
    %cst_235 = arith.constant 0.741935492 : f32
    %513 = vector.broadcast %cst_235 : f32 to vector<8x32xf32>
    %514 = arith.mulf %513, %421 : vector<8x32xf32>
    %515 = arith.addf %512, %514 : vector<8x32xf32>
    %cst_236 = arith.constant 0.774193525 : f32
    %516 = vector.broadcast %cst_236 : f32 to vector<8x32xf32>
    %517 = arith.mulf %516, %421 : vector<8x32xf32>
    %cst_237 = arith.constant 0.225806445 : f32
    %518 = vector.broadcast %cst_237 : f32 to vector<8x32xf32>
    %519 = arith.mulf %518, %423 : vector<8x32xf32>
    %520 = arith.addf %517, %519 : vector<8x32xf32>
    %cst_238 = arith.constant 0.290322572 : f32
    %521 = vector.broadcast %cst_238 : f32 to vector<8x32xf32>
    %522 = arith.mulf %521, %421 : vector<8x32xf32>
    %cst_239 = arith.constant 0.709677398 : f32
    %523 = vector.broadcast %cst_239 : f32 to vector<8x32xf32>
    %524 = arith.mulf %523, %423 : vector<8x32xf32>
    %525 = arith.addf %522, %524 : vector<8x32xf32>
    %cst_240 = arith.constant 0.806451618 : f32
    %526 = vector.broadcast %cst_240 : f32 to vector<8x32xf32>
    %527 = arith.mulf %526, %423 : vector<8x32xf32>
    %cst_241 = arith.constant 0.193548381 : f32
    %528 = vector.broadcast %cst_241 : f32 to vector<8x32xf32>
    %529 = arith.mulf %528, %425 : vector<8x32xf32>
    %530 = arith.addf %527, %529 : vector<8x32xf32>
    %cst_242 = arith.constant 0.322580636 : f32
    %531 = vector.broadcast %cst_242 : f32 to vector<8x32xf32>
    %532 = arith.mulf %531, %423 : vector<8x32xf32>
    %cst_243 = arith.constant 0.677419364 : f32
    %533 = vector.broadcast %cst_243 : f32 to vector<8x32xf32>
    %534 = arith.mulf %533, %425 : vector<8x32xf32>
    %535 = arith.addf %532, %534 : vector<8x32xf32>
    %cst_244 = arith.constant 0.838709652 : f32
    %536 = vector.broadcast %cst_244 : f32 to vector<8x32xf32>
    %537 = arith.mulf %536, %425 : vector<8x32xf32>
    %cst_245 = arith.constant 0.161290318 : f32
    %538 = vector.broadcast %cst_245 : f32 to vector<8x32xf32>
    %539 = arith.mulf %538, %427 : vector<8x32xf32>
    %540 = arith.addf %537, %539 : vector<8x32xf32>
    %cst_246 = arith.constant 0.354838699 : f32
    %541 = vector.broadcast %cst_246 : f32 to vector<8x32xf32>
    %542 = arith.mulf %541, %425 : vector<8x32xf32>
    %cst_247 = arith.constant 0.645161271 : f32
    %543 = vector.broadcast %cst_247 : f32 to vector<8x32xf32>
    %544 = arith.mulf %543, %427 : vector<8x32xf32>
    %545 = arith.addf %542, %544 : vector<8x32xf32>
    %cst_248 = arith.constant 0.870967745 : f32
    %546 = vector.broadcast %cst_248 : f32 to vector<8x32xf32>
    %547 = arith.mulf %546, %427 : vector<8x32xf32>
    %cst_249 = arith.constant 0.129032254 : f32
    %548 = vector.broadcast %cst_249 : f32 to vector<8x32xf32>
    %549 = arith.mulf %548, %429 : vector<8x32xf32>
    %550 = arith.addf %547, %549 : vector<8x32xf32>
    %cst_250 = arith.constant 0.387096763 : f32
    %551 = vector.broadcast %cst_250 : f32 to vector<8x32xf32>
    %552 = arith.mulf %551, %427 : vector<8x32xf32>
    %cst_251 = arith.constant 0.612903237 : f32
    %553 = vector.broadcast %cst_251 : f32 to vector<8x32xf32>
    %554 = arith.mulf %553, %429 : vector<8x32xf32>
    %555 = arith.addf %552, %554 : vector<8x32xf32>
    %cst_252 = arith.constant 0.903225779 : f32
    %556 = vector.broadcast %cst_252 : f32 to vector<8x32xf32>
    %557 = arith.mulf %556, %429 : vector<8x32xf32>
    %cst_253 = arith.constant 0.0967741906 : f32
    %558 = vector.broadcast %cst_253 : f32 to vector<8x32xf32>
    %559 = arith.mulf %558, %431 : vector<8x32xf32>
    %560 = arith.addf %557, %559 : vector<8x32xf32>
    %cst_254 = arith.constant 0.419354826 : f32
    %561 = vector.broadcast %cst_254 : f32 to vector<8x32xf32>
    %562 = arith.mulf %561, %429 : vector<8x32xf32>
    %cst_255 = arith.constant 0.580645144 : f32
    %563 = vector.broadcast %cst_255 : f32 to vector<8x32xf32>
    %564 = arith.mulf %563, %431 : vector<8x32xf32>
    %565 = arith.addf %562, %564 : vector<8x32xf32>
    %cst_256 = arith.constant 0.935483872 : f32
    %566 = vector.broadcast %cst_256 : f32 to vector<8x32xf32>
    %567 = arith.mulf %566, %431 : vector<8x32xf32>
    %cst_257 = arith.constant 0.0645161271 : f32
    %568 = vector.broadcast %cst_257 : f32 to vector<8x32xf32>
    %569 = arith.mulf %568, %433 : vector<8x32xf32>
    %570 = arith.addf %567, %569 : vector<8x32xf32>
    %cst_258 = arith.constant 0.45161289 : f32
    %571 = vector.broadcast %cst_258 : f32 to vector<8x32xf32>
    %572 = arith.mulf %571, %431 : vector<8x32xf32>
    %cst_259 = arith.constant 0.54838711 : f32
    %573 = vector.broadcast %cst_259 : f32 to vector<8x32xf32>
    %574 = arith.mulf %573, %433 : vector<8x32xf32>
    %575 = arith.addf %572, %574 : vector<8x32xf32>
    %cst_260 = arith.constant 0.967741906 : f32
    %576 = vector.broadcast %cst_260 : f32 to vector<8x32xf32>
    %577 = arith.mulf %576, %433 : vector<8x32xf32>
    %cst_261 = arith.constant 0.0322580636 : f32
    %578 = vector.broadcast %cst_261 : f32 to vector<8x32xf32>
    %579 = arith.mulf %578, %435 : vector<8x32xf32>
    %580 = arith.addf %577, %579 : vector<8x32xf32>
    %cst_262 = arith.constant 0.483870953 : f32
    %581 = vector.broadcast %cst_262 : f32 to vector<8x32xf32>
    %582 = arith.mulf %581, %433 : vector<8x32xf32>
    %cst_263 = arith.constant 5.161290e-01 : f32
    %583 = vector.broadcast %cst_263 : f32 to vector<8x32xf32>
    %584 = arith.mulf %583, %435 : vector<8x32xf32>
    %585 = arith.addf %582, %584 : vector<8x32xf32>
    %cst_264 = arith.constant 0.000000e+00 : f32
    %586 = vector.broadcast %cst_264 : f32 to vector<8x32xf32>
    %587 = arith.mulf %586, %433 : vector<8x32xf32>
    %cst_265 = arith.constant 1.000000e+00 : f32
    %588 = vector.broadcast %cst_265 : f32 to vector<8x32xf32>
    %589 = arith.mulf %588, %435 : vector<8x32xf32>
    %590 = arith.addf %587, %589 : vector<8x32xf32>
    %591 = tpu.concatenate %405, %440, %445, %450, %455, %460, %465, %470, %475, %480, %485, %490, %495, %500, %505, %510 in 1 : vector<8x32xf32>, vector<8x32xf32>, vector<8x32xf32>, vector<8x32xf32>, vector<8x32xf32>, vector<8x32xf32>, vector<8x32xf32>, vector<8x32xf32>, vector<8x32xf32>, vector<8x32xf32>, vector<8x32xf32>, vector<8x32xf32>, vector<8x32xf32>, vector<8x32xf32>, vector<8x32xf32>, vector<8x32xf32> -> vector<8x512xf32>
    %592 = tpu.concatenate %515, %520, %525, %530, %535, %540, %545, %550, %555, %560, %565, %570, %575, %580, %585, %590 in 1 : vector<8x32xf32>, vector<8x32xf32>, vector<8x32xf32>, vector<8x32xf32>, vector<8x32xf32>, vector<8x32xf32>, vector<8x32xf32>, vector<8x32xf32>, vector<8x32xf32>, vector<8x32xf32>, vector<8x32xf32>, vector<8x32xf32>, vector<8x32xf32>, vector<8x32xf32>, vector<8x32xf32>, vector<8x32xf32> -> vector<8x512xf32>
    %593 = tpu.concatenate %591, %592 in 1 : vector<8x512xf32>, vector<8x512xf32> -> vector<8x1024xf32>
    %594 = tpu.concatenate %401, %593 in 0 : vector<4x1024xf32>, vector<8x1024xf32> -> vector<12x1024xf32>
    %595 = tpu.iota {dimensions = array<i32: 1>} : vector<1x1024xi32>
    %c32_i32 = arith.constant 32 : i32
    %c0_i32_266 = arith.constant 0 : i32
    %596 = arith.cmpi eq, %c32_i32, %c0_i32_266 : i32
    %c1_i32_267 = arith.constant 1 : i32
    %597 = arith.select %596, %c1_i32_267, %c32_i32 : i32
    %598 = vector.broadcast %597 : i32 to vector<1x1024xi32>
    %599 = arith.remsi %595, %598 : vector<1x1024xi32>
    %c0_i32_268 = arith.constant 0 : i32
    %600 = vector.broadcast %c0_i32_268 : i32 to vector<1x1024xi32>
    %601 = arith.cmpi ne, %599, %600 : vector<1x1024xi32>
    %c0_i32_269 = arith.constant 0 : i32
    %602 = vector.broadcast %c0_i32_269 : i32 to vector<1x1024xi32>
    %603 = arith.cmpi slt, %599, %602 : vector<1x1024xi32>
    %c0_i32_270 = arith.constant 0 : i32
    %604 = arith.cmpi slt, %597, %c0_i32_270 : i32
    %605 = vector.broadcast %604 : i1 to vector<1x1024xi1>
    %606 = vector.broadcast %605 : vector<1x1024xi1> to vector<1x1024xi1>
    %607 = arith.xori %603, %606 : vector<1x1024xi1>
    %608 = arith.andi %607, %601 : vector<1x1024xi1>
    %609 = vector.broadcast %597 : i32 to vector<1x1024xi32>
    %610 = arith.addi %599, %609 : vector<1x1024xi32>
    %611 = arith.select %608, %610, %599 : vector<1x1024xi1>, vector<1x1024xi32>
    %c1_i32_271 = arith.constant 1 : i32
    %612 = vector.broadcast %c1_i32_271 : i32 to vector<1x1024xi32>
    %613 = arith.cmpi sge, %611, %612 : vector<1x1024xi32>
    %c31_i32 = arith.constant 31 : i32
    %614 = vector.broadcast %c31_i32 : i32 to vector<1x1024xi32>
    %615 = arith.cmpi slt, %611, %614 : vector<1x1024xi32>
    %c32_i32_272 = arith.constant 32 : i32
    %616 = vector.broadcast %c32_i32_272 : i32 to vector<1x1024xi32>
    %617 = arith.cmpi sge, %595, %616 : vector<1x1024xi32>
    %c992_i32 = arith.constant 992 : i32
    %618 = vector.broadcast %c992_i32 : i32 to vector<1x1024xi32>
    %619 = arith.cmpi slt, %595, %618 : vector<1x1024xi32>
    %cst_273 = arith.constant 0.000000e+00 : f32
    %620 = vector.broadcast %cst_273 : f32 to vector<4x1024xf32>
    %c33_i32 = arith.constant 33 : i32
    %621 = tpu.dynamic_rotate %594 by %c33_i32 dim 1 : vector<12x1024xf32>, i32 -> vector<12x1024xf32>
    %622 = arith.andi %613, %617 : vector<1x1024xi1>
    %cst_274 = arith.constant 0.000000e+00 : f32
    %623 = vector.broadcast %cst_274 : f32 to vector<12x1024xf32>
    %624 = vector.shape_cast %622 : vector<1x1024xi1> to vector<1x1024xi1>
    %625 = vector.broadcast %624 : vector<1x1024xi1> to vector<12x1024xi1>
    %626 = arith.select %625, %621, %623 : vector<12x1024xi1>, vector<12x1024xf32>
    %c0_275 = arith.constant 0 : index
    %c0_276 = arith.constant 0 : index
    %c0_277 = arith.constant 0 : index
    %627 = vector.load %arg12[%c0_275, %c0_276, %c0_277] : memref<9x4x12xbf16, #tpu.memory_space<vmem>>, vector<1x4x12xbf16>
    %628 = vector.shape_cast %627 : vector<1x4x12xbf16> to vector<4x12xbf16>
    %629 = arith.truncf %626 : vector<12x1024xf32> to vector<12x1024xbf16>
    %cst_278 = arith.constant dense<0.000000e+00> : vector<4x1024xf32>
    %630 = tpu.matmul %628, %629, %cst_278 {dimension_numbers = #tpu.dot_dimension_numbers<[1], [0], [0], [1], [0, 0, 1, 1], [], []>} : vector<4x12xbf16>, vector<12x1024xbf16>, vector<4x1024xf32> -> vector<4x1024xf32>
    %631 = arith.addf %620, %630 : vector<4x1024xf32>
    %c32_i32_279 = arith.constant 32 : i32
    %632 = tpu.dynamic_rotate %594 by %c32_i32_279 dim 1 : vector<12x1024xf32>, i32 -> vector<12x1024xf32>
    %cst_280 = arith.constant 0.000000e+00 : f32
    %633 = vector.broadcast %cst_280 : f32 to vector<12x1024xf32>
    %634 = vector.shape_cast %617 : vector<1x1024xi1> to vector<1x1024xi1>
    %635 = vector.broadcast %634 : vector<1x1024xi1> to vector<12x1024xi1>
    %636 = arith.select %635, %632, %633 : vector<12x1024xi1>, vector<12x1024xf32>
    %c1_281 = arith.constant 1 : index
    %c0_282 = arith.constant 0 : index
    %c0_283 = arith.constant 0 : index
    %637 = vector.load %arg12[%c1_281, %c0_282, %c0_283] : memref<9x4x12xbf16, #tpu.memory_space<vmem>>, vector<1x4x12xbf16>
    %638 = vector.shape_cast %637 : vector<1x4x12xbf16> to vector<4x12xbf16>
    %639 = arith.truncf %636 : vector<12x1024xf32> to vector<12x1024xbf16>
    %cst_284 = arith.constant dense<0.000000e+00> : vector<4x1024xf32>
    %640 = tpu.matmul %638, %639, %cst_284 {dimension_numbers = #tpu.dot_dimension_numbers<[1], [0], [0], [1], [0, 0, 1, 1], [], []>} : vector<4x12xbf16>, vector<12x1024xbf16>, vector<4x1024xf32> -> vector<4x1024xf32>
    %641 = arith.addf %631, %640 : vector<4x1024xf32>
    %c31_i32_285 = arith.constant 31 : i32
    %642 = tpu.dynamic_rotate %594 by %c31_i32_285 dim 1 : vector<12x1024xf32>, i32 -> vector<12x1024xf32>
    %643 = arith.andi %615, %617 : vector<1x1024xi1>
    %cst_286 = arith.constant 0.000000e+00 : f32
    %644 = vector.broadcast %cst_286 : f32 to vector<12x1024xf32>
    %645 = vector.shape_cast %643 : vector<1x1024xi1> to vector<1x1024xi1>
    %646 = vector.broadcast %645 : vector<1x1024xi1> to vector<12x1024xi1>
    %647 = arith.select %646, %642, %644 : vector<12x1024xi1>, vector<12x1024xf32>
    %c2_287 = arith.constant 2 : index
    %c0_288 = arith.constant 0 : index
    %c0_289 = arith.constant 0 : index
    %648 = vector.load %arg12[%c2_287, %c0_288, %c0_289] : memref<9x4x12xbf16, #tpu.memory_space<vmem>>, vector<1x4x12xbf16>
    %649 = vector.shape_cast %648 : vector<1x4x12xbf16> to vector<4x12xbf16>
    %650 = arith.truncf %647 : vector<12x1024xf32> to vector<12x1024xbf16>
    %cst_290 = arith.constant dense<0.000000e+00> : vector<4x1024xf32>
    %651 = tpu.matmul %649, %650, %cst_290 {dimension_numbers = #tpu.dot_dimension_numbers<[1], [0], [0], [1], [0, 0, 1, 1], [], []>} : vector<4x12xbf16>, vector<12x1024xbf16>, vector<4x1024xf32> -> vector<4x1024xf32>
    %652 = arith.addf %641, %651 : vector<4x1024xf32>
    %c1_i32_291 = arith.constant 1 : i32
    %653 = tpu.dynamic_rotate %594 by %c1_i32_291 dim 1 : vector<12x1024xf32>, i32 -> vector<12x1024xf32>
    %cst_292 = arith.constant 0.000000e+00 : f32
    %654 = vector.broadcast %cst_292 : f32 to vector<12x1024xf32>
    %655 = vector.shape_cast %613 : vector<1x1024xi1> to vector<1x1024xi1>
    %656 = vector.broadcast %655 : vector<1x1024xi1> to vector<12x1024xi1>
    %657 = arith.select %656, %653, %654 : vector<12x1024xi1>, vector<12x1024xf32>
    %c3_293 = arith.constant 3 : index
    %c0_294 = arith.constant 0 : index
    %c0_295 = arith.constant 0 : index
    %658 = vector.load %arg12[%c3_293, %c0_294, %c0_295] : memref<9x4x12xbf16, #tpu.memory_space<vmem>>, vector<1x4x12xbf16>
    %659 = vector.shape_cast %658 : vector<1x4x12xbf16> to vector<4x12xbf16>
    %660 = arith.truncf %657 : vector<12x1024xf32> to vector<12x1024xbf16>
    %cst_296 = arith.constant dense<0.000000e+00> : vector<4x1024xf32>
    %661 = tpu.matmul %659, %660, %cst_296 {dimension_numbers = #tpu.dot_dimension_numbers<[1], [0], [0], [1], [0, 0, 1, 1], [], []>} : vector<4x12xbf16>, vector<12x1024xbf16>, vector<4x1024xf32> -> vector<4x1024xf32>
    %662 = arith.addf %652, %661 : vector<4x1024xf32>
    %c4_297 = arith.constant 4 : index
    %c0_298 = arith.constant 0 : index
    %c0_299 = arith.constant 0 : index
    %663 = vector.load %arg12[%c4_297, %c0_298, %c0_299] : memref<9x4x12xbf16, #tpu.memory_space<vmem>>, vector<1x4x12xbf16>
    %664 = vector.shape_cast %663 : vector<1x4x12xbf16> to vector<4x12xbf16>
    %665 = arith.truncf %594 : vector<12x1024xf32> to vector<12x1024xbf16>
    %cst_300 = arith.constant dense<0.000000e+00> : vector<4x1024xf32>
    %666 = tpu.matmul %664, %665, %cst_300 {dimension_numbers = #tpu.dot_dimension_numbers<[1], [0], [0], [1], [0, 0, 1, 1], [], []>} : vector<4x12xbf16>, vector<12x1024xbf16>, vector<4x1024xf32> -> vector<4x1024xf32>
    %667 = arith.addf %662, %666 : vector<4x1024xf32>
    %c1023_i32 = arith.constant 1023 : i32
    %668 = tpu.dynamic_rotate %594 by %c1023_i32 dim 1 : vector<12x1024xf32>, i32 -> vector<12x1024xf32>
    %cst_301 = arith.constant 0.000000e+00 : f32
    %669 = vector.broadcast %cst_301 : f32 to vector<12x1024xf32>
    %670 = vector.shape_cast %615 : vector<1x1024xi1> to vector<1x1024xi1>
    %671 = vector.broadcast %670 : vector<1x1024xi1> to vector<12x1024xi1>
    %672 = arith.select %671, %668, %669 : vector<12x1024xi1>, vector<12x1024xf32>
    %c5_302 = arith.constant 5 : index
    %c0_303 = arith.constant 0 : index
    %c0_304 = arith.constant 0 : index
    %673 = vector.load %arg12[%c5_302, %c0_303, %c0_304] : memref<9x4x12xbf16, #tpu.memory_space<vmem>>, vector<1x4x12xbf16>
    %674 = vector.shape_cast %673 : vector<1x4x12xbf16> to vector<4x12xbf16>
    %675 = arith.truncf %672 : vector<12x1024xf32> to vector<12x1024xbf16>
    %cst_305 = arith.constant dense<0.000000e+00> : vector<4x1024xf32>
    %676 = tpu.matmul %674, %675, %cst_305 {dimension_numbers = #tpu.dot_dimension_numbers<[1], [0], [0], [1], [0, 0, 1, 1], [], []>} : vector<4x12xbf16>, vector<12x1024xbf16>, vector<4x1024xf32> -> vector<4x1024xf32>
    %677 = arith.addf %667, %676 : vector<4x1024xf32>
    %c993_i32 = arith.constant 993 : i32
    %678 = tpu.dynamic_rotate %594 by %c993_i32 dim 1 : vector<12x1024xf32>, i32 -> vector<12x1024xf32>
    %679 = arith.andi %613, %619 : vector<1x1024xi1>
    %cst_306 = arith.constant 0.000000e+00 : f32
    %680 = vector.broadcast %cst_306 : f32 to vector<12x1024xf32>
    %681 = vector.shape_cast %679 : vector<1x1024xi1> to vector<1x1024xi1>
    %682 = vector.broadcast %681 : vector<1x1024xi1> to vector<12x1024xi1>
    %683 = arith.select %682, %678, %680 : vector<12x1024xi1>, vector<12x1024xf32>
    %c6_307 = arith.constant 6 : index
    %c0_308 = arith.constant 0 : index
    %c0_309 = arith.constant 0 : index
    %684 = vector.load %arg12[%c6_307, %c0_308, %c0_309] : memref<9x4x12xbf16, #tpu.memory_space<vmem>>, vector<1x4x12xbf16>
    %685 = vector.shape_cast %684 : vector<1x4x12xbf16> to vector<4x12xbf16>
    %686 = arith.truncf %683 : vector<12x1024xf32> to vector<12x1024xbf16>
    %cst_310 = arith.constant dense<0.000000e+00> : vector<4x1024xf32>
    %687 = tpu.matmul %685, %686, %cst_310 {dimension_numbers = #tpu.dot_dimension_numbers<[1], [0], [0], [1], [0, 0, 1, 1], [], []>} : vector<4x12xbf16>, vector<12x1024xbf16>, vector<4x1024xf32> -> vector<4x1024xf32>
    %688 = arith.addf %677, %687 : vector<4x1024xf32>
    %c992_i32_311 = arith.constant 992 : i32
    %689 = tpu.dynamic_rotate %594 by %c992_i32_311 dim 1 : vector<12x1024xf32>, i32 -> vector<12x1024xf32>
    %cst_312 = arith.constant 0.000000e+00 : f32
    %690 = vector.broadcast %cst_312 : f32 to vector<12x1024xf32>
    %691 = vector.shape_cast %619 : vector<1x1024xi1> to vector<1x1024xi1>
    %692 = vector.broadcast %691 : vector<1x1024xi1> to vector<12x1024xi1>
    %693 = arith.select %692, %689, %690 : vector<12x1024xi1>, vector<12x1024xf32>
    %c7_313 = arith.constant 7 : index
    %c0_314 = arith.constant 0 : index
    %c0_315 = arith.constant 0 : index
    %694 = vector.load %arg12[%c7_313, %c0_314, %c0_315] : memref<9x4x12xbf16, #tpu.memory_space<vmem>>, vector<1x4x12xbf16>
    %695 = vector.shape_cast %694 : vector<1x4x12xbf16> to vector<4x12xbf16>
    %696 = arith.truncf %693 : vector<12x1024xf32> to vector<12x1024xbf16>
    %cst_316 = arith.constant dense<0.000000e+00> : vector<4x1024xf32>
    %697 = tpu.matmul %695, %696, %cst_316 {dimension_numbers = #tpu.dot_dimension_numbers<[1], [0], [0], [1], [0, 0, 1, 1], [], []>} : vector<4x12xbf16>, vector<12x1024xbf16>, vector<4x1024xf32> -> vector<4x1024xf32>
    %698 = arith.addf %688, %697 : vector<4x1024xf32>
    %c991_i32 = arith.constant 991 : i32
    %699 = tpu.dynamic_rotate %594 by %c991_i32 dim 1 : vector<12x1024xf32>, i32 -> vector<12x1024xf32>
    %700 = arith.andi %615, %619 : vector<1x1024xi1>
    %cst_317 = arith.constant 0.000000e+00 : f32
    %701 = vector.broadcast %cst_317 : f32 to vector<12x1024xf32>
    %702 = vector.shape_cast %700 : vector<1x1024xi1> to vector<1x1024xi1>
    %703 = vector.broadcast %702 : vector<1x1024xi1> to vector<12x1024xi1>
    %704 = arith.select %703, %699, %701 : vector<12x1024xi1>, vector<12x1024xf32>
    %c8_318 = arith.constant 8 : index
    %c0_319 = arith.constant 0 : index
    %c0_320 = arith.constant 0 : index
    %705 = vector.load %arg12[%c8_318, %c0_319, %c0_320] : memref<9x4x12xbf16, #tpu.memory_space<vmem>>, vector<1x4x12xbf16>
    %706 = vector.shape_cast %705 : vector<1x4x12xbf16> to vector<4x12xbf16>
    %707 = arith.truncf %704 : vector<12x1024xf32> to vector<12x1024xbf16>
    %cst_321 = arith.constant dense<0.000000e+00> : vector<4x1024xf32>
    %708 = tpu.matmul %706, %707, %cst_321 {dimension_numbers = #tpu.dot_dimension_numbers<[1], [0], [0], [1], [0, 0, 1, 1], [], []>} : vector<4x12xbf16>, vector<12x1024xbf16>, vector<4x1024xf32> -> vector<4x1024xf32>
    %709 = arith.addf %698, %708 : vector<4x1024xf32>
    %710 = vector.broadcast %403 : vector<4x1xf32> to vector<4x1024xf32>
    %711 = arith.addf %709, %710 : vector<4x1024xf32>
    %712 = arith.negf %711 : vector<4x1024xf32>
    %713 = math.exp %712 : vector<4x1024xf32>
    %cst_322 = arith.constant 1.000000e+00 : f32
    %714 = vector.broadcast %cst_322 : f32 to vector<4x1024xf32>
    %715 = arith.addf %714, %713 : vector<4x1024xf32>
    %716 = arith.divf %714, %715 : vector<4x1024xf32>
    %717 = arith.mulf %711, %716 : vector<4x1024xf32>
    %c0_323 = arith.constant 0 : index
    %c0_324 = arith.constant 0 : index
    %c0_325 = arith.constant 0 : index
    %718 = vector.load %arg16[%c0_323, %c0_324, %c0_325] : memref<1x4x1024xf32, #tpu.memory_space<vmem>>, vector<1x4x1024xf32>
    %719 = vector.shape_cast %718 : vector<1x4x1024xf32> to vector<4x1024xf32>
    %720 = vector.shape_cast %717 : vector<4x1024xf32> to vector<1x4x1024xf32>
    tpu.vector_store %arg16[%c0_323, %c0_324, %c0_325], %720 {strides = array<i32>} : memref<1x4x1024xf32, #tpu.memory_space<vmem>>, vector<1x4x1024xf32>,
    return
  }
  func.func @transform_0(%arg0: i32) -> (i32, i32, i32) {
    %c0_i32 = arith.constant 0 : i32
    %c0_i32_0 = arith.constant 0 : i32
    %c0_i32_1 = arith.constant 0 : i32
    return %arg0, %c0_i32, %c0_i32_0 : i32, i32, i32
  }
  func.func @transform_1(%arg0: i32) -> (i32, i32, i32) {
    %c0_i32 = arith.constant 0 : i32
    %c0_i32_0 = arith.constant 0 : i32
    %c0_i32_1 = arith.constant 0 : i32
    return %arg0, %c0_i32, %c0_i32_0 : i32, i32, i32
  }
  func.func @transform_2(%arg0: i32) -> (i32, i32, i32) {
    %c0_i32 = arith.constant 0 : i32
    %c0_i32_0 = arith.constant 0 : i32
    %c0_i32_1 = arith.constant 0 : i32
    return %arg0, %c0_i32, %c0_i32_0 : i32, i32, i32
  }
  func.func @transform_3(%arg0: i32) -> (i32, i32, i32) {
    %c0_i32 = arith.constant 0 : i32
    %c0_i32_0 = arith.constant 0 : i32
    %c0_i32_1 = arith.constant 0 : i32
    return %arg0, %c0_i32, %c0_i32_0 : i32, i32, i32
  }
  func.func @transform_4(%arg0: i32) -> (i32, i32) {
    %c0_i32 = arith.constant 0 : i32
    %c0_i32_0 = arith.constant 0 : i32
    %c0_i32_1 = arith.constant 0 : i32
    return %c0_i32, %c0_i32_0 : i32, i32
  }
  func.func @transform_5(%arg0: i32) -> (i32, i32) {
    %c0_i32 = arith.constant 0 : i32
    %c0_i32_0 = arith.constant 0 : i32
    %c0_i32_1 = arith.constant 0 : i32
    return %c0_i32, %c0_i32_0 : i32, i32
  }
  func.func @transform_6(%arg0: i32) -> (i32, i32) {
    %c0_i32 = arith.constant 0 : i32
    %c0_i32_0 = arith.constant 0 : i32
    %c0_i32_1 = arith.constant 0 : i32
    return %c0_i32, %c0_i32_0 : i32, i32
  }
  func.func @transform_7(%arg0: i32) -> (i32, i32, i32) {
    %c0_i32 = arith.constant 0 : i32
    %c0_i32_0 = arith.constant 0 : i32
    %c0_i32_1 = arith.constant 0 : i32
    %c0_i32_2 = arith.constant 0 : i32
    return %c0_i32, %c0_i32_0, %c0_i32_1 : i32, i32, i32
  }
  func.func @transform_8(%arg0: i32) -> (i32, i32) {
    %c0_i32 = arith.constant 0 : i32
    %c0_i32_0 = arith.constant 0 : i32
    %c0_i32_1 = arith.constant 0 : i32
    return %c0_i32, %c0_i32_0 : i32, i32
  }
  func.func @transform_9(%arg0: i32) -> (i32, i32, i32) {
    %c0_i32 = arith.constant 0 : i32
    %c0_i32_0 = arith.constant 0 : i32
    %c0_i32_1 = arith.constant 0 : i32
    %c0_i32_2 = arith.constant 0 : i32
    return %c0_i32, %c0_i32_0, %c0_i32_1 : i32, i32, i32
  }
  func.func @transform_10(%arg0: i32) -> (i32, i32) {
    %c0_i32 = arith.constant 0 : i32
    %c0_i32_0 = arith.constant 0 : i32
    %c0_i32_1 = arith.constant 0 : i32
    return %c0_i32, %c0_i32_0 : i32, i32
  }
  func.func @transform_11(%arg0: i32) -> (i32, i32, i32) {
    %c0_i32 = arith.constant 0 : i32
    %c0_i32_0 = arith.constant 0 : i32
    %c0_i32_1 = arith.constant 0 : i32
    %c0_i32_2 = arith.constant 0 : i32
    return %c0_i32, %c0_i32_0, %c0_i32_1 : i32, i32, i32
  }
  func.func @transform_12(%arg0: i32) -> (i32, i32) {
    %c0_i32 = arith.constant 0 : i32
    %c0_i32_0 = arith.constant 0 : i32
    %c0_i32_1 = arith.constant 0 : i32
    return %c0_i32, %c0_i32_0 : i32, i32
  }
  func.func @transform_13(%arg0: i32) -> (i32, i32, i32) {
    %c0_i32 = arith.constant 0 : i32
    %c0_i32_0 = arith.constant 0 : i32
    %c0_i32_1 = arith.constant 0 : i32
    return %arg0, %c0_i32, %c0_i32_0 : i32, i32, i32
  }
  func.func @transform_14(%arg0: i32) -> (i32, i32, i32) {
    %c0_i32 = arith.constant 0 : i32
    %c0_i32_0 = arith.constant 0 : i32
    %c0_i32_1 = arith.constant 0 : i32
    return %arg0, %c0_i32, %c0_i32_0 : i32, i32, i32
  }
  func.func @transform_15(%arg0: i32) -> (i32, i32, i32) {
    %c0_i32 = arith.constant 0 : i32
    %c0_i32_0 = arith.constant 0 : i32
    %c0_i32_1 = arith.constant 0 : i32
    return %arg0, %c0_i32, %c0_i32_0 : i32, i32, i32
  }
}

</mosaic_0001>

<llo_original>
// kernel: mul.33
$region0: #{mul.33}
  %s0 = inlined_call_operand.vmem [shape: f32[3,3,48], index: 0, kind: input, shape index: {}]
  %s1 = inlined_call_operand.vmem [shape: f32[9,48], index: 1, kind: output, shape index: {}]
  $region1: #{mul.33} parent=0
    #allocation0 [shape = 'u8[12288]{0}', space=vmem, size = 0x3000, scoped, tag = 'scoped mem for input reshape']
    %s3 = sshll.u32 1, 4
    %s4 = ssub.s32 %s3, 1
    %s5 = smul.addr 4, 2
    %s6 = scalar_lea.vmem %s0, %s5
    %v7 = vld [vmem:[%s6] sm:%s4]
    %s8 = scalar_lea.vmem [#allocation0], 16
    %9 = vst [vmem:[%s8] sm:%s4] %v7
    %s10 = scalar_lea.vmem %s0, 4
    %v11 = vld [vmem:[%s10] sm:%s4]
    %s12 = scalar_lea.vmem [#allocation0], 8
    %13 = vst [vmem:[%s12] sm:%s4] %v11
    %v14 = vld [vmem:[%s0] sm:%s4]
    %15 = vst [vmem:[#allocation0] sm:%s4] %v14
    %v16 = vld [vmem:[#allocation0] sm:$0x7]
    %vm17 = vcmask 392192
    %18 = vst.msk [vmem:[%s1] sm:$0x7] %vm17, %v16
    %s19 = scalar_lea.vmem [#allocation0], 8
    %v20 = vld [vmem:[%s19] sm:$0x7]
    %vm21 = vcmask 392192
    %s22 = scalar_lea.vmem %s1, 3
    %23 = vst.msk [vmem:[%s22] sm:$0x7] %vm21, %v20
    %s24 = scalar_lea.vmem [#allocation0], 16
    %v25 = vld [vmem:[%s24] sm:$0x7]
    %vm26 = vcmask 392192
    %s27 = scalar_lea.vmem %s1, 6
    %28 = vst.msk [vmem:[%s27] sm:$0x7] %vm26, %v25

// kernel: mul.40
$region0: #{mul.40}
  %s0 = inlined_call_operand.vmem [shape: f32[3,3,24], index: 0, kind: input, shape index: {}]
  %s1 = inlined_call_operand.vmem [shape: f32[9,24], index: 1, kind: output, shape index: {}]
  $region1: #{mul.40} parent=0
    #allocation0 [shape = 'u8[12288]{0}', space=vmem, size = 0x3000, scoped, tag = 'scoped mem for input reshape']
    %s3 = sshll.u32 1, 4
    %s4 = ssub.s32 %s3, 1
    %s5 = smul.addr 4, 2
    %s6 = scalar_lea.vmem %s0, %s5
    %v7 = vld [vmem:[%s6] sm:%s4]
    %s8 = scalar_lea.vmem [#allocation0], 16
    %9 = vst [vmem:[%s8] sm:%s4] %v7
    %s10 = scalar_lea.vmem %s0, 4
    %v11 = vld [vmem:[%s10] sm:%s4]
    %s12 = scalar_lea.vmem [#allocation0], 8
    %13 = vst [vmem:[%s12] sm:%s4] %v11
    %v14 = vld [vmem:[%s0] sm:%s4]
    %15 = vst [vmem:[#allocation0] sm:%s4] %v14
    %v16 = vld [vmem:[#allocation0] sm:$0x7]
    %vm17 = vcmask 195584
    %18 = vst.msk [vmem:[%s1] sm:$0x7] %vm17, %v16
    %s19 = scalar_lea.vmem [#allocation0], 8
    %v20 = vld [vmem:[%s19] sm:$0x7]
    %vm21 = vcmask 195584
    %s22 = scalar_lea.vmem %s1, 3
    %23 = vst.msk [vmem:[%s22] sm:$0x7] %vm21, %v20
    %s24 = scalar_lea.vmem [#allocation0], 16
    %v25 = vld [vmem:[%s24] sm:$0x7]
    %vm26 = vcmask 195584
    %s27 = scalar_lea.vmem %s1, 6
    %28 = vst.msk [vmem:[%s27] sm:$0x7] %vm26, %v25

// kernel: mul.47
$region0: #{mul.47}
  %s0 = inlined_call_operand.vmem [shape: f32[3,3,12], index: 0, kind: input, shape index: {}]
  %s1 = inlined_call_operand.vmem [shape: f32[9,12], index: 1, kind: output, shape index: {}]
  $region1: #{mul.47} parent=0
    #allocation0 [shape = 'u8[12288]{0}', space=vmem, size = 0x3000, scoped, tag = 'scoped mem for input reshape']
    %s3 = sshll.u32 1, 4
    %s4 = ssub.s32 %s3, 1
    %s5 = smul.addr 4, 2
    %s6 = scalar_lea.vmem %s0, %s5
    %v7 = vld [vmem:[%s6] sm:%s4]
    %s8 = scalar_lea.vmem [#allocation0], 16
    %9 = vst [vmem:[%s8] sm:%s4] %v7
    %s10 = scalar_lea.vmem %s0, 4
    %v11 = vld [vmem:[%s10] sm:%s4]
    %s12 = scalar_lea.vmem [#allocation0], 8
    %13 = vst [vmem:[%s12] sm:%s4] %v11
    %v14 = vld [vmem:[%s0] sm:%s4]
    %15 = vst [vmem:[#allocation0] sm:%s4] %v14
    %v16 = vld [vmem:[#allocation0] sm:$0x7]
    %vm17 = vcmask 97280
    %18 = vst.msk [vmem:[%s1] sm:$0x7] %vm17, %v16
    %s19 = scalar_lea.vmem [#allocation0], 8
    %v20 = vld [vmem:[%s19] sm:$0x7]
    %vm21 = vcmask 97280
    %s22 = scalar_lea.vmem %s1, 3
    %23 = vst.msk [vmem:[%s22] sm:$0x7] %vm21, %v20
    %s24 = scalar_lea.vmem [#allocation0], 16
    %v25 = vld [vmem:[%s24] sm:$0x7]
    %vm26 = vcmask 97280
    %s27 = scalar_lea.vmem %s1, 6
    %28 = vst.msk [vmem:[%s27] sm:$0x7] %vm26, %v25

// kernel: decoder_full_forward.1
$region0: #{decoder_full_forward.1}
  #allocation0 [shape = 'u32[]', space=smem, size = 0x4, offset = 0x4, fixed_abs, tag = 'smem constant byte address 0x4 - core index']
  #allocation1 [shape = 'u32[144,128]{1,0:T(1,128)}', space=vmem, size = 0x12000, scoped, tag = 'internal scratch']
  %s0 = inlined_call_operand.vmem [shape: f32[2,32,16], index: 0, kind: input, shape index: {}]
  %s1 = inlined_call_operand.vmem [shape: f32[2,16,64], index: 1, kind: input, shape index: {}]
  %s2 = inlined_call_operand.vmem [shape: f32[2,8,256], index: 2, kind: input, shape index: {}]
  %s3 = inlined_call_operand.vmem [shape: f32[2,4,1024], index: 3, kind: input, shape index: {}]
  %s4 = inlined_call_operand.vmem [shape: f32[4,8], index: 4, kind: input, shape index: {}]
  %s5 = inlined_call_operand.vmem [shape: f32[8,16], index: 5, kind: input, shape index: {}]
  %s6 = inlined_call_operand.vmem [shape: f32[16,32], index: 6, kind: input, shape index: {}]
  %s7 = inlined_call_operand.vmem [shape: bf16[9,16,48], index: 7, kind: input, shape index: {}]
  %s8 = inlined_call_operand.vmem [shape: f32[16,1], index: 8, kind: input, shape index: {}]
  %s9 = inlined_call_operand.vmem [shape: bf16[9,8,24], index: 9, kind: input, shape index: {}]
  %s10 = inlined_call_operand.vmem [shape: f32[8,1], index: 10, kind: input, shape index: {}]
  %s11 = inlined_call_operand.vmem [shape: bf16[9,4,12], index: 11, kind: input, shape index: {}]
  %s12 = inlined_call_operand.vmem [shape: f32[4,1], index: 12, kind: input, shape index: {}]
  %s13 = inlined_call_operand.vmem [shape: f32[2,16,64], index: 13, kind: output, shape index: {0}]
  %s14 = inlined_call_operand.vmem [shape: f32[2,8,256], index: 14, kind: output, shape index: {1}]
  %s15 = inlined_call_operand.vmem [shape: f32[2,4,1024], index: 15, kind: output, shape index: {2}]
  %16 = xla_tuple %s13, %s14, %s15
  %s17 = sld [smem:[#allocation0]]
  $region101: #{decoder_full_forward.1} parent=0
    _
  %s19 = ssub.s32 1, %s17
  %s20 = scalar_select 0, %s19, %s17
  loop: start=0, step=1, limit=4
  $region2: #{decoder_full_forward.1} parent=0 // loop_pre_header
    _
  $region3: #{decoder_full_forward.1} parent=0 // loop_header
    %s22 = sphi 0, %s26
    %p23 = scmp.ge.s32.totalorder %s22, 4
    %s32 = sphi 0, %s34
    %s35 = sphi 0, %s32
    %s36 = sphi 0, %s35
    %s52 = sphi 0, %s36
    %s58 = sphi 0, %s60
    %s61 = sphi 0, %s58
    %s62 = sphi 0, %s61
    %s78 = sphi 0, %s62
    %s84 = sphi 0, %s86
    %s87 = sphi 0, %s84
    %s88 = sphi 0, %s87
    %s104 = sphi 0, %s88
    %s110 = sphi 0, %s112
    %s113 = sphi 0, %s110
    %s114 = sphi 0, %s113
    %s130 = sphi 0, %s114
    %s134 = sphi 0, %s134
    %s136 = sphi 0, %s134
    %s137 = sphi 0, %s136
    %s151 = sphi 0, %s137
    %s155 = sphi 0, %s155
    %s157 = sphi 0, %s155
    %s158 = sphi 0, %s157
    %s172 = sphi 0, %s158
    %s176 = sphi 0, %s176
    %s178 = sphi 0, %s176
    %s179 = sphi 0, %s178
    %s193 = sphi 0, %s179
    %s197 = sphi 0, %s197
    %s199 = sphi 0, %s197
    %s200 = sphi 0, %s199
    %s214 = sphi 0, %s200
    %s218 = sphi 0, %s218
    %s220 = sphi 0, %s218
    %s221 = sphi 0, %s220
    %s235 = sphi 0, %s221
    %s239 = sphi 0, %s239
    %s241 = sphi 0, %s239
    %s242 = sphi 0, %s241
    %s256 = sphi 0, %s242
    %s260 = sphi 0, %s260
    %s262 = sphi 0, %s260
    %s263 = sphi 0, %s262
    %s277 = sphi 0, %s263
    %s281 = sphi 0, %s281
    %s283 = sphi 0, %s281
    %s284 = sphi 0, %s283
    %s298 = sphi 0, %s284
    %s302 = sphi 0, %s302
    %s304 = sphi 0, %s302
    %s305 = sphi 0, %s304
    %s319 = sphi 0, %s305
    %s325 = sphi 0, %s327
    %s328 = sphi 0, %s325
    %s329 = sphi 0, %s328
    %s345 = sphi 0, %s329
    %s351 = sphi 0, %s353
    %s354 = sphi 0, %s351
    %s355 = sphi 0, %s354
    %s371 = sphi 0, %s355
    %s377 = sphi 0, %s379
    %s380 = sphi 0, %s377
    %s381 = sphi 0, %s380
    %s397 = sphi 0, %s381
  $region4: #{decoder_full_forward.1} parent=0 // loop_header_branch
    %25 = sbr.rel (%p23) target = $region8
  $region5: #{decoder_full_forward.1} parent=0 // loop_body
    %s27 = ssub.s32 %s22, 1
    %s28 = ssub.s32 %s22, 2
    %s29 = sadd.s32 %s22, 1
    %s30 = ssub.s32 %s22, %s29
    %p31 = scmp.eq.s32.totalorder %s30, 0
    %s33 = sadd.s32 %s32, 1
    %s34 = scalar_select %p31, %s32, %s33
    %p37 = pneg %p31
    %p38 = scmp.eq.s32.totalorder %s22, 1
    %p39 = por %p37, %p38
    %p40 = scmp.ne.s32.totalorder %s32, %s35
    %p41 = scmp.eq.s32.totalorder %s22, 0
    %p42 = por %p40, %p41
    %p43 = scmp.ne.s32.totalorder %s32, %s35
    %p44 = scmp.eq.s32.totalorder %s27, 1
    %p45 = por %p43, %p44
    %p46 = scmp.ne.s32.totalorder %s35, %s36
    %p47 = scmp.eq.s32.totalorder %s27, 0
    %p48 = por %p46, %p47
    %p49 = scmp.ne.s32.totalorder %s35, %s36
    %p50 = scmp.eq.s32.totalorder %s28, 1
    %p51 = por %p49, %p50
    %p53 = scmp.ne.s32.totalorder %s36, %s52
    %p54 = scmp.eq.s32.totalorder %s28, 0
    %p55 = por %p53, %p54
    %s56 = ssub.s32 %s22, %s29
    %p57 = scmp.eq.s32.totalorder %s56, 0
    %s59 = sadd.s32 %s58, 1
    %s60 = scalar_select %p57, %s58, %s59
    %p63 = pneg %p57
    %p64 = scmp.eq.s32.totalorder %s22, 1
    %p65 = por %p63, %p64
    %p66 = scmp.ne.s32.totalorder %s58, %s61
    %p67 = scmp.eq.s32.totalorder %s22, 0
    %p68 = por %p66, %p67
    %p69 = scmp.ne.s32.totalorder %s58, %s61
    %p70 = scmp.eq.s32.totalorder %s27, 1
    %p71 = por %p69, %p70
    %p72 = scmp.ne.s32.totalorder %s61, %s62
    %p73 = scmp.eq.s32.totalorder %s27, 0
    %p74 = por %p72, %p73
    %p75 = scmp.ne.s32.totalorder %s61, %s62
    %p76 = scmp.eq.s32.totalorder %s28, 1
    %p77 = por %p75, %p76
    %p79 = scmp.ne.s32.totalorder %s62, %s78
    %p80 = scmp.eq.s32.totalorder %s28, 0
    %p81 = por %p79, %p80
    %s82 = ssub.s32 %s22, %s29
    %p83 = scmp.eq.s32.totalorder %s82, 0
    %s85 = sadd.s32 %s84, 1
    %s86 = scalar_select %p83, %s84, %s85
    %p89 = pneg %p83
    %p90 = scmp.eq.s32.totalorder %s22, 1
    %p91 = por %p89, %p90
    %p92 = scmp.ne.s32.totalorder %s84, %s87
    %p93 = scmp.eq.s32.totalorder %s22, 0
    %p94 = por %p92, %p93
    %p95 = scmp.ne.s32.totalorder %s84, %s87
    %p96 = scmp.eq.s32.totalorder %s27, 1
    %p97 = por %p95, %p96
    %p98 = scmp.ne.s32.totalorder %s87, %s88
    %p99 = scmp.eq.s32.totalorder %s27, 0
    %p100 = por %p98, %p99
    %p101 = scmp.ne.s32.totalorder %s87, %s88
    %p102 = scmp.eq.s32.totalorder %s28, 1
    %p103 = por %p101, %p102
    %p105 = scmp.ne.s32.totalorder %s88, %s104
    %p106 = scmp.eq.s32.totalorder %s28, 0
    %p107 = por %p105, %p106
    %s108 = ssub.s32 %s22, %s29
    %p109 = scmp.eq.s32.totalorder %s108, 0
    %s111 = sadd.s32 %s110, 1
    %s112 = scalar_select %p109, %s110, %s111
    %p115 = pneg %p109
    %p116 = scmp.eq.s32.totalorder %s22, 1
    %p117 = por %p115, %p116
    %p118 = scmp.ne.s32.totalorder %s110, %s113
    %p119 = scmp.eq.s32.totalorder %s22, 0
    %p120 = por %p118, %p119
    %p121 = scmp.ne.s32.totalorder %s110, %s113
    %p122 = scmp.eq.s32.totalorder %s27, 1
    %p123 = por %p121, %p122
    %p124 = scmp.ne.s32.totalorder %s113, %s114
    %p125 = scmp.eq.s32.totalorder %s27, 0
    %p126 = por %p124, %p125
    %p127 = scmp.ne.s32.totalorder %s113, %s114
    %p128 = scmp.eq.s32.totalorder %s28, 1
    %p129 = por %p127, %p128
    %p131 = scmp.ne.s32.totalorder %s114, %s130
    %p132 = scmp.eq.s32.totalorder %s28, 0
    %p133 = por %p131, %p132
    %s135 = sadd.s32 %s134, 1
    %p138 = scmp.eq.s32.totalorder %s22, 1
    %p139 = scmp.ne.s32.totalorder %s134, %s136
    %p140 = scmp.eq.s32.totalorder %s22, 0
    %p141 = por %p139, %p140
    %p142 = scmp.ne.s32.totalorder %s134, %s136
    %p143 = scmp.eq.s32.totalorder %s27, 1
    %p144 = por %p142, %p143
    %p145 = scmp.ne.s32.totalorder %s136, %s137
    %p146 = scmp.eq.s32.totalorder %s27, 0
    %p147 = por %p145, %p146
    %p148 = scmp.ne.s32.totalorder %s136, %s137
    %p149 = scmp.eq.s32.totalorder %s28, 1
    %p150 = por %p148, %p149
    %p152 = scmp.ne.s32.totalorder %s137, %s151
    %p153 = scmp.eq.s32.totalorder %s28, 0
    %p154 = por %p152, %p153
    %s156 = sadd.s32 %s155, 1
    %p159 = scmp.eq.s32.totalorder %s22, 1
    %p160 = scmp.ne.s32.totalorder %s155, %s157
    %p161 = scmp.eq.s32.totalorder %s22, 0
    %p162 = por %p160, %p161
    %p163 = scmp.ne.s32.totalorder %s155, %s157
    %p164 = scmp.eq.s32.totalorder %s27, 1
    %p165 = por %p163, %p164
    %p166 = scmp.ne.s32.totalorder %s157, %s158
    %p167 = scmp.eq.s32.totalorder %s27, 0
    %p168 = por %p166, %p167
    %p169 = scmp.ne.s32.totalorder %s157, %s158
    %p170 = scmp.eq.s32.totalorder %s28, 1
    %p171 = por %p169, %p170
    %p173 = scmp.ne.s32.totalorder %s158, %s172
    %p174 = scmp.eq.s32.totalorder %s28, 0
    %p175 = por %p173, %p174
    %s177 = sadd.s32 %s176, 1
    %p180 = scmp.eq.s32.totalorder %s22, 1
    %p181 = scmp.ne.s32.totalorder %s176, %s178
    %p182 = scmp.eq.s32.totalorder %s22, 0
    %p183 = por %p181, %p182
    %p184 = scmp.ne.s32.totalorder %s176, %s178
    %p185 = scmp.eq.s32.totalorder %s27, 1
    %p186 = por %p184, %p185
    %p187 = scmp.ne.s32.totalorder %s178, %s179
    %p188 = scmp.eq.s32.totalorder %s27, 0
    %p189 = por %p187, %p188
    %p190 = scmp.ne.s32.totalorder %s178, %s179
    %p191 = scmp.eq.s32.totalorder %s28, 1
    %p192 = por %p190, %p191
    %p194 = scmp.ne.s32.totalorder %s179, %s193
    %p195 = scmp.eq.s32.totalorder %s28, 0
    %p196 = por %p194, %p195
    %s198 = sadd.s32 %s197, 1
    %p201 = scmp.eq.s32.totalorder %s22, 1
    %p202 = scmp.ne.s32.totalorder %s197, %s199
    %p203 = scmp.eq.s32.totalorder %s22, 0
    %p204 = por %p202, %p203
    %p205 = scmp.ne.s32.totalorder %s197, %s199
    %p206 = scmp.eq.s32.totalorder %s27, 1
    %p207 = por %p205, %p206
    %p208 = scmp.ne.s32.totalorder %s199, %s200
    %p209 = scmp.eq.s32.totalorder %s27, 0
    %p210 = por %p208, %p209
    %p211 = scmp.ne.s32.totalorder %s199, %s200
    %p212 = scmp.eq.s32.totalorder %s28, 1
    %p213 = por %p211, %p212
    %p215 = scmp.ne.s32.totalorder %s200, %s214
    %p216 = scmp.eq.s32.totalorder %s28, 0
    %p217 = por %p215, %p216
    %s219 = sadd.s32 %s218, 1
    %p222 = scmp.eq.s32.totalorder %s22, 1
    %p223 = scmp.ne.s32.totalorder %s218, %s220
    %p224 = scmp.eq.s32.totalorder %s22, 0
    %p225 = por %p223, %p224
    %p226 = scmp.ne.s32.totalorder %s218, %s220
    %p227 = scmp.eq.s32.totalorder %s27, 1
    %p228 = por %p226, %p227
    %p229 = scmp.ne.s32.totalorder %s220, %s221
    %p230 = scmp.eq.s32.totalorder %s27, 0
    %p231 = por %p229, %p230
    %p232 = scmp.ne.s32.totalorder %s220, %s221
    %p233 = scmp.eq.s32.totalorder %s28, 1
    %p234 = por %p232, %p233
    %p236 = scmp.ne.s32.totalorder %s221, %s235
    %p237 = scmp.eq.s32.totalorder %s28, 0
    %p238 = por %p236, %p237
    %s240 = sadd.s32 %s239, 1
    %p243 = scmp.eq.s32.totalorder %s22, 1
    %p244 = scmp.ne.s32.totalorder %s239, %s241
    %p245 = scmp.eq.s32.totalorder %s22, 0
    %p246 = por %p244, %p245
    %p247 = scmp.ne.s32.totalorder %s239, %s241
    %p248 = scmp.eq.s32.totalorder %s27, 1
    %p249 = por %p247, %p248
    %p250 = scmp.ne.s32.totalorder %s241, %s242
    %p251 = scmp.eq.s32.totalorder %s27, 0
    %p252 = por %p250, %p251
    %p253 = scmp.ne.s32.totalorder %s241, %s242
    %p254 = scmp.eq.s32.totalorder %s28, 1
    %p255 = por %p253, %p254
    %p257 = scmp.ne.s32.totalorder %s242, %s256
    %p258 = scmp.eq.s32.totalorder %s28, 0
    %p259 = por %p257, %p258
    %s261 = sadd.s32 %s260, 1
    %p264 = scmp.eq.s32.totalorder %s22, 1
    %p265 = scmp.ne.s32.totalorder %s260, %s262
    %p266 = scmp.eq.s32.totalorder %s22, 0
    %p267 = por %p265, %p266
    %p268 = scmp.ne.s32.totalorder %s260, %s262
    %p269 = scmp.eq.s32.totalorder %s27, 1
    %p270 = por %p268, %p269
    %p271 = scmp.ne.s32.totalorder %s262, %s263
    %p272 = scmp.eq.s32.totalorder %s27, 0
    %p273 = por %p271, %p272
    %p274 = scmp.ne.s32.totalorder %s262, %s263
    %p275 = scmp.eq.s32.totalorder %s28, 1
    %p276 = por %p274, %p275
    %p278 = scmp.ne.s32.totalorder %s263, %s277
    %p279 = scmp.eq.s32.totalorder %s28, 0
    %p280 = por %p278, %p279
    %s282 = sadd.s32 %s281, 1
    %p285 = scmp.eq.s32.totalorder %s22, 1
    %p286 = scmp.ne.s32.totalorder %s281, %s283
    %p287 = scmp.eq.s32.totalorder %s22, 0
    %p288 = por %p286, %p287
    %p289 = scmp.ne.s32.totalorder %s281, %s283
    %p290 = scmp.eq.s32.totalorder %s27, 1
    %p291 = por %p289, %p290
    %p292 = scmp.ne.s32.totalorder %s283, %s284
    %p293 = scmp.eq.s32.totalorder %s27, 0
    %p294 = por %p292, %p293
    %p295 = scmp.ne.s32.totalorder %s283, %s284
    %p296 = scmp.eq.s32.totalorder %s28, 1
    %p297 = por %p295, %p296
    %p299 = scmp.ne.s32.totalorder %s284, %s298
    %p300 = scmp.eq.s32.totalorder %s28, 0
    %p301 = por %p299, %p300
    %s303 = sadd.s32 %s302, 1
    %p306 = scmp.eq.s32.totalorder %s22, 1
    %p307 = scmp.ne.s32.totalorder %s302, %s304
    %p308 = scmp.eq.s32.totalorder %s22, 0
    %p309 = por %p307, %p308
    %p310 = scmp.ne.s32.totalorder %s302, %s304
    %p311 = scmp.eq.s32.totalorder %s27, 1
    %p312 = por %p310, %p311
    %p313 = scmp.ne.s32.totalorder %s304, %s305
    %p314 = scmp.eq.s32.totalorder %s27, 0
    %p315 = por %p313, %p314
    %p316 = scmp.ne.s32.totalorder %s304, %s305
    %p317 = scmp.eq.s32.totalorder %s28, 1
    %p318 = por %p316, %p317
    %p320 = scmp.ne.s32.totalorder %s305, %s319
    %p321 = scmp.eq.s32.totalorder %s28, 0
    %p322 = por %p320, %p321
    %s323 = ssub.s32 %s22, %s29
    %p324 = scmp.eq.s32.totalorder %s323, 0
    %s326 = sadd.s32 %s325, 1
    %s327 = scalar_select %p324, %s325, %s326
    %p330 = pneg %p324
    %p331 = scmp.eq.s32.totalorder %s22, 1
    %p332 = por %p330, %p331
    %p333 = scmp.ne.s32.totalorder %s325, %s328
    %p334 = scmp.eq.s32.totalorder %s22, 0
    %p335 = por %p333, %p334
    %p336 = scmp.ne.s32.totalorder %s325, %s328
    %p337 = scmp.eq.s32.totalorder %s27, 1
    %p338 = por %p336, %p337
    %p339 = scmp.ne.s32.totalorder %s328, %s329
    %p340 = scmp.eq.s32.totalorder %s27, 0
    %p341 = por %p339, %p340
    %p342 = scmp.ne.s32.totalorder %s328, %s329
    %p343 = scmp.eq.s32.totalorder %s28, 1
    %p344 = por %p342, %p343
    %p346 = scmp.ne.s32.totalorder %s329, %s345
    %p347 = scmp.eq.s32.totalorder %s28, 0
    %p348 = por %p346, %p347
    %s349 = ssub.s32 %s22, %s29
    %p350 = scmp.eq.s32.totalorder %s349, 0
    %s352 = sadd.s32 %s351, 1
    %s353 = scalar_select %p350, %s351, %s352
    %p356 = pneg %p350
    %p357 = scmp.eq.s32.totalorder %s22, 1
    %p358 = por %p356, %p357
    %p359 = scmp.ne.s32.totalorder %s351, %s354
    %p360 = scmp.eq.s32.totalorder %s22, 0
    %p361 = por %p359, %p360
    %p362 = scmp.ne.s32.totalorder %s351, %s354
    %p363 = scmp.eq.s32.totalorder %s27, 1
    %p364 = por %p362, %p363
    %p365 = scmp.ne.s32.totalorder %s354, %s355
    %p366 = scmp.eq.s32.totalorder %s27, 0
    %p367 = por %p365, %p366
    %p368 = scmp.ne.s32.totalorder %s354, %s355
    %p369 = scmp.eq.s32.totalorder %s28, 1
    %p370 = por %p368, %p369
    %p372 = scmp.ne.s32.totalorder %s355, %s371
    %p373 = scmp.eq.s32.totalorder %s28, 0
    %p374 = por %p372, %p373
    %s375 = ssub.s32 %s22, %s29
    %p376 = scmp.eq.s32.totalorder %s375, 0
    %s378 = sadd.s32 %s377, 1
    %s379 = scalar_select %p376, %s377, %s378
    %p382 = pneg %p376
    %p383 = scmp.eq.s32.totalorder %s22, 1
    %p384 = por %p382, %p383
    %p385 = scmp.ne.s32.totalorder %s377, %s380
    %p386 = scmp.eq.s32.totalorder %s22, 0
    %p387 = por %p385, %p386
    %p388 = scmp.ne.s32.totalorder %s377, %s380
    %p389 = scmp.eq.s32.totalorder %s27, 1
    %p390 = por %p388, %p389
    %p391 = scmp.ne.s32.totalorder %s380, %s381
    %p392 = scmp.eq.s32.totalorder %s27, 0
    %p393 = por %p391, %p392
    %p394 = scmp.ne.s32.totalorder %s380, %s381
    %p395 = scmp.eq.s32.totalorder %s28, 1
    %p396 = por %p394, %p395
    %p398 = scmp.ne.s32.totalorder %s381, %s397
    %p399 = scmp.eq.s32.totalorder %s28, 0
    %p400 = por %p398, %p399
    %p401 = scmp.le.s32.totalorder 1, %s22
    %p402 = scmp.lt.s32.totalorder %s22, 3
    %p403 = pnand %p401, %p402
    %p404 = pneg %p403
    // Predicated region
    $region9: #{decoder_full_forward.1} parent=5 // pred_check
      _
    $region10: #{decoder_full_forward.1} parent=5 // pred_check_branch
      %406 = sbr.rel (%p403) target = $region12
    $region11: #{decoder_full_forward.1} parent=5 // pred_region
      %s407 = ssub.s32 %s22, 1
      // Predicated region
      $region13: #{decoder_full_forward.1} parent=11 // pred_check
        %p408 = pneg %p147
      $region14: #{decoder_full_forward.1} parent=11 // pred_check_branch
        %410 = sbr.rel (%p408) target = $region16
      $region15: #{decoder_full_forward.1} parent=11 // pred_region
        _
      $region16: #{decoder_full_forward.1} parent=11 // pred_fallthru
        _
      // Predicated region
      $region17: #{decoder_full_forward.1} parent=11 // pred_check
        %p411 = pneg %p168
      $region18: #{decoder_full_forward.1} parent=11 // pred_check_branch
        %413 = sbr.rel (%p411) target = $region20
      $region19: #{decoder_full_forward.1} parent=11 // pred_region
        _
      $region20: #{decoder_full_forward.1} parent=11 // pred_fallthru
        _
      // Predicated region
      $region21: #{decoder_full_forward.1} parent=11 // pred_check
        %p414 = pneg %p189
      $region22: #{decoder_full_forward.1} parent=11 // pred_check_branch
        %416 = sbr.rel (%p414) target = $region24
      $region23: #{decoder_full_forward.1} parent=11 // pred_region
        _
      $region24: #{decoder_full_forward.1} parent=11 // pred_fallthru
        _
      // Predicated region
      $region25: #{decoder_full_forward.1} parent=11 // pred_check
        %p417 = pneg %p210
      $region26: #{decoder_full_forward.1} parent=11 // pred_check_branch
        %419 = sbr.rel (%p417) target = $region28
      $region27: #{decoder_full_forward.1} parent=11 // pred_region
        _
      $region28: #{decoder_full_forward.1} parent=11 // pred_fallthru
        _
      // Predicated region
      $region29: #{decoder_full_forward.1} parent=11 // pred_check
        %p420 = pneg %p231
      $region30: #{decoder_full_forward.1} parent=11 // pred_check_branch
        %422 = sbr.rel (%p420) target = $region32
      $region31: #{decoder_full_forward.1} parent=11 // pred_region
        _
      $region32: #{decoder_full_forward.1} parent=11 // pred_fallthru
        _
      // Predicated region
      $region33: #{decoder_full_forward.1} parent=11 // pred_check
        %p423 = pneg %p252
      $region34: #{decoder_full_forward.1} parent=11 // pred_check_branch
        %425 = sbr.rel (%p423) target = $region36
      $region35: #{decoder_full_forward.1} parent=11 // pred_region
        _
      $region36: #{decoder_full_forward.1} parent=11 // pred_fallthru
        _
      // Predicated region
      $region37: #{decoder_full_forward.1} parent=11 // pred_check
        %p426 = pneg %p273
      $region38: #{decoder_full_forward.1} parent=11 // pred_check_branch
        %428 = sbr.rel (%p426) target = $region40
      $region39: #{decoder_full_forward.1} parent=11 // pred_region
        _
      $region40: #{decoder_full_forward.1} parent=11 // pred_fallthru
        _
      // Predicated region
      $region41: #{decoder_full_forward.1} parent=11 // pred_check
        %p429 = pneg %p294
      $region42: #{decoder_full_forward.1} parent=11 // pred_check_branch
        %431 = sbr.rel (%p429) target = $region44
      $region43: #{decoder_full_forward.1} parent=11 // pred_region
        _
      $region44: #{decoder_full_forward.1} parent=11 // pred_fallthru
        _
      // Predicated region
      $region45: #{decoder_full_forward.1} parent=11 // pred_check
        %p432 = pneg %p315
      $region46: #{decoder_full_forward.1} parent=11 // pred_check_branch
        %434 = sbr.rel (%p432) target = $region48
      $region47: #{decoder_full_forward.1} parent=11 // pred_region
        _
      $region48: #{decoder_full_forward.1} parent=11 // pred_fallthru
        _
    $region12: #{decoder_full_forward.1} parent=5 // pred_fallthru
      _
    %p435 = scmp.lt.s32.totalorder %s22, 2
    // Predicated region
    $region49: #{decoder_full_forward.1} parent=5 // pred_check
      %p436 = pneg %p435
    $region50: #{decoder_full_forward.1} parent=5 // pred_check_branch
      %438 = sbr.rel (%p436) target = $region52
    $region51: #{decoder_full_forward.1} parent=5 // pred_region
      // Predicated region
      $region53: #{decoder_full_forward.1} parent=51 // pred_check
        %p439 = pneg %p42
      $region54: #{decoder_full_forward.1} parent=51 // pred_check_branch
        %441 = sbr.rel (%p439) target = $region56
      $region55: #{decoder_full_forward.1} parent=51 // pred_region
        %p442 = scmp.lt.s32.totalorder %s22, 1
        %s443 = scalar_select %p442, %s22, 1
        %s444 = smul.addr %s443, 4
        %s445 = smul.addr %s444, 8
        %s446 = scalar_lea.vmem %s0, %s445
      $region56: #{decoder_full_forward.1} parent=51 // pred_fallthru
        _
      // Predicated region
      $region57: #{decoder_full_forward.1} parent=51 // pred_check
        %p447 = pneg %p68
      $region58: #{decoder_full_forward.1} parent=51 // pred_check_branch
        %449 = sbr.rel (%p447) target = $region60
      $region59: #{decoder_full_forward.1} parent=51 // pred_region
        %p450 = scmp.lt.s32.totalorder %s22, 1
        %s451 = scalar_select %p450, %s22, 1
        %s452 = smul.addr %s451, 2
        %s453 = smul.addr %s452, 8
        %s454 = scalar_lea.vmem %s1, %s453
      $region60: #{decoder_full_forward.1} parent=51 // pred_fallthru
        _
      // Predicated region
      $region61: #{decoder_full_forward.1} parent=51 // pred_check
        %p455 = pneg %p94
      $region62: #{decoder_full_forward.1} parent=51 // pred_check_branch
        %457 = sbr.rel (%p455) target = $region64
      $region63: #{decoder_full_forward.1} parent=51 // pred_region
        %p458 = scmp.lt.s32.totalorder %s22, 1
        %s459 = scalar_select %p458, %s22, 1
        %s460 = smul.addr %s459, 2
        %s461 = smul.addr %s460, 8
        %s462 = scalar_lea.vmem %s2, %s461
      $region64: #{decoder_full_forward.1} parent=51 // pred_fallthru
        _
      // Predicated region
      $region65: #{decoder_full_forward.1} parent=51 // pred_check
        %p463 = pneg %p120
      $region66: #{decoder_full_forward.1} parent=51 // pred_check_branch
        %465 = sbr.rel (%p463) target = $region68
      $region67: #{decoder_full_forward.1} parent=51 // pred_region
        %p466 = scmp.lt.s32.totalorder %s22, 1
        %s467 = scalar_select %p466, %s22, 1
        %s468 = smul.addr %s467, 8
        %s469 = smul.addr %s468, 4
        %s470 = scalar_lea.vmem %s3, %s469
      $region68: #{decoder_full_forward.1} parent=51 // pred_fallthru
        _
    $region52: #{decoder_full_forward.1} parent=5 // pred_fallthru
      _
    %p471 = scmp.le.s32.totalorder 1, %s22
    %p472 = scmp.lt.s32.totalorder %s22, 3
    %p473 = pnand %p471, %p472
    %p474 = pneg %p473
    // Predicated region
    $region69: #{decoder_full_forward.1} parent=5 // pred_check
      _
    $region70: #{decoder_full_forward.1} parent=5 // pred_check_branch
      %476 = sbr.rel (%p473) target = $region72
    $region71: #{decoder_full_forward.1} parent=5 // pred_region
      %s477 = ssub.s32 %s22, 1
      %p478 = scmp.lt.s32.totalorder %s27, 1
      %s479 = scalar_select %p478, %s27, 1
      %s480 = smul.addr %s479, 4
      %s481 = smul.addr %s480, 8
      %s482 = scalar_lea.vmem %s0, %s481
      %p483 = pneg %p48
      %p484 = pneg %p45
      %p485 = scmp.lt.s32.totalorder %s27, 1
      %s486 = scalar_select %p485, %s27, 1
      %s487 = smul.addr %s486, 2
      %s488 = smul.addr %s487, 8
      %s489 = scalar_lea.vmem %s1, %s488
      %p490 = pneg %p74
      %p491 = pneg %p71
      %p492 = scmp.lt.s32.totalorder %s27, 1
      %s493 = scalar_select %p492, %s27, 1
      %s494 = smul.addr %s493, 2
      %s495 = smul.addr %s494, 8
      %s496 = scalar_lea.vmem %s2, %s495
      %p497 = pneg %p100
      %p498 = pneg %p97
      %p499 = scmp.lt.s32.totalorder %s27, 1
      %s500 = scalar_select %p499, %s27, 1
      %s501 = smul.addr %s500, 8
      %s502 = smul.addr %s501, 4
      %s503 = scalar_lea.vmem %s3, %s502
      %p504 = pneg %p126
      %p505 = pneg %p123
      %p506 = pneg %p147
      %p507 = pneg %p144
      %p508 = pneg %p168
      %p509 = pneg %p165
      %p510 = pneg %p189
      %p511 = pneg %p186
      %p512 = pneg %p210
      %p513 = pneg %p207
      %p514 = pneg %p231
      %p515 = pneg %p228
      %p516 = pneg %p252
      %p517 = pneg %p249
      %p518 = pneg %p273
      %p519 = pneg %p270
      %p520 = pneg %p294
      %p521 = pneg %p291
      %p522 = pneg %p315
      %p523 = pneg %p312
      %p524 = pneg %p341
      %p525 = pneg %p338
      %p526 = scmp.lt.s32.totalorder %s27, 1
      %s527 = scalar_select %p526, %s27, 1
      %s528 = smul.addr %s527, 2
      %s529 = smul.addr %s528, 8
      %s530 = scalar_lea.vmem %s13, %s529
      %p531 = pneg %p367
      %p532 = pneg %p364
      %p533 = scmp.lt.s32.totalorder %s27, 1
      %s534 = scalar_select %p533, %s27, 1
      %s535 = smul.addr %s534, 2
      %s536 = smul.addr %s535, 8
      %s537 = scalar_lea.vmem %s14, %s536
      %p538 = pneg %p393
      %p539 = pneg %p390
      %p540 = scmp.lt.s32.totalorder %s27, 1
      %s541 = scalar_select %p540, %s27, 1
      %s542 = smul.addr %s541, 8
      %s543 = smul.addr %s542, 4
      %s544 = scalar_lea.vmem %s15, %s543
      %p545 = scmp.lt.s32.totalorder %s27, 1
      %s546 = scalar_select %p545, %s27, 1
      %s547 = smul.addr %s546, 4
      %s548 = smul.addr %s547, 8
      %s549 = scalar_lea.vmem %s0, %s548
      %p550 = scmp.lt.s32.totalorder %s27, 1
      %s551 = scalar_select %p550, %s27, 1
      %s552 = smul.addr %s551, 2
      %s553 = smul.addr %s552, 8
      %s554 = scalar_lea.vmem %s1, %s553
      %p555 = scmp.lt.s32.totalorder %s27, 1
      %s556 = scalar_select %p555, %s27, 1
      %s557 = smul.addr %s556, 2
      %s558 = smul.addr %s557, 8
      %s559 = scalar_lea.vmem %s2, %s558
      %p560 = scmp.lt.s32.totalorder %s27, 1
      %s561 = scalar_select %p560, %s27, 1
      %s562 = smul.addr %s561, 8
      %s563 = smul.addr %s562, 4
      %s564 = scalar_lea.vmem %s3, %s563
      %p565 = scmp.lt.s32.totalorder %s27, 1
      %s566 = scalar_select %p565, %s27, 1
      %s567 = smul.addr %s566, 2
      %s568 = smul.addr %s567, 8
      %s569 = scalar_lea.vmem %s13, %s568
      %p570 = scmp.lt.s32.totalorder %s27, 1
      %s571 = scalar_select %p570, %s27, 1
      %s572 = smul.addr %s571, 2
      %s573 = smul.addr %s572, 8
      %s574 = scalar_lea.vmem %s14, %s573
      %p575 = scmp.lt.s32.totalorder %s27, 1
      %s576 = scalar_select %p575, %s27, 1
      %s577 = smul.addr %s576, 8
      %s578 = smul.addr %s577, 4
      %s579 = scalar_lea.vmem %s15, %s578
      %v581 = vld [vmem:[%s549] sm:$0xff]
      %v582 = vld [vmem:[%s549 + $0x8] sm:$0xff]
      %v583 = vld [vmem:[%s549 + $0x10] sm:$0xff]
      %v584 = vld [vmem:[%s549 + $0x18] sm:$0xff]
      %v585 = vld [vmem:[%s554] sm:$0xff]
      %v586 = vld [vmem:[%s554 + $0x8] sm:$0xff]
      %v587 = vld [vmem:[%s4] sm:$0xf]
      %v588 = vld [vmem:[%s8] sm:$0xff]
      %v589 = vld [vmem:[%s8 + $0x8] sm:$0xff]
      %vm590 = vcmask 31744
      %v592 = vsel %vm590, %v581, 0
      %v595 = vsel %vm590, %v582, 0
      %v598 = vsel %vm590, %v583, 0
      %v601 = vsel %vm590, %v584, 0
      %vm603 = vcmask 1043456
      %v605 = vsel %vm603, %v587, 0
      %607 = vmatprep.subr.mxu0 0.0
      %608 = vmatpush1.msra.mxu0 0.0
      %609 = vmatprep.subr.mxu0 0.0
      %610 = vmatpush1.msra.mxu0 0.0
      %611 = vmatprep.subr.mxu0 0.0
      %612 = vmatpush1.msra.mxu0 0.0
      %613 = vmatprep.subr.mxu0 0.0
      %614 = vmatpush1.msra.mxu0 0.0
      %615 = vmatprep.subr.mxu0 0.0
      %616 = vmatpush1.msra.mxu0 0.0
      %617 = vmatprep.subr.mxu0 0.0
      %618 = vmatpush1.msra.mxu0 0.0
      %619 = vmatprep.subr.mxu0 0.0
      %620 = vmatpush1.msra.mxu0 0.0
      %621 = vmatprep.subr.mxu0 0.0
      %622 = vmatpush1.msra.mxu0 0.0
      %623 = vmatprep.subr.mxu0 0.0
      %624 = vmatpush1.msra.mxu0 0.0
      %625 = vmatprep.subr.mxu0 0.0
      %626 = vmatpush1.msra.mxu0 0.0
      %627 = vmatprep.subr.mxu0 0.0
      %628 = vmatpush1.msra.mxu0 0.0
      %629 = vmatprep.subr.mxu0 0.0
      %630 = vmatpush1.msra.mxu0 0.0
      %631 = vmatprep.subr.mxu0 0.0
      %632 = vmatpush1.msra.mxu0 0.0
      %633 = vmatprep.subr.mxu0 0.0
      %634 = vmatpush1.msra.mxu0 0.0
      %635 = vmatprep.subr.mxu0 0.0
      %636 = vmatpush1.msra.mxu0 0.0
      %637 = vmatprep.subr.mxu0 0.0
      %638 = vmatpush1.msra.mxu0 %v605
      %639 = vmatprep.subr.mxu0 0.0
      %640 = vmatpush2.msra.mxu0 0.0
      %641 = vmatprep.subr.mxu0 0.0
      %642 = vmatpush2.msra.mxu0 0.0
      %643 = vmatprep.subr.mxu0 0.0
      %644 = vmatpush2.msra.mxu0 0.0
      %645 = vmatprep.subr.mxu0 0.0
      %646 = vmatpush2.msra.mxu0 0.0
      %647 = vmatprep.subr.mxu0 0.0
      %648 = vmatpush2.msra.mxu0 0.0
      %649 = vmatprep.subr.mxu0 0.0
      %650 = vmatpush2.msra.mxu0 0.0
      %651 = vmatprep.subr.mxu0 0.0
      %652 = vmatpush2.msra.mxu0 0.0
      %653 = vmatprep.subr.mxu0 0.0
      %654 = vmatpush2.msra.mxu0 0.0
      %655 = vmatprep.subr.mxu0 0.0
      %656 = vmatpush2.msra.mxu0 0.0
      %657 = vmatprep.subr.mxu0 0.0
      %658 = vmatpush2.msra.mxu0 0.0
      %659 = vmatprep.subr.mxu0 0.0
      %660 = vmatpush2.msra.mxu0 0.0
      %661 = vmatprep.subr.mxu0 0.0
      %662 = vmatpush2.msra.mxu0 0.0
      %663 = vmatprep.subr.mxu0 0.0
      %664 = vmatpush2.msra.mxu0 0.0
      %665 = vmatprep.subr.mxu0 0.0
      %666 = vmatpush2.msra.mxu0 0.0
      %667 = vmatprep.subr.mxu0 0.0
      %668 = vmatpush2.msra.mxu0 0.0
      %669 = vmatprep.subr.mxu0 0.0
      %670 = vmatpush2.msra.mxu0 0.0
      %671 = vmatprep.mubr.f32.mxu0 0.0
      %672 = vmatmul.mubr.f32.gmra.mxu0 %v592
      %v673 = vpop.f32.mrf.mxu0
      %v674 = vadd.f32 0.0, %v673
      %v675 = vpop.f32.mrf.mxu0
      %676 = vmatprep.mubr.f32.mxu0 0.0
      %677 = vmatmul.mubr.f32.gmra.mxu0 %v595
      %v678 = vpop.f32.mrf.mxu0
      %v679 = vadd.f32 0.0, %v678
      %v680 = vpop.f32.mrf.mxu0
      %681 = vmatprep.mubr.f32.mxu0 0.0
      %682 = vmatmul.mubr.f32.gmra.mxu0 %v598
      %v683 = vpop.f32.mrf.mxu0
      %v684 = vadd.f32 0.0, %v683
      %v685 = vpop.f32.mrf.mxu0
      %686 = vmatprep.mubr.f32.mxu0 0.0
      %687 = vmatmul.mubr.f32.gmra.mxu0 %v601
      %v688 = vpop.f32.mrf.mxu0
      %v689 = vadd.f32 0.0, %v688
      %v690 = vpop.f32.mrf.mxu0
      %691 = vdwg.mxu0
      %692 = vrot.lane.b32.xlu0 %v581, 124
      %v693 = vpop.permute.xlu0 %692
      %694 = vrot.lane.b32.xlu0 %v582, 124
      %v695 = vpop.permute.xlu0 %694
      %696 = vrot.lane.b32.xlu0 %v583, 124
      %v697 = vpop.permute.xlu0 %696
      %698 = vrot.lane.b32.xlu0 %v584, 124
      %v699 = vpop.permute.xlu0 %698
      %v700 = vsel %vm590, %v693, 0
      %v702 = vsel %vm590, %v695, 0
      %v704 = vsel %vm590, %v697, 0
      %v706 = vsel %vm590, %v699, 0
      %708 = vmatprep.subr.mxu0 0.0
      %709 = vmatpush1.msra.mxu0 0.0
      %710 = vmatprep.subr.mxu0 0.0
      %711 = vmatpush1.msra.mxu0 0.0
      %712 = vmatprep.subr.mxu0 0.0
      %713 = vmatpush1.msra.mxu0 0.0
      %714 = vmatprep.subr.mxu0 0.0
      %715 = vmatpush1.msra.mxu0 0.0
      %716 = vmatprep.subr.mxu0 0.0
      %717 = vmatpush1.msra.mxu0 0.0
      %718 = vmatprep.subr.mxu0 0.0
      %719 = vmatpush1.msra.mxu0 0.0
      %720 = vmatprep.subr.mxu0 0.0
      %721 = vmatpush1.msra.mxu0 0.0
      %722 = vmatprep.subr.mxu0 0.0
      %723 = vmatpush1.msra.mxu0 0.0
      %724 = vmatprep.subr.mxu0 0.0
      %725 = vmatpush1.msra.mxu0 0.0
      %726 = vmatprep.subr.mxu0 0.0
      %727 = vmatpush1.msra.mxu0 0.0
      %728 = vmatprep.subr.mxu0 0.0
      %729 = vmatpush1.msra.mxu0 0.0
      %730 = vmatprep.subr.mxu0 0.0
      %731 = vmatpush1.msra.mxu0 0.0
      %732 = vmatprep.subr.mxu0 0.0
      %733 = vmatpush1.msra.mxu0 0.0
      %734 = vmatprep.subr.mxu0 0.0
      %735 = vmatpush1.msra.mxu0 0.0
      %736 = vmatprep.subr.mxu0 0.0
      %737 = vmatpush1.msra.mxu0 0.0
      %738 = vmatprep.subr.mxu0 0.0
      %739 = vmatpush1.msra.mxu0 %v605
      %740 = vmatprep.subr.mxu0 0.0
      %741 = vmatpush2.msra.mxu0 0.0
      %742 = vmatprep.subr.mxu0 0.0
      %743 = vmatpush2.msra.mxu0 0.0
      %744 = vmatprep.subr.mxu0 0.0
      %745 = vmatpush2.msra.mxu0 0.0
      %746 = vmatprep.subr.mxu0 0.0
      %747 = vmatpush2.msra.mxu0 0.0
      %748 = vmatprep.subr.mxu0 0.0
      %749 = vmatpush2.msra.mxu0 0.0
      %750 = vmatprep.subr.mxu0 0.0
      %751 = vmatpush2.msra.mxu0 0.0
      %752 = vmatprep.subr.mxu0 0.0
      %753 = vmatpush2.msra.mxu0 0.0
      %754 = vmatprep.subr.mxu0 0.0
      %755 = vmatpush2.msra.mxu0 0.0
      %756 = vmatprep.subr.mxu0 0.0
      %757 = vmatpush2.msra.mxu0 0.0
      %758 = vmatprep.subr.mxu0 0.0
      %759 = vmatpush2.msra.mxu0 0.0
      %760 = vmatprep.subr.mxu0 0.0
      %761 = vmatpush2.msra.mxu0 0.0
      %762 = vmatprep.subr.mxu0 0.0
      %763 = vmatpush2.msra.mxu0 0.0
      %764 = vmatprep.subr.mxu0 0.0
      %765 = vmatpush2.msra.mxu0 0.0
      %766 = vmatprep.subr.mxu0 0.0
      %767 = vmatpush2.msra.mxu0 0.0
      %768 = vmatprep.subr.mxu0 0.0
      %769 = vmatpush2.msra.mxu0 0.0
      %770 = vmatprep.subr.mxu0 0.0
      %771 = vmatpush2.msra.mxu0 0.0
      %772 = vmatprep.mubr.f32.mxu0 0.0
      %773 = vmatmul.mubr.f32.gmra.mxu0 %v700
      %v774 = vpop.f32.mrf.mxu0
      %v775 = vadd.f32 0.0, %v774
      %v776 = vpop.f32.mrf.mxu0
      %777 = vmatprep.mubr.f32.mxu0 0.0
      %778 = vmatmul.mubr.f32.gmra.mxu0 %v702
      %v779 = vpop.f32.mrf.mxu0
      %v780 = vadd.f32 0.0, %v779
      %v781 = vpop.f32.mrf.mxu0
      %782 = vmatprep.mubr.f32.mxu0 0.0
      %783 = vmatmul.mubr.f32.gmra.mxu0 %v704
      %v784 = vpop.f32.mrf.mxu0
      %v785 = vadd.f32 0.0, %v784
      %v786 = vpop.f32.mrf.mxu0
      %787 = vmatprep.mubr.f32.mxu0 0.0
      %788 = vmatmul.mubr.f32.gmra.mxu0 %v706
      %v789 = vpop.f32.mrf.mxu0
      %v790 = vadd.f32 0.0, %v789
      %v791 = vpop.f32.mrf.mxu0
      %792 = vdwg.mxu0
      %793 = vrot.lane.b32.xlu0 %v581, 120
      %v794 = vpop.permute.xlu0 %793
      %795 = vrot.lane.b32.xlu0 %v582, 120
      %v796 = vpop.permute.xlu0 %795
      %797 = vrot.lane.b32.xlu0 %v583, 120
      %v798 = vpop.permute.xlu0 %797
      %799 = vrot.lane.b32.xlu0 %v584, 120
      %v800 = vpop.permute.xlu0 %799
      %v801 = vsel %vm590, %v794, 0
      %v803 = vsel %vm590, %v796, 0
      %v805 = vsel %vm590, %v798, 0
      %v807 = vsel %vm590, %v800, 0
      %809 = vmatprep.subr.mxu0 0.0
      %810 = vmatpush1.msra.mxu0 0.0
      %811 = vmatprep.subr.mxu0 0.0
      %812 = vmatpush1.msra.mxu0 0.0
      %813 = vmatprep.subr.mxu0 0.0
      %814 = vmatpush1.msra.mxu0 0.0
      %815 = vmatprep.subr.mxu0 0.0
      %816 = vmatpush1.msra.mxu0 0.0
      %817 = vmatprep.subr.mxu0 0.0
      %818 = vmatpush1.msra.mxu0 0.0
      %819 = vmatprep.subr.mxu0 0.0
      %820 = vmatpush1.msra.mxu0 0.0
      %821 = vmatprep.subr.mxu0 0.0
      %822 = vmatpush1.msra.mxu0 0.0
      %823 = vmatprep.subr.mxu0 0.0
      %824 = vmatpush1.msra.mxu0 0.0
      %825 = vmatprep.subr.mxu0 0.0
      %826 = vmatpush1.msra.mxu0 0.0
      %827 = vmatprep.subr.mxu0 0.0
      %828 = vmatpush1.msra.mxu0 0.0
      %829 = vmatprep.subr.mxu0 0.0
      %830 = vmatpush1.msra.mxu0 0.0
      %831 = vmatprep.subr.mxu0 0.0
      %832 = vmatpush1.msra.mxu0 0.0
      %833 = vmatprep.subr.mxu0 0.0
      %834 = vmatpush1.msra.mxu0 0.0
      %835 = vmatprep.subr.mxu0 0.0
      %836 = vmatpush1.msra.mxu0 0.0
      %837 = vmatprep.subr.mxu0 0.0
      %838 = vmatpush1.msra.mxu0 0.0
      %839 = vmatprep.subr.mxu0 0.0
      %840 = vmatpush1.msra.mxu0 %v605
      %841 = vmatprep.subr.mxu0 0.0
      %842 = vmatpush2.msra.mxu0 0.0
      %843 = vmatprep.subr.mxu0 0.0
      %844 = vmatpush2.msra.mxu0 0.0
      %845 = vmatprep.subr.mxu0 0.0
      %846 = vmatpush2.msra.mxu0 0.0
      %847 = vmatprep.subr.mxu0 0.0
      %848 = vmatpush2.msra.mxu0 0.0
      %849 = vmatprep.subr.mxu0 0.0
      %850 = vmatpush2.msra.mxu0 0.0
      %851 = vmatprep.subr.mxu0 0.0
      %852 = vmatpush2.msra.mxu0 0.0
      %853 = vmatprep.subr.mxu0 0.0
      %854 = vmatpush2.msra.mxu0 0.0
      %855 = vmatprep.subr.mxu0 0.0
      %856 = vmatpush2.msra.mxu0 0.0
      %857 = vmatprep.subr.mxu0 0.0
      %858 = vmatpush2.msra.mxu0 0.0
      %859 = vmatprep.subr.mxu0 0.0
      %860 = vmatpush2.msra.mxu0 0.0
      %861 = vmatprep.subr.mxu0 0.0
      %862 = vmatpush2.msra.mxu0 0.0
      %863 = vmatprep.subr.mxu0 0.0
      %864 = vmatpush2.msra.mxu0 0.0
      %865 = vmatprep.subr.mxu0 0.0
      %866 = vmatpush2.msra.mxu0 0.0
      %867 = vmatprep.subr.mxu0 0.0
      %868 = vmatpush2.msra.mxu0 0.0
      %869 = vmatprep.subr.mxu0 0.0
      %870 = vmatpush2.msra.mxu0 0.0
      %871 = vmatprep.subr.mxu0 0.0
      %872 = vmatpush2.msra.mxu0 0.0
      %873 = vmatprep.mubr.f32.mxu0 0.0
      %874 = vmatmul.mubr.f32.gmra.mxu0 %v801
      %v875 = vpop.f32.mrf.mxu0
      %v876 = vadd.f32 0.0, %v875
      %v877 = vpop.f32.mrf.mxu0
      %878 = vmatprep.mubr.f32.mxu0 0.0
      %879 = vmatmul.mubr.f32.gmra.mxu0 %v803
      %v880 = vpop.f32.mrf.mxu0
      %v881 = vadd.f32 0.0, %v880
      %v882 = vpop.f32.mrf.mxu0
      %883 = vmatprep.mubr.f32.mxu0 0.0
      %884 = vmatmul.mubr.f32.gmra.mxu0 %v805
      %v885 = vpop.f32.mrf.mxu0
      %v886 = vadd.f32 0.0, %v885
      %v887 = vpop.f32.mrf.mxu0
      %888 = vmatprep.mubr.f32.mxu0 0.0
      %889 = vmatmul.mubr.f32.gmra.mxu0 %v807
      %v890 = vpop.f32.mrf.mxu0
      %v891 = vadd.f32 0.0, %v890
      %v892 = vpop.f32.mrf.mxu0
      %893 = vdwg.mxu0
      %894 = vrot.lane.b32.xlu0 %v581, 116
      %v895 = vpop.permute.xlu0 %894
      %896 = vrot.lane.b32.xlu0 %v582, 116
      %v897 = vpop.permute.xlu0 %896
      %898 = vrot.lane.b32.xlu0 %v583, 116
      %v899 = vpop.permute.xlu0 %898
      %900 = vrot.lane.b32.xlu0 %v584, 116
      %v901 = vpop.permute.xlu0 %900
      %v902 = vsel %vm590, %v895, 0
      %v904 = vsel %vm590, %v897, 0
      %v906 = vsel %vm590, %v899, 0
      %v908 = vsel %vm590, %v901, 0
      %910 = vmatprep.subr.mxu0 0.0
      %911 = vmatpush1.msra.mxu0 0.0
      %912 = vmatprep.subr.mxu0 0.0
      %913 = vmatpush1.msra.mxu0 0.0
      %914 = vmatprep.subr.mxu0 0.0
      %915 = vmatpush1.msra.mxu0 0.0
      %916 = vmatprep.subr.mxu0 0.0
      %917 = vmatpush1.msra.mxu0 0.0
      %918 = vmatprep.subr.mxu0 0.0
      %919 = vmatpush1.msra.mxu0 0.0
      %920 = vmatprep.subr.mxu0 0.0
      %921 = vmatpush1.msra.mxu0 0.0
      %922 = vmatprep.subr.mxu0 0.0
      %923 = vmatpush1.msra.mxu0 0.0
      %924 = vmatprep.subr.mxu0 0.0
      %925 = vmatpush1.msra.mxu0 0.0
      %926 = vmatprep.subr.mxu0 0.0
      %927 = vmatpush1.msra.mxu0 0.0
      %928 = vmatprep.subr.mxu0 0.0
      %929 = vmatpush1.msra.mxu0 0.0
      %930 = vmatprep.subr.mxu0 0.0
      %931 = vmatpush1.msra.mxu0 0.0
      %932 = vmatprep.subr.mxu0 0.0
      %933 = vmatpush1.msra.mxu0 0.0
      %934 = vmatprep.subr.mxu0 0.0
      %935 = vmatpush1.msra.mxu0 0.0
      %936 = vmatprep.subr.mxu0 0.0
      %937 = vmatpush1.msra.mxu0 0.0
      %938 = vmatprep.subr.mxu0 0.0
      %939 = vmatpush1.msra.mxu0 0.0
      %940 = vmatprep.subr.mxu0 0.0
      %941 = vmatpush1.msra.mxu0 %v605
      %942 = vmatprep.subr.mxu0 0.0
      %943 = vmatpush2.msra.mxu0 0.0
      %944 = vmatprep.subr.mxu0 0.0
      %945 = vmatpush2.msra.mxu0 0.0
      %946 = vmatprep.subr.mxu0 0.0
      %947 = vmatpush2.msra.mxu0 0.0
      %948 = vmatprep.subr.mxu0 0.0
      %949 = vmatpush2.msra.mxu0 0.0
      %950 = vmatprep.subr.mxu0 0.0
      %951 = vmatpush2.msra.mxu0 0.0
      %952 = vmatprep.subr.mxu0 0.0
      %953 = vmatpush2.msra.mxu0 0.0
      %954 = vmatprep.subr.mxu0 0.0
      %955 = vmatpush2.msra.mxu0 0.0
      %956 = vmatprep.subr.mxu0 0.0
      %957 = vmatpush2.msra.mxu0 0.0
      %958 = vmatprep.subr.mxu0 0.0
      %959 = vmatpush2.msra.mxu0 0.0
      %960 = vmatprep.subr.mxu0 0.0
      %961 = vmatpush2.msra.mxu0 0.0
      %962 = vmatprep.subr.mxu0 0.0
      %963 = vmatpush2.msra.mxu0 0.0
      %964 = vmatprep.subr.mxu0 0.0
      %965 = vmatpush2.msra.mxu0 0.0
      %966 = vmatprep.subr.mxu0 0.0
      %967 = vmatpush2.msra.mxu0 0.0
      %968 = vmatprep.subr.mxu0 0.0
      %969 = vmatpush2.msra.mxu0 0.0
      %970 = vmatprep.subr.mxu0 0.0
      %971 = vmatpush2.msra.mxu0 0.0
      %972 = vmatprep.subr.mxu0 0.0
      %973 = vmatpush2.msra.mxu0 0.0
      %974 = vmatprep.mubr.f32.mxu0 0.0
      %975 = vmatmul.mubr.f32.gmra.mxu0 %v902
      %v976 = vpop.f32.mrf.mxu0
      %v977 = vadd.f32 0.0, %v976
      %v978 = vpop.f32.mrf.mxu0
      %979 = vmatprep.mubr.f32.mxu0 0.0
      %980 = vmatmul.mubr.f32.gmra.mxu0 %v904
      %v981 = vpop.f32.mrf.mxu0
      %v982 = vadd.f32 0.0, %v981
      %v983 = vpop.f32.mrf.mxu0
      %984 = vmatprep.mubr.f32.mxu0 0.0
      %985 = vmatmul.mubr.f32.gmra.mxu0 %v906
      %v986 = vpop.f32.mrf.mxu0
      %v987 = vadd.f32 0.0, %v986
      %v988 = vpop.f32.mrf.mxu0
      %989 = vmatprep.mubr.f32.mxu0 0.0
      %990 = vmatmul.mubr.f32.gmra.mxu0 %v908
      %v991 = vpop.f32.mrf.mxu0
      %v992 = vadd.f32 0.0, %v991
      %v993 = vpop.f32.mrf.mxu0
      %994 = vdwg.mxu0
      %v995 = vmul.f32 %v674, 0.5714286
      %v996 = vmul.f32 %v679, 0.5714286
      %v997 = vmul.f32 %v684, 0.5714286
      %v998 = vmul.f32 %v689, 0.5714286
      %v999 = vmul.f32 %v775, 0.42857143
      %v1000 = vmul.f32 %v780, 0.42857143
      %v1001 = vmul.f32 %v785, 0.42857143
      %v1002 = vmul.f32 %v790, 0.42857143
      %v1003 = vadd.f32 %v995, %v999
      %v1004 = vadd.f32 %v996, %v1000
      %v1005 = vadd.f32 %v997, %v1001
      %v1006 = vadd.f32 %v998, %v1002
      %v1007 = vmul.f32 %v674, 0.14285715
      %v1008 = vmul.f32 %v679, 0.14285715
      %v1009 = vmul.f32 %v684, 0.14285715
      %v1010 = vmul.f32 %v689, 0.14285715
      %v1011 = vmul.f32 %v775, 0.85714287
      %v1012 = vmul.f32 %v780, 0.85714287
      %v1013 = vmul.f32 %v785, 0.85714287
      %v1014 = vmul.f32 %v790, 0.85714287
      %v1015 = vadd.f32 %v1007, %v1011
      %v1016 = vadd.f32 %v1008, %v1012
      %v1017 = vadd.f32 %v1009, %v1013
      %v1018 = vadd.f32 %v1010, %v1014
      %v1019 = vmul.f32 %v775, 0.71428573
      %v1020 = vmul.f32 %v780, 0.71428573
      %v1021 = vmul.f32 %v785, 0.71428573
      %v1022 = vmul.f32 %v790, 0.71428573
      %v1023 = vmul.f32 %v876, 0.2857143
      %v1024 = vmul.f32 %v881, 0.2857143
      %v1025 = vmul.f32 %v886, 0.2857143
      %v1026 = vmul.f32 %v891, 0.2857143
      %v1027 = vadd.f32 %v1019, %v1023
      %v1028 = vadd.f32 %v1020, %v1024
      %v1029 = vadd.f32 %v1021, %v1025
      %v1030 = vadd.f32 %v1022, %v1026
      %v1031 = vmul.f32 %v775, 0.2857143
      %v1032 = vmul.f32 %v780, 0.2857143
      %v1033 = vmul.f32 %v785, 0.2857143
      %v1034 = vmul.f32 %v790, 0.2857143
      %v1035 = vmul.f32 %v876, 0.71428573
      %v1036 = vmul.f32 %v881, 0.71428573
      %v1037 = vmul.f32 %v886, 0.71428573
      %v1038 = vmul.f32 %v891, 0.71428573
      %v1039 = vadd.f32 %v1031, %v1035
      %v1040 = vadd.f32 %v1032, %v1036
      %v1041 = vadd.f32 %v1033, %v1037
      %v1042 = vadd.f32 %v1034, %v1038
      %v1043 = vmul.f32 %v876, 0.85714287
      %v1044 = vmul.f32 %v881, 0.85714287
      %v1045 = vmul.f32 %v886, 0.85714287
      %v1046 = vmul.f32 %v891, 0.85714287
      %v1047 = vmul.f32 %v977, 0.14285715
      %v1048 = vmul.f32 %v982, 0.14285715
      %v1049 = vmul.f32 %v987, 0.14285715
      %v1050 = vmul.f32 %v992, 0.14285715
      %v1051 = vadd.f32 %v1043, %v1047
      %v1052 = vadd.f32 %v1044, %v1048
      %v1053 = vadd.f32 %v1045, %v1049
      %v1054 = vadd.f32 %v1046, %v1050
      %v1055 = vmul.f32 %v876, 0.42857143
      %v1056 = vmul.f32 %v881, 0.42857143
      %v1057 = vmul.f32 %v886, 0.42857143
      %v1058 = vmul.f32 %v891, 0.42857143
      %v1059 = vmul.f32 %v977, 0.5714286
      %v1060 = vmul.f32 %v982, 0.5714286
      %v1061 = vmul.f32 %v987, 0.5714286
      %v1062 = vmul.f32 %v992, 0.5714286
      %v1063 = vadd.f32 %v1055, %v1059
      %v1064 = vadd.f32 %v1056, %v1060
      %v1065 = vadd.f32 %v1057, %v1061
      %v1066 = vadd.f32 %v1058, %v1062
      %v1067 = vmul.f32 %v876, 0.0
      %v1068 = vmul.f32 %v881, 0.0
      %v1069 = vmul.f32 %v886, 0.0
      %v1070 = vmul.f32 %v891, 0.0
      %v1071 = vadd.f32 %v1067, %v977
      %v1072 = vadd.f32 %v1068, %v982
      %v1073 = vadd.f32 %v1069, %v987
      %v1074 = vadd.f32 %v1070, %v992
      %1079 = vrot.lane.b32.xlu0 %v1003, 8
      %v1080 = vpop.permute.xlu0 %1079
      %1081 = vrot.lane.b32.xlu0 %v1004, 8
      %v1082 = vpop.permute.xlu0 %1081
      %1083 = vrot.lane.b32.xlu0 %v1005, 8
      %v1084 = vpop.permute.xlu0 %1083
      %1085 = vrot.lane.b32.xlu0 %v1006, 8
      %v1086 = vpop.permute.xlu0 %1085
      %1095 = vrot.lane.b32.xlu0 %v1015, 16
      %v1096 = vpop.permute.xlu0 %1095
      %1097 = vrot.lane.b32.xlu0 %v1016, 16
      %v1098 = vpop.permute.xlu0 %1097
      %1099 = vrot.lane.b32.xlu0 %v1017, 16
      %v1100 = vpop.permute.xlu0 %1099
      %1101 = vrot.lane.b32.xlu0 %v1018, 16
      %v1102 = vpop.permute.xlu0 %1101
      %1111 = vrot.lane.b32.xlu0 %v1027, 24
      %v1112 = vpop.permute.xlu0 %1111
      %1113 = vrot.lane.b32.xlu0 %v1028, 24
      %v1114 = vpop.permute.xlu0 %1113
      %1115 = vrot.lane.b32.xlu0 %v1029, 24
      %v1116 = vpop.permute.xlu0 %1115
      %1117 = vrot.lane.b32.xlu0 %v1030, 24
      %v1118 = vpop.permute.xlu0 %1117
      %1127 = vrot.lane.b32.xlu0 %v1039, 32
      %v1128 = vpop.permute.xlu0 %1127
      %1129 = vrot.lane.b32.xlu0 %v1040, 32
      %v1130 = vpop.permute.xlu0 %1129
      %1131 = vrot.lane.b32.xlu0 %v1041, 32
      %v1132 = vpop.permute.xlu0 %1131
      %1133 = vrot.lane.b32.xlu0 %v1042, 32
      %v1134 = vpop.permute.xlu0 %1133
      %1143 = vrot.lane.b32.xlu0 %v1051, 40
      %v1144 = vpop.permute.xlu0 %1143
      %1145 = vrot.lane.b32.xlu0 %v1052, 40
      %v1146 = vpop.permute.xlu0 %1145
      %1147 = vrot.lane.b32.xlu0 %v1053, 40
      %v1148 = vpop.permute.xlu0 %1147
      %1149 = vrot.lane.b32.xlu0 %v1054, 40
      %v1150 = vpop.permute.xlu0 %1149
      %1159 = vrot.lane.b32.xlu0 %v1063, 48
      %v1160 = vpop.permute.xlu0 %1159
      %1161 = vrot.lane.b32.xlu0 %v1064, 48
      %v1162 = vpop.permute.xlu0 %1161
      %1163 = vrot.lane.b32.xlu0 %v1065, 48
      %v1164 = vpop.permute.xlu0 %1163
      %1165 = vrot.lane.b32.xlu0 %v1066, 48
      %v1166 = vpop.permute.xlu0 %1165
      %1175 = vrot.lane.b32.xlu0 %v1071, 56
      %v1176 = vpop.permute.xlu0 %1175
      %1177 = vrot.lane.b32.xlu0 %v1072, 56
      %v1178 = vpop.permute.xlu0 %1177
      %1179 = vrot.lane.b32.xlu0 %v1073, 56
      %v1180 = vpop.permute.xlu0 %1179
      %1181 = vrot.lane.b32.xlu0 %v1074, 56
      %v1182 = vpop.permute.xlu0 %1181
      %vm1187 = vcmask 64512
      %v1188 = vsel %vm1187, %v674, %v1080
      %v1189 = vsel %vm1187, %v679, %v1082
      %v1190 = vsel %vm1187, %v684, %v1084
      %v1191 = vsel %vm1187, %v689, %v1086
      %vm1192 = vcmask 130048
      %v1193 = vsel %vm1192, %v1188, %v1096
      %v1194 = vsel %vm1192, %v1189, %v1098
      %v1195 = vsel %vm1192, %v1190, %v1100
      %v1196 = vsel %vm1192, %v1191, %v1102
      %vm1197 = vcmask 195584
      %v1198 = vsel %vm1197, %v1193, %v1112
      %v1199 = vsel %vm1197, %v1194, %v1114
      %v1200 = vsel %vm1197, %v1195, %v1116
      %v1201 = vsel %vm1197, %v1196, %v1118
      %vm1202 = vcmask 261120
      %v1203 = vsel %vm1202, %v1198, %v1128
      %v1204 = vsel %vm1202, %v1199, %v1130
      %v1205 = vsel %vm1202, %v1200, %v1132
      %v1206 = vsel %vm1202, %v1201, %v1134
      %vm1207 = vcmask 326656
      %v1208 = vsel %vm1207, %v1203, %v1144
      %v1209 = vsel %vm1207, %v1204, %v1146
      %v1210 = vsel %vm1207, %v1205, %v1148
      %v1211 = vsel %vm1207, %v1206, %v1150
      %vm1212 = vcmask 392192
      %v1213 = vsel %vm1212, %v1208, %v1160
      %v1214 = vsel %vm1212, %v1209, %v1162
      %v1215 = vsel %vm1212, %v1210, %v1164
      %v1216 = vsel %vm1212, %v1211, %v1166
      %vm1217 = vcmask 457728
      %v1218 = vsel %vm1217, %v1213, %v1176
      %v1219 = vsel %vm1217, %v1214, %v1178
      %v1220 = vsel %vm1217, %v1215, %v1180
      %v1221 = vsel %vm1217, %v1216, %v1182
      %v1222 = vlaneseq
      %v1223 = vand.u32 %v1222, 127
      %vm1224 = vcmp.lt.s32.totalorder %v1223, 0
      %v1225 = vsub.s32 0, %v1223
      %v1226 = vsel %vm1224, %v1225, %v1223
      %v1227 = vshrl.u32 %v1226, 3
      %v1228 = vand.u32 %v1226, 7
      %v1229 = vsub.s32 0, %v1228
      %v1230 = vsel %vm1224, %v1229, %v1228
      %vm1231 = vcmp.ne.s32.totalorder %v1230, 0
      %vm1232 = vcmp.lt.s32.totalorder %v1230, 0
      %vm1233 = vmand %vm1232, %vm1231
      %v1234 = vadd.s32 %v1230, 8
      %v1235 = vsel %vm1233, %v1234, %v1230
      %vm1236 = vcmp.ge.s32.totalorder %v1235, 1
      %vm1237 = vcmp.lt.s32.totalorder %v1235, 7
      %vm1238 = vcmp.ge.s32.totalorder %v1223, 8
      %vm1239 = vcmp.lt.s32.totalorder %v1223, 56
      %vm1240 = vcmask 1048064
      %1241 = vrot.lane.b32.xlu0 %v585, 64
      %v1242 = vpop.permute.xlu0 %1241
      %v1243 = vsel %vm1240, %v1242, %v585
      %1244 = vrot.lane.b32.xlu0 %v586, 64
      %v1245 = vpop.permute.xlu0 %1244
      %v1246 = vsel %vm1240, %v1245, %v586
      %1247 = vrot.lane.b32.xlu0 %v1218, 64
      %v1248 = vpop.permute.xlu0 %1247
      %v1249 = vsel %vm1240, %v1248, %v1218
      %1250 = vrot.lane.b32.xlu0 %v1219, 64
      %v1251 = vpop.permute.xlu0 %1250
      %v1252 = vsel %vm1240, %v1251, %v1219
      %1253 = vrot.lane.b32.xlu0 %v1220, 64
      %v1254 = vpop.permute.xlu0 %1253
      %v1255 = vsel %vm1240, %v1254, %v1220
      %1256 = vrot.lane.b32.xlu0 %v1221, 64
      %v1257 = vpop.permute.xlu0 %1256
      %v1258 = vsel %vm1240, %v1257, %v1221
      %1259 = vrot.lane.b32.xlu0 %v1243, 64
      %v1260 = vpop.permute.xlu0 %1259
      %1261 = vrot.lane.b32.xlu0 %v1246, 64
      %v1262 = vpop.permute.xlu0 %1261
      %1263 = vrot.lane.b32.xlu0 %v1249, 64
      %v1264 = vpop.permute.xlu0 %1263
      %1265 = vrot.lane.b32.xlu0 %v1252, 64
      %v1266 = vpop.permute.xlu0 %1265
      %1267 = vrot.lane.b32.xlu0 %v1255, 64
      %v1268 = vpop.permute.xlu0 %1267
      %1269 = vrot.lane.b32.xlu0 %v1258, 64
      %v1270 = vpop.permute.xlu0 %1269
      %v1271 = vsel %vm1240, %v1260, %v585
      %v1272 = vsel %vm1240, %v1262, %v586
      %v1273 = vsel %vm1240, %v1264, %v1218
      %v1274 = vsel %vm1240, %v1266, %v1219
      %v1275 = vsel %vm1240, %v1268, %v1220
      %v1276 = vsel %vm1240, %v1270, %v1221
      %vm1277 = vmand %vm1236, %vm1238
      %v1278 = vsel %vm1277, 1, 0
      %vm1279 = vcmp.eq.s32.totalorder %v1278, 1
      %1286 = vrot.lane.b32.xlu0 %v1271, 73
      %v1287 = vpop.permute.xlu0 %1286
      %1288 = vrot.lane.b32.xlu0 %v1272, 73
      %v1289 = vpop.permute.xlu0 %1288
      %1290 = vrot.lane.b32.xlu0 %v1273, 73
      %v1291 = vpop.permute.xlu0 %1290
      %1292 = vrot.lane.b32.xlu0 %v1274, 73
      %v1293 = vpop.permute.xlu0 %1292
      %1294 = vrot.lane.b32.xlu0 %v1275, 73
      %v1295 = vpop.permute.xlu0 %1294
      %1296 = vrot.lane.b32.xlu0 %v1276, 73
      %v1297 = vpop.permute.xlu0 %1296
      %v1304 = vsel %vm1279, %v1287, 0.0
      %v1305 = vsel %vm1279, %v1289, 0.0
      %v1306 = vsel %vm1279, %v1291, 0.0
      %v1307 = vsel %vm1279, %v1293, 0.0
      %v1308 = vsel %vm1279, %v1295, 0.0
      %v1309 = vsel %vm1279, %v1297, 0.0
      %v1310 = vld [vmem:[%s7] sm:$0xf]
      %v1311 = vld [vmem:[%s7 + $0x4] sm:$0xf]
      %v1312 = vpack.c.bf16 %v1305, %v1304
      %v1313 = vpack.c.bf16 %v1307, %v1306
      %v1314 = vpack.c.bf16 %v1309, %v1308
      %v1315 = vsel %vm1238, 1, 0
      %vm1316 = vcmp.eq.s32.totalorder %v1315, 1
      %1317 = vrot.lane.b32.xlu0 %v1271, 72
      %v1318 = vpop.permute.xlu0 %1317
      %1319 = vrot.lane.b32.xlu0 %v1272, 72
      %v1320 = vpop.permute.xlu0 %1319
      %1321 = vrot.lane.b32.xlu0 %v1273, 72
      %v1322 = vpop.permute.xlu0 %1321
      %1323 = vrot.lane.b32.xlu0 %v1274, 72
      %v1324 = vpop.permute.xlu0 %1323
      %1325 = vrot.lane.b32.xlu0 %v1275, 72
      %v1326 = vpop.permute.xlu0 %1325
      %1327 = vrot.lane.b32.xlu0 %v1276, 72
      %v1328 = vpop.permute.xlu0 %1327
      %v1335 = vsel %vm1316, %v1318, 0.0
      %v1336 = vsel %vm1316, %v1320, 0.0
      %v1337 = vsel %vm1316, %v1322, 0.0
      %v1338 = vsel %vm1316, %v1324, 0.0
      %v1339 = vsel %vm1316, %v1326, 0.0
      %v1340 = vsel %vm1316, %v1328, 0.0
      %s1341 = scalar_lea.vmem %s7, 8
      %v1342 = vld [vmem:[%s1341] sm:$0xf]
      %v1343 = vld [vmem:[%s1341 + $0x4] sm:$0xf]
      %v1344 = vpack.c.bf16 %v1336, %v1335
      %v1345 = vpack.c.bf16 %v1338, %v1337
      %v1346 = vpack.c.bf16 %v1340, %v1339
      %v1349 = vunpack.c.l.b16 %v1342
      %v1350 = vunpack.c.l.b16 %v1343
      %v1351 = vpack.c.b16 %v1350, %v1349
      %v1353 = vsel %vm1212, %v1351, 0
      %1355 = vmatprep.subr.bf16.mxu0 0
      %1356 = vmatpush1.bf16.msra.mxu0 0
      %1357 = vmatprep.subr.bf16.mxu0 0
      %1358 = vmatpush1.bf16.msra.mxu0 0
      %1359 = vmatprep.subr.bf16.mxu0 0
      %1360 = vmatpush1.bf16.msra.mxu0 0
      %1361 = vmatprep.subr.bf16.mxu0 0
      %1362 = vmatpush1.bf16.msra.mxu0 0
      %1363 = vmatprep.subr.bf16.mxu0 0
      %1364 = vmatpush1.bf16.msra.mxu0 0
      %1365 = vmatprep.subr.bf16.mxu0 0
      %1366 = vmatpush1.bf16.msra.mxu0 %v1346
      %1367 = vmatprep.subr.bf16.mxu0 0
      %1368 = vmatpush1.bf16.msra.mxu0 %v1345
      %1369 = vmatprep.subr.bf16.mxu0 0
      %1370 = vmatpush1.bf16.msra.mxu0 %v1344
      %1371 = vmatprep.subr.bf16.mxu0 0
      %1372 = vmatpush2.bf16.msra.mxu0 0
      %1373 = vmatprep.subr.bf16.mxu0 0
      %1374 = vmatpush2.bf16.msra.mxu0 0
      %1375 = vmatprep.subr.bf16.mxu0 0
      %1376 = vmatpush2.bf16.msra.mxu0 0
      %1377 = vmatprep.subr.bf16.mxu0 0
      %1378 = vmatpush2.bf16.msra.mxu0 0
      %1379 = vmatprep.subr.bf16.mxu0 0
      %1380 = vmatpush2.bf16.msra.mxu0 0
      %1381 = vmatprep.subr.bf16.mxu0 0
      %1382 = vmatpush2.bf16.msra.mxu0 0
      %1383 = vmatprep.subr.bf16.mxu0 0
      %1384 = vmatpush2.bf16.msra.mxu0 0
      %1385 = vmatprep.subr.bf16.mxu0 0
      %1386 = vmatpush2.bf16.msra.mxu0 0
      %1387 = vmatprep.mubr.bf16.mxu0 0
      %1388 = vmatmul.mubr.bf16.gmra.mxu0 %v1353
      %v1389 = vpop.f32.mrf.mxu0
      %v1390 = vadd.f32 0.0, %v1389
      %v1391 = vpop.f32.mrf.mxu0
      %v1392 = vpop.f32.mrf.mxu0
      %v1393 = vadd.f32 0.0, %v1392
      %v1394 = vpop.f32.mrf.mxu0
      %1395 = vdwg.mxu0
      %v1398 = vunpack.c.l.b16 %v1310
      %v1399 = vunpack.c.l.b16 %v1311
      %v1400 = vpack.c.b16 %v1399, %v1398
      %v1402 = vsel %vm1212, %v1400, 0
      %1404 = vmatprep.subr.bf16.mxu0 0
      %1405 = vmatpush1.bf16.msra.mxu0 0
      %1406 = vmatprep.subr.bf16.mxu0 0
      %1407 = vmatpush1.bf16.msra.mxu0 0
      %1408 = vmatprep.subr.bf16.mxu0 0
      %1409 = vmatpush1.bf16.msra.mxu0 0
      %1410 = vmatprep.subr.bf16.mxu0 0
      %1411 = vmatpush1.bf16.msra.mxu0 0
      %1412 = vmatprep.subr.bf16.mxu0 0
      %1413 = vmatpush1.bf16.msra.mxu0 0
      %1414 = vmatprep.subr.bf16.mxu0 0
      %1415 = vmatpush1.bf16.msra.mxu0 %v1314
      %1416 = vmatprep.subr.bf16.mxu0 0
      %1417 = vmatpush1.bf16.msra.mxu0 %v1313
      %1418 = vmatprep.subr.bf16.mxu0 0
      %1419 = vmatpush1.bf16.msra.mxu0 %v1312
      %1420 = vmatprep.subr.bf16.mxu0 0
      %1421 = vmatpush2.bf16.msra.mxu0 0
      %1422 = vmatprep.subr.bf16.mxu0 0
      %1423 = vmatpush2.bf16.msra.mxu0 0
      %1424 = vmatprep.subr.bf16.mxu0 0
      %1425 = vmatpush2.bf16.msra.mxu0 0
      %1426 = vmatprep.subr.bf16.mxu0 0
      %1427 = vmatpush2.bf16.msra.mxu0 0
      %1428 = vmatprep.subr.bf16.mxu0 0
      %1429 = vmatpush2.bf16.msra.mxu0 0
      %1430 = vmatprep.subr.bf16.mxu0 0
      %1431 = vmatpush2.bf16.msra.mxu0 0
      %1432 = vmatprep.subr.bf16.mxu0 0
      %1433 = vmatpush2.bf16.msra.mxu0 0
      %1434 = vmatprep.subr.bf16.mxu0 0
      %1435 = vmatpush2.bf16.msra.mxu0 0
      %1436 = vmatprep.mubr.bf16.mxu0 0
      %1437 = vmatmul.mubr.bf16.gmra.mxu0 %v1402
      %v1438 = vpop.f32.mrf.mxu0
      %v1439 = vadd.f32 %v1390, %v1438
      %v1440 = vpop.f32.mrf.mxu0
      %v1441 = vpop.f32.mrf.mxu0
      %v1442 = vadd.f32 %v1393, %v1441
      %v1443 = vpop.f32.mrf.mxu0
      %1444 = vdwg.mxu0
      %vm1445 = vmand %vm1237, %vm1238
      %v1446 = vsel %vm1445, 1, 0
      %vm1447 = vcmp.eq.s32.totalorder %v1446, 1
      %1448 = vrot.lane.b32.xlu0 %v1271, 71
      %v1449 = vpop.permute.xlu0 %1448
      %1450 = vrot.lane.b32.xlu0 %v1272, 71
      %v1451 = vpop.permute.xlu0 %1450
      %1452 = vrot.lane.b32.xlu0 %v1273, 71
      %v1453 = vpop.permute.xlu0 %1452
      %1454 = vrot.lane.b32.xlu0 %v1274, 71
      %v1455 = vpop.permute.xlu0 %1454
      %1456 = vrot.lane.b32.xlu0 %v1275, 71
      %v1457 = vpop.permute.xlu0 %1456
      %1458 = vrot.lane.b32.xlu0 %v1276, 71
      %v1459 = vpop.permute.xlu0 %1458
      %v1466 = vsel %vm1447, %v1449, 0.0
      %v1467 = vsel %vm1447, %v1451, 0.0
      %v1468 = vsel %vm1447, %v1453, 0.0
      %v1469 = vsel %vm1447, %v1455, 0.0
      %v1470 = vsel %vm1447, %v1457, 0.0
      %v1471 = vsel %vm1447, %v1459, 0.0
      %s1472 = scalar_lea.vmem %s7, 16
      %v1473 = vld [vmem:[%s1472] sm:$0xf]
      %v1474 = vld [vmem:[%s1472 + $0x4] sm:$0xf]
      %v1475 = vpack.c.bf16 %v1467, %v1466
      %v1476 = vpack.c.bf16 %v1469, %v1468
      %v1477 = vpack.c.bf16 %v1471, %v1470
      %v1480 = vunpack.c.l.b16 %v1473
      %v1481 = vunpack.c.l.b16 %v1474
      %v1482 = vpack.c.b16 %v1481, %v1480
      %v1484 = vsel %vm1212, %v1482, 0
      %1486 = vmatprep.subr.bf16.mxu0 0
      %1487 = vmatpush1.bf16.msra.mxu0 0
      %1488 = vmatprep.subr.bf16.mxu0 0
      %1489 = vmatpush1.bf16.msra.mxu0 0
      %1490 = vmatprep.subr.bf16.mxu0 0
      %1491 = vmatpush1.bf16.msra.mxu0 0
      %1492 = vmatprep.subr.bf16.mxu0 0
      %1493 = vmatpush1.bf16.msra.mxu0 0
      %1494 = vmatprep.subr.bf16.mxu0 0
      %1495 = vmatpush1.bf16.msra.mxu0 0
      %1496 = vmatprep.subr.bf16.mxu0 0
      %1497 = vmatpush1.bf16.msra.mxu0 %v1477
      %1498 = vmatprep.subr.bf16.mxu0 0
      %1499 = vmatpush1.bf16.msra.mxu0 %v1476
      %1500 = vmatprep.subr.bf16.mxu0 0
      %1501 = vmatpush1.bf16.msra.mxu0 %v1475
      %1502 = vmatprep.subr.bf16.mxu0 0
      %1503 = vmatpush2.bf16.msra.mxu0 0
      %1504 = vmatprep.subr.bf16.mxu0 0
      %1505 = vmatpush2.bf16.msra.mxu0 0
      %1506 = vmatprep.subr.bf16.mxu0 0
      %1507 = vmatpush2.bf16.msra.mxu0 0
      %1508 = vmatprep.subr.bf16.mxu0 0
      %1509 = vmatpush2.bf16.msra.mxu0 0
      %1510 = vmatprep.subr.bf16.mxu0 0
      %1511 = vmatpush2.bf16.msra.mxu0 0
      %1512 = vmatprep.subr.bf16.mxu0 0
      %1513 = vmatpush2.bf16.msra.mxu0 0
      %1514 = vmatprep.subr.bf16.mxu0 0
      %1515 = vmatpush2.bf16.msra.mxu0 0
      %1516 = vmatprep.subr.bf16.mxu0 0
      %1517 = vmatpush2.bf16.msra.mxu0 0
      %1518 = vmatprep.mubr.bf16.mxu0 0
      %1519 = vmatmul.mubr.bf16.gmra.mxu0 %v1484
      %v1520 = vpop.f32.mrf.mxu0
      %v1521 = vadd.f32 0.0, %v1520
      %v1522 = vpop.f32.mrf.mxu0
      %v1523 = vpop.f32.mrf.mxu0
      %v1524 = vadd.f32 0.0, %v1523
      %v1525 = vpop.f32.mrf.mxu0
      %1526 = vdwg.mxu0
      %v1527 = vadd.f32 %v1439, %v1521
      %v1528 = vadd.f32 %v1442, %v1524
      %v1529 = vsel %vm1236, 1, 0
      %vm1530 = vcmp.eq.s32.totalorder %v1529, 1
      %1531 = vrot.lane.b32.xlu0 %v1271, 65
      %v1532 = vpop.permute.xlu0 %1531
      %1533 = vrot.lane.b32.xlu0 %v1272, 65
      %v1534 = vpop.permute.xlu0 %1533
      %1535 = vrot.lane.b32.xlu0 %v1273, 65
      %v1536 = vpop.permute.xlu0 %1535
      %1537 = vrot.lane.b32.xlu0 %v1274, 65
      %v1538 = vpop.permute.xlu0 %1537
      %1539 = vrot.lane.b32.xlu0 %v1275, 65
      %v1540 = vpop.permute.xlu0 %1539
      %1541 = vrot.lane.b32.xlu0 %v1276, 65
      %v1542 = vpop.permute.xlu0 %1541
      %v1549 = vsel %vm1530, %v1532, 0.0
      %v1550 = vsel %vm1530, %v1534, 0.0
      %v1551 = vsel %vm1530, %v1536, 0.0
      %v1552 = vsel %vm1530, %v1538, 0.0
      %v1553 = vsel %vm1530, %v1540, 0.0
      %v1554 = vsel %vm1530, %v1542, 0.0
      %s1555 = scalar_lea.vmem %s7, 24
      %v1556 = vld [vmem:[%s1555] sm:$0xf]
      %v1557 = vld [vmem:[%s1555 + $0x4] sm:$0xf]
      %v1558 = vpack.c.bf16 %v1550, %v1549
      %v1559 = vpack.c.bf16 %v1552, %v1551
      %v1560 = vpack.c.bf16 %v1554, %v1553
      %v1563 = vunpack.c.l.b16 %v1556
      %v1564 = vunpack.c.l.b16 %v1557
      %v1565 = vpack.c.b16 %v1564, %v1563
      %v1567 = vsel %vm1212, %v1565, 0
      %1569 = vmatprep.subr.bf16.mxu0 0
      %1570 = vmatpush1.bf16.msra.mxu0 0
      %1571 = vmatprep.subr.bf16.mxu0 0
      %1572 = vmatpush1.bf16.msra.mxu0 0
      %1573 = vmatprep.subr.bf16.mxu0 0
      %1574 = vmatpush1.bf16.msra.mxu0 0
      %1575 = vmatprep.subr.bf16.mxu0 0
      %1576 = vmatpush1.bf16.msra.mxu0 0
      %1577 = vmatprep.subr.bf16.mxu0 0
      %1578 = vmatpush1.bf16.msra.mxu0 0
      %1579 = vmatprep.subr.bf16.mxu0 0
      %1580 = vmatpush1.bf16.msra.mxu0 %v1560
      %1581 = vmatprep.subr.bf16.mxu0 0
      %1582 = vmatpush1.bf16.msra.mxu0 %v1559
      %1583 = vmatprep.subr.bf16.mxu0 0
      %1584 = vmatpush1.bf16.msra.mxu0 %v1558
      %1585 = vmatprep.subr.bf16.mxu0 0
      %1586 = vmatpush2.bf16.msra.mxu0 0
      %1587 = vmatprep.subr.bf16.mxu0 0
      %1588 = vmatpush2.bf16.msra.mxu0 0
      %1589 = vmatprep.subr.bf16.mxu0 0
      %1590 = vmatpush2.bf16.msra.mxu0 0
      %1591 = vmatprep.subr.bf16.mxu0 0
      %1592 = vmatpush2.bf16.msra.mxu0 0
      %1593 = vmatprep.subr.bf16.mxu0 0
      %1594 = vmatpush2.bf16.msra.mxu0 0
      %1595 = vmatprep.subr.bf16.mxu0 0
      %1596 = vmatpush2.bf16.msra.mxu0 0
      %1597 = vmatprep.subr.bf16.mxu0 0
      %1598 = vmatpush2.bf16.msra.mxu0 0
      %1599 = vmatprep.subr.bf16.mxu0 0
      %1600 = vmatpush2.bf16.msra.mxu0 0
      %1601 = vmatprep.mubr.bf16.mxu0 0
      %1602 = vmatmul.mubr.bf16.gmra.mxu0 %v1567
      %v1603 = vpop.f32.mrf.mxu0
      %v1604 = vadd.f32 0.0, %v1603
      %v1605 = vpop.f32.mrf.mxu0
      %v1606 = vpop.f32.mrf.mxu0
      %v1607 = vadd.f32 0.0, %v1606
      %v1608 = vpop.f32.mrf.mxu0
      %1609 = vdwg.mxu0
      %v1610 = vadd.f32 %v1527, %v1604
      %v1611 = vadd.f32 %v1528, %v1607
      %s1612 = scalar_lea.vmem %s7, 32
      %v1613 = vld [vmem:[%s1612] sm:$0xf]
      %v1614 = vld [vmem:[%s1612 + $0x4] sm:$0xf]
      %v1615 = vpack.c.bf16 %v586, %v585
      %v1616 = vpack.c.bf16 %v1219, %v1218
      %v1617 = vpack.c.bf16 %v1221, %v1220
      %v1620 = vunpack.c.l.b16 %v1613
      %v1621 = vunpack.c.l.b16 %v1614
      %v1622 = vpack.c.b16 %v1621, %v1620
      %v1624 = vsel %vm1212, %v1622, 0
      %1626 = vmatprep.subr.bf16.mxu0 0
      %1627 = vmatpush1.bf16.msra.mxu0 0
      %1628 = vmatprep.subr.bf16.mxu0 0
      %1629 = vmatpush1.bf16.msra.mxu0 0
      %1630 = vmatprep.subr.bf16.mxu0 0
      %1631 = vmatpush1.bf16.msra.mxu0 0
      %1632 = vmatprep.subr.bf16.mxu0 0
      %1633 = vmatpush1.bf16.msra.mxu0 0
      %1634 = vmatprep.subr.bf16.mxu0 0
      %1635 = vmatpush1.bf16.msra.mxu0 0
      %1636 = vmatprep.subr.bf16.mxu0 0
      %1637 = vmatpush1.bf16.msra.mxu0 %v1617
      %1638 = vmatprep.subr.bf16.mxu0 0
      %1639 = vmatpush1.bf16.msra.mxu0 %v1616
      %1640 = vmatprep.subr.bf16.mxu0 0
      %1641 = vmatpush1.bf16.msra.mxu0 %v1615
      %1642 = vmatprep.subr.bf16.mxu0 0
      %1643 = vmatpush2.bf16.msra.mxu0 0
      %1644 = vmatprep.subr.bf16.mxu0 0
      %1645 = vmatpush2.bf16.msra.mxu0 0
      %1646 = vmatprep.subr.bf16.mxu0 0
      %1647 = vmatpush2.bf16.msra.mxu0 0
      %1648 = vmatprep.subr.bf16.mxu0 0
      %1649 = vmatpush2.bf16.msra.mxu0 0
      %1650 = vmatprep.subr.bf16.mxu0 0
      %1651 = vmatpush2.bf16.msra.mxu0 0
      %1652 = vmatprep.subr.bf16.mxu0 0
      %1653 = vmatpush2.bf16.msra.mxu0 0
      %1654 = vmatprep.subr.bf16.mxu0 0
      %1655 = vmatpush2.bf16.msra.mxu0 0
      %1656 = vmatprep.subr.bf16.mxu0 0
      %1657 = vmatpush2.bf16.msra.mxu0 0
      %1658 = vmatprep.mubr.bf16.mxu0 0
      %1659 = vmatmul.mubr.bf16.gmra.mxu0 %v1624
      %v1660 = vpop.f32.mrf.mxu0
      %v1661 = vadd.f32 0.0, %v1660
      %v1662 = vpop.f32.mrf.mxu0
      %v1663 = vpop.f32.mrf.mxu0
      %v1664 = vadd.f32 0.0, %v1663
      %v1665 = vpop.f32.mrf.mxu0
      %1666 = vdwg.mxu0
      %v1667 = vadd.f32 %v1610, %v1661
      %v1668 = vadd.f32 %v1611, %v1664
      %v1669 = vsel %vm1237, 1, 0
      %vm1670 = vcmp.eq.s32.totalorder %v1669, 1
      %1671 = vrot.lane.b32.xlu0 %v1271, 127
      %v1672 = vpop.permute.xlu0 %1671
      %1673 = vrot.lane.b32.xlu0 %v1272, 127
      %v1674 = vpop.permute.xlu0 %1673
      %1675 = vrot.lane.b32.xlu0 %v1273, 127
      %v1676 = vpop.permute.xlu0 %1675
      %1677 = vrot.lane.b32.xlu0 %v1274, 127
      %v1678 = vpop.permute.xlu0 %1677
      %1679 = vrot.lane.b32.xlu0 %v1275, 127
      %v1680 = vpop.permute.xlu0 %1679
      %1681 = vrot.lane.b32.xlu0 %v1276, 127
      %v1682 = vpop.permute.xlu0 %1681
      %v1689 = vsel %vm1670, %v1672, 0.0
      %v1690 = vsel %vm1670, %v1674, 0.0
      %v1691 = vsel %vm1670, %v1676, 0.0
      %v1692 = vsel %vm1670, %v1678, 0.0
      %v1693 = vsel %vm1670, %v1680, 0.0
      %v1694 = vsel %vm1670, %v1682, 0.0
      %s1695 = scalar_lea.vmem %s7, 40
      %v1696 = vld [vmem:[%s1695] sm:$0xf]
      %v1697 = vld [vmem:[%s1695 + $0x4] sm:$0xf]
      %v1698 = vpack.c.bf16 %v1690, %v1689
      %v1699 = vpack.c.bf16 %v1692, %v1691
      %v1700 = vpack.c.bf16 %v1694, %v1693
      %v1703 = vunpack.c.l.b16 %v1696
      %v1704 = vunpack.c.l.b16 %v1697
      %v1705 = vpack.c.b16 %v1704, %v1703
      %v1707 = vsel %vm1212, %v1705, 0
      %1709 = vmatprep.subr.bf16.mxu0 0
      %1710 = vmatpush1.bf16.msra.mxu0 0
      %1711 = vmatprep.subr.bf16.mxu0 0
      %1712 = vmatpush1.bf16.msra.mxu0 0
      %1713 = vmatprep.subr.bf16.mxu0 0
      %1714 = vmatpush1.bf16.msra.mxu0 0
      %1715 = vmatprep.subr.bf16.mxu0 0
      %1716 = vmatpush1.bf16.msra.mxu0 0
      %1717 = vmatprep.subr.bf16.mxu0 0
      %1718 = vmatpush1.bf16.msra.mxu0 0
      %1719 = vmatprep.subr.bf16.mxu0 0
      %1720 = vmatpush1.bf16.msra.mxu0 %v1700
      %1721 = vmatprep.subr.bf16.mxu0 0
      %1722 = vmatpush1.bf16.msra.mxu0 %v1699
      %1723 = vmatprep.subr.bf16.mxu0 0
      %1724 = vmatpush1.bf16.msra.mxu0 %v1698
      %1725 = vmatprep.subr.bf16.mxu0 0
      %1726 = vmatpush2.bf16.msra.mxu0 0
      %1727 = vmatprep.subr.bf16.mxu0 0
      %1728 = vmatpush2.bf16.msra.mxu0 0
      %1729 = vmatprep.subr.bf16.mxu0 0
      %1730 = vmatpush2.bf16.msra.mxu0 0
      %1731 = vmatprep.subr.bf16.mxu0 0
      %1732 = vmatpush2.bf16.msra.mxu0 0
      %1733 = vmatprep.subr.bf16.mxu0 0
      %1734 = vmatpush2.bf16.msra.mxu0 0
      %1735 = vmatprep.subr.bf16.mxu0 0
      %1736 = vmatpush2.bf16.msra.mxu0 0
      %1737 = vmatprep.subr.bf16.mxu0 0
      %1738 = vmatpush2.bf16.msra.mxu0 0
      %1739 = vmatprep.subr.bf16.mxu0 0
      %1740 = vmatpush2.bf16.msra.mxu0 0
      %1741 = vmatprep.mubr.bf16.mxu0 0
      %1742 = vmatmul.mubr.bf16.gmra.mxu0 %v1707
      %v1743 = vpop.f32.mrf.mxu0
      %v1744 = vadd.f32 0.0, %v1743
      %v1745 = vpop.f32.mrf.mxu0
      %v1746 = vpop.f32.mrf.mxu0
      %v1747 = vadd.f32 0.0, %v1746
      %v1748 = vpop.f32.mrf.mxu0
      %1749 = vdwg.mxu0
      %v1750 = vadd.f32 %v1667, %v1744
      %v1751 = vadd.f32 %v1668, %v1747
      %vm1752 = vmand %vm1236, %vm1239
      %v1753 = vsel %vm1752, 1, 0
      %vm1754 = vcmp.eq.s32.totalorder %v1753, 1
      %1755 = vrot.lane.b32.xlu0 %v1271, 121
      %v1756 = vpop.permute.xlu0 %1755
      %1757 = vrot.lane.b32.xlu0 %v1272, 121
      %v1758 = vpop.permute.xlu0 %1757
      %1759 = vrot.lane.b32.xlu0 %v1273, 121
      %v1760 = vpop.permute.xlu0 %1759
      %1761 = vrot.lane.b32.xlu0 %v1274, 121
      %v1762 = vpop.permute.xlu0 %1761
      %1763 = vrot.lane.b32.xlu0 %v1275, 121
      %v1764 = vpop.permute.xlu0 %1763
      %1765 = vrot.lane.b32.xlu0 %v1276, 121
      %v1766 = vpop.permute.xlu0 %1765
      %v1773 = vsel %vm1754, %v1756, 0.0
      %v1774 = vsel %vm1754, %v1758, 0.0
      %v1775 = vsel %vm1754, %v1760, 0.0
      %v1776 = vsel %vm1754, %v1762, 0.0
      %v1777 = vsel %vm1754, %v1764, 0.0
      %v1778 = vsel %vm1754, %v1766, 0.0
      %s1779 = scalar_lea.vmem %s7, 48
      %v1780 = vld [vmem:[%s1779] sm:$0xf]
      %v1781 = vld [vmem:[%s1779 + $0x4] sm:$0xf]
      %v1782 = vpack.c.bf16 %v1774, %v1773
      %v1783 = vpack.c.bf16 %v1776, %v1775
      %v1784 = vpack.c.bf16 %v1778, %v1777
      %v1787 = vunpack.c.l.b16 %v1780
      %v1788 = vunpack.c.l.b16 %v1781
      %v1789 = vpack.c.b16 %v1788, %v1787
      %v1791 = vsel %vm1212, %v1789, 0
      %1793 = vmatprep.subr.bf16.mxu0 0
      %1794 = vmatpush1.bf16.msra.mxu0 0
      %1795 = vmatprep.subr.bf16.mxu0 0
      %1796 = vmatpush1.bf16.msra.mxu0 0
      %1797 = vmatprep.subr.bf16.mxu0 0
      %1798 = vmatpush1.bf16.msra.mxu0 0
      %1799 = vmatprep.subr.bf16.mxu0 0
      %1800 = vmatpush1.bf16.msra.mxu0 0
      %1801 = vmatprep.subr.bf16.mxu0 0
      %1802 = vmatpush1.bf16.msra.mxu0 0
      %1803 = vmatprep.subr.bf16.mxu0 0
      %1804 = vmatpush1.bf16.msra.mxu0 %v1784
      %1805 = vmatprep.subr.bf16.mxu0 0
      %1806 = vmatpush1.bf16.msra.mxu0 %v1783
      %1807 = vmatprep.subr.bf16.mxu0 0
      %1808 = vmatpush1.bf16.msra.mxu0 %v1782
      %1809 = vmatprep.subr.bf16.mxu0 0
      %1810 = vmatpush2.bf16.msra.mxu0 0
      %1811 = vmatprep.subr.bf16.mxu0 0
      %1812 = vmatpush2.bf16.msra.mxu0 0
      %1813 = vmatprep.subr.bf16.mxu0 0
      %1814 = vmatpush2.bf16.msra.mxu0 0
      %1815 = vmatprep.subr.bf16.mxu0 0
      %1816 = vmatpush2.bf16.msra.mxu0 0
      %1817 = vmatprep.subr.bf16.mxu0 0
      %1818 = vmatpush2.bf16.msra.mxu0 0
      %1819 = vmatprep.subr.bf16.mxu0 0
      %1820 = vmatpush2.bf16.msra.mxu0 0
      %1821 = vmatprep.subr.bf16.mxu0 0
      %1822 = vmatpush2.bf16.msra.mxu0 0
      %1823 = vmatprep.subr.bf16.mxu0 0
      %1824 = vmatpush2.bf16.msra.mxu0 0
      %1825 = vmatprep.mubr.bf16.mxu0 0
      %1826 = vmatmul.mubr.bf16.gmra.mxu0 %v1791
      %v1827 = vpop.f32.mrf.mxu0
      %v1828 = vadd.f32 0.0, %v1827
      %v1829 = vpop.f32.mrf.mxu0
      %v1830 = vpop.f32.mrf.mxu0
      %v1831 = vadd.f32 0.0, %v1830
      %v1832 = vpop.f32.mrf.mxu0
      %1833 = vdwg.mxu0
      %v1834 = vadd.f32 %v1750, %v1828
      %v1835 = vadd.f32 %v1751, %v1831
      %v1836 = vsel %vm1239, 1, 0
      %vm1837 = vcmp.eq.s32.totalorder %v1836, 1
      %1838 = vrot.lane.b32.xlu0 %v1271, 120
      %v1839 = vpop.permute.xlu0 %1838
      %1840 = vrot.lane.b32.xlu0 %v1272, 120
      %v1841 = vpop.permute.xlu0 %1840
      %1842 = vrot.lane.b32.xlu0 %v1273, 120
      %v1843 = vpop.permute.xlu0 %1842
      %1844 = vrot.lane.b32.xlu0 %v1274, 120
      %v1845 = vpop.permute.xlu0 %1844
      %1846 = vrot.lane.b32.xlu0 %v1275, 120
      %v1847 = vpop.permute.xlu0 %1846
      %1848 = vrot.lane.b32.xlu0 %v1276, 120
      %v1849 = vpop.permute.xlu0 %1848
      %v1856 = vsel %vm1837, %v1839, 0.0
      %v1857 = vsel %vm1837, %v1841, 0.0
      %v1858 = vsel %vm1837, %v1843, 0.0
      %v1859 = vsel %vm1837, %v1845, 0.0
      %v1860 = vsel %vm1837, %v1847, 0.0
      %v1861 = vsel %vm1837, %v1849, 0.0
      %s1862 = scalar_lea.vmem %s7, 56
      %v1863 = vld [vmem:[%s1862] sm:$0xf]
      %v1864 = vld [vmem:[%s1862 + $0x4] sm:$0xf]
      %v1865 = vpack.c.bf16 %v1857, %v1856
      %v1866 = vpack.c.bf16 %v1859, %v1858
      %v1867 = vpack.c.bf16 %v1861, %v1860
      %v1870 = vunpack.c.l.b16 %v1863
      %v1871 = vunpack.c.l.b16 %v1864
      %v1872 = vpack.c.b16 %v1871, %v1870
      %v1874 = vsel %vm1212, %v1872, 0
      %1876 = vmatprep.subr.bf16.mxu0 0
      %1877 = vmatpush1.bf16.msra.mxu0 0
      %1878 = vmatprep.subr.bf16.mxu0 0
      %1879 = vmatpush1.bf16.msra.mxu0 0
      %1880 = vmatprep.subr.bf16.mxu0 0
      %1881 = vmatpush1.bf16.msra.mxu0 0
      %1882 = vmatprep.subr.bf16.mxu0 0
      %1883 = vmatpush1.bf16.msra.mxu0 0
      %1884 = vmatprep.subr.bf16.mxu0 0
      %1885 = vmatpush1.bf16.msra.mxu0 0
      %1886 = vmatprep.subr.bf16.mxu0 0
      %1887 = vmatpush1.bf16.msra.mxu0 %v1867
      %1888 = vmatprep.subr.bf16.mxu0 0
      %1889 = vmatpush1.bf16.msra.mxu0 %v1866
      %1890 = vmatprep.subr.bf16.mxu0 0
      %1891 = vmatpush1.bf16.msra.mxu0 %v1865
      %1892 = vmatprep.subr.bf16.mxu0 0
      %1893 = vmatpush2.bf16.msra.mxu0 0
      %1894 = vmatprep.subr.bf16.mxu0 0
      %1895 = vmatpush2.bf16.msra.mxu0 0
      %1896 = vmatprep.subr.bf16.mxu0 0
      %1897 = vmatpush2.bf16.msra.mxu0 0
      %1898 = vmatprep.subr.bf16.mxu0 0
      %1899 = vmatpush2.bf16.msra.mxu0 0
      %1900 = vmatprep.subr.bf16.mxu0 0
      %1901 = vmatpush2.bf16.msra.mxu0 0
      %1902 = vmatprep.subr.bf16.mxu0 0
      %1903 = vmatpush2.bf16.msra.mxu0 0
      %1904 = vmatprep.subr.bf16.mxu0 0
      %1905 = vmatpush2.bf16.msra.mxu0 0
      %1906 = vmatprep.subr.bf16.mxu0 0
      %1907 = vmatpush2.bf16.msra.mxu0 0
      %1908 = vmatprep.mubr.bf16.mxu0 0
      %1909 = vmatmul.mubr.bf16.gmra.mxu0 %v1874
      %v1910 = vpop.f32.mrf.mxu0
      %v1911 = vadd.f32 0.0, %v1910
      %v1912 = vpop.f32.mrf.mxu0
      %v1913 = vpop.f32.mrf.mxu0
      %v1914 = vadd.f32 0.0, %v1913
      %v1915 = vpop.f32.mrf.mxu0
      %1916 = vdwg.mxu0
      %v1917 = vadd.f32 %v1834, %v1911
      %v1918 = vadd.f32 %v1835, %v1914
      %vm1919 = vmand %vm1237, %vm1239
      %v1920 = vsel %vm1919, 1, 0
      %vm1921 = vcmp.eq.s32.totalorder %v1920, 1
      %1922 = vrot.lane.b32.xlu0 %v1271, 119
      %v1923 = vpop.permute.xlu0 %1922
      %1924 = vrot.lane.b32.xlu0 %v1272, 119
      %v1925 = vpop.permute.xlu0 %1924
      %1926 = vrot.lane.b32.xlu0 %v1273, 119
      %v1927 = vpop.permute.xlu0 %1926
      %1928 = vrot.lane.b32.xlu0 %v1274, 119
      %v1929 = vpop.permute.xlu0 %1928
      %1930 = vrot.lane.b32.xlu0 %v1275, 119
      %v1931 = vpop.permute.xlu0 %1930
      %1932 = vrot.lane.b32.xlu0 %v1276, 119
      %v1933 = vpop.permute.xlu0 %1932
      %v1940 = vsel %vm1921, %v1923, 0.0
      %v1941 = vsel %vm1921, %v1925, 0.0
      %v1942 = vsel %vm1921, %v1927, 0.0
      %v1943 = vsel %vm1921, %v1929, 0.0
      %v1944 = vsel %vm1921, %v1931, 0.0
      %v1945 = vsel %vm1921, %v1933, 0.0
      %s1946 = scalar_lea.vmem %s7, 64
      %v1947 = vld [vmem:[%s1946] sm:$0xf]
      %v1948 = vld [vmem:[%s1946 + $0x4] sm:$0xf]
      %v1949 = vpack.c.bf16 %v1941, %v1940
      %v1950 = vpack.c.bf16 %v1943, %v1942
      %v1951 = vpack.c.bf16 %v1945, %v1944
      %v1954 = vunpack.c.l.b16 %v1947
      %v1955 = vunpack.c.l.b16 %v1948
      %v1956 = vpack.c.b16 %v1955, %v1954
      %v1958 = vsel %vm1212, %v1956, 0
      %1960 = vmatprep.subr.bf16.mxu0 0
      %1961 = vmatpush1.bf16.msra.mxu0 0
      %1962 = vmatprep.subr.bf16.mxu0 0
      %1963 = vmatpush1.bf16.msra.mxu0 0
      %1964 = vmatprep.subr.bf16.mxu0 0
      %1965 = vmatpush1.bf16.msra.mxu0 0
      %1966 = vmatprep.subr.bf16.mxu0 0
      %1967 = vmatpush1.bf16.msra.mxu0 0
      %1968 = vmatprep.subr.bf16.mxu0 0
      %1969 = vmatpush1.bf16.msra.mxu0 0
      %1970 = vmatprep.subr.bf16.mxu0 0
      %1971 = vmatpush1.bf16.msra.mxu0 %v1951
      %1972 = vmatprep.subr.bf16.mxu0 0
      %1973 = vmatpush1.bf16.msra.mxu0 %v1950
      %1974 = vmatprep.subr.bf16.mxu0 0
      %1975 = vmatpush1.bf16.msra.mxu0 %v1949
      %1976 = vmatprep.subr.bf16.mxu0 0
      %1977 = vmatpush2.bf16.msra.mxu0 0
      %1978 = vmatprep.subr.bf16.mxu0 0
      %1979 = vmatpush2.bf16.msra.mxu0 0
      %1980 = vmatprep.subr.bf16.mxu0 0
      %1981 = vmatpush2.bf16.msra.mxu0 0
      %1982 = vmatprep.subr.bf16.mxu0 0
      %1983 = vmatpush2.bf16.msra.mxu0 0
      %1984 = vmatprep.subr.bf16.mxu0 0
      %1985 = vmatpush2.bf16.msra.mxu0 0
      %1986 = vmatprep.subr.bf16.mxu0 0
      %1987 = vmatpush2.bf16.msra.mxu0 0
      %1988 = vmatprep.subr.bf16.mxu0 0
      %1989 = vmatpush2.bf16.msra.mxu0 0
      %1990 = vmatprep.subr.bf16.mxu0 0
      %1991 = vmatpush2.bf16.msra.mxu0 0
      %1992 = vmatprep.mubr.bf16.mxu0 0
      %1993 = vmatmul.mubr.bf16.gmra.mxu0 %v1958
      %v1994 = vpop.f32.mrf.mxu0
      %v1995 = vadd.f32 0.0, %v1994
      %v1996 = vpop.f32.mrf.mxu0
      %v1997 = vpop.f32.mrf.mxu0
      %v1998 = vadd.f32 0.0, %v1997
      %v1999 = vpop.f32.mrf.mxu0
      %2000 = vdwg.mxu0
      %v2001 = vadd.f32 %v1917, %v1995
      %v2002 = vadd.f32 %v1918, %v1998
      %2004 = vset.pattern.permute.xlu0 0
      %2005 = vperm.xlu0 %2004, %v588
      %v2006 = vpop.permute.xlu0 %2005
      %2009 = vset.pattern.permute.xlu0 0
      %2010 = vperm.xlu0 %2009, %v589
      %v2011 = vpop.permute.xlu0 %2010
      %v2013 = vadd.f32 %v2001, %v2006
      %v2014 = vadd.f32 %v2002, %v2011
      %v2015 = vxor.u32 %v2013, 2147483648
      %v2016 = vxor.u32 %v2014, 2147483648
      %v2017 = vmul.f32 %v2015, 1.442695
      %v2018 = vpow.pop %v2017
      %v2019 = vmul.f32 %v2016, 1.442695
      %v2020 = vpow.pop %v2019
      %v2021 = vadd.f32 %v2018, 1.0
      %v2022 = vadd.f32 %v2020, 1.0
      %v2023 = vrcp.pop %v2021
      %v2024 = vmul.f32 1.0, %v2023
      %v2025 = vrcp.pop %v2022
      %v2026 = vmul.f32 1.0, %v2025
      %v2027 = vmul.f32 %v2013, %v2024
      %v2028 = vmul.f32 %v2014, %v2026
      %vm2029 = vcmask 523264
      %2030 = vst.msk [vmem:[%s569] sm:$0xff] %vm2029, %v2027
      %2031 = vst.msk [vmem:[%s569 + $0x8] sm:$0xff] %vm2029, %v2028
      %v2032 = vld [vmem:[%s559] sm:$0xff]
      %v2033 = vld [vmem:[%s559 + $0x8] sm:$0xff]
      %v2034 = vld [vmem:[%s5] sm:$0xff]
      %v2035 = vld [vmem:[%s10] sm:$0xff]
      %v2037 = vsel %vm1187, %v2027, 0
      %v2040 = vsel %vm1187, %v2028, 0
      %2042 = vmatprep.subr.mxu0 0.0
      %2043 = vmatpush1.msra.mxu0 0.0
      %2044 = vmatprep.subr.mxu0 0.0
      %2045 = vmatpush1.msra.mxu0 0.0
      %2046 = vmatprep.subr.mxu0 0.0
      %2047 = vmatpush1.msra.mxu0 0.0
      %2048 = vmatprep.subr.mxu0 0.0
      %2049 = vmatpush1.msra.mxu0 0.0
      %2050 = vmatprep.subr.mxu0 0.0
      %2051 = vmatpush1.msra.mxu0 0.0
      %2052 = vmatprep.subr.mxu0 0.0
      %2053 = vmatpush1.msra.mxu0 0.0
      %2054 = vmatprep.subr.mxu0 0.0
      %2055 = vmatpush1.msra.mxu0 0.0
      %2056 = vmatprep.subr.mxu0 0.0
      %2057 = vmatpush1.msra.mxu0 0.0
      %2058 = vmatprep.subr.mxu0 0.0
      %2059 = vmatpush1.msra.mxu0 0.0
      %2060 = vmatprep.subr.mxu0 0.0
      %2061 = vmatpush1.msra.mxu0 0.0
      %2062 = vmatprep.subr.mxu0 0.0
      %2063 = vmatpush1.msra.mxu0 0.0
      %2064 = vmatprep.subr.mxu0 0.0
      %2065 = vmatpush1.msra.mxu0 0.0
      %2066 = vmatprep.subr.mxu0 0.0
      %2067 = vmatpush1.msra.mxu0 0.0
      %2068 = vmatprep.subr.mxu0 0.0
      %2069 = vmatpush1.msra.mxu0 0.0
      %2070 = vmatprep.subr.mxu0 0.0
      %2071 = vmatpush1.msra.mxu0 0.0
      %2072 = vmatprep.subr.mxu0 0.0
      %2073 = vmatpush1.msra.mxu0 %v2034
      %2074 = vmatprep.subr.mxu0 0.0
      %2075 = vmatpush2.msra.mxu0 0.0
      %2076 = vmatprep.subr.mxu0 0.0
      %2077 = vmatpush2.msra.mxu0 0.0
      %2078 = vmatprep.subr.mxu0 0.0
      %2079 = vmatpush2.msra.mxu0 0.0
      %2080 = vmatprep.subr.mxu0 0.0
      %2081 = vmatpush2.msra.mxu0 0.0
      %2082 = vmatprep.subr.mxu0 0.0
      %2083 = vmatpush2.msra.mxu0 0.0
      %2084 = vmatprep.subr.mxu0 0.0
      %2085 = vmatpush2.msra.mxu0 0.0
      %2086 = vmatprep.subr.mxu0 0.0
      %2087 = vmatpush2.msra.mxu0 0.0
      %2088 = vmatprep.subr.mxu0 0.0
      %2089 = vmatpush2.msra.mxu0 0.0
      %2090 = vmatprep.subr.mxu0 0.0
      %2091 = vmatpush2.msra.mxu0 0.0
      %2092 = vmatprep.subr.mxu0 0.0
      %2093 = vmatpush2.msra.mxu0 0.0
      %2094 = vmatprep.subr.mxu0 0.0
      %2095 = vmatpush2.msra.mxu0 0.0
      %2096 = vmatprep.subr.mxu0 0.0
      %2097 = vmatpush2.msra.mxu0 0.0
      %2098 = vmatprep.subr.mxu0 0.0
      %2099 = vmatpush2.msra.mxu0 0.0
      %2100 = vmatprep.subr.mxu0 0.0
      %2101 = vmatpush2.msra.mxu0 0.0
      %2102 = vmatprep.subr.mxu0 0.0
      %2103 = vmatpush2.msra.mxu0 0.0
      %2104 = vmatprep.subr.mxu0 0.0
      %2105 = vmatpush2.msra.mxu0 0.0
      %2106 = vmatprep.mubr.f32.mxu0 0.0
      %2107 = vmatmul.mubr.f32.gmra.mxu0 %v2037
      %v2108 = vpop.f32.mrf.mxu0
      %v2109 = vadd.f32 0.0, %v2108
      %v2110 = vpop.f32.mrf.mxu0
      %2111 = vmatprep.mubr.f32.mxu0 0.0
      %2112 = vmatmul.mubr.f32.gmra.mxu0 %v2040
      %v2113 = vpop.f32.mrf.mxu0
      %v2114 = vadd.f32 0.0, %v2113
      %v2115 = vpop.f32.mrf.mxu0
      %2116 = vdwg.mxu0
      %2117 = vrot.lane.b32.xlu0 %v2027, 120
      %v2118 = vpop.permute.xlu0 %2117
      %2119 = vrot.lane.b32.xlu0 %v2028, 120
      %v2120 = vpop.permute.xlu0 %2119
      %v2121 = vsel %vm1187, %v2118, 0
      %v2123 = vsel %vm1187, %v2120, 0
      %2125 = vmatprep.subr.mxu0 0.0
      %2126 = vmatpush1.msra.mxu0 0.0
      %2127 = vmatprep.subr.mxu0 0.0
      %2128 = vmatpush1.msra.mxu0 0.0
      %2129 = vmatprep.subr.mxu0 0.0
      %2130 = vmatpush1.msra.mxu0 0.0
      %2131 = vmatprep.subr.mxu0 0.0
      %2132 = vmatpush1.msra.mxu0 0.0
      %2133 = vmatprep.subr.mxu0 0.0
      %2134 = vmatpush1.msra.mxu0 0.0
      %2135 = vmatprep.subr.mxu0 0.0
      %2136 = vmatpush1.msra.mxu0 0.0
      %2137 = vmatprep.subr.mxu0 0.0
      %2138 = vmatpush1.msra.mxu0 0.0
      %2139 = vmatprep.subr.mxu0 0.0
      %2140 = vmatpush1.msra.mxu0 0.0
      %2141 = vmatprep.subr.mxu0 0.0
      %2142 = vmatpush1.msra.mxu0 0.0
      %2143 = vmatprep.subr.mxu0 0.0
      %2144 = vmatpush1.msra.mxu0 0.0
      %2145 = vmatprep.subr.mxu0 0.0
      %2146 = vmatpush1.msra.mxu0 0.0
      %2147 = vmatprep.subr.mxu0 0.0
      %2148 = vmatpush1.msra.mxu0 0.0
      %2149 = vmatprep.subr.mxu0 0.0
      %2150 = vmatpush1.msra.mxu0 0.0
      %2151 = vmatprep.subr.mxu0 0.0
      %2152 = vmatpush1.msra.mxu0 0.0
      %2153 = vmatprep.subr.mxu0 0.0
      %2154 = vmatpush1.msra.mxu0 0.0
      %2155 = vmatprep.subr.mxu0 0.0
      %2156 = vmatpush1.msra.mxu0 %v2034
      %2157 = vmatprep.subr.mxu0 0.0
      %2158 = vmatpush2.msra.mxu0 0.0
      %2159 = vmatprep.subr.mxu0 0.0
      %2160 = vmatpush2.msra.mxu0 0.0
      %2161 = vmatprep.subr.mxu0 0.0
      %2162 = vmatpush2.msra.mxu0 0.0
      %2163 = vmatprep.subr.mxu0 0.0
      %2164 = vmatpush2.msra.mxu0 0.0
      %2165 = vmatprep.subr.mxu0 0.0
      %2166 = vmatpush2.msra.mxu0 0.0
      %2167 = vmatprep.subr.mxu0 0.0
      %2168 = vmatpush2.msra.mxu0 0.0
      %2169 = vmatprep.subr.mxu0 0.0
      %2170 = vmatpush2.msra.mxu0 0.0
      %2171 = vmatprep.subr.mxu0 0.0
      %2172 = vmatpush2.msra.mxu0 0.0
      %2173 = vmatprep.subr.mxu0 0.0
      %2174 = vmatpush2.msra.mxu0 0.0
      %2175 = vmatprep.subr.mxu0 0.0
      %2176 = vmatpush2.msra.mxu0 0.0
      %2177 = vmatprep.subr.mxu0 0.0
      %2178 = vmatpush2.msra.mxu0 0.0
      %2179 = vmatprep.subr.mxu0 0.0
      %2180 = vmatpush2.msra.mxu0 0.0
      %2181 = vmatprep.subr.mxu0 0.0
      %2182 = vmatpush2.msra.mxu0 0.0
      %2183 = vmatprep.subr.mxu0 0.0
      %2184 = vmatpush2.msra.mxu0 0.0
      %2185 = vmatprep.subr.mxu0 0.0
      %2186 = vmatpush2.msra.mxu0 0.0
      %2187 = vmatprep.subr.mxu0 0.0
      %2188 = vmatpush2.msra.mxu0 0.0
      %2189 = vmatprep.mubr.f32.mxu0 0.0
      %2190 = vmatmul.mubr.f32.gmra.mxu0 %v2121
      %v2191 = vpop.f32.mrf.mxu0
      %v2192 = vadd.f32 0.0, %v2191
      %v2193 = vpop.f32.mrf.mxu0
      %2194 = vmatprep.mubr.f32.mxu0 0.0
      %2195 = vmatmul.mubr.f32.gmra.mxu0 %v2123
      %v2196 = vpop.f32.mrf.mxu0
      %v2197 = vadd.f32 0.0, %v2196
      %v2198 = vpop.f32.mrf.mxu0
      %2199 = vdwg.mxu0
      %2200 = vrot.lane.b32.xlu0 %v2027, 112
      %v2201 = vpop.permute.xlu0 %2200
      %2202 = vrot.lane.b32.xlu0 %v2028, 112
      %v2203 = vpop.permute.xlu0 %2202
      %v2204 = vsel %vm1187, %v2201, 0
      %v2206 = vsel %vm1187, %v2203, 0
      %2208 = vmatprep.subr.mxu0 0.0
      %2209 = vmatpush1.msra.mxu0 0.0
      %2210 = vmatprep.subr.mxu0 0.0
      %2211 = vmatpush1.msra.mxu0 0.0
      %2212 = vmatprep.subr.mxu0 0.0
      %2213 = vmatpush1.msra.mxu0 0.0
      %2214 = vmatprep.subr.mxu0 0.0
      %2215 = vmatpush1.msra.mxu0 0.0
      %2216 = vmatprep.subr.mxu0 0.0
      %2217 = vmatpush1.msra.mxu0 0.0
      %2218 = vmatprep.subr.mxu0 0.0
      %2219 = vmatpush1.msra.mxu0 0.0
      %2220 = vmatprep.subr.mxu0 0.0
      %2221 = vmatpush1.msra.mxu0 0.0
      %2222 = vmatprep.subr.mxu0 0.0
      %2223 = vmatpush1.msra.mxu0 0.0
      %2224 = vmatprep.subr.mxu0 0.0
      %2225 = vmatpush1.msra.mxu0 0.0
      %2226 = vmatprep.subr.mxu0 0.0
      %2227 = vmatpush1.msra.mxu0 0.0
      %2228 = vmatprep.subr.mxu0 0.0
      %2229 = vmatpush1.msra.mxu0 0.0
      %2230 = vmatprep.subr.mxu0 0.0
      %2231 = vmatpush1.msra.mxu0 0.0
      %2232 = vmatprep.subr.mxu0 0.0
      %2233 = vmatpush1.msra.mxu0 0.0
      %2234 = vmatprep.subr.mxu0 0.0
      %2235 = vmatpush1.msra.mxu0 0.0
      %2236 = vmatprep.subr.mxu0 0.0
      %2237 = vmatpush1.msra.mxu0 0.0
      %2238 = vmatprep.subr.mxu0 0.0
      %2239 = vmatpush1.msra.mxu0 %v2034
      %2240 = vmatprep.subr.mxu0 0.0
      %2241 = vmatpush2.msra.mxu0 0.0
      %2242 = vmatprep.subr.mxu0 0.0
      %2243 = vmatpush2.msra.mxu0 0.0
      %2244 = vmatprep.subr.mxu0 0.0
      %2245 = vmatpush2.msra.mxu0 0.0
      %2246 = vmatprep.subr.mxu0 0.0
      %2247 = vmatpush2.msra.mxu0 0.0
      %2248 = vmatprep.subr.mxu0 0.0
      %2249 = vmatpush2.msra.mxu0 0.0
      %2250 = vmatprep.subr.mxu0 0.0
      %2251 = vmatpush2.msra.mxu0 0.0
      %2252 = vmatprep.subr.mxu0 0.0
      %2253 = vmatpush2.msra.mxu0 0.0
      %2254 = vmatprep.subr.mxu0 0.0
      %2255 = vmatpush2.msra.mxu0 0.0
      %2256 = vmatprep.subr.mxu0 0.0
      %2257 = vmatpush2.msra.mxu0 0.0
      %2258 = vmatprep.subr.mxu0 0.0
      %2259 = vmatpush2.msra.mxu0 0.0
      %2260 = vmatprep.subr.mxu0 0.0
      %2261 = vmatpush2.msra.mxu0 0.0
      %2262 = vmatprep.subr.mxu0 0.0
      %2263 = vmatpush2.msra.mxu0 0.0
      %2264 = vmatprep.subr.mxu0 0.0
      %2265 = vmatpush2.msra.mxu0 0.0
      %2266 = vmatprep.subr.mxu0 0.0
      %2267 = vmatpush2.msra.mxu0 0.0
      %2268 = vmatprep.subr.mxu0 0.0
      %2269 = vmatpush2.msra.mxu0 0.0
      %2270 = vmatprep.subr.mxu0 0.0
      %2271 = vmatpush2.msra.mxu0 0.0
      %2272 = vmatprep.mubr.f32.mxu0 0.0
      %2273 = vmatmul.mubr.f32.gmra.mxu0 %v2204
      %v2274 = vpop.f32.mrf.mxu0
      %v2275 = vadd.f32 0.0, %v2274
      %v2276 = vpop.f32.mrf.mxu0
      %2277 = vmatprep.mubr.f32.mxu0 0.0
      %2278 = vmatmul.mubr.f32.gmra.mxu0 %v2206
      %v2279 = vpop.f32.mrf.mxu0
      %v2280 = vadd.f32 0.0, %v2279
      %v2281 = vpop.f32.mrf.mxu0
      %2282 = vdwg.mxu0
      %2283 = vrot.lane.b32.xlu0 %v2027, 104
      %v2284 = vpop.permute.xlu0 %2283
      %2285 = vrot.lane.b32.xlu0 %v2028, 104
      %v2286 = vpop.permute.xlu0 %2285
      %v2287 = vsel %vm1187, %v2284, 0
      %v2289 = vsel %vm1187, %v2286, 0
      %2291 = vmatprep.subr.mxu0 0.0
      %2292 = vmatpush1.msra.mxu0 0.0
      %2293 = vmatprep.subr.mxu0 0.0
      %2294 = vmatpush1.msra.mxu0 0.0
      %2295 = vmatprep.subr.mxu0 0.0
      %2296 = vmatpush1.msra.mxu0 0.0
      %2297 = vmatprep.subr.mxu0 0.0
      %2298 = vmatpush1.msra.mxu0 0.0
      %2299 = vmatprep.subr.mxu0 0.0
      %2300 = vmatpush1.msra.mxu0 0.0
      %2301 = vmatprep.subr.mxu0 0.0
      %2302 = vmatpush1.msra.mxu0 0.0
      %2303 = vmatprep.subr.mxu0 0.0
      %2304 = vmatpush1.msra.mxu0 0.0
      %2305 = vmatprep.subr.mxu0 0.0
      %2306 = vmatpush1.msra.mxu0 0.0
      %2307 = vmatprep.subr.mxu0 0.0
      %2308 = vmatpush1.msra.mxu0 0.0
      %2309 = vmatprep.subr.mxu0 0.0
      %2310 = vmatpush1.msra.mxu0 0.0
      %2311 = vmatprep.subr.mxu0 0.0
      %2312 = vmatpush1.msra.mxu0 0.0
      %2313 = vmatprep.subr.mxu0 0.0
      %2314 = vmatpush1.msra.mxu0 0.0
      %2315 = vmatprep.subr.mxu0 0.0
      %2316 = vmatpush1.msra.mxu0 0.0
      %2317 = vmatprep.subr.mxu0 0.0
      %2318 = vmatpush1.msra.mxu0 0.0
      %2319 = vmatprep.subr.mxu0 0.0
      %2320 = vmatpush1.msra.mxu0 0.0
      %2321 = vmatprep.subr.mxu0 0.0
      %2322 = vmatpush1.msra.mxu0 %v2034
      %2323 = vmatprep.subr.mxu0 0.0
      %2324 = vmatpush2.msra.mxu0 0.0
      %2325 = vmatprep.subr.mxu0 0.0
      %2326 = vmatpush2.msra.mxu0 0.0
      %2327 = vmatprep.subr.mxu0 0.0
      %2328 = vmatpush2.msra.mxu0 0.0
      %2329 = vmatprep.subr.mxu0 0.0
      %2330 = vmatpush2.msra.mxu0 0.0
      %2331 = vmatprep.subr.mxu0 0.0
      %2332 = vmatpush2.msra.mxu0 0.0
      %2333 = vmatprep.subr.mxu0 0.0
      %2334 = vmatpush2.msra.mxu0 0.0
      %2335 = vmatprep.subr.mxu0 0.0
      %2336 = vmatpush2.msra.mxu0 0.0
      %2337 = vmatprep.subr.mxu0 0.0
      %2338 = vmatpush2.msra.mxu0 0.0
      %2339 = vmatprep.subr.mxu0 0.0
      %2340 = vmatpush2.msra.mxu0 0.0
      %2341 = vmatprep.subr.mxu0 0.0
      %2342 = vmatpush2.msra.mxu0 0.0
      %2343 = vmatprep.subr.mxu0 0.0
      %2344 = vmatpush2.msra.mxu0 0.0
      %2345 = vmatprep.subr.mxu0 0.0
      %2346 = vmatpush2.msra.mxu0 0.0
      %2347 = vmatprep.subr.mxu0 0.0
      %2348 = vmatpush2.msra.mxu0 0.0
      %2349 = vmatprep.subr.mxu0 0.0
      %2350 = vmatpush2.msra.mxu0 0.0
      %2351 = vmatprep.subr.mxu0 0.0
      %2352 = vmatpush2.msra.mxu0 0.0
      %2353 = vmatprep.subr.mxu0 0.0
      %2354 = vmatpush2.msra.mxu0 0.0
      %2355 = vmatprep.mubr.f32.mxu0 0.0
      %2356 = vmatmul.mubr.f32.gmra.mxu0 %v2287
      %v2357 = vpop.f32.mrf.mxu0
      %v2358 = vadd.f32 0.0, %v2357
      %v2359 = vpop.f32.mrf.mxu0
      %2360 = vmatprep.mubr.f32.mxu0 0.0
      %2361 = vmatmul.mubr.f32.gmra.mxu0 %v2289
      %v2362 = vpop.f32.mrf.mxu0
      %v2363 = vadd.f32 0.0, %v2362
      %v2364 = vpop.f32.mrf.mxu0
      %2365 = vdwg.mxu0
      %2366 = vrot.lane.b32.xlu0 %v2027, 96
      %v2367 = vpop.permute.xlu0 %2366
      %2368 = vrot.lane.b32.xlu0 %v2028, 96
      %v2369 = vpop.permute.xlu0 %2368
      %v2370 = vsel %vm1187, %v2367, 0
      %v2372 = vsel %vm1187, %v2369, 0
      %2374 = vmatprep.subr.mxu0 0.0
      %2375 = vmatpush1.msra.mxu0 0.0
      %2376 = vmatprep.subr.mxu0 0.0
      %2377 = vmatpush1.msra.mxu0 0.0
      %2378 = vmatprep.subr.mxu0 0.0
      %2379 = vmatpush1.msra.mxu0 0.0
      %2380 = vmatprep.subr.mxu0 0.0
      %2381 = vmatpush1.msra.mxu0 0.0
      %2382 = vmatprep.subr.mxu0 0.0
      %2383 = vmatpush1.msra.mxu0 0.0
      %2384 = vmatprep.subr.mxu0 0.0
      %2385 = vmatpush1.msra.mxu0 0.0
      %2386 = vmatprep.subr.mxu0 0.0
      %2387 = vmatpush1.msra.mxu0 0.0
      %2388 = vmatprep.subr.mxu0 0.0
      %2389 = vmatpush1.msra.mxu0 0.0
      %2390 = vmatprep.subr.mxu0 0.0
      %2391 = vmatpush1.msra.mxu0 0.0
      %2392 = vmatprep.subr.mxu0 0.0
      %2393 = vmatpush1.msra.mxu0 0.0
      %2394 = vmatprep.subr.mxu0 0.0
      %2395 = vmatpush1.msra.mxu0 0.0
      %2396 = vmatprep.subr.mxu0 0.0
      %2397 = vmatpush1.msra.mxu0 0.0
      %2398 = vmatprep.subr.mxu0 0.0
      %2399 = vmatpush1.msra.mxu0 0.0
      %2400 = vmatprep.subr.mxu0 0.0
      %2401 = vmatpush1.msra.mxu0 0.0
      %2402 = vmatprep.subr.mxu0 0.0
      %2403 = vmatpush1.msra.mxu0 0.0
      %2404 = vmatprep.subr.mxu0 0.0
      %2405 = vmatpush1.msra.mxu0 %v2034
      %2406 = vmatprep.subr.mxu0 0.0
      %2407 = vmatpush2.msra.mxu0 0.0
      %2408 = vmatprep.subr.mxu0 0.0
      %2409 = vmatpush2.msra.mxu0 0.0
      %2410 = vmatprep.subr.mxu0 0.0
      %2411 = vmatpush2.msra.mxu0 0.0
      %2412 = vmatprep.subr.mxu0 0.0
      %2413 = vmatpush2.msra.mxu0 0.0
      %2414 = vmatprep.subr.mxu0 0.0
      %2415 = vmatpush2.msra.mxu0 0.0
      %2416 = vmatprep.subr.mxu0 0.0
      %2417 = vmatpush2.msra.mxu0 0.0
      %2418 = vmatprep.subr.mxu0 0.0
      %2419 = vmatpush2.msra.mxu0 0.0
      %2420 = vmatprep.subr.mxu0 0.0
      %2421 = vmatpush2.msra.mxu0 0.0
      %2422 = vmatprep.subr.mxu0 0.0
      %2423 = vmatpush2.msra.mxu0 0.0
      %2424 = vmatprep.subr.mxu0 0.0
      %2425 = vmatpush2.msra.mxu0 0.0
      %2426 = vmatprep.subr.mxu0 0.0
      %2427 = vmatpush2.msra.mxu0 0.0
      %2428 = vmatprep.subr.mxu0 0.0
      %2429 = vmatpush2.msra.mxu0 0.0
      %2430 = vmatprep.subr.mxu0 0.0
      %2431 = vmatpush2.msra.mxu0 0.0
      %2432 = vmatprep.subr.mxu0 0.0
      %2433 = vmatpush2.msra.mxu0 0.0
      %2434 = vmatprep.subr.mxu0 0.0
      %2435 = vmatpush2.msra.mxu0 0.0
      %2436 = vmatprep.subr.mxu0 0.0
      %2437 = vmatpush2.msra.mxu0 0.0
      %2438 = vmatprep.mubr.f32.mxu0 0.0
      %2439 = vmatmul.mubr.f32.gmra.mxu0 %v2370
      %v2440 = vpop.f32.mrf.mxu0
      %v2441 = vadd.f32 0.0, %v2440
      %v2442 = vpop.f32.mrf.mxu0
      %2443 = vmatprep.mubr.f32.mxu0 0.0
      %2444 = vmatmul.mubr.f32.gmra.mxu0 %v2372
      %v2445 = vpop.f32.mrf.mxu0
      %v2446 = vadd.f32 0.0, %v2445
      %v2447 = vpop.f32.mrf.mxu0
      %2448 = vdwg.mxu0
      %2449 = vrot.lane.b32.xlu0 %v2027, 88
      %v2450 = vpop.permute.xlu0 %2449
      %2451 = vrot.lane.b32.xlu0 %v2028, 88
      %v2452 = vpop.permute.xlu0 %2451
      %v2453 = vsel %vm1187, %v2450, 0
      %v2455 = vsel %vm1187, %v2452, 0
      %2457 = vmatprep.subr.mxu0 0.0
      %2458 = vmatpush1.msra.mxu0 0.0
      %2459 = vmatprep.subr.mxu0 0.0
      %2460 = vmatpush1.msra.mxu0 0.0
      %2461 = vmatprep.subr.mxu0 0.0
      %2462 = vmatpush1.msra.mxu0 0.0
      %2463 = vmatprep.subr.mxu0 0.0
      %2464 = vmatpush1.msra.mxu0 0.0
      %2465 = vmatprep.subr.mxu0 0.0
      %2466 = vmatpush1.msra.mxu0 0.0
      %2467 = vmatprep.subr.mxu0 0.0
      %2468 = vmatpush1.msra.mxu0 0.0
      %2469 = vmatprep.subr.mxu0 0.0
      %2470 = vmatpush1.msra.mxu0 0.0
      %2471 = vmatprep.subr.mxu0 0.0
      %2472 = vmatpush1.msra.mxu0 0.0
      %2473 = vmatprep.subr.mxu0 0.0
      %2474 = vmatpush1.msra.mxu0 0.0
      %2475 = vmatprep.subr.mxu0 0.0
      %2476 = vmatpush1.msra.mxu0 0.0
      %2477 = vmatprep.subr.mxu0 0.0
      %2478 = vmatpush1.msra.mxu0 0.0
      %2479 = vmatprep.subr.mxu0 0.0
      %2480 = vmatpush1.msra.mxu0 0.0
      %2481 = vmatprep.subr.mxu0 0.0
      %2482 = vmatpush1.msra.mxu0 0.0
      %2483 = vmatprep.subr.mxu0 0.0
      %2484 = vmatpush1.msra.mxu0 0.0
      %2485 = vmatprep.subr.mxu0 0.0
      %2486 = vmatpush1.msra.mxu0 0.0
      %2487 = vmatprep.subr.mxu0 0.0
      %2488 = vmatpush1.msra.mxu0 %v2034
      %2489 = vmatprep.subr.mxu0 0.0
      %2490 = vmatpush2.msra.mxu0 0.0
      %2491 = vmatprep.subr.mxu0 0.0
      %2492 = vmatpush2.msra.mxu0 0.0
      %2493 = vmatprep.subr.mxu0 0.0
      %2494 = vmatpush2.msra.mxu0 0.0
      %2495 = vmatprep.subr.mxu0 0.0
      %2496 = vmatpush2.msra.mxu0 0.0
      %2497 = vmatprep.subr.mxu0 0.0
      %2498 = vmatpush2.msra.mxu0 0.0
      %2499 = vmatprep.subr.mxu0 0.0
      %2500 = vmatpush2.msra.mxu0 0.0
      %2501 = vmatprep.subr.mxu0 0.0
      %2502 = vmatpush2.msra.mxu0 0.0
      %2503 = vmatprep.subr.mxu0 0.0
      %2504 = vmatpush2.msra.mxu0 0.0
      %2505 = vmatprep.subr.mxu0 0.0
      %2506 = vmatpush2.msra.mxu0 0.0
      %2507 = vmatprep.subr.mxu0 0.0
      %2508 = vmatpush2.msra.mxu0 0.0
      %2509 = vmatprep.subr.mxu0 0.0
      %2510 = vmatpush2.msra.mxu0 0.0
      %2511 = vmatprep.subr.mxu0 0.0
      %2512 = vmatpush2.msra.mxu0 0.0
      %2513 = vmatprep.subr.mxu0 0.0
      %2514 = vmatpush2.msra.mxu0 0.0
      %2515 = vmatprep.subr.mxu0 0.0
      %2516 = vmatpush2.msra.mxu0 0.0
      %2517 = vmatprep.subr.mxu0 0.0
      %2518 = vmatpush2.msra.mxu0 0.0
      %2519 = vmatprep.subr.mxu0 0.0
      %2520 = vmatpush2.msra.mxu0 0.0
      %2521 = vmatprep.mubr.f32.mxu0 0.0
      %2522 = vmatmul.mubr.f32.gmra.mxu0 %v2453
      %v2523 = vpop.f32.mrf.mxu0
      %v2524 = vadd.f32 0.0, %v2523
      %v2525 = vpop.f32.mrf.mxu0
      %2526 = vmatprep.mubr.f32.mxu0 0.0
      %2527 = vmatmul.mubr.f32.gmra.mxu0 %v2455
      %v2528 = vpop.f32.mrf.mxu0
      %v2529 = vadd.f32 0.0, %v2528
      %v2530 = vpop.f32.mrf.mxu0
      %2531 = vdwg.mxu0
      %2532 = vrot.lane.b32.xlu0 %v2027, 80
      %v2533 = vpop.permute.xlu0 %2532
      %2534 = vrot.lane.b32.xlu0 %v2028, 80
      %v2535 = vpop.permute.xlu0 %2534
      %v2536 = vsel %vm1187, %v2533, 0
      %v2538 = vsel %vm1187, %v2535, 0
      %2540 = vmatprep.subr.mxu0 0.0
      %2541 = vmatpush1.msra.mxu0 0.0
      %2542 = vmatprep.subr.mxu0 0.0
      %2543 = vmatpush1.msra.mxu0 0.0
      %2544 = vmatprep.subr.mxu0 0.0
      %2545 = vmatpush1.msra.mxu0 0.0
      %2546 = vmatprep.subr.mxu0 0.0
      %2547 = vmatpush1.msra.mxu0 0.0
      %2548 = vmatprep.subr.mxu0 0.0
      %2549 = vmatpush1.msra.mxu0 0.0
      %2550 = vmatprep.subr.mxu0 0.0
      %2551 = vmatpush1.msra.mxu0 0.0
      %2552 = vmatprep.subr.mxu0 0.0
      %2553 = vmatpush1.msra.mxu0 0.0
      %2554 = vmatprep.subr.mxu0 0.0
      %2555 = vmatpush1.msra.mxu0 0.0
      %2556 = vmatprep.subr.mxu0 0.0
      %2557 = vmatpush1.msra.mxu0 0.0
      %2558 = vmatprep.subr.mxu0 0.0
      %2559 = vmatpush1.msra.mxu0 0.0
      %2560 = vmatprep.subr.mxu0 0.0
      %2561 = vmatpush1.msra.mxu0 0.0
      %2562 = vmatprep.subr.mxu0 0.0
      %2563 = vmatpush1.msra.mxu0 0.0
      %2564 = vmatprep.subr.mxu0 0.0
      %2565 = vmatpush1.msra.mxu0 0.0
      %2566 = vmatprep.subr.mxu0 0.0
      %2567 = vmatpush1.msra.mxu0 0.0
      %2568 = vmatprep.subr.mxu0 0.0
      %2569 = vmatpush1.msra.mxu0 0.0
      %2570 = vmatprep.subr.mxu0 0.0
      %2571 = vmatpush1.msra.mxu0 %v2034
      %2572 = vmatprep.subr.mxu0 0.0
      %2573 = vmatpush2.msra.mxu0 0.0
      %2574 = vmatprep.subr.mxu0 0.0
      %2575 = vmatpush2.msra.mxu0 0.0
      %2576 = vmatprep.subr.mxu0 0.0
      %2577 = vmatpush2.msra.mxu0 0.0
      %2578 = vmatprep.subr.mxu0 0.0
      %2579 = vmatpush2.msra.mxu0 0.0
      %2580 = vmatprep.subr.mxu0 0.0
      %2581 = vmatpush2.msra.mxu0 0.0
      %2582 = vmatprep.subr.mxu0 0.0
      %2583 = vmatpush2.msra.mxu0 0.0
      %2584 = vmatprep.subr.mxu0 0.0
      %2585 = vmatpush2.msra.mxu0 0.0
      %2586 = vmatprep.subr.mxu0 0.0
      %2587 = vmatpush2.msra.mxu0 0.0
      %2588 = vmatprep.subr.mxu0 0.0
      %2589 = vmatpush2.msra.mxu0 0.0
      %2590 = vmatprep.subr.mxu0 0.0
      %2591 = vmatpush2.msra.mxu0 0.0
      %2592 = vmatprep.subr.mxu0 0.0
      %2593 = vmatpush2.msra.mxu0 0.0
      %2594 = vmatprep.subr.mxu0 0.0
      %2595 = vmatpush2.msra.mxu0 0.0
      %2596 = vmatprep.subr.mxu0 0.0
      %2597 = vmatpush2.msra.mxu0 0.0
      %2598 = vmatprep.subr.mxu0 0.0
      %2599 = vmatpush2.msra.mxu0 0.0
      %2600 = vmatprep.subr.mxu0 0.0
      %2601 = vmatpush2.msra.mxu0 0.0
      %2602 = vmatprep.subr.mxu0 0.0
      %2603 = vmatpush2.msra.mxu0 0.0
      %2604 = vmatprep.mubr.f32.mxu0 0.0
      %2605 = vmatmul.mubr.f32.gmra.mxu0 %v2536
      %v2606 = vpop.f32.mrf.mxu0
      %v2607 = vadd.f32 0.0, %v2606
      %v2608 = vpop.f32.mrf.mxu0
      %2609 = vmatprep.mubr.f32.mxu0 0.0
      %2610 = vmatmul.mubr.f32.gmra.mxu0 %v2538
      %v2611 = vpop.f32.mrf.mxu0
      %v2612 = vadd.f32 0.0, %v2611
      %v2613 = vpop.f32.mrf.mxu0
      %2614 = vdwg.mxu0
      %2615 = vrot.lane.b32.xlu0 %v2027, 72
      %v2616 = vpop.permute.xlu0 %2615
      %2617 = vrot.lane.b32.xlu0 %v2028, 72
      %v2618 = vpop.permute.xlu0 %2617
      %v2619 = vsel %vm1187, %v2616, 0
      %v2621 = vsel %vm1187, %v2618, 0
      %2623 = vmatprep.subr.mxu0 0.0
      %2624 = vmatpush1.msra.mxu0 0.0
      %2625 = vmatprep.subr.mxu0 0.0
      %2626 = vmatpush1.msra.mxu0 0.0
      %2627 = vmatprep.subr.mxu0 0.0
      %2628 = vmatpush1.msra.mxu0 0.0
      %2629 = vmatprep.subr.mxu0 0.0
      %2630 = vmatpush1.msra.mxu0 0.0
      %2631 = vmatprep.subr.mxu0 0.0
      %2632 = vmatpush1.msra.mxu0 0.0
      %2633 = vmatprep.subr.mxu0 0.0
      %2634 = vmatpush1.msra.mxu0 0.0
      %2635 = vmatprep.subr.mxu0 0.0
      %2636 = vmatpush1.msra.mxu0 0.0
      %2637 = vmatprep.subr.mxu0 0.0
      %2638 = vmatpush1.msra.mxu0 0.0
      %2639 = vmatprep.subr.mxu0 0.0
      %2640 = vmatpush1.msra.mxu0 0.0
      %2641 = vmatprep.subr.mxu0 0.0
      %2642 = vmatpush1.msra.mxu0 0.0
      %2643 = vmatprep.subr.mxu0 0.0
      %2644 = vmatpush1.msra.mxu0 0.0
      %2645 = vmatprep.subr.mxu0 0.0
      %2646 = vmatpush1.msra.mxu0 0.0
      %2647 = vmatprep.subr.mxu0 0.0
      %2648 = vmatpush1.msra.mxu0 0.0
      %2649 = vmatprep.subr.mxu0 0.0
      %2650 = vmatpush1.msra.mxu0 0.0
      %2651 = vmatprep.subr.mxu0 0.0
      %2652 = vmatpush1.msra.mxu0 0.0
      %2653 = vmatprep.subr.mxu0 0.0
      %2654 = vmatpush1.msra.mxu0 %v2034
      %2655 = vmatprep.subr.mxu0 0.0
      %2656 = vmatpush2.msra.mxu0 0.0
      %2657 = vmatprep.subr.mxu0 0.0
      %2658 = vmatpush2.msra.mxu0 0.0
      %2659 = vmatprep.subr.mxu0 0.0
      %2660 = vmatpush2.msra.mxu0 0.0
      %2661 = vmatprep.subr.mxu0 0.0
      %2662 = vmatpush2.msra.mxu0 0.0
      %2663 = vmatprep.subr.mxu0 0.0
      %2664 = vmatpush2.msra.mxu0 0.0
      %2665 = vmatprep.subr.mxu0 0.0
      %2666 = vmatpush2.msra.mxu0 0.0
      %2667 = vmatprep.subr.mxu0 0.0
      %2668 = vmatpush2.msra.mxu0 0.0
      %2669 = vmatprep.subr.mxu0 0.0
      %2670 = vmatpush2.msra.mxu0 0.0
      %2671 = vmatprep.subr.mxu0 0.0
      %2672 = vmatpush2.msra.mxu0 0.0
      %2673 = vmatprep.subr.mxu0 0.0
      %2674 = vmatpush2.msra.mxu0 0.0
      %2675 = vmatprep.subr.mxu0 0.0
      %2676 = vmatpush2.msra.mxu0 0.0
      %2677 = vmatprep.subr.mxu0 0.0
      %2678 = vmatpush2.msra.mxu0 0.0
      %2679 = vmatprep.subr.mxu0 0.0
      %2680 = vmatpush2.msra.mxu0 0.0
      %2681 = vmatprep.subr.mxu0 0.0
      %2682 = vmatpush2.msra.mxu0 0.0
      %2683 = vmatprep.subr.mxu0 0.0
      %2684 = vmatpush2.msra.mxu0 0.0
      %2685 = vmatprep.subr.mxu0 0.0
      %2686 = vmatpush2.msra.mxu0 0.0
      %2687 = vmatprep.mubr.f32.mxu0 0.0
      %2688 = vmatmul.mubr.f32.gmra.mxu0 %v2619
      %v2689 = vpop.f32.mrf.mxu0
      %v2690 = vadd.f32 0.0, %v2689
      %v2691 = vpop.f32.mrf.mxu0
      %2692 = vmatprep.mubr.f32.mxu0 0.0
      %2693 = vmatmul.mubr.f32.gmra.mxu0 %v2621
      %v2694 = vpop.f32.mrf.mxu0
      %v2695 = vadd.f32 0.0, %v2694
      %v2696 = vpop.f32.mrf.mxu0
      %2697 = vdwg.mxu0
      %v2698 = vmul.f32 %v2109, 0.53333336
      %v2699 = vmul.f32 %v2114, 0.53333336
      %v2700 = vmul.f32 %v2192, 0.46666667
      %v2701 = vmul.f32 %v2197, 0.46666667
      %v2702 = vadd.f32 %v2698, %v2700
      %v2703 = vadd.f32 %v2699, %v2701
      %v2704 = vmul.f32 %v2109, 0.06666667
      %v2705 = vmul.f32 %v2114, 0.06666667
      %v2706 = vmul.f32 %v2192, 0.93333334
      %v2707 = vmul.f32 %v2197, 0.93333334
      %v2708 = vadd.f32 %v2704, %v2706
      %v2709 = vadd.f32 %v2705, %v2707
      %v2710 = vmul.f32 %v2192, 0.6
      %v2711 = vmul.f32 %v2197, 0.6
      %v2712 = vmul.f32 %v2275, 0.4
      %v2713 = vmul.f32 %v2280, 0.4
      %v2714 = vadd.f32 %v2710, %v2712
      %v2715 = vadd.f32 %v2711, %v2713
      %v2716 = vmul.f32 %v2192, 0.13333334
      %v2717 = vmul.f32 %v2197, 0.13333334
      %v2718 = vmul.f32 %v2275, 0.8666667
      %v2719 = vmul.f32 %v2280, 0.8666667
      %v2720 = vadd.f32 %v2716, %v2718
      %v2721 = vadd.f32 %v2717, %v2719
      %v2722 = vmul.f32 %v2275, 0.6666667
      %v2723 = vmul.f32 %v2280, 0.6666667
      %v2724 = vmul.f32 %v2358, 0.33333334
      %v2725 = vmul.f32 %v2363, 0.33333334
      %v2726 = vadd.f32 %v2722, %v2724
      %v2727 = vadd.f32 %v2723, %v2725
      %v2728 = vmul.f32 %v2275, 0.2
      %v2729 = vmul.f32 %v2280, 0.2
      %v2730 = vmul.f32 %v2358, 0.8
      %v2731 = vmul.f32 %v2363, 0.8
      %v2732 = vadd.f32 %v2728, %v2730
      %v2733 = vadd.f32 %v2729, %v2731
      %v2734 = vmul.f32 %v2358, 0.73333335
      %v2735 = vmul.f32 %v2363, 0.73333335
      %v2736 = vmul.f32 %v2441, 0.26666668
      %v2737 = vmul.f32 %v2446, 0.26666668
      %v2738 = vadd.f32 %v2734, %v2736
      %v2739 = vadd.f32 %v2735, %v2737
      %v2740 = vmul.f32 %v2358, 0.26666668
      %v2741 = vmul.f32 %v2363, 0.26666668
      %v2742 = vmul.f32 %v2441, 0.73333335
      %v2743 = vmul.f32 %v2446, 0.73333335
      %v2744 = vadd.f32 %v2740, %v2742
      %v2745 = vadd.f32 %v2741, %v2743
      %v2746 = vmul.f32 %v2441, 0.8
      %v2747 = vmul.f32 %v2446, 0.8
      %v2748 = vmul.f32 %v2524, 0.2
      %v2749 = vmul.f32 %v2529, 0.2
      %v2750 = vadd.f32 %v2746, %v2748
      %v2751 = vadd.f32 %v2747, %v2749
      %v2752 = vmul.f32 %v2441, 0.33333334
      %v2753 = vmul.f32 %v2446, 0.33333334
      %v2754 = vmul.f32 %v2524, 0.6666667
      %v2755 = vmul.f32 %v2529, 0.6666667
      %v2756 = vadd.f32 %v2752, %v2754
      %v2757 = vadd.f32 %v2753, %v2755
      %v2758 = vmul.f32 %v2524, 0.8666667
      %v2759 = vmul.f32 %v2529, 0.8666667
      %v2760 = vmul.f32 %v2607, 0.13333334
      %v2761 = vmul.f32 %v2612, 0.13333334
      %v2762 = vadd.f32 %v2758, %v2760
      %v2763 = vadd.f32 %v2759, %v2761
      %v2764 = vmul.f32 %v2524, 0.4
      %v2765 = vmul.f32 %v2529, 0.4
      %v2766 = vmul.f32 %v2607, 0.6
      %v2767 = vmul.f32 %v2612, 0.6
      %v2768 = vadd.f32 %v2764, %v2766
      %v2769 = vadd.f32 %v2765, %v2767
      %v2770 = vmul.f32 %v2607, 0.93333334
      %v2771 = vmul.f32 %v2612, 0.93333334
      %v2772 = vmul.f32 %v2690, 0.06666667
      %v2773 = vmul.f32 %v2695, 0.06666667
      %v2774 = vadd.f32 %v2770, %v2772
      %v2775 = vadd.f32 %v2771, %v2773
      %v2776 = vmul.f32 %v2607, 0.46666667
      %v2777 = vmul.f32 %v2612, 0.46666667
      %v2778 = vmul.f32 %v2690, 0.53333336
      %v2779 = vmul.f32 %v2695, 0.53333336
      %v2780 = vadd.f32 %v2776, %v2778
      %v2781 = vadd.f32 %v2777, %v2779
      %v2782 = vmul.f32 %v2607, 0.0
      %v2783 = vmul.f32 %v2612, 0.0
      %v2784 = vadd.f32 %v2782, %v2690
      %v2785 = vadd.f32 %v2783, %v2695
      %2788 = vrot.lane.b32.xlu0 %v2702, 16
      %v2789 = vpop.permute.xlu0 %2788
      %2790 = vrot.lane.b32.xlu0 %v2703, 16
      %v2791 = vpop.permute.xlu0 %2790
      %2796 = vrot.lane.b32.xlu0 %v2708, 32
      %v2797 = vpop.permute.xlu0 %2796
      %2798 = vrot.lane.b32.xlu0 %v2709, 32
      %v2799 = vpop.permute.xlu0 %2798
      %2804 = vrot.lane.b32.xlu0 %v2714, 48
      %v2805 = vpop.permute.xlu0 %2804
      %2806 = vrot.lane.b32.xlu0 %v2715, 48
      %v2807 = vpop.permute.xlu0 %2806
      %2812 = vrot.lane.b32.xlu0 %v2720, 64
      %v2813 = vpop.permute.xlu0 %2812
      %2814 = vrot.lane.b32.xlu0 %v2721, 64
      %v2815 = vpop.permute.xlu0 %2814
      %2820 = vrot.lane.b32.xlu0 %v2726, 80
      %v2821 = vpop.permute.xlu0 %2820
      %2822 = vrot.lane.b32.xlu0 %v2727, 80
      %v2823 = vpop.permute.xlu0 %2822
      %2828 = vrot.lane.b32.xlu0 %v2732, 96
      %v2829 = vpop.permute.xlu0 %2828
      %2830 = vrot.lane.b32.xlu0 %v2733, 96
      %v2831 = vpop.permute.xlu0 %2830
      %2836 = vrot.lane.b32.xlu0 %v2738, 112
      %v2837 = vpop.permute.xlu0 %2836
      %2838 = vrot.lane.b32.xlu0 %v2739, 112
      %v2839 = vpop.permute.xlu0 %2838
      %2844 = vrot.lane.b32.xlu0 %v2750, 16
      %v2845 = vpop.permute.xlu0 %2844
      %2846 = vrot.lane.b32.xlu0 %v2751, 16
      %v2847 = vpop.permute.xlu0 %2846
      %2852 = vrot.lane.b32.xlu0 %v2756, 32
      %v2853 = vpop.permute.xlu0 %2852
      %2854 = vrot.lane.b32.xlu0 %v2757, 32
      %v2855 = vpop.permute.xlu0 %2854
      %2860 = vrot.lane.b32.xlu0 %v2762, 48
      %v2861 = vpop.permute.xlu0 %2860
      %2862 = vrot.lane.b32.xlu0 %v2763, 48
      %v2863 = vpop.permute.xlu0 %2862
      %2868 = vrot.lane.b32.xlu0 %v2768, 64
      %v2869 = vpop.permute.xlu0 %2868
      %2870 = vrot.lane.b32.xlu0 %v2769, 64
      %v2871 = vpop.permute.xlu0 %2870
      %2876 = vrot.lane.b32.xlu0 %v2774, 80
      %v2877 = vpop.permute.xlu0 %2876
      %2878 = vrot.lane.b32.xlu0 %v2775, 80
      %v2879 = vpop.permute.xlu0 %2878
      %2884 = vrot.lane.b32.xlu0 %v2780, 96
      %v2885 = vpop.permute.xlu0 %2884
      %2886 = vrot.lane.b32.xlu0 %v2781, 96
      %v2887 = vpop.permute.xlu0 %2886
      %2892 = vrot.lane.b32.xlu0 %v2784, 112
      %v2893 = vpop.permute.xlu0 %2892
      %2894 = vrot.lane.b32.xlu0 %v2785, 112
      %v2895 = vpop.permute.xlu0 %2894
      %v2898 = vsel %vm1192, %v2109, %v2789
      %v2899 = vsel %vm1192, %v2114, %v2791
      %v2900 = vsel %vm1202, %v2898, %v2797
      %v2901 = vsel %vm1202, %v2899, %v2799
      %v2902 = vsel %vm1212, %v2900, %v2805
      %v2903 = vsel %vm1212, %v2901, %v2807
      %v2904 = vsel %vm2029, %v2902, %v2813
      %v2905 = vsel %vm2029, %v2903, %v2815
      %vm2906 = vcmask 654336
      %v2907 = vsel %vm2906, %v2904, %v2821
      %v2908 = vsel %vm2906, %v2905, %v2823
      %vm2909 = vcmask 785408
      %v2910 = vsel %vm2909, %v2907, %v2829
      %v2911 = vsel %vm2909, %v2908, %v2831
      %vm2912 = vcmask 916480
      %v2913 = vsel %vm2912, %v2910, %v2837
      %v2914 = vsel %vm2912, %v2911, %v2839
      %v2915 = vsel %vm1192, %v2744, %v2845
      %v2916 = vsel %vm1192, %v2745, %v2847
      %v2917 = vsel %vm1202, %v2915, %v2853
      %v2918 = vsel %vm1202, %v2916, %v2855
      %v2919 = vsel %vm1212, %v2917, %v2861
      %v2920 = vsel %vm1212, %v2918, %v2863
      %v2921 = vsel %vm2029, %v2919, %v2869
      %v2922 = vsel %vm2029, %v2920, %v2871
      %v2923 = vsel %vm2906, %v2921, %v2877
      %v2924 = vsel %vm2906, %v2922, %v2879
      %v2925 = vsel %vm2909, %v2923, %v2885
      %v2926 = vsel %vm2909, %v2924, %v2887
      %v2927 = vsel %vm2912, %v2925, %v2893
      %v2928 = vsel %vm2912, %v2926, %v2895
      %v2929 = vadd.s32 %v1223, 128
      %vm2930 = vcmp.lt.s32.totalorder %v1223, 0
      %v2931 = vsub.s32 0, %v1223
      %v2932 = vsel %vm2930, %v2931, %v1223
      %v2933 = vshrl.u32 %v2932, 4
      %v2934 = vand.u32 %v2932, 15
      %v2935 = vsub.s32 0, %v2934
      %v2936 = vsel %vm2930, %v2935, %v2934
      %vm2937 = vcmp.lt.s32.totalorder %v2929, 0
      %v2938 = vsub.s32 0, %v2929
      %v2939 = vsel %vm2937, %v2938, %v2929
      %v2940 = vshrl.u32 %v2939, 4
      %v2941 = vand.u32 %v2939, 15
      %v2942 = vsub.s32 0, %v2941
      %v2943 = vsel %vm2937, %v2942, %v2941
      %vm2944 = vcmp.ne.s32.totalorder %v2936, 0
      %vm2945 = vcmp.ne.s32.totalorder %v2943, 0
      %vm2946 = vcmp.lt.s32.totalorder %v2936, 0
      %vm2947 = vcmp.lt.s32.totalorder %v2943, 0
      %vm2948 = vmand %vm2946, %vm2944
      %vm2949 = vmand %vm2947, %vm2945
      %v2950 = vadd.s32 %v2936, 16
      %v2951 = vadd.s32 %v2943, 16
      %v2952 = vsel %vm2948, %v2950, %v2936
      %v2953 = vsel %vm2949, %v2951, %v2943
      %vm2954 = vcmp.ge.s32.totalorder %v2952, 1
      %vm2955 = vcmp.ge.s32.totalorder %v2953, 1
      %vm2956 = vcmp.lt.s32.totalorder %v2952, 15
      %vm2957 = vcmp.lt.s32.totalorder %v2953, 15
      %vm2958 = vcmp.ge.s32.totalorder %v1223, 16
      %vm2959 = vcmp.ge.s32.totalorder %v2929, 16
      %vm2960 = vcmp.lt.s32.totalorder %v1223, 240
      %vm2961 = vcmp.lt.s32.totalorder %v2929, 240
      %2962 = vrot.lane.b32.xlu0 %v2032, 17
      %v2963 = vpop.permute.xlu0 %2962
      %2964 = vrot.lane.b32.xlu0 %v2913, 17
      %v2965 = vpop.permute.xlu0 %2964
      %2966 = vrot.lane.b32.xlu0 %v2914, 17
      %v2967 = vpop.permute.xlu0 %2966
      %2968 = vrot.lane.b32.xlu0 %v2033, 17
      %v2969 = vpop.permute.xlu0 %2968
      %2970 = vrot.lane.b32.xlu0 %v2927, 17
      %v2971 = vpop.permute.xlu0 %2970
      %2972 = vrot.lane.b32.xlu0 %v2928, 17
      %v2973 = vpop.permute.xlu0 %2972
      %vm2974 = vcmp.lt.s32.totalorder %v1223, 17
      %v2975 = vsel %vm2974, %v2963, %v2969
      %v2976 = vsel %vm2974, %v2965, %v2971
      %v2977 = vsel %vm2974, %v2967, %v2973
      %v2978 = vsel %vm2974, %v2969, %v2963
      %v2979 = vsel %vm2974, %v2971, %v2965
      %v2980 = vsel %vm2974, %v2973, %v2967
      %vm2981 = vmand %vm2954, %vm2958
      %vm2982 = vmand %vm2955, %vm2959
      %v2983 = vsel %vm2981, 1, 0
      %v2984 = vsel %vm2982, 1, 0
      %vm2985 = vcmp.eq.s32.totalorder %v2983, 1
      %vm2986 = vcmp.eq.s32.totalorder %v2984, 1
      %v2987 = vsel %vm2985, %v2978, 0.0
      %v2988 = vsel %vm2986, %v2975, 0.0
      %v2989 = vsel %vm2985, %v2979, 0.0
      %v2990 = vsel %vm2986, %v2976, 0.0
      %v2991 = vsel %vm2985, %v2980, 0.0
      %v2992 = vsel %vm2986, %v2977, 0.0
      %v2993 = vld [vmem:[%s9] sm:$0xf]
      %v2994 = vpack.c.bf16 %v2989, %v2987
      %v2995 = vpack.c.bf16 %v2990, %v2988
      %v2996 = vpack.c.bf16 %v2991, %v2991
      %v2997 = vpack.c.bf16 %v2992, %v2992
      %2998 = vrot.lane.b32.xlu0 %v2032, 16
      %v2999 = vpop.permute.xlu0 %2998
      %3000 = vrot.lane.b32.xlu0 %v2913, 16
      %v3001 = vpop.permute.xlu0 %3000
      %3002 = vrot.lane.b32.xlu0 %v2914, 16
      %v3003 = vpop.permute.xlu0 %3002
      %3004 = vrot.lane.b32.xlu0 %v2033, 16
      %v3005 = vpop.permute.xlu0 %3004
      %3006 = vrot.lane.b32.xlu0 %v2927, 16
      %v3007 = vpop.permute.xlu0 %3006
      %3008 = vrot.lane.b32.xlu0 %v2928, 16
      %v3009 = vpop.permute.xlu0 %3008
      %vm3010 = vcmp.lt.s32.totalorder %v1223, 16
      %v3011 = vsel %vm3010, %v2999, %v3005
      %v3012 = vsel %vm3010, %v3001, %v3007
      %v3013 = vsel %vm3010, %v3003, %v3009
      %v3014 = vsel %vm3010, %v3005, %v2999
      %v3015 = vsel %vm3010, %v3007, %v3001
      %v3016 = vsel %vm3010, %v3009, %v3003
      %v3017 = vsel %vm2958, 1, 0
      %v3018 = vsel %vm2959, 1, 0
      %vm3019 = vcmp.eq.s32.totalorder %v3017, 1
      %vm3020 = vcmp.eq.s32.totalorder %v3018, 1
      %v3021 = vsel %vm3019, %v3014, 0.0
      %v3022 = vsel %vm3020, %v3011, 0.0
      %v3023 = vsel %vm3019, %v3015, 0.0
      %v3024 = vsel %vm3020, %v3012, 0.0
      %v3025 = vsel %vm3019, %v3016, 0.0
      %v3026 = vsel %vm3020, %v3013, 0.0
      %s3027 = scalar_lea.vmem %s9, 4
      %v3028 = vld [vmem:[%s3027] sm:$0xf]
      %v3029 = vpack.c.bf16 %v3023, %v3021
      %v3030 = vpack.c.bf16 %v3024, %v3022
      %v3031 = vpack.c.bf16 %v3025, %v3025
      %v3032 = vpack.c.bf16 %v3026, %v3026
      %v3034 = vsel %vm1197, %v3028, 0
      %v3037 = vsel %vm603, %v3031, 0
      %v3040 = vsel %vm603, %v3032, 0
      %3042 = vmatprep.subr.bf16.mxu0 0
      %3043 = vmatpush1.bf16.msra.mxu0 0
      %3044 = vmatprep.subr.bf16.mxu0 0
      %3045 = vmatpush1.bf16.msra.mxu0 0
      %3046 = vmatprep.subr.bf16.mxu0 0
      %3047 = vmatpush1.bf16.msra.mxu0 0
      %3048 = vmatprep.subr.bf16.mxu0 0
      %3049 = vmatpush1.bf16.msra.mxu0 0
      %3050 = vmatprep.subr.bf16.mxu0 0
      %3051 = vmatpush1.bf16.msra.mxu0 0
      %3052 = vmatprep.subr.bf16.mxu0 0
      %3053 = vmatpush1.bf16.msra.mxu0 0
      %3054 = vmatprep.subr.bf16.mxu0 %v3040
      %3055 = vmatpush1.bf16.msra.mxu0 %v3037
      %3056 = vmatprep.subr.bf16.mxu0 %v3030
      %3057 = vmatpush1.bf16.msra.mxu0 %v3029
      %3058 = vmatprep.subr.bf16.mxu0 0
      %3059 = vmatpush2.bf16.msra.mxu0 0
      %3060 = vmatprep.subr.bf16.mxu0 0
      %3061 = vmatpush2.bf16.msra.mxu0 0
      %3062 = vmatprep.subr.bf16.mxu0 0
      %3063 = vmatpush2.bf16.msra.mxu0 0
      %3064 = vmatprep.subr.bf16.mxu0 0
      %3065 = vmatpush2.bf16.msra.mxu0 0
      %3066 = vmatprep.subr.bf16.mxu0 0
      %3067 = vmatpush2.bf16.msra.mxu0 0
      %3068 = vmatprep.subr.bf16.mxu0 0
      %3069 = vmatpush2.bf16.msra.mxu0 0
      %3070 = vmatprep.subr.bf16.mxu0 0
      %3071 = vmatpush2.bf16.msra.mxu0 0
      %3072 = vmatprep.subr.bf16.mxu0 0
      %3073 = vmatpush2.bf16.msra.mxu0 0
      %3074 = vmatprep.mubr.bf16.mxu0 0
      %3075 = vmatmul.mubr.bf16.gmra.mxu0 %v3034
      %v3076 = vpop.f32.mrf.mxu0
      %v3077 = vadd.f32 0.0, %v3076
      %v3078 = vpop.f32.mrf.mxu0
      %v3079 = vadd.f32 0.0, %v3078
      %v3080 = vpop.f32.mrf.mxu0
      %v3081 = vpop.f32.mrf.mxu0
      %3082 = vdwg.mxu0
      %v3084 = vsel %vm1197, %v2993, 0
      %v3087 = vsel %vm603, %v2996, 0
      %v3090 = vsel %vm603, %v2997, 0
      %3092 = vmatprep.subr.bf16.mxu0 0
      %3093 = vmatpush1.bf16.msra.mxu0 0
      %3094 = vmatprep.subr.bf16.mxu0 0
      %3095 = vmatpush1.bf16.msra.mxu0 0
      %3096 = vmatprep.subr.bf16.mxu0 0
      %3097 = vmatpush1.bf16.msra.mxu0 0
      %3098 = vmatprep.subr.bf16.mxu0 0
      %3099 = vmatpush1.bf16.msra.mxu0 0
      %3100 = vmatprep.subr.bf16.mxu0 0
      %3101 = vmatpush1.bf16.msra.mxu0 0
      %3102 = vmatprep.subr.bf16.mxu0 0
      %3103 = vmatpush1.bf16.msra.mxu0 0
      %3104 = vmatprep.subr.bf16.mxu0 %v3090
      %3105 = vmatpush1.bf16.msra.mxu0 %v3087
      %3106 = vmatprep.subr.bf16.mxu0 %v2995
      %3107 = vmatpush1.bf16.msra.mxu0 %v2994
      %3108 = vmatprep.subr.bf16.mxu0 0
      %3109 = vmatpush2.bf16.msra.mxu0 0
      %3110 = vmatprep.subr.bf16.mxu0 0
      %3111 = vmatpush2.bf16.msra.mxu0 0
      %3112 = vmatprep.subr.bf16.mxu0 0
      %3113 = vmatpush2.bf16.msra.mxu0 0
      %3114 = vmatprep.subr.bf16.mxu0 0
      %3115 = vmatpush2.bf16.msra.mxu0 0
      %3116 = vmatprep.subr.bf16.mxu0 0
      %3117 = vmatpush2.bf16.msra.mxu0 0
      %3118 = vmatprep.subr.bf16.mxu0 0
      %3119 = vmatpush2.bf16.msra.mxu0 0
      %3120 = vmatprep.subr.bf16.mxu0 0
      %3121 = vmatpush2.bf16.msra.mxu0 0
      %3122 = vmatprep.subr.bf16.mxu0 0
      %3123 = vmatpush2.bf16.msra.mxu0 0
      %3124 = vmatprep.mubr.bf16.mxu0 0
      %3125 = vmatmul.mubr.bf16.gmra.mxu0 %v3084
      %v3126 = vpop.f32.mrf.mxu0
      %v3127 = vadd.f32 %v3077, %v3126
      %v3128 = vpop.f32.mrf.mxu0
      %v3129 = vadd.f32 %v3079, %v3128
      %v3130 = vpop.f32.mrf.mxu0
      %v3131 = vpop.f32.mrf.mxu0
      %3132 = vdwg.mxu0
      %3133 = vrot.lane.b32.xlu0 %v2032, 15
      %v3134 = vpop.permute.xlu0 %3133
      %3135 = vrot.lane.b32.xlu0 %v2913, 15
      %v3136 = vpop.permute.xlu0 %3135
      %3137 = vrot.lane.b32.xlu0 %v2914, 15
      %v3138 = vpop.permute.xlu0 %3137
      %3139 = vrot.lane.b32.xlu0 %v2033, 15
      %v3140 = vpop.permute.xlu0 %3139
      %3141 = vrot.lane.b32.xlu0 %v2927, 15
      %v3142 = vpop.permute.xlu0 %3141
      %3143 = vrot.lane.b32.xlu0 %v2928, 15
      %v3144 = vpop.permute.xlu0 %3143
      %vm3145 = vcmp.lt.s32.totalorder %v1223, 15
      %v3146 = vsel %vm3145, %v3134, %v3140
      %v3147 = vsel %vm3145, %v3136, %v3142
      %v3148 = vsel %vm3145, %v3138, %v3144
      %v3149 = vsel %vm3145, %v3140, %v3134
      %v3150 = vsel %vm3145, %v3142, %v3136
      %v3151 = vsel %vm3145, %v3144, %v3138
      %vm3152 = vmand %vm2956, %vm2958
      %vm3153 = vmand %vm2957, %vm2959
      %v3154 = vsel %vm3152, 1, 0
      %v3155 = vsel %vm3153, 1, 0
      %vm3156 = vcmp.eq.s32.totalorder %v3154, 1
      %vm3157 = vcmp.eq.s32.totalorder %v3155, 1
      %v3158 = vsel %vm3156, %v3149, 0.0
      %v3159 = vsel %vm3157, %v3146, 0.0
      %v3160 = vsel %vm3156, %v3150, 0.0
      %v3161 = vsel %vm3157, %v3147, 0.0
      %v3162 = vsel %vm3156, %v3151, 0.0
      %v3163 = vsel %vm3157, %v3148, 0.0
      %s3164 = scalar_lea.vmem %s9, 8
      %v3165 = vld [vmem:[%s3164] sm:$0xf]
      %v3166 = vpack.c.bf16 %v3160, %v3158
      %v3167 = vpack.c.bf16 %v3161, %v3159
      %v3168 = vpack.c.bf16 %v3162, %v3162
      %v3169 = vpack.c.bf16 %v3163, %v3163
      %v3171 = vsel %vm1197, %v3165, 0
      %v3174 = vsel %vm603, %v3168, 0
      %v3177 = vsel %vm603, %v3169, 0
      %3179 = vmatprep.subr.bf16.mxu0 0
      %3180 = vmatpush1.bf16.msra.mxu0 0
      %3181 = vmatprep.subr.bf16.mxu0 0
      %3182 = vmatpush1.bf16.msra.mxu0 0
      %3183 = vmatprep.subr.bf16.mxu0 0
      %3184 = vmatpush1.bf16.msra.mxu0 0
      %3185 = vmatprep.subr.bf16.mxu0 0
      %3186 = vmatpush1.bf16.msra.mxu0 0
      %3187 = vmatprep.subr.bf16.mxu0 0
      %3188 = vmatpush1.bf16.msra.mxu0 0
      %3189 = vmatprep.subr.bf16.mxu0 0
      %3190 = vmatpush1.bf16.msra.mxu0 0
      %3191 = vmatprep.subr.bf16.mxu0 %v3177
      %3192 = vmatpush1.bf16.msra.mxu0 %v3174
      %3193 = vmatprep.subr.bf16.mxu0 %v3167
      %3194 = vmatpush1.bf16.msra.mxu0 %v3166
      %3195 = vmatprep.subr.bf16.mxu0 0
      %3196 = vmatpush2.bf16.msra.mxu0 0
      %3197 = vmatprep.subr.bf16.mxu0 0
      %3198 = vmatpush2.bf16.msra.mxu0 0
      %3199 = vmatprep.subr.bf16.mxu0 0
      %3200 = vmatpush2.bf16.msra.mxu0 0
      %3201 = vmatprep.subr.bf16.mxu0 0
      %3202 = vmatpush2.bf16.msra.mxu0 0
      %3203 = vmatprep.subr.bf16.mxu0 0
      %3204 = vmatpush2.bf16.msra.mxu0 0
      %3205 = vmatprep.subr.bf16.mxu0 0
      %3206 = vmatpush2.bf16.msra.mxu0 0
      %3207 = vmatprep.subr.bf16.mxu0 0
      %3208 = vmatpush2.bf16.msra.mxu0 0
      %3209 = vmatprep.subr.bf16.mxu0 0
      %3210 = vmatpush2.bf16.msra.mxu0 0
      %3211 = vmatprep.mubr.bf16.mxu0 0
      %3212 = vmatmul.mubr.bf16.gmra.mxu0 %v3171
      %v3213 = vpop.f32.mrf.mxu0
      %v3214 = vadd.f32 0.0, %v3213
      %v3215 = vpop.f32.mrf.mxu0
      %v3216 = vadd.f32 0.0, %v3215
      %v3217 = vpop.f32.mrf.mxu0
      %v3218 = vpop.f32.mrf.mxu0
      %3219 = vdwg.mxu0
      %v3220 = vadd.f32 %v3127, %v3214
      %v3221 = vadd.f32 %v3129, %v3216
      %3222 = vrot.lane.b32.xlu0 %v2032, 1
      %v3223 = vpop.permute.xlu0 %3222
      %3224 = vrot.lane.b32.xlu0 %v2913, 1
      %v3225 = vpop.permute.xlu0 %3224
      %3226 = vrot.lane.b32.xlu0 %v2914, 1
      %v3227 = vpop.permute.xlu0 %3226
      %3228 = vrot.lane.b32.xlu0 %v2033, 1
      %v3229 = vpop.permute.xlu0 %3228
      %3230 = vrot.lane.b32.xlu0 %v2927, 1
      %v3231 = vpop.permute.xlu0 %3230
      %3232 = vrot.lane.b32.xlu0 %v2928, 1
      %v3233 = vpop.permute.xlu0 %3232
      %vm3234 = vcmp.lt.s32.totalorder %v1223, 1
      %v3235 = vsel %vm3234, %v3223, %v3229
      %v3236 = vsel %vm3234, %v3225, %v3231
      %v3237 = vsel %vm3234, %v3227, %v3233
      %v3238 = vsel %vm3234, %v3229, %v3223
      %v3239 = vsel %vm3234, %v3231, %v3225
      %v3240 = vsel %vm3234, %v3233, %v3227
      %v3241 = vsel %vm2954, 1, 0
      %v3242 = vsel %vm2955, 1, 0
      %vm3243 = vcmp.eq.s32.totalorder %v3241, 1
      %vm3244 = vcmp.eq.s32.totalorder %v3242, 1
      %v3245 = vsel %vm3243, %v3238, 0.0
      %v3246 = vsel %vm3244, %v3235, 0.0
      %v3247 = vsel %vm3243, %v3239, 0.0
      %v3248 = vsel %vm3244, %v3236, 0.0
      %v3249 = vsel %vm3243, %v3240, 0.0
      %v3250 = vsel %vm3244, %v3237, 0.0
      %s3251 = scalar_lea.vmem %s9, 12
      %v3252 = vld [vmem:[%s3251] sm:$0xf]
      %v3253 = vpack.c.bf16 %v3247, %v3245
      %v3254 = vpack.c.bf16 %v3248, %v3246
      %v3255 = vpack.c.bf16 %v3249, %v3249
      %v3256 = vpack.c.bf16 %v3250, %v3250
      %v3258 = vsel %vm1197, %v3252, 0
      %v3261 = vsel %vm603, %v3255, 0
      %v3264 = vsel %vm603, %v3256, 0
      %3266 = vmatprep.subr.bf16.mxu0 0
      %3267 = vmatpush1.bf16.msra.mxu0 0
      %3268 = vmatprep.subr.bf16.mxu0 0
      %3269 = vmatpush1.bf16.msra.mxu0 0
      %3270 = vmatprep.subr.bf16.mxu0 0
      %3271 = vmatpush1.bf16.msra.mxu0 0
      %3272 = vmatprep.subr.bf16.mxu0 0
      %3273 = vmatpush1.bf16.msra.mxu0 0
      %3274 = vmatprep.subr.bf16.mxu0 0
      %3275 = vmatpush1.bf16.msra.mxu0 0
      %3276 = vmatprep.subr.bf16.mxu0 0
      %3277 = vmatpush1.bf16.msra.mxu0 0
      %3278 = vmatprep.subr.bf16.mxu0 %v3264
      %3279 = vmatpush1.bf16.msra.mxu0 %v3261
      %3280 = vmatprep.subr.bf16.mxu0 %v3254
      %3281 = vmatpush1.bf16.msra.mxu0 %v3253
      %3282 = vmatprep.subr.bf16.mxu0 0
      %3283 = vmatpush2.bf16.msra.mxu0 0
      %3284 = vmatprep.subr.bf16.mxu0 0
      %3285 = vmatpush2.bf16.msra.mxu0 0
      %3286 = vmatprep.subr.bf16.mxu0 0
      %3287 = vmatpush2.bf16.msra.mxu0 0
      %3288 = vmatprep.subr.bf16.mxu0 0
      %3289 = vmatpush2.bf16.msra.mxu0 0
      %3290 = vmatprep.subr.bf16.mxu0 0
      %3291 = vmatpush2.bf16.msra.mxu0 0
      %3292 = vmatprep.subr.bf16.mxu0 0
      %3293 = vmatpush2.bf16.msra.mxu0 0
      %3294 = vmatprep.subr.bf16.mxu0 0
      %3295 = vmatpush2.bf16.msra.mxu0 0
      %3296 = vmatprep.subr.bf16.mxu0 0
      %3297 = vmatpush2.bf16.msra.mxu0 0
      %3298 = vmatprep.mubr.bf16.mxu0 0
      %3299 = vmatmul.mubr.bf16.gmra.mxu0 %v3258
      %v3300 = vpop.f32.mrf.mxu0
      %v3301 = vadd.f32 0.0, %v3300
      %v3302 = vpop.f32.mrf.mxu0
      %v3303 = vadd.f32 0.0, %v3302
      %v3304 = vpop.f32.mrf.mxu0
      %v3305 = vpop.f32.mrf.mxu0
      %3306 = vdwg.mxu0
      %v3307 = vadd.f32 %v3220, %v3301
      %v3308 = vadd.f32 %v3221, %v3303
      %s3309 = scalar_lea.vmem %s9, 16
      %v3310 = vld [vmem:[%s3309] sm:$0xf]
      %v3311 = vpack.c.bf16 %v2913, %v2032
      %v3312 = vpack.c.bf16 %v2927, %v2033
      %v3313 = vpack.c.bf16 %v2914, %v2914
      %v3314 = vpack.c.bf16 %v2928, %v2928
      %v3316 = vsel %vm1197, %v3310, 0
      %v3319 = vsel %vm603, %v3313, 0
      %v3322 = vsel %vm603, %v3314, 0
      %3324 = vmatprep.subr.bf16.mxu0 0
      %3325 = vmatpush1.bf16.msra.mxu0 0
      %3326 = vmatprep.subr.bf16.mxu0 0
      %3327 = vmatpush1.bf16.msra.mxu0 0
      %3328 = vmatprep.subr.bf16.mxu0 0
      %3329 = vmatpush1.bf16.msra.mxu0 0
      %3330 = vmatprep.subr.bf16.mxu0 0
      %3331 = vmatpush1.bf16.msra.mxu0 0
      %3332 = vmatprep.subr.bf16.mxu0 0
      %3333 = vmatpush1.bf16.msra.mxu0 0
      %3334 = vmatprep.subr.bf16.mxu0 0
      %3335 = vmatpush1.bf16.msra.mxu0 0
      %3336 = vmatprep.subr.bf16.mxu0 %v3322
      %3337 = vmatpush1.bf16.msra.mxu0 %v3319
      %3338 = vmatprep.subr.bf16.mxu0 %v3312
      %3339 = vmatpush1.bf16.msra.mxu0 %v3311
      %3340 = vmatprep.subr.bf16.mxu0 0
      %3341 = vmatpush2.bf16.msra.mxu0 0
      %3342 = vmatprep.subr.bf16.mxu0 0
      %3343 = vmatpush2.bf16.msra.mxu0 0
      %3344 = vmatprep.subr.bf16.mxu0 0
      %3345 = vmatpush2.bf16.msra.mxu0 0
      %3346 = vmatprep.subr.bf16.mxu0 0
      %3347 = vmatpush2.bf16.msra.mxu0 0
      %3348 = vmatprep.subr.bf16.mxu0 0
      %3349 = vmatpush2.bf16.msra.mxu0 0
      %3350 = vmatprep.subr.bf16.mxu0 0
      %3351 = vmatpush2.bf16.msra.mxu0 0
      %3352 = vmatprep.subr.bf16.mxu0 0
      %3353 = vmatpush2.bf16.msra.mxu0 0
      %3354 = vmatprep.subr.bf16.mxu0 0
      %3355 = vmatpush2.bf16.msra.mxu0 0
      %3356 = vmatprep.mubr.bf16.mxu0 0
      %3357 = vmatmul.mubr.bf16.gmra.mxu0 %v3316
      %v3358 = vpop.f32.mrf.mxu0
      %v3359 = vadd.f32 0.0, %v3358
      %v3360 = vpop.f32.mrf.mxu0
      %v3361 = vadd.f32 0.0, %v3360
      %v3362 = vpop.f32.mrf.mxu0
      %v3363 = vpop.f32.mrf.mxu0
      %3364 = vdwg.mxu0
      %v3365 = vadd.f32 %v3307, %v3359
      %v3366 = vadd.f32 %v3308, %v3361
      %3367 = vrot.lane.b32.xlu0 %v2032, 127
      %v3368 = vpop.permute.xlu0 %3367
      %3369 = vrot.lane.b32.xlu0 %v2913, 127
      %v3370 = vpop.permute.xlu0 %3369
      %3371 = vrot.lane.b32.xlu0 %v2914, 127
      %v3372 = vpop.permute.xlu0 %3371
      %3373 = vrot.lane.b32.xlu0 %v2033, 127
      %v3374 = vpop.permute.xlu0 %3373
      %3375 = vrot.lane.b32.xlu0 %v2927, 127
      %v3376 = vpop.permute.xlu0 %3375
      %3377 = vrot.lane.b32.xlu0 %v2928, 127
      %v3378 = vpop.permute.xlu0 %3377
      %vm3379 = vcmp.lt.s32.totalorder %v1223, 127
      %v3380 = vsel %vm3379, %v3368, %v3374
      %v3381 = vsel %vm3379, %v3370, %v3376
      %v3382 = vsel %vm3379, %v3372, %v3378
      %v3383 = vsel %vm3379, %v3374, %v3368
      %v3384 = vsel %vm3379, %v3376, %v3370
      %v3385 = vsel %vm3379, %v3378, %v3372
      %v3386 = vsel %vm2956, 1, 0
      %v3387 = vsel %vm2957, 1, 0
      %vm3388 = vcmp.eq.s32.totalorder %v3386, 1
      %vm3389 = vcmp.eq.s32.totalorder %v3387, 1
      %v3390 = vsel %vm3388, %v3380, 0.0
      %v3391 = vsel %vm3389, %v3383, 0.0
      %v3392 = vsel %vm3388, %v3381, 0.0
      %v3393 = vsel %vm3389, %v3384, 0.0
      %v3394 = vsel %vm3388, %v3382, 0.0
      %v3395 = vsel %vm3389, %v3385, 0.0
      %s3396 = scalar_lea.vmem %s9, 20
      %v3397 = vld [vmem:[%s3396] sm:$0xf]
      %v3398 = vpack.c.bf16 %v3392, %v3390
      %v3399 = vpack.c.bf16 %v3393, %v3391
      %v3400 = vpack.c.bf16 %v3394, %v3394
      %v3401 = vpack.c.bf16 %v3395, %v3395
      %v3403 = vsel %vm1197, %v3397, 0
      %v3406 = vsel %vm603, %v3400, 0
      %v3409 = vsel %vm603, %v3401, 0
      %3411 = vmatprep.subr.bf16.mxu0 0
      %3412 = vmatpush1.bf16.msra.mxu0 0
      %3413 = vmatprep.subr.bf16.mxu0 0
      %3414 = vmatpush1.bf16.msra.mxu0 0
      %3415 = vmatprep.subr.bf16.mxu0 0
      %3416 = vmatpush1.bf16.msra.mxu0 0
      %3417 = vmatprep.subr.bf16.mxu0 0
      %3418 = vmatpush1.bf16.msra.mxu0 0
      %3419 = vmatprep.subr.bf16.mxu0 0
      %3420 = vmatpush1.bf16.msra.mxu0 0
      %3421 = vmatprep.subr.bf16.mxu0 0
      %3422 = vmatpush1.bf16.msra.mxu0 0
      %3423 = vmatprep.subr.bf16.mxu0 %v3409
      %3424 = vmatpush1.bf16.msra.mxu0 %v3406
      %3425 = vmatprep.subr.bf16.mxu0 %v3399
      %3426 = vmatpush1.bf16.msra.mxu0 %v3398
      %3427 = vmatprep.subr.bf16.mxu0 0
      %3428 = vmatpush2.bf16.msra.mxu0 0
      %3429 = vmatprep.subr.bf16.mxu0 0
      %3430 = vmatpush2.bf16.msra.mxu0 0
      %3431 = vmatprep.subr.bf16.mxu0 0
      %3432 = vmatpush2.bf16.msra.mxu0 0
      %3433 = vmatprep.subr.bf16.mxu0 0
      %3434 = vmatpush2.bf16.msra.mxu0 0
      %3435 = vmatprep.subr.bf16.mxu0 0
      %3436 = vmatpush2.bf16.msra.mxu0 0
      %3437 = vmatprep.subr.bf16.mxu0 0
      %3438 = vmatpush2.bf16.msra.mxu0 0
      %3439 = vmatprep.subr.bf16.mxu0 0
      %3440 = vmatpush2.bf16.msra.mxu0 0
      %3441 = vmatprep.subr.bf16.mxu0 0
      %3442 = vmatpush2.bf16.msra.mxu0 0
      %3443 = vmatprep.mubr.bf16.mxu0 0
      %3444 = vmatmul.mubr.bf16.gmra.mxu0 %v3403
      %v3445 = vpop.f32.mrf.mxu0
      %v3446 = vadd.f32 0.0, %v3445
      %v3447 = vpop.f32.mrf.mxu0
      %v3448 = vadd.f32 0.0, %v3447
      %v3449 = vpop.f32.mrf.mxu0
      %v3450 = vpop.f32.mrf.mxu0
      %3451 = vdwg.mxu0
      %v3452 = vadd.f32 %v3365, %v3446
      %v3453 = vadd.f32 %v3366, %v3448
      %3454 = vrot.lane.b32.xlu0 %v2032, 113
      %v3455 = vpop.permute.xlu0 %3454
      %3456 = vrot.lane.b32.xlu0 %v2913, 113
      %v3457 = vpop.permute.xlu0 %3456
      %3458 = vrot.lane.b32.xlu0 %v2914, 113
      %v3459 = vpop.permute.xlu0 %3458
      %3460 = vrot.lane.b32.xlu0 %v2033, 113
      %v3461 = vpop.permute.xlu0 %3460
      %3462 = vrot.lane.b32.xlu0 %v2927, 113
      %v3463 = vpop.permute.xlu0 %3462
      %3464 = vrot.lane.b32.xlu0 %v2928, 113
      %v3465 = vpop.permute.xlu0 %3464
      %vm3466 = vcmp.lt.s32.totalorder %v1223, 113
      %v3467 = vsel %vm3466, %v3455, %v3461
      %v3468 = vsel %vm3466, %v3457, %v3463
      %v3469 = vsel %vm3466, %v3459, %v3465
      %v3470 = vsel %vm3466, %v3461, %v3455
      %v3471 = vsel %vm3466, %v3463, %v3457
      %v3472 = vsel %vm3466, %v3465, %v3459
      %vm3473 = vmand %vm2954, %vm2960
      %vm3474 = vmand %vm2955, %vm2961
      %v3475 = vsel %vm3473, 1, 0
      %v3476 = vsel %vm3474, 1, 0
      %vm3477 = vcmp.eq.s32.totalorder %v3475, 1
      %vm3478 = vcmp.eq.s32.totalorder %v3476, 1
      %v3479 = vsel %vm3477, %v3467, 0.0
      %v3480 = vsel %vm3478, %v3470, 0.0
      %v3481 = vsel %vm3477, %v3468, 0.0
      %v3482 = vsel %vm3478, %v3471, 0.0
      %v3483 = vsel %vm3477, %v3469, 0.0
      %v3484 = vsel %vm3478, %v3472, 0.0
      %s3485 = scalar_lea.vmem %s9, 24
      %v3486 = vld [vmem:[%s3485] sm:$0xf]
      %v3487 = vpack.c.bf16 %v3481, %v3479
      %v3488 = vpack.c.bf16 %v3482, %v3480
      %v3489 = vpack.c.bf16 %v3483, %v3483
      %v3490 = vpack.c.bf16 %v3484, %v3484
      %v3492 = vsel %vm1197, %v3486, 0
      %v3495 = vsel %vm603, %v3489, 0
      %v3498 = vsel %vm603, %v3490, 0
      %3500 = vmatprep.subr.bf16.mxu0 0
      %3501 = vmatpush1.bf16.msra.mxu0 0
      %3502 = vmatprep.subr.bf16.mxu0 0
      %3503 = vmatpush1.bf16.msra.mxu0 0
      %3504 = vmatprep.subr.bf16.mxu0 0
      %3505 = vmatpush1.bf16.msra.mxu0 0
      %3506 = vmatprep.subr.bf16.mxu0 0
      %3507 = vmatpush1.bf16.msra.mxu0 0
      %3508 = vmatprep.subr.bf16.mxu0 0
      %3509 = vmatpush1.bf16.msra.mxu0 0
      %3510 = vmatprep.subr.bf16.mxu0 0
      %3511 = vmatpush1.bf16.msra.mxu0 0
      %3512 = vmatprep.subr.bf16.mxu0 %v3498
      %3513 = vmatpush1.bf16.msra.mxu0 %v3495
      %3514 = vmatprep.subr.bf16.mxu0 %v3488
      %3515 = vmatpush1.bf16.msra.mxu0 %v3487
      %3516 = vmatprep.subr.bf16.mxu0 0
      %3517 = vmatpush2.bf16.msra.mxu0 0
      %3518 = vmatprep.subr.bf16.mxu0 0
      %3519 = vmatpush2.bf16.msra.mxu0 0
      %3520 = vmatprep.subr.bf16.mxu0 0
      %3521 = vmatpush2.bf16.msra.mxu0 0
      %3522 = vmatprep.subr.bf16.mxu0 0
      %3523 = vmatpush2.bf16.msra.mxu0 0
      %3524 = vmatprep.subr.bf16.mxu0 0
      %3525 = vmatpush2.bf16.msra.mxu0 0
      %3526 = vmatprep.subr.bf16.mxu0 0
      %3527 = vmatpush2.bf16.msra.mxu0 0
      %3528 = vmatprep.subr.bf16.mxu0 0
      %3529 = vmatpush2.bf16.msra.mxu0 0
      %3530 = vmatprep.subr.bf16.mxu0 0
      %3531 = vmatpush2.bf16.msra.mxu0 0
      %3532 = vmatprep.mubr.bf16.mxu0 0
      %3533 = vmatmul.mubr.bf16.gmra.mxu0 %v3492
      %v3534 = vpop.f32.mrf.mxu0
      %v3535 = vadd.f32 0.0, %v3534
      %v3536 = vpop.f32.mrf.mxu0
      %v3537 = vadd.f32 0.0, %v3536
      %v3538 = vpop.f32.mrf.mxu0
      %v3539 = vpop.f32.mrf.mxu0
      %3540 = vdwg.mxu0
      %v3541 = vadd.f32 %v3452, %v3535
      %v3542 = vadd.f32 %v3453, %v3537
      %3543 = vrot.lane.b32.xlu0 %v2032, 112
      %v3544 = vpop.permute.xlu0 %3543
      %3545 = vrot.lane.b32.xlu0 %v2913, 112
      %v3546 = vpop.permute.xlu0 %3545
      %3547 = vrot.lane.b32.xlu0 %v2914, 112
      %v3548 = vpop.permute.xlu0 %3547
      %3549 = vrot.lane.b32.xlu0 %v2033, 112
      %v3550 = vpop.permute.xlu0 %3549
      %3551 = vrot.lane.b32.xlu0 %v2927, 112
      %v3552 = vpop.permute.xlu0 %3551
      %3553 = vrot.lane.b32.xlu0 %v2928, 112
      %v3554 = vpop.permute.xlu0 %3553
      %vm3555 = vcmp.lt.s32.totalorder %v1223, 112
      %v3556 = vsel %vm3555, %v3544, %v3550
      %v3557 = vsel %vm3555, %v3546, %v3552
      %v3558 = vsel %vm3555, %v3548, %v3554
      %v3559 = vsel %vm3555, %v3550, %v3544
      %v3560 = vsel %vm3555, %v3552, %v3546
      %v3561 = vsel %vm3555, %v3554, %v3548
      %v3562 = vsel %vm2960, 1, 0
      %v3563 = vsel %vm2961, 1, 0
      %vm3564 = vcmp.eq.s32.totalorder %v3562, 1
      %vm3565 = vcmp.eq.s32.totalorder %v3563, 1
      %v3566 = vsel %vm3564, %v3556, 0.0
      %v3567 = vsel %vm3565, %v3559, 0.0
      %v3568 = vsel %vm3564, %v3557, 0.0
      %v3569 = vsel %vm3565, %v3560, 0.0
      %v3570 = vsel %vm3564, %v3558, 0.0
      %v3571 = vsel %vm3565, %v3561, 0.0
      %s3572 = scalar_lea.vmem %s9, 28
      %v3573 = vld [vmem:[%s3572] sm:$0xf]
      %v3574 = vpack.c.bf16 %v3568, %v3566
      %v3575 = vpack.c.bf16 %v3569, %v3567
      %v3576 = vpack.c.bf16 %v3570, %v3570
      %v3577 = vpack.c.bf16 %v3571, %v3571
      %v3579 = vsel %vm1197, %v3573, 0
      %v3582 = vsel %vm603, %v3576, 0
      %v3585 = vsel %vm603, %v3577, 0
      %3587 = vmatprep.subr.bf16.mxu0 0
      %3588 = vmatpush1.bf16.msra.mxu0 0
      %3589 = vmatprep.subr.bf16.mxu0 0
      %3590 = vmatpush1.bf16.msra.mxu0 0
      %3591 = vmatprep.subr.bf16.mxu0 0
      %3592 = vmatpush1.bf16.msra.mxu0 0
      %3593 = vmatprep.subr.bf16.mxu0 0
      %3594 = vmatpush1.bf16.msra.mxu0 0
      %3595 = vmatprep.subr.bf16.mxu0 0
      %3596 = vmatpush1.bf16.msra.mxu0 0
      %3597 = vmatprep.subr.bf16.mxu0 0
      %3598 = vmatpush1.bf16.msra.mxu0 0
      %3599 = vmatprep.subr.bf16.mxu0 %v3585
      %3600 = vmatpush1.bf16.msra.mxu0 %v3582
      %3601 = vmatprep.subr.bf16.mxu0 %v3575
      %3602 = vmatpush1.bf16.msra.mxu0 %v3574
      %3603 = vmatprep.subr.bf16.mxu0 0
      %3604 = vmatpush2.bf16.msra.mxu0 0
      %3605 = vmatprep.subr.bf16.mxu0 0
      %3606 = vmatpush2.bf16.msra.mxu0 0
      %3607 = vmatprep.subr.bf16.mxu0 0
      %3608 = vmatpush2.bf16.msra.mxu0 0
      %3609 = vmatprep.subr.bf16.mxu0 0
      %3610 = vmatpush2.bf16.msra.mxu0 0
      %3611 = vmatprep.subr.bf16.mxu0 0
      %3612 = vmatpush2.bf16.msra.mxu0 0
      %3613 = vmatprep.subr.bf16.mxu0 0
      %3614 = vmatpush2.bf16.msra.mxu0 0
      %3615 = vmatprep.subr.bf16.mxu0 0
      %3616 = vmatpush2.bf16.msra.mxu0 0
      %3617 = vmatprep.subr.bf16.mxu0 0
      %3618 = vmatpush2.bf16.msra.mxu0 0
      %3619 = vmatprep.mubr.bf16.mxu0 0
      %3620 = vmatmul.mubr.bf16.gmra.mxu0 %v3579
      %v3621 = vpop.f32.mrf.mxu0
      %v3622 = vadd.f32 0.0, %v3621
      %v3623 = vpop.f32.mrf.mxu0
      %v3624 = vadd.f32 0.0, %v3623
      %v3625 = vpop.f32.mrf.mxu0
      %v3626 = vpop.f32.mrf.mxu0
      %3627 = vdwg.mxu0
      %v3628 = vadd.f32 %v3541, %v3622
      %v3629 = vadd.f32 %v3542, %v3624
      %3630 = vrot.lane.b32.xlu0 %v2032, 111
      %v3631 = vpop.permute.xlu0 %3630
      %3632 = vrot.lane.b32.xlu0 %v2913, 111
      %v3633 = vpop.permute.xlu0 %3632
      %3634 = vrot.lane.b32.xlu0 %v2914, 111
      %v3635 = vpop.permute.xlu0 %3634
      %3636 = vrot.lane.b32.xlu0 %v2033, 111
      %v3637 = vpop.permute.xlu0 %3636
      %3638 = vrot.lane.b32.xlu0 %v2927, 111
      %v3639 = vpop.permute.xlu0 %3638
      %3640 = vrot.lane.b32.xlu0 %v2928, 111
      %v3641 = vpop.permute.xlu0 %3640
      %vm3642 = vcmp.lt.s32.totalorder %v1223, 111
      %v3643 = vsel %vm3642, %v3631, %v3637
      %v3644 = vsel %vm3642, %v3633, %v3639
      %v3645 = vsel %vm3642, %v3635, %v3641
      %v3646 = vsel %vm3642, %v3637, %v3631
      %v3647 = vsel %vm3642, %v3639, %v3633
      %v3648 = vsel %vm3642, %v3641, %v3635
      %vm3649 = vmand %vm2956, %vm2960
      %vm3650 = vmand %vm2957, %vm2961
      %v3651 = vsel %vm3649, 1, 0
      %v3652 = vsel %vm3650, 1, 0
      %vm3653 = vcmp.eq.s32.totalorder %v3651, 1
      %vm3654 = vcmp.eq.s32.totalorder %v3652, 1
      %v3655 = vsel %vm3653, %v3643, 0.0
      %v3656 = vsel %vm3654, %v3646, 0.0
      %v3657 = vsel %vm3653, %v3644, 0.0
      %v3658 = vsel %vm3654, %v3647, 0.0
      %v3659 = vsel %vm3653, %v3645, 0.0
      %v3660 = vsel %vm3654, %v3648, 0.0
      %s3661 = scalar_lea.vmem %s9, 32
      %v3662 = vld [vmem:[%s3661] sm:$0xf]
      %v3663 = vpack.c.bf16 %v3657, %v3655
      %v3664 = vpack.c.bf16 %v3658, %v3656
      %v3665 = vpack.c.bf16 %v3659, %v3659
      %v3666 = vpack.c.bf16 %v3660, %v3660
      %v3668 = vsel %vm1197, %v3662, 0
      %v3671 = vsel %vm603, %v3665, 0
      %v3674 = vsel %vm603, %v3666, 0
      %3676 = vmatprep.subr.bf16.mxu0 0
      %3677 = vmatpush1.bf16.msra.mxu0 0
      %3678 = vmatprep.subr.bf16.mxu0 0
      %3679 = vmatpush1.bf16.msra.mxu0 0
      %3680 = vmatprep.subr.bf16.mxu0 0
      %3681 = vmatpush1.bf16.msra.mxu0 0
      %3682 = vmatprep.subr.bf16.mxu0 0
      %3683 = vmatpush1.bf16.msra.mxu0 0
      %3684 = vmatprep.subr.bf16.mxu0 0
      %3685 = vmatpush1.bf16.msra.mxu0 0
      %3686 = vmatprep.subr.bf16.mxu0 0
      %3687 = vmatpush1.bf16.msra.mxu0 0
      %3688 = vmatprep.subr.bf16.mxu0 %v3674
      %3689 = vmatpush1.bf16.msra.mxu0 %v3671
      %3690 = vmatprep.subr.bf16.mxu0 %v3664
      %3691 = vmatpush1.bf16.msra.mxu0 %v3663
      %3692 = vmatprep.subr.bf16.mxu0 0
      %3693 = vmatpush2.bf16.msra.mxu0 0
      %3694 = vmatprep.subr.bf16.mxu0 0
      %3695 = vmatpush2.bf16.msra.mxu0 0
      %3696 = vmatprep.subr.bf16.mxu0 0
      %3697 = vmatpush2.bf16.msra.mxu0 0
      %3698 = vmatprep.subr.bf16.mxu0 0
      %3699 = vmatpush2.bf16.msra.mxu0 0
      %3700 = vmatprep.subr.bf16.mxu0 0
      %3701 = vmatpush2.bf16.msra.mxu0 0
      %3702 = vmatprep.subr.bf16.mxu0 0
      %3703 = vmatpush2.bf16.msra.mxu0 0
      %3704 = vmatprep.subr.bf16.mxu0 0
      %3705 = vmatpush2.bf16.msra.mxu0 0
      %3706 = vmatprep.subr.bf16.mxu0 0
      %3707 = vmatpush2.bf16.msra.mxu0 0
      %3708 = vmatprep.mubr.bf16.mxu0 0
      %3709 = vmatmul.mubr.bf16.gmra.mxu0 %v3668
      %v3710 = vpop.f32.mrf.mxu0
      %v3711 = vadd.f32 0.0, %v3710
      %v3712 = vpop.f32.mrf.mxu0
      %v3713 = vadd.f32 0.0, %v3712
      %v3714 = vpop.f32.mrf.mxu0
      %v3715 = vpop.f32.mrf.mxu0
      %3716 = vdwg.mxu0
      %v3717 = vadd.f32 %v3628, %v3711
      %v3718 = vadd.f32 %v3629, %v3713
      %3720 = vset.pattern.permute.xlu0 0
      %3721 = vperm.xlu0 %3720, %v2035
      %v3722 = vpop.permute.xlu0 %3721
      %v3724 = vadd.f32 %v3717, %v3722
      %v3725 = vadd.f32 %v3718, %v3722
      %v3726 = vxor.u32 %v3724, 2147483648
      %v3727 = vxor.u32 %v3725, 2147483648
      %v3728 = vmul.f32 %v3726, 1.442695
      %v3729 = vpow.pop %v3728
      %v3730 = vmul.f32 %v3727, 1.442695
      %v3731 = vpow.pop %v3730
      %v3732 = vadd.f32 %v3729, 1.0
      %v3733 = vadd.f32 %v3731, 1.0
      %v3734 = vrcp.pop %v3732
      %v3735 = vmul.f32 1.0, %v3734
      %v3736 = vrcp.pop %v3733
      %v3737 = vmul.f32 1.0, %v3736
      %v3738 = vmul.f32 %v3724, %v3735
      %v3739 = vmul.f32 %v3725, %v3737
      %3740 = vst [vmem:[%s574] sm:$0xff] %v3738
      %3741 = vst [vmem:[%s574 + $0x8] sm:$0xff] %v3739
      %v3742 = vld [vmem:[%s564] sm:$0xff]
      %v3743 = vld [vmem:[%s564 + $0x8] sm:$0xff]
      %v3744 = vld [vmem:[%s564 + $0x10] sm:$0xff]
      %v3745 = vld [vmem:[%s564 + $0x18] sm:$0xff]
      %v3746 = vld [vmem:[%s6] sm:$0xff]
      %v3747 = vld [vmem:[%s6 + $0x8] sm:$0xff]
      %v3748 = vld [vmem:[%s12] sm:$0xf]
      %v3750 = vsel %vm1192, %v3738, 0
      %3752 = vmatprep.subr.mxu0 0.0
      %3753 = vmatpush1.msra.mxu0 0.0
      %3754 = vmatprep.subr.mxu0 0.0
      %3755 = vmatpush1.msra.mxu0 0.0
      %3756 = vmatprep.subr.mxu0 0.0
      %3757 = vmatpush1.msra.mxu0 0.0
      %3758 = vmatprep.subr.mxu0 0.0
      %3759 = vmatpush1.msra.mxu0 0.0
      %3760 = vmatprep.subr.mxu0 0.0
      %3761 = vmatpush1.msra.mxu0 0.0
      %3762 = vmatprep.subr.mxu0 0.0
      %3763 = vmatpush1.msra.mxu0 0.0
      %3764 = vmatprep.subr.mxu0 0.0
      %3765 = vmatpush1.msra.mxu0 0.0
      %3766 = vmatprep.subr.mxu0 0.0
      %3767 = vmatpush1.msra.mxu0 0.0
      %3768 = vmatprep.subr.mxu0 0.0
      %3769 = vmatpush1.msra.mxu0 0.0
      %3770 = vmatprep.subr.mxu0 0.0
      %3771 = vmatpush1.msra.mxu0 0.0
      %3772 = vmatprep.subr.mxu0 0.0
      %3773 = vmatpush1.msra.mxu0 0.0
      %3774 = vmatprep.subr.mxu0 0.0
      %3775 = vmatpush1.msra.mxu0 0.0
      %3776 = vmatprep.subr.mxu0 0.0
      %3777 = vmatpush1.msra.mxu0 0.0
      %3778 = vmatprep.subr.mxu0 0.0
      %3779 = vmatpush1.msra.mxu0 0.0
      %3780 = vmatprep.subr.mxu0 0.0
      %3781 = vmatpush1.msra.mxu0 %v3747
      %3782 = vmatprep.subr.mxu0 0.0
      %3783 = vmatpush1.msra.mxu0 %v3746
      %3784 = vmatprep.subr.mxu0 0.0
      %3785 = vmatpush2.msra.mxu0 0.0
      %3786 = vmatprep.subr.mxu0 0.0
      %3787 = vmatpush2.msra.mxu0 0.0
      %3788 = vmatprep.subr.mxu0 0.0
      %3789 = vmatpush2.msra.mxu0 0.0
      %3790 = vmatprep.subr.mxu0 0.0
      %3791 = vmatpush2.msra.mxu0 0.0
      %3792 = vmatprep.subr.mxu0 0.0
      %3793 = vmatpush2.msra.mxu0 0.0
      %3794 = vmatprep.subr.mxu0 0.0
      %3795 = vmatpush2.msra.mxu0 0.0
      %3796 = vmatprep.subr.mxu0 0.0
      %3797 = vmatpush2.msra.mxu0 0.0
      %3798 = vmatprep.subr.mxu0 0.0
      %3799 = vmatpush2.msra.mxu0 0.0
      %3800 = vmatprep.subr.mxu0 0.0
      %3801 = vmatpush2.msra.mxu0 0.0
      %3802 = vmatprep.subr.mxu0 0.0
      %3803 = vmatpush2.msra.mxu0 0.0
      %3804 = vmatprep.subr.mxu0 0.0
      %3805 = vmatpush2.msra.mxu0 0.0
      %3806 = vmatprep.subr.mxu0 0.0
      %3807 = vmatpush2.msra.mxu0 0.0
      %3808 = vmatprep.subr.mxu0 0.0
      %3809 = vmatpush2.msra.mxu0 0.0
      %3810 = vmatprep.subr.mxu0 0.0
      %3811 = vmatpush2.msra.mxu0 0.0
      %3812 = vmatprep.subr.mxu0 0.0
      %3813 = vmatpush2.msra.mxu0 0.0
      %3814 = vmatprep.subr.mxu0 0.0
      %3815 = vmatpush2.msra.mxu0 0.0
      %3816 = vmatprep.mubr.f32.mxu0 0.0
      %3817 = vmatmul.mubr.f32.gmra.mxu0 %v3750
      %v3818 = vpop.f32.mrf.mxu0
      %v3819 = vadd.f32 0.0, %v3818
      %v3820 = vpop.f32.mrf.mxu0
      %3821 = vdwg.mxu0
      %3822 = vrot.lane.b32.xlu0 %v3738, 112
      %v3823 = vpop.permute.xlu0 %3822
      %v3824 = vsel %vm1192, %v3823, 0
      %3826 = vmatprep.subr.mxu0 0.0
      %3827 = vmatpush1.msra.mxu0 0.0
      %3828 = vmatprep.subr.mxu0 0.0
      %3829 = vmatpush1.msra.mxu0 0.0
      %3830 = vmatprep.subr.mxu0 0.0
      %3831 = vmatpush1.msra.mxu0 0.0
      %3832 = vmatprep.subr.mxu0 0.0
      %3833 = vmatpush1.msra.mxu0 0.0
      %3834 = vmatprep.subr.mxu0 0.0
      %3835 = vmatpush1.msra.mxu0 0.0
      %3836 = vmatprep.subr.mxu0 0.0
      %3837 = vmatpush1.msra.mxu0 0.0
      %3838 = vmatprep.subr.mxu0 0.0
      %3839 = vmatpush1.msra.mxu0 0.0
      %3840 = vmatprep.subr.mxu0 0.0
      %3841 = vmatpush1.msra.mxu0 0.0
      %3842 = vmatprep.subr.mxu0 0.0
      %3843 = vmatpush1.msra.mxu0 0.0
      %3844 = vmatprep.subr.mxu0 0.0
      %3845 = vmatpush1.msra.mxu0 0.0
      %3846 = vmatprep.subr.mxu0 0.0
      %3847 = vmatpush1.msra.mxu0 0.0
      %3848 = vmatprep.subr.mxu0 0.0
      %3849 = vmatpush1.msra.mxu0 0.0
      %3850 = vmatprep.subr.mxu0 0.0
      %3851 = vmatpush1.msra.mxu0 0.0
      %3852 = vmatprep.subr.mxu0 0.0
      %3853 = vmatpush1.msra.mxu0 0.0
      %3854 = vmatprep.subr.mxu0 0.0
      %3855 = vmatpush1.msra.mxu0 %v3747
      %3856 = vmatprep.subr.mxu0 0.0
      %3857 = vmatpush1.msra.mxu0 %v3746
      %3858 = vmatprep.subr.mxu0 0.0
      %3859 = vmatpush2.msra.mxu0 0.0
      %3860 = vmatprep.subr.mxu0 0.0
      %3861 = vmatpush2.msra.mxu0 0.0
      %3862 = vmatprep.subr.mxu0 0.0
      %3863 = vmatpush2.msra.mxu0 0.0
      %3864 = vmatprep.subr.mxu0 0.0
      %3865 = vmatpush2.msra.mxu0 0.0
      %3866 = vmatprep.subr.mxu0 0.0
      %3867 = vmatpush2.msra.mxu0 0.0
      %3868 = vmatprep.subr.mxu0 0.0
      %3869 = vmatpush2.msra.mxu0 0.0
      %3870 = vmatprep.subr.mxu0 0.0
      %3871 = vmatpush2.msra.mxu0 0.0
      %3872 = vmatprep.subr.mxu0 0.0
      %3873 = vmatpush2.msra.mxu0 0.0
      %3874 = vmatprep.subr.mxu0 0.0
      %3875 = vmatpush2.msra.mxu0 0.0
      %3876 = vmatprep.subr.mxu0 0.0
      %3877 = vmatpush2.msra.mxu0 0.0
      %3878 = vmatprep.subr.mxu0 0.0
      %3879 = vmatpush2.msra.mxu0 0.0
      %3880 = vmatprep.subr.mxu0 0.0
      %3881 = vmatpush2.msra.mxu0 0.0
      %3882 = vmatprep.subr.mxu0 0.0
      %3883 = vmatpush2.msra.mxu0 0.0
      %3884 = vmatprep.subr.mxu0 0.0
      %3885 = vmatpush2.msra.mxu0 0.0
      %3886 = vmatprep.subr.mxu0 0.0
      %3887 = vmatpush2.msra.mxu0 0.0
      %3888 = vmatprep.subr.mxu0 0.0
      %3889 = vmatpush2.msra.mxu0 0.0
      %3890 = vmatprep.mubr.f32.mxu0 0.0
      %3891 = vmatmul.mubr.f32.gmra.mxu0 %v3824
      %v3892 = vpop.f32.mrf.mxu0
      %v3893 = vadd.f32 0.0, %v3892
      %v3894 = vpop.f32.mrf.mxu0
      %3895 = vdwg.mxu0
      %3896 = vrot.lane.b32.xlu0 %v3738, 96
      %v3897 = vpop.permute.xlu0 %3896
      %v3898 = vsel %vm1192, %v3897, 0
      %3900 = vmatprep.subr.mxu0 0.0
      %3901 = vmatpush1.msra.mxu0 0.0
      %3902 = vmatprep.subr.mxu0 0.0
      %3903 = vmatpush1.msra.mxu0 0.0
      %3904 = vmatprep.subr.mxu0 0.0
      %3905 = vmatpush1.msra.mxu0 0.0
      %3906 = vmatprep.subr.mxu0 0.0
      %3907 = vmatpush1.msra.mxu0 0.0
      %3908 = vmatprep.subr.mxu0 0.0
      %3909 = vmatpush1.msra.mxu0 0.0
      %3910 = vmatprep.subr.mxu0 0.0
      %3911 = vmatpush1.msra.mxu0 0.0
      %3912 = vmatprep.subr.mxu0 0.0
      %3913 = vmatpush1.msra.mxu0 0.0
      %3914 = vmatprep.subr.mxu0 0.0
      %3915 = vmatpush1.msra.mxu0 0.0
      %3916 = vmatprep.subr.mxu0 0.0
      %3917 = vmatpush1.msra.mxu0 0.0
      %3918 = vmatprep.subr.mxu0 0.0
      %3919 = vmatpush1.msra.mxu0 0.0
      %3920 = vmatprep.subr.mxu0 0.0
      %3921 = vmatpush1.msra.mxu0 0.0
      %3922 = vmatprep.subr.mxu0 0.0
      %3923 = vmatpush1.msra.mxu0 0.0
      %3924 = vmatprep.subr.mxu0 0.0
      %3925 = vmatpush1.msra.mxu0 0.0
      %3926 = vmatprep.subr.mxu0 0.0
      %3927 = vmatpush1.msra.mxu0 0.0
      %3928 = vmatprep.subr.mxu0 0.0
      %3929 = vmatpush1.msra.mxu0 %v3747
      %3930 = vmatprep.subr.mxu0 0.0
      %3931 = vmatpush1.msra.mxu0 %v3746
      %3932 = vmatprep.subr.mxu0 0.0
      %3933 = vmatpush2.msra.mxu0 0.0
      %3934 = vmatprep.subr.mxu0 0.0
      %3935 = vmatpush2.msra.mxu0 0.0
      %3936 = vmatprep.subr.mxu0 0.0
      %3937 = vmatpush2.msra.mxu0 0.0
      %3938 = vmatprep.subr.mxu0 0.0
      %3939 = vmatpush2.msra.mxu0 0.0
      %3940 = vmatprep.subr.mxu0 0.0
      %3941 = vmatpush2.msra.mxu0 0.0
      %3942 = vmatprep.subr.mxu0 0.0
      %3943 = vmatpush2.msra.mxu0 0.0
      %3944 = vmatprep.subr.mxu0 0.0
      %3945 = vmatpush2.msra.mxu0 0.0
      %3946 = vmatprep.subr.mxu0 0.0
      %3947 = vmatpush2.msra.mxu0 0.0
      %3948 = vmatprep.subr.mxu0 0.0
      %3949 = vmatpush2.msra.mxu0 0.0
      %3950 = vmatprep.subr.mxu0 0.0
      %3951 = vmatpush2.msra.mxu0 0.0
      %3952 = vmatprep.subr.mxu0 0.0
      %3953 = vmatpush2.msra.mxu0 0.0
      %3954 = vmatprep.subr.mxu0 0.0
      %3955 = vmatpush2.msra.mxu0 0.0
      %3956 = vmatprep.subr.mxu0 0.0
      %3957 = vmatpush2.msra.mxu0 0.0
      %3958 = vmatprep.subr.mxu0 0.0
      %3959 = vmatpush2.msra.mxu0 0.0
      %3960 = vmatprep.subr.mxu0 0.0
      %3961 = vmatpush2.msra.mxu0 0.0
      %3962 = vmatprep.subr.mxu0 0.0
      %3963 = vmatpush2.msra.mxu0 0.0
      %3964 = vmatprep.mubr.f32.mxu0 0.0
      %3965 = vmatmul.mubr.f32.gmra.mxu0 %v3898
      %v3966 = vpop.f32.mrf.mxu0
      %v3967 = vadd.f32 0.0, %v3966
      %v3968 = vpop.f32.mrf.mxu0
      %3969 = vdwg.mxu0
      %3970 = vrot.lane.b32.xlu0 %v3738, 80
      %v3971 = vpop.permute.xlu0 %3970
      %v3972 = vsel %vm1192, %v3971, 0
      %3974 = vmatprep.subr.mxu0 0.0
      %3975 = vmatpush1.msra.mxu0 0.0
      %3976 = vmatprep.subr.mxu0 0.0
      %3977 = vmatpush1.msra.mxu0 0.0
      %3978 = vmatprep.subr.mxu0 0.0
      %3979 = vmatpush1.msra.mxu0 0.0
      %3980 = vmatprep.subr.mxu0 0.0
      %3981 = vmatpush1.msra.mxu0 0.0
      %3982 = vmatprep.subr.mxu0 0.0
      %3983 = vmatpush1.msra.mxu0 0.0
      %3984 = vmatprep.subr.mxu0 0.0
      %3985 = vmatpush1.msra.mxu0 0.0
      %3986 = vmatprep.subr.mxu0 0.0
      %3987 = vmatpush1.msra.mxu0 0.0
      %3988 = vmatprep.subr.mxu0 0.0
      %3989 = vmatpush1.msra.mxu0 0.0
      %3990 = vmatprep.subr.mxu0 0.0
      %3991 = vmatpush1.msra.mxu0 0.0
      %3992 = vmatprep.subr.mxu0 0.0
      %3993 = vmatpush1.msra.mxu0 0.0
      %3994 = vmatprep.subr.mxu0 0.0
      %3995 = vmatpush1.msra.mxu0 0.0
      %3996 = vmatprep.subr.mxu0 0.0
      %3997 = vmatpush1.msra.mxu0 0.0
      %3998 = vmatprep.subr.mxu0 0.0
      %3999 = vmatpush1.msra.mxu0 0.0
      %4000 = vmatprep.subr.mxu0 0.0
      %4001 = vmatpush1.msra.mxu0 0.0
      %4002 = vmatprep.subr.mxu0 0.0
      %4003 = vmatpush1.msra.mxu0 %v3747
      %4004 = vmatprep.subr.mxu0 0.0
      %4005 = vmatpush1.msra.mxu0 %v3746
      %4006 = vmatprep.subr.mxu0 0.0
      %4007 = vmatpush2.msra.mxu0 0.0
      %4008 = vmatprep.subr.mxu0 0.0
      %4009 = vmatpush2.msra.mxu0 0.0
      %4010 = vmatprep.subr.mxu0 0.0
      %4011 = vmatpush2.msra.mxu0 0.0
      %4012 = vmatprep.subr.mxu0 0.0
      %4013 = vmatpush2.msra.mxu0 0.0
      %4014 = vmatprep.subr.mxu0 0.0
      %4015 = vmatpush2.msra.mxu0 0.0
      %4016 = vmatprep.subr.mxu0 0.0
      %4017 = vmatpush2.msra.mxu0 0.0
      %4018 = vmatprep.subr.mxu0 0.0
      %4019 = vmatpush2.msra.mxu0 0.0
      %4020 = vmatprep.subr.mxu0 0.0
      %4021 = vmatpush2.msra.mxu0 0.0
      %4022 = vmatprep.subr.mxu0 0.0
      %4023 = vmatpush2.msra.mxu0 0.0
      %4024 = vmatprep.subr.mxu0 0.0
      %4025 = vmatpush2.msra.mxu0 0.0
      %4026 = vmatprep.subr.mxu0 0.0
      %4027 = vmatpush2.msra.mxu0 0.0
      %4028 = vmatprep.subr.mxu0 0.0
      %4029 = vmatpush2.msra.mxu0 0.0
      %4030 = vmatprep.subr.mxu0 0.0
      %4031 = vmatpush2.msra.mxu0 0.0
      %4032 = vmatprep.subr.mxu0 0.0
      %4033 = vmatpush2.msra.mxu0 0.0
      %4034 = vmatprep.subr.mxu0 0.0
      %4035 = vmatpush2.msra.mxu0 0.0
      %4036 = vmatprep.subr.mxu0 0.0
      %4037 = vmatpush2.msra.mxu0 0.0
      %4038 = vmatprep.mubr.f32.mxu0 0.0
      %4039 = vmatmul.mubr.f32.gmra.mxu0 %v3972
      %v4040 = vpop.f32.mrf.mxu0
      %v4041 = vadd.f32 0.0, %v4040
      %v4042 = vpop.f32.mrf.mxu0
      %4043 = vdwg.mxu0
      %4044 = vrot.lane.b32.xlu0 %v3738, 64
      %v4045 = vpop.permute.xlu0 %4044
      %v4046 = vsel %vm1192, %v4045, 0
      %4048 = vmatprep.subr.mxu0 0.0
      %4049 = vmatpush1.msra.mxu0 0.0
      %4050 = vmatprep.subr.mxu0 0.0
      %4051 = vmatpush1.msra.mxu0 0.0
      %4052 = vmatprep.subr.mxu0 0.0
      %4053 = vmatpush1.msra.mxu0 0.0
      %4054 = vmatprep.subr.mxu0 0.0
      %4055 = vmatpush1.msra.mxu0 0.0
      %4056 = vmatprep.subr.mxu0 0.0
      %4057 = vmatpush1.msra.mxu0 0.0
      %4058 = vmatprep.subr.mxu0 0.0
      %4059 = vmatpush1.msra.mxu0 0.0
      %4060 = vmatprep.subr.mxu0 0.0
      %4061 = vmatpush1.msra.mxu0 0.0
      %4062 = vmatprep.subr.mxu0 0.0
      %4063 = vmatpush1.msra.mxu0 0.0
      %4064 = vmatprep.subr.mxu0 0.0
      %4065 = vmatpush1.msra.mxu0 0.0
      %4066 = vmatprep.subr.mxu0 0.0
      %4067 = vmatpush1.msra.mxu0 0.0
      %4068 = vmatprep.subr.mxu0 0.0
      %4069 = vmatpush1.msra.mxu0 0.0
      %4070 = vmatprep.subr.mxu0 0.0
      %4071 = vmatpush1.msra.mxu0 0.0
      %4072 = vmatprep.subr.mxu0 0.0
      %4073 = vmatpush1.msra.mxu0 0.0
      %4074 = vmatprep.subr.mxu0 0.0
      %4075 = vmatpush1.msra.mxu0 0.0
      %4076 = vmatprep.subr.mxu0 0.0
      %4077 = vmatpush1.msra.mxu0 %v3747
      %4078 = vmatprep.subr.mxu0 0.0
      %4079 = vmatpush1.msra.mxu0 %v3746
      %4080 = vmatprep.subr.mxu0 0.0
      %4081 = vmatpush2.msra.mxu0 0.0
      %4082 = vmatprep.subr.mxu0 0.0
      %4083 = vmatpush2.msra.mxu0 0.0
      %4084 = vmatprep.subr.mxu0 0.0
      %4085 = vmatpush2.msra.mxu0 0.0
      %4086 = vmatprep.subr.mxu0 0.0
      %4087 = vmatpush2.msra.mxu0 0.0
      %4088 = vmatprep.subr.mxu0 0.0
      %4089 = vmatpush2.msra.mxu0 0.0
      %4090 = vmatprep.subr.mxu0 0.0
      %4091 = vmatpush2.msra.mxu0 0.0
      %4092 = vmatprep.subr.mxu0 0.0
      %4093 = vmatpush2.msra.mxu0 0.0
      %4094 = vmatprep.subr.mxu0 0.0
      %4095 = vmatpush2.msra.mxu0 0.0
      %4096 = vmatprep.subr.mxu0 0.0
      %4097 = vmatpush2.msra.mxu0 0.0
      %4098 = vmatprep.subr.mxu0 0.0
      %4099 = vmatpush2.msra.mxu0 0.0
      %4100 = vmatprep.subr.mxu0 0.0
      %4101 = vmatpush2.msra.mxu0 0.0
      %4102 = vmatprep.subr.mxu0 0.0
      %4103 = vmatpush2.msra.mxu0 0.0
      %4104 = vmatprep.subr.mxu0 0.0
      %4105 = vmatpush2.msra.mxu0 0.0
      %4106 = vmatprep.subr.mxu0 0.0
      %4107 = vmatpush2.msra.mxu0 0.0
      %4108 = vmatprep.subr.mxu0 0.0
      %4109 = vmatpush2.msra.mxu0 0.0
      %4110 = vmatprep.subr.mxu0 0.0
      %4111 = vmatpush2.msra.mxu0 0.0
      %4112 = vmatprep.mubr.f32.mxu0 0.0
      %4113 = vmatmul.mubr.f32.gmra.mxu0 %v4046
      %v4114 = vpop.f32.mrf.mxu0
      %v4115 = vadd.f32 0.0, %v4114
      %v4116 = vpop.f32.mrf.mxu0
      %4117 = vdwg.mxu0
      %4118 = vrot.lane.b32.xlu0 %v3738, 48
      %v4119 = vpop.permute.xlu0 %4118
      %v4120 = vsel %vm1192, %v4119, 0
      %4122 = vmatprep.subr.mxu0 0.0
      %4123 = vmatpush1.msra.mxu0 0.0
      %4124 = vmatprep.subr.mxu0 0.0
      %4125 = vmatpush1.msra.mxu0 0.0
      %4126 = vmatprep.subr.mxu0 0.0
      %4127 = vmatpush1.msra.mxu0 0.0
      %4128 = vmatprep.subr.mxu0 0.0
      %4129 = vmatpush1.msra.mxu0 0.0
      %4130 = vmatprep.subr.mxu0 0.0
      %4131 = vmatpush1.msra.mxu0 0.0
      %4132 = vmatprep.subr.mxu0 0.0
      %4133 = vmatpush1.msra.mxu0 0.0
      %4134 = vmatprep.subr.mxu0 0.0
      %4135 = vmatpush1.msra.mxu0 0.0
      %4136 = vmatprep.subr.mxu0 0.0
      %4137 = vmatpush1.msra.mxu0 0.0
      %4138 = vmatprep.subr.mxu0 0.0
      %4139 = vmatpush1.msra.mxu0 0.0
      %4140 = vmatprep.subr.mxu0 0.0
      %4141 = vmatpush1.msra.mxu0 0.0
      %4142 = vmatprep.subr.mxu0 0.0
      %4143 = vmatpush1.msra.mxu0 0.0
      %4144 = vmatprep.subr.mxu0 0.0
      %4145 = vmatpush1.msra.mxu0 0.0
      %4146 = vmatprep.subr.mxu0 0.0
      %4147 = vmatpush1.msra.mxu0 0.0
      %4148 = vmatprep.subr.mxu0 0.0
      %4149 = vmatpush1.msra.mxu0 0.0
      %4150 = vmatprep.subr.mxu0 0.0
      %4151 = vmatpush1.msra.mxu0 %v3747
      %4152 = vmatprep.subr.mxu0 0.0
      %4153 = vmatpush1.msra.mxu0 %v3746
      %4154 = vmatprep.subr.mxu0 0.0
      %4155 = vmatpush2.msra.mxu0 0.0
      %4156 = vmatprep.subr.mxu0 0.0
      %4157 = vmatpush2.msra.mxu0 0.0
      %4158 = vmatprep.subr.mxu0 0.0
      %4159 = vmatpush2.msra.mxu0 0.0
      %4160 = vmatprep.subr.mxu0 0.0
      %4161 = vmatpush2.msra.mxu0 0.0
      %4162 = vmatprep.subr.mxu0 0.0
      %4163 = vmatpush2.msra.mxu0 0.0
      %4164 = vmatprep.subr.mxu0 0.0
      %4165 = vmatpush2.msra.mxu0 0.0
      %4166 = vmatprep.subr.mxu0 0.0
      %4167 = vmatpush2.msra.mxu0 0.0
      %4168 = vmatprep.subr.mxu0 0.0
      %4169 = vmatpush2.msra.mxu0 0.0
      %4170 = vmatprep.subr.mxu0 0.0
      %4171 = vmatpush2.msra.mxu0 0.0
      %4172 = vmatprep.subr.mxu0 0.0
      %4173 = vmatpush2.msra.mxu0 0.0
      %4174 = vmatprep.subr.mxu0 0.0
      %4175 = vmatpush2.msra.mxu0 0.0
      %4176 = vmatprep.subr.mxu0 0.0
      %4177 = vmatpush2.msra.mxu0 0.0
      %4178 = vmatprep.subr.mxu0 0.0
      %4179 = vmatpush2.msra.mxu0 0.0
      %4180 = vmatprep.subr.mxu0 0.0
      %4181 = vmatpush2.msra.mxu0 0.0
      %4182 = vmatprep.subr.mxu0 0.0
      %4183 = vmatpush2.msra.mxu0 0.0
      %4184 = vmatprep.subr.mxu0 0.0
      %4185 = vmatpush2.msra.mxu0 0.0
      %4186 = vmatprep.mubr.f32.mxu0 0.0
      %4187 = vmatmul.mubr.f32.gmra.mxu0 %v4120
      %v4188 = vpop.f32.mrf.mxu0
      %v4189 = vadd.f32 0.0, %v4188
      %v4190 = vpop.f32.mrf.mxu0
      %4191 = vdwg.mxu0
      %4192 = vrot.lane.b32.xlu0 %v3738, 32
      %v4193 = vpop.permute.xlu0 %4192
      %v4194 = vsel %vm1192, %v4193, 0
      %4196 = vmatprep.subr.mxu0 0.0
      %4197 = vmatpush1.msra.mxu0 0.0
      %4198 = vmatprep.subr.mxu0 0.0
      %4199 = vmatpush1.msra.mxu0 0.0
      %4200 = vmatprep.subr.mxu0 0.0
      %4201 = vmatpush1.msra.mxu0 0.0
      %4202 = vmatprep.subr.mxu0 0.0
      %4203 = vmatpush1.msra.mxu0 0.0
      %4204 = vmatprep.subr.mxu0 0.0
      %4205 = vmatpush1.msra.mxu0 0.0
      %4206 = vmatprep.subr.mxu0 0.0
      %4207 = vmatpush1.msra.mxu0 0.0
      %4208 = vmatprep.subr.mxu0 0.0
      %4209 = vmatpush1.msra.mxu0 0.0
      %4210 = vmatprep.subr.mxu0 0.0
      %4211 = vmatpush1.msra.mxu0 0.0
      %4212 = vmatprep.subr.mxu0 0.0
      %4213 = vmatpush1.msra.mxu0 0.0
      %4214 = vmatprep.subr.mxu0 0.0
      %4215 = vmatpush1.msra.mxu0 0.0
      %4216 = vmatprep.subr.mxu0 0.0
      %4217 = vmatpush1.msra.mxu0 0.0
      %4218 = vmatprep.subr.mxu0 0.0
      %4219 = vmatpush1.msra.mxu0 0.0
      %4220 = vmatprep.subr.mxu0 0.0
      %4221 = vmatpush1.msra.mxu0 0.0
      %4222 = vmatprep.subr.mxu0 0.0
      %4223 = vmatpush1.msra.mxu0 0.0
      %4224 = vmatprep.subr.mxu0 0.0
      %4225 = vmatpush1.msra.mxu0 %v3747
      %4226 = vmatprep.subr.mxu0 0.0
      %4227 = vmatpush1.msra.mxu0 %v3746
      %4228 = vmatprep.subr.mxu0 0.0
      %4229 = vmatpush2.msra.mxu0 0.0
      %4230 = vmatprep.subr.mxu0 0.0
      %4231 = vmatpush2.msra.mxu0 0.0
      %4232 = vmatprep.subr.mxu0 0.0
      %4233 = vmatpush2.msra.mxu0 0.0
      %4234 = vmatprep.subr.mxu0 0.0
      %4235 = vmatpush2.msra.mxu0 0.0
      %4236 = vmatprep.subr.mxu0 0.0
      %4237 = vmatpush2.msra.mxu0 0.0
      %4238 = vmatprep.subr.mxu0 0.0
      %4239 = vmatpush2.msra.mxu0 0.0
      %4240 = vmatprep.subr.mxu0 0.0
      %4241 = vmatpush2.msra.mxu0 0.0
      %4242 = vmatprep.subr.mxu0 0.0
      %4243 = vmatpush2.msra.mxu0 0.0
      %4244 = vmatprep.subr.mxu0 0.0
      %4245 = vmatpush2.msra.mxu0 0.0
      %4246 = vmatprep.subr.mxu0 0.0
      %4247 = vmatpush2.msra.mxu0 0.0
      %4248 = vmatprep.subr.mxu0 0.0
      %4249 = vmatpush2.msra.mxu0 0.0
      %4250 = vmatprep.subr.mxu0 0.0
      %4251 = vmatpush2.msra.mxu0 0.0
      %4252 = vmatprep.subr.mxu0 0.0
      %4253 = vmatpush2.msra.mxu0 0.0
      %4254 = vmatprep.subr.mxu0 0.0
      %4255 = vmatpush2.msra.mxu0 0.0
      %4256 = vmatprep.subr.mxu0 0.0
      %4257 = vmatpush2.msra.mxu0 0.0
      %4258 = vmatprep.subr.mxu0 0.0
      %4259 = vmatpush2.msra.mxu0 0.0
      %4260 = vmatprep.mubr.f32.mxu0 0.0
      %4261 = vmatmul.mubr.f32.gmra.mxu0 %v4194
      %v4262 = vpop.f32.mrf.mxu0
      %v4263 = vadd.f32 0.0, %v4262
      %v4264 = vpop.f32.mrf.mxu0
      %4265 = vdwg.mxu0
      %4266 = vrot.lane.b32.xlu0 %v3738, 16
      %v4267 = vpop.permute.xlu0 %4266
      %v4268 = vsel %vm1192, %v4267, 0
      %4270 = vmatprep.subr.mxu0 0.0
      %4271 = vmatpush1.msra.mxu0 0.0
      %4272 = vmatprep.subr.mxu0 0.0
      %4273 = vmatpush1.msra.mxu0 0.0
      %4274 = vmatprep.subr.mxu0 0.0
      %4275 = vmatpush1.msra.mxu0 0.0
      %4276 = vmatprep.subr.mxu0 0.0
      %4277 = vmatpush1.msra.mxu0 0.0
      %4278 = vmatprep.subr.mxu0 0.0
      %4279 = vmatpush1.msra.mxu0 0.0
      %4280 = vmatprep.subr.mxu0 0.0
      %4281 = vmatpush1.msra.mxu0 0.0
      %4282 = vmatprep.subr.mxu0 0.0
      %4283 = vmatpush1.msra.mxu0 0.0
      %4284 = vmatprep.subr.mxu0 0.0
      %4285 = vmatpush1.msra.mxu0 0.0
      %4286 = vmatprep.subr.mxu0 0.0
      %4287 = vmatpush1.msra.mxu0 0.0
      %4288 = vmatprep.subr.mxu0 0.0
      %4289 = vmatpush1.msra.mxu0 0.0
      %4290 = vmatprep.subr.mxu0 0.0
      %4291 = vmatpush1.msra.mxu0 0.0
      %4292 = vmatprep.subr.mxu0 0.0
      %4293 = vmatpush1.msra.mxu0 0.0
      %4294 = vmatprep.subr.mxu0 0.0
      %4295 = vmatpush1.msra.mxu0 0.0
      %4296 = vmatprep.subr.mxu0 0.0
      %4297 = vmatpush1.msra.mxu0 0.0
      %4298 = vmatprep.subr.mxu0 0.0
      %4299 = vmatpush1.msra.mxu0 %v3747
      %4300 = vmatprep.subr.mxu0 0.0
      %4301 = vmatpush1.msra.mxu0 %v3746
      %4302 = vmatprep.subr.mxu0 0.0
      %4303 = vmatpush2.msra.mxu0 0.0
      %4304 = vmatprep.subr.mxu0 0.0
      %4305 = vmatpush2.msra.mxu0 0.0
      %4306 = vmatprep.subr.mxu0 0.0
      %4307 = vmatpush2.msra.mxu0 0.0
      %4308 = vmatprep.subr.mxu0 0.0
      %4309 = vmatpush2.msra.mxu0 0.0
      %4310 = vmatprep.subr.mxu0 0.0
      %4311 = vmatpush2.msra.mxu0 0.0
      %4312 = vmatprep.subr.mxu0 0.0
      %4313 = vmatpush2.msra.mxu0 0.0
      %4314 = vmatprep.subr.mxu0 0.0
      %4315 = vmatpush2.msra.mxu0 0.0
      %4316 = vmatprep.subr.mxu0 0.0
      %4317 = vmatpush2.msra.mxu0 0.0
      %4318 = vmatprep.subr.mxu0 0.0
      %4319 = vmatpush2.msra.mxu0 0.0
      %4320 = vmatprep.subr.mxu0 0.0
      %4321 = vmatpush2.msra.mxu0 0.0
      %4322 = vmatprep.subr.mxu0 0.0
      %4323 = vmatpush2.msra.mxu0 0.0
      %4324 = vmatprep.subr.mxu0 0.0
      %4325 = vmatpush2.msra.mxu0 0.0
      %4326 = vmatprep.subr.mxu0 0.0
      %4327 = vmatpush2.msra.mxu0 0.0
      %4328 = vmatprep.subr.mxu0 0.0
      %4329 = vmatpush2.msra.mxu0 0.0
      %4330 = vmatprep.subr.mxu0 0.0
      %4331 = vmatpush2.msra.mxu0 0.0
      %4332 = vmatprep.subr.mxu0 0.0
      %4333 = vmatpush2.msra.mxu0 0.0
      %4334 = vmatprep.mubr.f32.mxu0 0.0
      %4335 = vmatmul.mubr.f32.gmra.mxu0 %v4268
      %v4336 = vpop.f32.mrf.mxu0
      %v4337 = vadd.f32 0.0, %v4336
      %v4338 = vpop.f32.mrf.mxu0
      %4339 = vdwg.mxu0
      %v4341 = vsel %vm1192, %v3739, 0
      %4343 = vmatprep.subr.mxu0 0.0
      %4344 = vmatpush1.msra.mxu0 0.0
      %4345 = vmatprep.subr.mxu0 0.0
      %4346 = vmatpush1.msra.mxu0 0.0
      %4347 = vmatprep.subr.mxu0 0.0
      %4348 = vmatpush1.msra.mxu0 0.0
      %4349 = vmatprep.subr.mxu0 0.0
      %4350 = vmatpush1.msra.mxu0 0.0
      %4351 = vmatprep.subr.mxu0 0.0
      %4352 = vmatpush1.msra.mxu0 0.0
      %4353 = vmatprep.subr.mxu0 0.0
      %4354 = vmatpush1.msra.mxu0 0.0
      %4355 = vmatprep.subr.mxu0 0.0
      %4356 = vmatpush1.msra.mxu0 0.0
      %4357 = vmatprep.subr.mxu0 0.0
      %4358 = vmatpush1.msra.mxu0 0.0
      %4359 = vmatprep.subr.mxu0 0.0
      %4360 = vmatpush1.msra.mxu0 0.0
      %4361 = vmatprep.subr.mxu0 0.0
      %4362 = vmatpush1.msra.mxu0 0.0
      %4363 = vmatprep.subr.mxu0 0.0
      %4364 = vmatpush1.msra.mxu0 0.0
      %4365 = vmatprep.subr.mxu0 0.0
      %4366 = vmatpush1.msra.mxu0 0.0
      %4367 = vmatprep.subr.mxu0 0.0
      %4368 = vmatpush1.msra.mxu0 0.0
      %4369 = vmatprep.subr.mxu0 0.0
      %4370 = vmatpush1.msra.mxu0 0.0
      %4371 = vmatprep.subr.mxu0 0.0
      %4372 = vmatpush1.msra.mxu0 %v3747
      %4373 = vmatprep.subr.mxu0 0.0
      %4374 = vmatpush1.msra.mxu0 %v3746
      %4375 = vmatprep.subr.mxu0 0.0
      %4376 = vmatpush2.msra.mxu0 0.0
      %4377 = vmatprep.subr.mxu0 0.0
      %4378 = vmatpush2.msra.mxu0 0.0
      %4379 = vmatprep.subr.mxu0 0.0
      %4380 = vmatpush2.msra.mxu0 0.0
      %4381 = vmatprep.subr.mxu0 0.0
      %4382 = vmatpush2.msra.mxu0 0.0
      %4383 = vmatprep.subr.mxu0 0.0
      %4384 = vmatpush2.msra.mxu0 0.0
      %4385 = vmatprep.subr.mxu0 0.0
      %4386 = vmatpush2.msra.mxu0 0.0
      %4387 = vmatprep.subr.mxu0 0.0
      %4388 = vmatpush2.msra.mxu0 0.0
      %4389 = vmatprep.subr.mxu0 0.0
      %4390 = vmatpush2.msra.mxu0 0.0
      %4391 = vmatprep.subr.mxu0 0.0
      %4392 = vmatpush2.msra.mxu0 0.0
      %4393 = vmatprep.subr.mxu0 0.0
      %4394 = vmatpush2.msra.mxu0 0.0
      %4395 = vmatprep.subr.mxu0 0.0
      %4396 = vmatpush2.msra.mxu0 0.0
      %4397 = vmatprep.subr.mxu0 0.0
      %4398 = vmatpush2.msra.mxu0 0.0
      %4399 = vmatprep.subr.mxu0 0.0
      %4400 = vmatpush2.msra.mxu0 0.0
      %4401 = vmatprep.subr.mxu0 0.0
      %4402 = vmatpush2.msra.mxu0 0.0
      %4403 = vmatprep.subr.mxu0 0.0
      %4404 = vmatpush2.msra.mxu0 0.0
      %4405 = vmatprep.subr.mxu0 0.0
      %4406 = vmatpush2.msra.mxu0 0.0
      %4407 = vmatprep.mubr.f32.mxu0 0.0
      %4408 = vmatmul.mubr.f32.gmra.mxu0 %v4341
      %v4409 = vpop.f32.mrf.mxu0
      %v4410 = vadd.f32 0.0, %v4409
      %v4411 = vpop.f32.mrf.mxu0
      %4412 = vdwg.mxu0
      %4413 = vrot.lane.b32.xlu0 %v3739, 112
      %v4414 = vpop.permute.xlu0 %4413
      %v4415 = vsel %vm1192, %v4414, 0
      %4417 = vmatprep.subr.mxu0 0.0
      %4418 = vmatpush1.msra.mxu0 0.0
      %4419 = vmatprep.subr.mxu0 0.0
      %4420 = vmatpush1.msra.mxu0 0.0
      %4421 = vmatprep.subr.mxu0 0.0
      %4422 = vmatpush1.msra.mxu0 0.0
      %4423 = vmatprep.subr.mxu0 0.0
      %4424 = vmatpush1.msra.mxu0 0.0
      %4425 = vmatprep.subr.mxu0 0.0
      %4426 = vmatpush1.msra.mxu0 0.0
      %4427 = vmatprep.subr.mxu0 0.0
      %4428 = vmatpush1.msra.mxu0 0.0
      %4429 = vmatprep.subr.mxu0 0.0
      %4430 = vmatpush1.msra.mxu0 0.0
      %4431 = vmatprep.subr.mxu0 0.0
      %4432 = vmatpush1.msra.mxu0 0.0
      %4433 = vmatprep.subr.mxu0 0.0
      %4434 = vmatpush1.msra.mxu0 0.0
      %4435 = vmatprep.subr.mxu0 0.0
      %4436 = vmatpush1.msra.mxu0 0.0
      %4437 = vmatprep.subr.mxu0 0.0
      %4438 = vmatpush1.msra.mxu0 0.0
      %4439 = vmatprep.subr.mxu0 0.0
      %4440 = vmatpush1.msra.mxu0 0.0
      %4441 = vmatprep.subr.mxu0 0.0
      %4442 = vmatpush1.msra.mxu0 0.0
      %4443 = vmatprep.subr.mxu0 0.0
      %4444 = vmatpush1.msra.mxu0 0.0
      %4445 = vmatprep.subr.mxu0 0.0
      %4446 = vmatpush1.msra.mxu0 %v3747
      %4447 = vmatprep.subr.mxu0 0.0
      %4448 = vmatpush1.msra.mxu0 %v3746
      %4449 = vmatprep.subr.mxu0 0.0
      %4450 = vmatpush2.msra.mxu0 0.0
      %4451 = vmatprep.subr.mxu0 0.0
      %4452 = vmatpush2.msra.mxu0 0.0
      %4453 = vmatprep.subr.mxu0 0.0
      %4454 = vmatpush2.msra.mxu0 0.0
      %4455 = vmatprep.subr.mxu0 0.0
      %4456 = vmatpush2.msra.mxu0 0.0
      %4457 = vmatprep.subr.mxu0 0.0
      %4458 = vmatpush2.msra.mxu0 0.0
      %4459 = vmatprep.subr.mxu0 0.0
      %4460 = vmatpush2.msra.mxu0 0.0
      %4461 = vmatprep.subr.mxu0 0.0
      %4462 = vmatpush2.msra.mxu0 0.0
      %4463 = vmatprep.subr.mxu0 0.0
      %4464 = vmatpush2.msra.mxu0 0.0
      %4465 = vmatprep.subr.mxu0 0.0
      %4466 = vmatpush2.msra.mxu0 0.0
      %4467 = vmatprep.subr.mxu0 0.0
      %4468 = vmatpush2.msra.mxu0 0.0
      %4469 = vmatprep.subr.mxu0 0.0
      %4470 = vmatpush2.msra.mxu0 0.0
      %4471 = vmatprep.subr.mxu0 0.0
      %4472 = vmatpush2.msra.mxu0 0.0
      %4473 = vmatprep.subr.mxu0 0.0
      %4474 = vmatpush2.msra.mxu0 0.0
      %4475 = vmatprep.subr.mxu0 0.0
      %4476 = vmatpush2.msra.mxu0 0.0
      %4477 = vmatprep.subr.mxu0 0.0
      %4478 = vmatpush2.msra.mxu0 0.0
      %4479 = vmatprep.subr.mxu0 0.0
      %4480 = vmatpush2.msra.mxu0 0.0
      %4481 = vmatprep.mubr.f32.mxu0 0.0
      %4482 = vmatmul.mubr.f32.gmra.mxu0 %v4415
      %v4483 = vpop.f32.mrf.mxu0
      %v4484 = vadd.f32 0.0, %v4483
      %v4485 = vpop.f32.mrf.mxu0
      %4486 = vdwg.mxu0
      %4487 = vrot.lane.b32.xlu0 %v3739, 96
      %v4488 = vpop.permute.xlu0 %4487
      %v4489 = vsel %vm1192, %v4488, 0
      %4491 = vmatprep.subr.mxu0 0.0
      %4492 = vmatpush1.msra.mxu0 0.0
      %4493 = vmatprep.subr.mxu0 0.0
      %4494 = vmatpush1.msra.mxu0 0.0
      %4495 = vmatprep.subr.mxu0 0.0
      %4496 = vmatpush1.msra.mxu0 0.0
      %4497 = vmatprep.subr.mxu0 0.0
      %4498 = vmatpush1.msra.mxu0 0.0
      %4499 = vmatprep.subr.mxu0 0.0
      %4500 = vmatpush1.msra.mxu0 0.0
      %4501 = vmatprep.subr.mxu0 0.0
      %4502 = vmatpush1.msra.mxu0 0.0
      %4503 = vmatprep.subr.mxu0 0.0
      %4504 = vmatpush1.msra.mxu0 0.0
      %4505 = vmatprep.subr.mxu0 0.0
      %4506 = vmatpush1.msra.mxu0 0.0
      %4507 = vmatprep.subr.mxu0 0.0
      %4508 = vmatpush1.msra.mxu0 0.0
      %4509 = vmatprep.subr.mxu0 0.0
      %4510 = vmatpush1.msra.mxu0 0.0
      %4511 = vmatprep.subr.mxu0 0.0
      %4512 = vmatpush1.msra.mxu0 0.0
      %4513 = vmatprep.subr.mxu0 0.0
      %4514 = vmatpush1.msra.mxu0 0.0
      %4515 = vmatprep.subr.mxu0 0.0
      %4516 = vmatpush1.msra.mxu0 0.0
      %4517 = vmatprep.subr.mxu0 0.0
      %4518 = vmatpush1.msra.mxu0 0.0
      %4519 = vmatprep.subr.mxu0 0.0
      %4520 = vmatpush1.msra.mxu0 %v3747
      %4521 = vmatprep.subr.mxu0 0.0
      %4522 = vmatpush1.msra.mxu0 %v3746
      %4523 = vmatprep.subr.mxu0 0.0
      %4524 = vmatpush2.msra.mxu0 0.0
      %4525 = vmatprep.subr.mxu0 0.0
      %4526 = vmatpush2.msra.mxu0 0.0
      %4527 = vmatprep.subr.mxu0 0.0
      %4528 = vmatpush2.msra.mxu0 0.0
      %4529 = vmatprep.subr.mxu0 0.0
      %4530 = vmatpush2.msra.mxu0 0.0
      %4531 = vmatprep.subr.mxu0 0.0
      %4532 = vmatpush2.msra.mxu0 0.0
      %4533 = vmatprep.subr.mxu0 0.0
      %4534 = vmatpush2.msra.mxu0 0.0
      %4535 = vmatprep.subr.mxu0 0.0
      %4536 = vmatpush2.msra.mxu0 0.0
      %4537 = vmatprep.subr.mxu0 0.0
      %4538 = vmatpush2.msra.mxu0 0.0
      %4539 = vmatprep.subr.mxu0 0.0
      %4540 = vmatpush2.msra.mxu0 0.0
      %4541 = vmatprep.subr.mxu0 0.0
      %4542 = vmatpush2.msra.mxu0 0.0
      %4543 = vmatprep.subr.mxu0 0.0
      %4544 = vmatpush2.msra.mxu0 0.0
      %4545 = vmatprep.subr.mxu0 0.0
      %4546 = vmatpush2.msra.mxu0 0.0
      %4547 = vmatprep.subr.mxu0 0.0
      %4548 = vmatpush2.msra.mxu0 0.0
      %4549 = vmatprep.subr.mxu0 0.0
      %4550 = vmatpush2.msra.mxu0 0.0
      %4551 = vmatprep.subr.mxu0 0.0
      %4552 = vmatpush2.msra.mxu0 0.0
      %4553 = vmatprep.subr.mxu0 0.0
      %4554 = vmatpush2.msra.mxu0 0.0
      %4555 = vmatprep.mubr.f32.mxu0 0.0
      %4556 = vmatmul.mubr.f32.gmra.mxu0 %v4489
      %v4557 = vpop.f32.mrf.mxu0
      %v4558 = vadd.f32 0.0, %v4557
      %v4559 = vpop.f32.mrf.mxu0
      %4560 = vdwg.mxu0
      %4561 = vrot.lane.b32.xlu0 %v3739, 80
      %v4562 = vpop.permute.xlu0 %4561
      %v4563 = vsel %vm1192, %v4562, 0
      %4565 = vmatprep.subr.mxu0 0.0
      %4566 = vmatpush1.msra.mxu0 0.0
      %4567 = vmatprep.subr.mxu0 0.0
      %4568 = vmatpush1.msra.mxu0 0.0
      %4569 = vmatprep.subr.mxu0 0.0
      %4570 = vmatpush1.msra.mxu0 0.0
      %4571 = vmatprep.subr.mxu0 0.0
      %4572 = vmatpush1.msra.mxu0 0.0
      %4573 = vmatprep.subr.mxu0 0.0
      %4574 = vmatpush1.msra.mxu0 0.0
      %4575 = vmatprep.subr.mxu0 0.0
      %4576 = vmatpush1.msra.mxu0 0.0
      %4577 = vmatprep.subr.mxu0 0.0
      %4578 = vmatpush1.msra.mxu0 0.0
      %4579 = vmatprep.subr.mxu0 0.0
      %4580 = vmatpush1.msra.mxu0 0.0
      %4581 = vmatprep.subr.mxu0 0.0
      %4582 = vmatpush1.msra.mxu0 0.0
      %4583 = vmatprep.subr.mxu0 0.0
      %4584 = vmatpush1.msra.mxu0 0.0
      %4585 = vmatprep.subr.mxu0 0.0
      %4586 = vmatpush1.msra.mxu0 0.0
      %4587 = vmatprep.subr.mxu0 0.0
      %4588 = vmatpush1.msra.mxu0 0.0
      %4589 = vmatprep.subr.mxu0 0.0
      %4590 = vmatpush1.msra.mxu0 0.0
      %4591 = vmatprep.subr.mxu0 0.0
      %4592 = vmatpush1.msra.mxu0 0.0
      %4593 = vmatprep.subr.mxu0 0.0
      %4594 = vmatpush1.msra.mxu0 %v3747
      %4595 = vmatprep.subr.mxu0 0.0
      %4596 = vmatpush1.msra.mxu0 %v3746
      %4597 = vmatprep.subr.mxu0 0.0
      %4598 = vmatpush2.msra.mxu0 0.0
      %4599 = vmatprep.subr.mxu0 0.0
      %4600 = vmatpush2.msra.mxu0 0.0
      %4601 = vmatprep.subr.mxu0 0.0
      %4602 = vmatpush2.msra.mxu0 0.0
      %4603 = vmatprep.subr.mxu0 0.0
      %4604 = vmatpush2.msra.mxu0 0.0
      %4605 = vmatprep.subr.mxu0 0.0
      %4606 = vmatpush2.msra.mxu0 0.0
      %4607 = vmatprep.subr.mxu0 0.0
      %4608 = vmatpush2.msra.mxu0 0.0
      %4609 = vmatprep.subr.mxu0 0.0
      %4610 = vmatpush2.msra.mxu0 0.0
      %4611 = vmatprep.subr.mxu0 0.0
      %4612 = vmatpush2.msra.mxu0 0.0
      %4613 = vmatprep.subr.mxu0 0.0
      %4614 = vmatpush2.msra.mxu0 0.0
      %4615 = vmatprep.subr.mxu0 0.0
      %4616 = vmatpush2.msra.mxu0 0.0
      %4617 = vmatprep.subr.mxu0 0.0
      %4618 = vmatpush2.msra.mxu0 0.0
      %4619 = vmatprep.subr.mxu0 0.0
      %4620 = vmatpush2.msra.mxu0 0.0
      %4621 = vmatprep.subr.mxu0 0.0
      %4622 = vmatpush2.msra.mxu0 0.0
      %4623 = vmatprep.subr.mxu0 0.0
      %4624 = vmatpush2.msra.mxu0 0.0
      %4625 = vmatprep.subr.mxu0 0.0
      %4626 = vmatpush2.msra.mxu0 0.0
      %4627 = vmatprep.subr.mxu0 0.0
      %4628 = vmatpush2.msra.mxu0 0.0
      %4629 = vmatprep.mubr.f32.mxu0 0.0
      %4630 = vmatmul.mubr.f32.gmra.mxu0 %v4563
      %v4631 = vpop.f32.mrf.mxu0
      %v4632 = vadd.f32 0.0, %v4631
      %v4633 = vpop.f32.mrf.mxu0
      %4634 = vdwg.mxu0
      %4635 = vrot.lane.b32.xlu0 %v3739, 64
      %v4636 = vpop.permute.xlu0 %4635
      %v4637 = vsel %vm1192, %v4636, 0
      %4639 = vmatprep.subr.mxu0 0.0
      %4640 = vmatpush1.msra.mxu0 0.0
      %4641 = vmatprep.subr.mxu0 0.0
      %4642 = vmatpush1.msra.mxu0 0.0
      %4643 = vmatprep.subr.mxu0 0.0
      %4644 = vmatpush1.msra.mxu0 0.0
      %4645 = vmatprep.subr.mxu0 0.0
      %4646 = vmatpush1.msra.mxu0 0.0
      %4647 = vmatprep.subr.mxu0 0.0
      %4648 = vmatpush1.msra.mxu0 0.0
      %4649 = vmatprep.subr.mxu0 0.0
      %4650 = vmatpush1.msra.mxu0 0.0
      %4651 = vmatprep.subr.mxu0 0.0
      %4652 = vmatpush1.msra.mxu0 0.0
      %4653 = vmatprep.subr.mxu0 0.0
      %4654 = vmatpush1.msra.mxu0 0.0
      %4655 = vmatprep.subr.mxu0 0.0
      %4656 = vmatpush1.msra.mxu0 0.0
      %4657 = vmatprep.subr.mxu0 0.0
      %4658 = vmatpush1.msra.mxu0 0.0
      %4659 = vmatprep.subr.mxu0 0.0
      %4660 = vmatpush1.msra.mxu0 0.0
      %4661 = vmatprep.subr.mxu0 0.0
      %4662 = vmatpush1.msra.mxu0 0.0
      %4663 = vmatprep.subr.mxu0 0.0
      %4664 = vmatpush1.msra.mxu0 0.0
      %4665 = vmatprep.subr.mxu0 0.0
      %4666 = vmatpush1.msra.mxu0 0.0
      %4667 = vmatprep.subr.mxu0 0.0
      %4668 = vmatpush1.msra.mxu0 %v3747
      %4669 = vmatprep.subr.mxu0 0.0
      %4670 = vmatpush1.msra.mxu0 %v3746
      %4671 = vmatprep.subr.mxu0 0.0
      %4672 = vmatpush2.msra.mxu0 0.0
      %4673 = vmatprep.subr.mxu0 0.0
      %4674 = vmatpush2.msra.mxu0 0.0
      %4675 = vmatprep.subr.mxu0 0.0
      %4676 = vmatpush2.msra.mxu0 0.0
      %4677 = vmatprep.subr.mxu0 0.0
      %4678 = vmatpush2.msra.mxu0 0.0
      %4679 = vmatprep.subr.mxu0 0.0
      %4680 = vmatpush2.msra.mxu0 0.0
      %4681 = vmatprep.subr.mxu0 0.0
      %4682 = vmatpush2.msra.mxu0 0.0
      %4683 = vmatprep.subr.mxu0 0.0
      %4684 = vmatpush2.msra.mxu0 0.0
      %4685 = vmatprep.subr.mxu0 0.0
      %4686 = vmatpush2.msra.mxu0 0.0
      %4687 = vmatprep.subr.mxu0 0.0
      %4688 = vmatpush2.msra.mxu0 0.0
      %4689 = vmatprep.subr.mxu0 0.0
      %4690 = vmatpush2.msra.mxu0 0.0
      %4691 = vmatprep.subr.mxu0 0.0
      %4692 = vmatpush2.msra.mxu0 0.0
      %4693 = vmatprep.subr.mxu0 0.0
      %4694 = vmatpush2.msra.mxu0 0.0
      %4695 = vmatprep.subr.mxu0 0.0
      %4696 = vmatpush2.msra.mxu0 0.0
      %4697 = vmatprep.subr.mxu0 0.0
      %4698 = vmatpush2.msra.mxu0 0.0
      %4699 = vmatprep.subr.mxu0 0.0
      %4700 = vmatpush2.msra.mxu0 0.0
      %4701 = vmatprep.subr.mxu0 0.0
      %4702 = vmatpush2.msra.mxu0 0.0
      %4703 = vmatprep.mubr.f32.mxu0 0.0
      %4704 = vmatmul.mubr.f32.gmra.mxu0 %v4637
      %v4705 = vpop.f32.mrf.mxu0
      %v4706 = vadd.f32 0.0, %v4705
      %v4707 = vpop.f32.mrf.mxu0
      %4708 = vdwg.mxu0
      %4709 = vrot.lane.b32.xlu0 %v3739, 48
      %v4710 = vpop.permute.xlu0 %4709
      %v4711 = vsel %vm1192, %v4710, 0
      %4713 = vmatprep.subr.mxu0 0.0
      %4714 = vmatpush1.msra.mxu0 0.0
      %4715 = vmatprep.subr.mxu0 0.0
      %4716 = vmatpush1.msra.mxu0 0.0
      %4717 = vmatprep.subr.mxu0 0.0
      %4718 = vmatpush1.msra.mxu0 0.0
      %4719 = vmatprep.subr.mxu0 0.0
      %4720 = vmatpush1.msra.mxu0 0.0
      %4721 = vmatprep.subr.mxu0 0.0
      %4722 = vmatpush1.msra.mxu0 0.0
      %4723 = vmatprep.subr.mxu0 0.0
      %4724 = vmatpush1.msra.mxu0 0.0
      %4725 = vmatprep.subr.mxu0 0.0
      %4726 = vmatpush1.msra.mxu0 0.0
      %4727 = vmatprep.subr.mxu0 0.0
      %4728 = vmatpush1.msra.mxu0 0.0
      %4729 = vmatprep.subr.mxu0 0.0
      %4730 = vmatpush1.msra.mxu0 0.0
      %4731 = vmatprep.subr.mxu0 0.0
      %4732 = vmatpush1.msra.mxu0 0.0
      %4733 = vmatprep.subr.mxu0 0.0
      %4734 = vmatpush1.msra.mxu0 0.0
      %4735 = vmatprep.subr.mxu0 0.0
      %4736 = vmatpush1.msra.mxu0 0.0
      %4737 = vmatprep.subr.mxu0 0.0
      %4738 = vmatpush1.msra.mxu0 0.0
      %4739 = vmatprep.subr.mxu0 0.0
      %4740 = vmatpush1.msra.mxu0 0.0
      %4741 = vmatprep.subr.mxu0 0.0
      %4742 = vmatpush1.msra.mxu0 %v3747
      %4743 = vmatprep.subr.mxu0 0.0
      %4744 = vmatpush1.msra.mxu0 %v3746
      %4745 = vmatprep.subr.mxu0 0.0
      %4746 = vmatpush2.msra.mxu0 0.0
      %4747 = vmatprep.subr.mxu0 0.0
      %4748 = vmatpush2.msra.mxu0 0.0
      %4749 = vmatprep.subr.mxu0 0.0
      %4750 = vmatpush2.msra.mxu0 0.0
      %4751 = vmatprep.subr.mxu0 0.0
      %4752 = vmatpush2.msra.mxu0 0.0
      %4753 = vmatprep.subr.mxu0 0.0
      %4754 = vmatpush2.msra.mxu0 0.0
      %4755 = vmatprep.subr.mxu0 0.0
      %4756 = vmatpush2.msra.mxu0 0.0
      %4757 = vmatprep.subr.mxu0 0.0
      %4758 = vmatpush2.msra.mxu0 0.0
      %4759 = vmatprep.subr.mxu0 0.0
      %4760 = vmatpush2.msra.mxu0 0.0
      %4761 = vmatprep.subr.mxu0 0.0
      %4762 = vmatpush2.msra.mxu0 0.0
      %4763 = vmatprep.subr.mxu0 0.0
      %4764 = vmatpush2.msra.mxu0 0.0
      %4765 = vmatprep.subr.mxu0 0.0
      %4766 = vmatpush2.msra.mxu0 0.0
      %4767 = vmatprep.subr.mxu0 0.0
      %4768 = vmatpush2.msra.mxu0 0.0
      %4769 = vmatprep.subr.mxu0 0.0
      %4770 = vmatpush2.msra.mxu0 0.0
      %4771 = vmatprep.subr.mxu0 0.0
      %4772 = vmatpush2.msra.mxu0 0.0
      %4773 = vmatprep.subr.mxu0 0.0
      %4774 = vmatpush2.msra.mxu0 0.0
      %4775 = vmatprep.subr.mxu0 0.0
      %4776 = vmatpush2.msra.mxu0 0.0
      %4777 = vmatprep.mubr.f32.mxu0 0.0
      %4778 = vmatmul.mubr.f32.gmra.mxu0 %v4711
      %v4779 = vpop.f32.mrf.mxu0
      %v4780 = vadd.f32 0.0, %v4779
      %v4781 = vpop.f32.mrf.mxu0
      %4782 = vdwg.mxu0
      %4783 = vrot.lane.b32.xlu0 %v3739, 32
      %v4784 = vpop.permute.xlu0 %4783
      %v4785 = vsel %vm1192, %v4784, 0
      %4787 = vmatprep.subr.mxu0 0.0
      %4788 = vmatpush1.msra.mxu0 0.0
      %4789 = vmatprep.subr.mxu0 0.0
      %4790 = vmatpush1.msra.mxu0 0.0
      %4791 = vmatprep.subr.mxu0 0.0
      %4792 = vmatpush1.msra.mxu0 0.0
      %4793 = vmatprep.subr.mxu0 0.0
      %4794 = vmatpush1.msra.mxu0 0.0
      %4795 = vmatprep.subr.mxu0 0.0
      %4796 = vmatpush1.msra.mxu0 0.0
      %4797 = vmatprep.subr.mxu0 0.0
      %4798 = vmatpush1.msra.mxu0 0.0
      %4799 = vmatprep.subr.mxu0 0.0
      %4800 = vmatpush1.msra.mxu0 0.0
      %4801 = vmatprep.subr.mxu0 0.0
      %4802 = vmatpush1.msra.mxu0 0.0
      %4803 = vmatprep.subr.mxu0 0.0
      %4804 = vmatpush1.msra.mxu0 0.0
      %4805 = vmatprep.subr.mxu0 0.0
      %4806 = vmatpush1.msra.mxu0 0.0
      %4807 = vmatprep.subr.mxu0 0.0
      %4808 = vmatpush1.msra.mxu0 0.0
      %4809 = vmatprep.subr.mxu0 0.0
      %4810 = vmatpush1.msra.mxu0 0.0
      %4811 = vmatprep.subr.mxu0 0.0
      %4812 = vmatpush1.msra.mxu0 0.0
      %4813 = vmatprep.subr.mxu0 0.0
      %4814 = vmatpush1.msra.mxu0 0.0
      %4815 = vmatprep.subr.mxu0 0.0
      %4816 = vmatpush1.msra.mxu0 %v3747
      %4817 = vmatprep.subr.mxu0 0.0
      %4818 = vmatpush1.msra.mxu0 %v3746
      %4819 = vmatprep.subr.mxu0 0.0
      %4820 = vmatpush2.msra.mxu0 0.0
      %4821 = vmatprep.subr.mxu0 0.0
      %4822 = vmatpush2.msra.mxu0 0.0
      %4823 = vmatprep.subr.mxu0 0.0
      %4824 = vmatpush2.msra.mxu0 0.0
      %4825 = vmatprep.subr.mxu0 0.0
      %4826 = vmatpush2.msra.mxu0 0.0
      %4827 = vmatprep.subr.mxu0 0.0
      %4828 = vmatpush2.msra.mxu0 0.0
      %4829 = vmatprep.subr.mxu0 0.0
      %4830 = vmatpush2.msra.mxu0 0.0
      %4831 = vmatprep.subr.mxu0 0.0
      %4832 = vmatpush2.msra.mxu0 0.0
      %4833 = vmatprep.subr.mxu0 0.0
      %4834 = vmatpush2.msra.mxu0 0.0
      %4835 = vmatprep.subr.mxu0 0.0
      %4836 = vmatpush2.msra.mxu0 0.0
      %4837 = vmatprep.subr.mxu0 0.0
      %4838 = vmatpush2.msra.mxu0 0.0
      %4839 = vmatprep.subr.mxu0 0.0
      %4840 = vmatpush2.msra.mxu0 0.0
      %4841 = vmatprep.subr.mxu0 0.0
      %4842 = vmatpush2.msra.mxu0 0.0
      %4843 = vmatprep.subr.mxu0 0.0
      %4844 = vmatpush2.msra.mxu0 0.0
      %4845 = vmatprep.subr.mxu0 0.0
      %4846 = vmatpush2.msra.mxu0 0.0
      %4847 = vmatprep.subr.mxu0 0.0
      %4848 = vmatpush2.msra.mxu0 0.0
      %4849 = vmatprep.subr.mxu0 0.0
      %4850 = vmatpush2.msra.mxu0 0.0
      %4851 = vmatprep.mubr.f32.mxu0 0.0
      %4852 = vmatmul.mubr.f32.gmra.mxu0 %v4785
      %v4853 = vpop.f32.mrf.mxu0
      %v4854 = vadd.f32 0.0, %v4853
      %v4855 = vpop.f32.mrf.mxu0
      %4856 = vdwg.mxu0
      %4857 = vrot.lane.b32.xlu0 %v3739, 16
      %v4858 = vpop.permute.xlu0 %4857
      %v4859 = vsel %vm1192, %v4858, 0
      %4861 = vmatprep.subr.mxu0 0.0
      %4862 = vmatpush1.msra.mxu0 0.0
      %4863 = vmatprep.subr.mxu0 0.0
      %4864 = vmatpush1.msra.mxu0 0.0
      %4865 = vmatprep.subr.mxu0 0.0
      %4866 = vmatpush1.msra.mxu0 0.0
      %4867 = vmatprep.subr.mxu0 0.0
      %4868 = vmatpush1.msra.mxu0 0.0
      %4869 = vmatprep.subr.mxu0 0.0
      %4870 = vmatpush1.msra.mxu0 0.0
      %4871 = vmatprep.subr.mxu0 0.0
      %4872 = vmatpush1.msra.mxu0 0.0
      %4873 = vmatprep.subr.mxu0 0.0
      %4874 = vmatpush1.msra.mxu0 0.0
      %4875 = vmatprep.subr.mxu0 0.0
      %4876 = vmatpush1.msra.mxu0 0.0
      %4877 = vmatprep.subr.mxu0 0.0
      %4878 = vmatpush1.msra.mxu0 0.0
      %4879 = vmatprep.subr.mxu0 0.0
      %4880 = vmatpush1.msra.mxu0 0.0
      %4881 = vmatprep.subr.mxu0 0.0
      %4882 = vmatpush1.msra.mxu0 0.0
      %4883 = vmatprep.subr.mxu0 0.0
      %4884 = vmatpush1.msra.mxu0 0.0
      %4885 = vmatprep.subr.mxu0 0.0
      %4886 = vmatpush1.msra.mxu0 0.0
      %4887 = vmatprep.subr.mxu0 0.0
      %4888 = vmatpush1.msra.mxu0 0.0
      %4889 = vmatprep.subr.mxu0 0.0
      %4890 = vmatpush1.msra.mxu0 %v3747
      %4891 = vmatprep.subr.mxu0 0.0
      %4892 = vmatpush1.msra.mxu0 %v3746
      %4893 = vmatprep.subr.mxu0 0.0
      %4894 = vmatpush2.msra.mxu0 0.0
      %4895 = vmatprep.subr.mxu0 0.0
      %4896 = vmatpush2.msra.mxu0 0.0
      %4897 = vmatprep.subr.mxu0 0.0
      %4898 = vmatpush2.msra.mxu0 0.0
      %4899 = vmatprep.subr.mxu0 0.0
      %4900 = vmatpush2.msra.mxu0 0.0
      %4901 = vmatprep.subr.mxu0 0.0
      %4902 = vmatpush2.msra.mxu0 0.0
      %4903 = vmatprep.subr.mxu0 0.0
      %4904 = vmatpush2.msra.mxu0 0.0
      %4905 = vmatprep.subr.mxu0 0.0
      %4906 = vmatpush2.msra.mxu0 0.0
      %4907 = vmatprep.subr.mxu0 0.0
      %4908 = vmatpush2.msra.mxu0 0.0
      %4909 = vmatprep.subr.mxu0 0.0
      %4910 = vmatpush2.msra.mxu0 0.0
      %4911 = vmatprep.subr.mxu0 0.0
      %4912 = vmatpush2.msra.mxu0 0.0
      %4913 = vmatprep.subr.mxu0 0.0
      %4914 = vmatpush2.msra.mxu0 0.0
      %4915 = vmatprep.subr.mxu0 0.0
      %4916 = vmatpush2.msra.mxu0 0.0
      %4917 = vmatprep.subr.mxu0 0.0
      %4918 = vmatpush2.msra.mxu0 0.0
      %4919 = vmatprep.subr.mxu0 0.0
      %4920 = vmatpush2.msra.mxu0 0.0
      %4921 = vmatprep.subr.mxu0 0.0
      %4922 = vmatpush2.msra.mxu0 0.0
      %4923 = vmatprep.subr.mxu0 0.0
      %4924 = vmatpush2.msra.mxu0 0.0
      %4925 = vmatprep.mubr.f32.mxu0 0.0
      %4926 = vmatmul.mubr.f32.gmra.mxu0 %v4859
      %v4927 = vpop.f32.mrf.mxu0
      %v4928 = vadd.f32 0.0, %v4927
      %v4929 = vpop.f32.mrf.mxu0
      %4930 = vdwg.mxu0
      %v4931 = vmul.f32 %v3819, 0.516129
      %v4932 = vmul.f32 %v3893, 0.48387095
      %v4933 = vadd.f32 %v4931, %v4932
      %v4934 = vmul.f32 %v3819, 0.032258064
      %v4935 = vmul.f32 %v3893, 0.9677419
      %v4936 = vadd.f32 %v4934, %v4935
      %v4937 = vmul.f32 %v3893, 0.5483871
      %v4938 = vmul.f32 %v3967, 0.4516129
      %v4939 = vadd.f32 %v4937, %v4938
      %v4940 = vmul.f32 %v3893, 0.06451613
      %v4941 = vmul.f32 %v3967, 0.9354839
      %v4942 = vadd.f32 %v4940, %v4941
      %v4943 = vmul.f32 %v3967, 0.58064514
      %v4944 = vmul.f32 %v4041, 0.41935483
      %v4945 = vadd.f32 %v4943, %v4944
      %v4946 = vmul.f32 %v3967, 0.09677419
      %v4947 = vmul.f32 %v4041, 0.9032258
      %v4948 = vadd.f32 %v4946, %v4947
      %v4949 = vmul.f32 %v4041, 0.61290324
      %v4950 = vmul.f32 %v4115, 0.38709676
      %v4951 = vadd.f32 %v4949, %v4950
      %v4952 = vmul.f32 %v4041, 0.12903225
      %v4953 = vmul.f32 %v4115, 0.87096775
      %v4954 = vadd.f32 %v4952, %v4953
      %v4955 = vmul.f32 %v4115, 0.6451613
      %v4956 = vmul.f32 %v4189, 0.3548387
      %v4957 = vadd.f32 %v4955, %v4956
      %v4958 = vmul.f32 %v4115, 0.16129032
      %v4959 = vmul.f32 %v4189, 0.83870965
      %v4960 = vadd.f32 %v4958, %v4959
      %v4961 = vmul.f32 %v4189, 0.67741936
      %v4962 = vmul.f32 %v4263, 0.32258064
      %v4963 = vadd.f32 %v4961, %v4962
      %v4964 = vmul.f32 %v4189, 0.19354838
      %v4965 = vmul.f32 %v4263, 0.8064516
      %v4966 = vadd.f32 %v4964, %v4965
      %v4967 = vmul.f32 %v4263, 0.7096774
      %v4968 = vmul.f32 %v4337, 0.29032257
      %v4969 = vadd.f32 %v4967, %v4968
      %v4970 = vmul.f32 %v4263, 0.22580644
      %v4971 = vmul.f32 %v4337, 0.7741935
      %v4972 = vadd.f32 %v4970, %v4971
      %v4973 = vmul.f32 %v4337, 0.7419355
      %v4974 = vmul.f32 %v4410, 0.2580645
      %v4975 = vadd.f32 %v4973, %v4974
      %v4976 = vmul.f32 %v4337, 0.2580645
      %v4977 = vmul.f32 %v4410, 0.7419355
      %v4978 = vadd.f32 %v4976, %v4977
      %v4979 = vmul.f32 %v4410, 0.7741935
      %v4980 = vmul.f32 %v4484, 0.22580644
      %v4981 = vadd.f32 %v4979, %v4980
      %v4982 = vmul.f32 %v4410, 0.29032257
      %v4983 = vmul.f32 %v4484, 0.7096774
      %v4984 = vadd.f32 %v4982, %v4983
      %v4985 = vmul.f32 %v4484, 0.8064516
      %v4986 = vmul.f32 %v4558, 0.19354838
      %v4987 = vadd.f32 %v4985, %v4986
      %v4988 = vmul.f32 %v4484, 0.32258064
      %v4989 = vmul.f32 %v4558, 0.67741936
      %v4990 = vadd.f32 %v4988, %v4989
      %v4991 = vmul.f32 %v4558, 0.83870965
      %v4992 = vmul.f32 %v4632, 0.16129032
      %v4993 = vadd.f32 %v4991, %v4992
      %v4994 = vmul.f32 %v4558, 0.3548387
      %v4995 = vmul.f32 %v4632, 0.6451613
      %v4996 = vadd.f32 %v4994, %v4995
      %v4997 = vmul.f32 %v4632, 0.87096775
      %v4998 = vmul.f32 %v4706, 0.12903225
      %v4999 = vadd.f32 %v4997, %v4998
      %v5000 = vmul.f32 %v4632, 0.38709676
      %v5001 = vmul.f32 %v4706, 0.61290324
      %v5002 = vadd.f32 %v5000, %v5001
      %v5003 = vmul.f32 %v4706, 0.9032258
      %v5004 = vmul.f32 %v4780, 0.09677419
      %v5005 = vadd.f32 %v5003, %v5004
      %v5006 = vmul.f32 %v4706, 0.41935483
      %v5007 = vmul.f32 %v4780, 0.58064514
      %v5008 = vadd.f32 %v5006, %v5007
      %v5009 = vmul.f32 %v4780, 0.9354839
      %v5010 = vmul.f32 %v4854, 0.06451613
      %v5011 = vadd.f32 %v5009, %v5010
      %v5012 = vmul.f32 %v4780, 0.4516129
      %v5013 = vmul.f32 %v4854, 0.5483871
      %v5014 = vadd.f32 %v5012, %v5013
      %v5015 = vmul.f32 %v4854, 0.9677419
      %v5016 = vmul.f32 %v4928, 0.032258064
      %v5017 = vadd.f32 %v5015, %v5016
      %v5018 = vmul.f32 %v4854, 0.48387095
      %v5019 = vmul.f32 %v4928, 0.516129
      %v5020 = vadd.f32 %v5018, %v5019
      %v5021 = vmul.f32 %v4854, 0.0
      %v5022 = vadd.f32 %v5021, %v4928
      %5024 = vrot.lane.b32.xlu0 %v4933, 32
      %v5025 = vpop.permute.xlu0 %5024
      %5028 = vrot.lane.b32.xlu0 %v4936, 64
      %v5029 = vpop.permute.xlu0 %5028
      %5032 = vrot.lane.b32.xlu0 %v4939, 96
      %v5033 = vpop.permute.xlu0 %5032
      %5036 = vrot.lane.b32.xlu0 %v4945, 32
      %v5037 = vpop.permute.xlu0 %5036
      %5040 = vrot.lane.b32.xlu0 %v4948, 64
      %v5041 = vpop.permute.xlu0 %5040
      %5044 = vrot.lane.b32.xlu0 %v4951, 96
      %v5045 = vpop.permute.xlu0 %5044
      %5048 = vrot.lane.b32.xlu0 %v4957, 32
      %v5049 = vpop.permute.xlu0 %5048
      %5052 = vrot.lane.b32.xlu0 %v4960, 64
      %v5053 = vpop.permute.xlu0 %5052
      %5056 = vrot.lane.b32.xlu0 %v4963, 96
      %v5057 = vpop.permute.xlu0 %5056
      %5060 = vrot.lane.b32.xlu0 %v4969, 32
      %v5061 = vpop.permute.xlu0 %5060
      %5064 = vrot.lane.b32.xlu0 %v4972, 64
      %v5065 = vpop.permute.xlu0 %5064
      %5068 = vrot.lane.b32.xlu0 %v4975, 96
      %v5069 = vpop.permute.xlu0 %5068
      %v5071 = vsel %vm1202, %v3819, %v5025
      %v5072 = vsel %vm2029, %v5071, %v5029
      %v5073 = vsel %vm2909, %v5072, %v5033
      %v5074 = vsel %vm1202, %v4942, %v5037
      %v5075 = vsel %vm2029, %v5074, %v5041
      %v5076 = vsel %vm2909, %v5075, %v5045
      %v5077 = vsel %vm1202, %v4954, %v5049
      %v5078 = vsel %vm2029, %v5077, %v5053
      %v5079 = vsel %vm2909, %v5078, %v5057
      %v5080 = vsel %vm1202, %v4966, %v5061
      %v5081 = vsel %vm2029, %v5080, %v5065
      %v5082 = vsel %vm2909, %v5081, %v5069
      %5084 = vrot.lane.b32.xlu0 %v4981, 32
      %v5085 = vpop.permute.xlu0 %5084
      %5088 = vrot.lane.b32.xlu0 %v4984, 64
      %v5089 = vpop.permute.xlu0 %5088
      %5092 = vrot.lane.b32.xlu0 %v4987, 96
      %v5093 = vpop.permute.xlu0 %5092
      %5096 = vrot.lane.b32.xlu0 %v4993, 32
      %v5097 = vpop.permute.xlu0 %5096
      %5100 = vrot.lane.b32.xlu0 %v4996, 64
      %v5101 = vpop.permute.xlu0 %5100
      %5104 = vrot.lane.b32.xlu0 %v4999, 96
      %v5105 = vpop.permute.xlu0 %5104
      %5108 = vrot.lane.b32.xlu0 %v5005, 32
      %v5109 = vpop.permute.xlu0 %5108
      %5112 = vrot.lane.b32.xlu0 %v5008, 64
      %v5113 = vpop.permute.xlu0 %5112
      %5116 = vrot.lane.b32.xlu0 %v5011, 96
      %v5117 = vpop.permute.xlu0 %5116
      %5120 = vrot.lane.b32.xlu0 %v5017, 32
      %v5121 = vpop.permute.xlu0 %5120
      %5124 = vrot.lane.b32.xlu0 %v5020, 64
      %v5125 = vpop.permute.xlu0 %5124
      %5128 = vrot.lane.b32.xlu0 %v5022, 96
      %v5129 = vpop.permute.xlu0 %5128
      %v5131 = vsel %vm1202, %v4978, %v5085
      %v5132 = vsel %vm2029, %v5131, %v5089
      %v5133 = vsel %vm2909, %v5132, %v5093
      %v5134 = vsel %vm1202, %v4990, %v5097
      %v5135 = vsel %vm2029, %v5134, %v5101
      %v5136 = vsel %vm2909, %v5135, %v5105
      %v5137 = vsel %vm1202, %v5002, %v5109
      %v5138 = vsel %vm2029, %v5137, %v5113
      %v5139 = vsel %vm2909, %v5138, %v5117
      %v5140 = vsel %vm1202, %v5014, %v5121
      %v5141 = vsel %vm2029, %v5140, %v5125
      %v5142 = vsel %vm2909, %v5141, %v5129
      %v5147 = vcombine.high %v3742, %v3742
      %v5148 = vcombine.high %v3743, %v3743
      %v5149 = vcombine.high %v3744, %v3744
      %v5150 = vcombine.high %v3745, %v3745
      %v5163 = vrot.slane %v5073, 4
      %v5164 = vrot.slane %v5076, 4
      %v5165 = vrot.slane %v5079, 4
      %v5166 = vrot.slane %v5082, 4
      %v5167 = vrot.slane %v5133, 4
      %v5168 = vrot.slane %v5136, 4
      %v5169 = vrot.slane %v5139, 4
      %v5170 = vrot.slane %v5142, 4
      %v5179 = vsel %vm603, %v3742, %v5163
      %v5180 = vsel %vm603, %v5147, %v5164
      %v5181 = vsel %vm603, %v3743, %v5165
      %v5182 = vsel %vm603, %v5148, %v5166
      %v5183 = vsel %vm603, %v3744, %v5167
      %v5184 = vsel %vm603, %v5149, %v5168
      %v5185 = vsel %vm603, %v3745, %v5169
      %v5186 = vsel %vm603, %v5150, %v5170
      %v5187 = vadd.s32 %v1223, 256
      %v5188 = vadd.s32 %v1223, 384
      %v5189 = vadd.s32 %v1223, 512
      %v5190 = vadd.s32 %v1223, 640
      %v5191 = vadd.s32 %v1223, 768
      %v5192 = vadd.s32 %v1223, 896
      %vm5193 = vcmp.lt.s32.totalorder %v1223, 0
      %v5194 = vsub.s32 0, %v1223
      %v5195 = vsel %vm5193, %v5194, %v1223
      %v5196 = vshrl.u32 %v5195, 5
      %v5197 = vand.u32 %v5195, 31
      %v5198 = vsub.s32 0, %v5197
      %v5199 = vsel %vm5193, %v5198, %v5197
      %vm5200 = vcmp.lt.s32.totalorder %v2929, 0
      %v5201 = vsub.s32 0, %v2929
      %v5202 = vsel %vm5200, %v5201, %v2929
      %v5203 = vshrl.u32 %v5202, 5
      %v5204 = vand.u32 %v5202, 31
      %v5205 = vsub.s32 0, %v5204
      %v5206 = vsel %vm5200, %v5205, %v5204
      %vm5207 = vcmp.lt.s32.totalorder %v5187, 0
      %v5208 = vsub.s32 0, %v5187
      %v5209 = vsel %vm5207, %v5208, %v5187
      %v5210 = vshrl.u32 %v5209, 5
      %v5211 = vand.u32 %v5209, 31
      %v5212 = vsub.s32 0, %v5211
      %v5213 = vsel %vm5207, %v5212, %v5211
      %vm5214 = vcmp.lt.s32.totalorder %v5188, 0
      %v5215 = vsub.s32 0, %v5188
      %v5216 = vsel %vm5214, %v5215, %v5188
      %v5217 = vshrl.u32 %v5216, 5
      %v5218 = vand.u32 %v5216, 31
      %v5219 = vsub.s32 0, %v5218
      %v5220 = vsel %vm5214, %v5219, %v5218
      %vm5221 = vcmp.lt.s32.totalorder %v5189, 0
      %v5222 = vsub.s32 0, %v5189
      %v5223 = vsel %vm5221, %v5222, %v5189
      %v5224 = vshrl.u32 %v5223, 5
      %v5225 = vand.u32 %v5223, 31
      %v5226 = vsub.s32 0, %v5225
      %v5227 = vsel %vm5221, %v5226, %v5225
      %vm5228 = vcmp.lt.s32.totalorder %v5190, 0
      %v5229 = vsub.s32 0, %v5190
      %v5230 = vsel %vm5228, %v5229, %v5190
      %v5231 = vshrl.u32 %v5230, 5
      %v5232 = vand.u32 %v5230, 31
      %v5233 = vsub.s32 0, %v5232
      %v5234 = vsel %vm5228, %v5233, %v5232
      %vm5235 = vcmp.lt.s32.totalorder %v5191, 0
      %v5236 = vsub.s32 0, %v5191
      %v5237 = vsel %vm5235, %v5236, %v5191
      %v5238 = vshrl.u32 %v5237, 5
      %v5239 = vand.u32 %v5237, 31
      %v5240 = vsub.s32 0, %v5239
      %v5241 = vsel %vm5235, %v5240, %v5239
      %vm5242 = vcmp.lt.s32.totalorder %v5192, 0
      %v5243 = vsub.s32 0, %v5192
      %v5244 = vsel %vm5242, %v5243, %v5192
      %v5245 = vshrl.u32 %v5244, 5
      %v5246 = vand.u32 %v5244, 31
      %v5247 = vsub.s32 0, %v5246
      %v5248 = vsel %vm5242, %v5247, %v5246
      %vm5249 = vcmp.ne.s32.totalorder %v5199, 0
      %vm5250 = vcmp.ne.s32.totalorder %v5206, 0
      %vm5251 = vcmp.ne.s32.totalorder %v5213, 0
      %vm5252 = vcmp.ne.s32.totalorder %v5220, 0
      %vm5253 = vcmp.ne.s32.totalorder %v5227, 0
      %vm5254 = vcmp.ne.s32.totalorder %v5234, 0
      %vm5255 = vcmp.ne.s32.totalorder %v5241, 0
      %vm5256 = vcmp.ne.s32.totalorder %v5248, 0
      %vm5257 = vcmp.lt.s32.totalorder %v5199, 0
      %vm5258 = vcmp.lt.s32.totalorder %v5206, 0
      %vm5259 = vcmp.lt.s32.totalorder %v5213, 0
      %vm5260 = vcmp.lt.s32.totalorder %v5220, 0
      %vm5261 = vcmp.lt.s32.totalorder %v5227, 0
      %vm5262 = vcmp.lt.s32.totalorder %v5234, 0
      %vm5263 = vcmp.lt.s32.totalorder %v5241, 0
      %vm5264 = vcmp.lt.s32.totalorder %v5248, 0
      %vm5265 = vmand %vm5257, %vm5249
      %vm5266 = vmand %vm5258, %vm5250
      %vm5267 = vmand %vm5259, %vm5251
      %vm5268 = vmand %vm5260, %vm5252
      %vm5269 = vmand %vm5261, %vm5253
      %vm5270 = vmand %vm5262, %vm5254
      %vm5271 = vmand %vm5263, %vm5255
      %vm5272 = vmand %vm5264, %vm5256
      %v5273 = vadd.s32 %v5199, 32
      %v5274 = vadd.s32 %v5206, 32
      %v5275 = vadd.s32 %v5213, 32
      %v5276 = vadd.s32 %v5220, 32
      %v5277 = vadd.s32 %v5227, 32
      %v5278 = vadd.s32 %v5234, 32
      %v5279 = vadd.s32 %v5241, 32
      %v5280 = vadd.s32 %v5248, 32
      %v5281 = vsel %vm5265, %v5273, %v5199
      %v5282 = vsel %vm5266, %v5274, %v5206
      %v5283 = vsel %vm5267, %v5275, %v5213
      %v5284 = vsel %vm5268, %v5276, %v5220
      %v5285 = vsel %vm5269, %v5277, %v5227
      %v5286 = vsel %vm5270, %v5278, %v5234
      %v5287 = vsel %vm5271, %v5279, %v5241
      %v5288 = vsel %vm5272, %v5280, %v5248
      %vm5289 = vcmp.ge.s32.totalorder %v5281, 1
      %vm5290 = vcmp.ge.s32.totalorder %v5282, 1
      %vm5291 = vcmp.ge.s32.totalorder %v5283, 1
      %vm5292 = vcmp.ge.s32.totalorder %v5284, 1
      %vm5293 = vcmp.ge.s32.totalorder %v5285, 1
      %vm5294 = vcmp.ge.s32.totalorder %v5286, 1
      %vm5295 = vcmp.ge.s32.totalorder %v5287, 1
      %vm5296 = vcmp.ge.s32.totalorder %v5288, 1
      %vm5297 = vcmp.lt.s32.totalorder %v5281, 31
      %vm5298 = vcmp.lt.s32.totalorder %v5282, 31
      %vm5299 = vcmp.lt.s32.totalorder %v5283, 31
      %vm5300 = vcmp.lt.s32.totalorder %v5284, 31
      %vm5301 = vcmp.lt.s32.totalorder %v5285, 31
      %vm5302 = vcmp.lt.s32.totalorder %v5286, 31
      %vm5303 = vcmp.lt.s32.totalorder %v5287, 31
      %vm5304 = vcmp.lt.s32.totalorder %v5288, 31
      %vm5305 = vcmp.ge.s32.totalorder %v1223, 32
      %vm5306 = vcmp.ge.s32.totalorder %v2929, 32
      %vm5307 = vcmp.ge.s32.totalorder %v5187, 32
      %vm5308 = vcmp.ge.s32.totalorder %v5188, 32
      %vm5309 = vcmp.ge.s32.totalorder %v5189, 32
      %vm5310 = vcmp.ge.s32.totalorder %v5190, 32
      %vm5311 = vcmp.ge.s32.totalorder %v5191, 32
      %vm5312 = vcmp.ge.s32.totalorder %v5192, 32
      %vm5313 = vcmp.lt.s32.totalorder %v1223, 992
      %vm5314 = vcmp.lt.s32.totalorder %v2929, 992
      %vm5315 = vcmp.lt.s32.totalorder %v5187, 992
      %vm5316 = vcmp.lt.s32.totalorder %v5188, 992
      %vm5317 = vcmp.lt.s32.totalorder %v5189, 992
      %vm5318 = vcmp.lt.s32.totalorder %v5190, 992
      %vm5319 = vcmp.lt.s32.totalorder %v5191, 992
      %vm5320 = vcmp.lt.s32.totalorder %v5192, 992
      %5321 = vrot.lane.b32.xlu0 %v5179, 33
      %v5322 = vpop.permute.xlu0 %5321
      %5323 = vrot.lane.b32.xlu0 %v5163, 33
      %v5324 = vpop.permute.xlu0 %5323
      %5325 = vrot.lane.b32.xlu0 %v5180, 33
      %v5326 = vpop.permute.xlu0 %5325
      %5327 = vrot.lane.b32.xlu0 %v5164, 33
      %v5328 = vpop.permute.xlu0 %5327
      %5329 = vrot.lane.b32.xlu0 %v5181, 33
      %v5330 = vpop.permute.xlu0 %5329
      %5331 = vrot.lane.b32.xlu0 %v5165, 33
      %v5332 = vpop.permute.xlu0 %5331
      %5333 = vrot.lane.b32.xlu0 %v5182, 33
      %v5334 = vpop.permute.xlu0 %5333
      %5335 = vrot.lane.b32.xlu0 %v5166, 33
      %v5336 = vpop.permute.xlu0 %5335
      %5337 = vrot.lane.b32.xlu0 %v5183, 33
      %v5338 = vpop.permute.xlu0 %5337
      %5339 = vrot.lane.b32.xlu0 %v5167, 33
      %v5340 = vpop.permute.xlu0 %5339
      %5341 = vrot.lane.b32.xlu0 %v5184, 33
      %v5342 = vpop.permute.xlu0 %5341
      %5343 = vrot.lane.b32.xlu0 %v5168, 33
      %v5344 = vpop.permute.xlu0 %5343
      %5345 = vrot.lane.b32.xlu0 %v5185, 33
      %v5346 = vpop.permute.xlu0 %5345
      %5347 = vrot.lane.b32.xlu0 %v5169, 33
      %v5348 = vpop.permute.xlu0 %5347
      %5349 = vrot.lane.b32.xlu0 %v5186, 33
      %v5350 = vpop.permute.xlu0 %5349
      %5351 = vrot.lane.b32.xlu0 %v5170, 33
      %v5352 = vpop.permute.xlu0 %5351
      %vm5353 = vcmp.lt.s32.totalorder %v1223, 33
      %v5354 = vsel %vm5353, %v5346, %v5350
      %v5355 = vsel %vm5353, %v5348, %v5352
      %v5356 = vsel %vm5353, %v5342, %v5346
      %v5357 = vsel %vm5353, %v5344, %v5348
      %v5358 = vsel %vm5353, %v5338, %v5342
      %v5359 = vsel %vm5353, %v5340, %v5344
      %v5360 = vsel %vm5353, %v5334, %v5338
      %v5361 = vsel %vm5353, %v5336, %v5340
      %v5362 = vsel %vm5353, %v5330, %v5334
      %v5363 = vsel %vm5353, %v5332, %v5336
      %v5364 = vsel %vm5353, %v5326, %v5330
      %v5365 = vsel %vm5353, %v5328, %v5332
      %v5366 = vsel %vm5353, %v5322, %v5326
      %v5367 = vsel %vm5353, %v5324, %v5328
      %v5368 = vsel %vm5353, %v5350, %v5322
      %v5369 = vsel %vm5353, %v5352, %v5324
      %vm5370 = vmand %vm5289, %vm5305
      %vm5371 = vmand %vm5290, %vm5306
      %vm5372 = vmand %vm5291, %vm5307
      %vm5373 = vmand %vm5292, %vm5308
      %vm5374 = vmand %vm5293, %vm5309
      %vm5375 = vmand %vm5294, %vm5310
      %vm5376 = vmand %vm5295, %vm5311
      %vm5377 = vmand %vm5296, %vm5312
      %v5378 = vsel %vm5370, 1, 0
      %v5379 = vsel %vm5371, 1, 0
      %v5380 = vsel %vm5372, 1, 0
      %v5381 = vsel %vm5373, 1, 0
      %v5382 = vsel %vm5374, 1, 0
      %v5383 = vsel %vm5375, 1, 0
      %v5384 = vsel %vm5376, 1, 0
      %v5385 = vsel %vm5377, 1, 0
      %vm5386 = vcmp.eq.s32.totalorder %v5378, 1
      %vm5387 = vcmp.eq.s32.totalorder %v5379, 1
      %vm5388 = vcmp.eq.s32.totalorder %v5380, 1
      %vm5389 = vcmp.eq.s32.totalorder %v5381, 1
      %vm5390 = vcmp.eq.s32.totalorder %v5382, 1
      %vm5391 = vcmp.eq.s32.totalorder %v5383, 1
      %vm5392 = vcmp.eq.s32.totalorder %v5384, 1
      %vm5393 = vcmp.eq.s32.totalorder %v5385, 1
      %v5394 = vsel %vm5386, %v5368, 0.0
      %v5395 = vsel %vm5387, %v5366, 0.0
      %v5396 = vsel %vm5388, %v5364, 0.0
      %v5397 = vsel %vm5389, %v5362, 0.0
      %v5398 = vsel %vm5390, %v5360, 0.0
      %v5399 = vsel %vm5391, %v5358, 0.0
      %v5400 = vsel %vm5392, %v5356, 0.0
      %v5401 = vsel %vm5393, %v5354, 0.0
      %v5402 = vsel %vm5386, %v5369, 0.0
      %v5403 = vsel %vm5387, %v5367, 0.0
      %v5404 = vsel %vm5388, %v5365, 0.0
      %v5405 = vsel %vm5389, %v5363, 0.0
      %v5406 = vsel %vm5390, %v5361, 0.0
      %v5407 = vsel %vm5391, %v5359, 0.0
      %v5408 = vsel %vm5392, %v5357, 0.0
      %v5409 = vsel %vm5393, %v5355, 0.0
      %v5410 = vld [vmem:[%s11] sm:$0x3]
      %v5411 = vpack.c.bf16 %v5402, %v5394
      %v5412 = vpack.c.bf16 %v5403, %v5395
      %v5413 = vpack.c.bf16 %v5404, %v5396
      %v5414 = vpack.c.bf16 %v5405, %v5397
      %v5415 = vpack.c.bf16 %v5406, %v5398
      %v5416 = vpack.c.bf16 %v5407, %v5399
      %v5417 = vpack.c.bf16 %v5408, %v5400
      %v5418 = vpack.c.bf16 %v5409, %v5401
      %5419 = vrot.lane.b32.xlu0 %v5179, 32
      %v5420 = vpop.permute.xlu0 %5419
      %5421 = vrot.lane.b32.xlu0 %v5163, 32
      %v5422 = vpop.permute.xlu0 %5421
      %5423 = vrot.lane.b32.xlu0 %v5180, 32
      %v5424 = vpop.permute.xlu0 %5423
      %5425 = vrot.lane.b32.xlu0 %v5164, 32
      %v5426 = vpop.permute.xlu0 %5425
      %5427 = vrot.lane.b32.xlu0 %v5181, 32
      %v5428 = vpop.permute.xlu0 %5427
      %5429 = vrot.lane.b32.xlu0 %v5165, 32
      %v5430 = vpop.permute.xlu0 %5429
      %5431 = vrot.lane.b32.xlu0 %v5182, 32
      %v5432 = vpop.permute.xlu0 %5431
      %5433 = vrot.lane.b32.xlu0 %v5166, 32
      %v5434 = vpop.permute.xlu0 %5433
      %5435 = vrot.lane.b32.xlu0 %v5183, 32
      %v5436 = vpop.permute.xlu0 %5435
      %5437 = vrot.lane.b32.xlu0 %v5167, 32
      %v5438 = vpop.permute.xlu0 %5437
      %5439 = vrot.lane.b32.xlu0 %v5184, 32
      %v5440 = vpop.permute.xlu0 %5439
      %5441 = vrot.lane.b32.xlu0 %v5168, 32
      %v5442 = vpop.permute.xlu0 %5441
      %5443 = vrot.lane.b32.xlu0 %v5185, 32
      %v5444 = vpop.permute.xlu0 %5443
      %5445 = vrot.lane.b32.xlu0 %v5169, 32
      %v5446 = vpop.permute.xlu0 %5445
      %5447 = vrot.lane.b32.xlu0 %v5186, 32
      %v5448 = vpop.permute.xlu0 %5447
      %5449 = vrot.lane.b32.xlu0 %v5170, 32
      %v5450 = vpop.permute.xlu0 %5449
      %vm5451 = vcmp.lt.s32.totalorder %v1223, 32
      %v5452 = vsel %vm5451, %v5444, %v5448
      %v5453 = vsel %vm5451, %v5446, %v5450
      %v5454 = vsel %vm5451, %v5440, %v5444
      %v5455 = vsel %vm5451, %v5442, %v5446
      %v5456 = vsel %vm5451, %v5436, %v5440
      %v5457 = vsel %vm5451, %v5438, %v5442
      %v5458 = vsel %vm5451, %v5432, %v5436
      %v5459 = vsel %vm5451, %v5434, %v5438
      %v5460 = vsel %vm5451, %v5428, %v5432
      %v5461 = vsel %vm5451, %v5430, %v5434
      %v5462 = vsel %vm5451, %v5424, %v5428
      %v5463 = vsel %vm5451, %v5426, %v5430
      %v5464 = vsel %vm5451, %v5420, %v5424
      %v5465 = vsel %vm5451, %v5422, %v5426
      %v5466 = vsel %vm5451, %v5448, %v5420
      %v5467 = vsel %vm5451, %v5450, %v5422
      %v5468 = vsel %vm5305, 1, 0
      %v5469 = vsel %vm5306, 1, 0
      %v5470 = vsel %vm5307, 1, 0
      %v5471 = vsel %vm5308, 1, 0
      %v5472 = vsel %vm5309, 1, 0
      %v5473 = vsel %vm5310, 1, 0
      %v5474 = vsel %vm5311, 1, 0
      %v5475 = vsel %vm5312, 1, 0
      %vm5476 = vcmp.eq.s32.totalorder %v5468, 1
      %vm5477 = vcmp.eq.s32.totalorder %v5469, 1
      %vm5478 = vcmp.eq.s32.totalorder %v5470, 1
      %vm5479 = vcmp.eq.s32.totalorder %v5471, 1
      %vm5480 = vcmp.eq.s32.totalorder %v5472, 1
      %vm5481 = vcmp.eq.s32.totalorder %v5473, 1
      %vm5482 = vcmp.eq.s32.totalorder %v5474, 1
      %vm5483 = vcmp.eq.s32.totalorder %v5475, 1
      %v5484 = vsel %vm5476, %v5466, 0.0
      %v5485 = vsel %vm5477, %v5464, 0.0
      %v5486 = vsel %vm5478, %v5462, 0.0
      %v5487 = vsel %vm5479, %v5460, 0.0
      %v5488 = vsel %vm5480, %v5458, 0.0
      %v5489 = vsel %vm5481, %v5456, 0.0
      %v5490 = vsel %vm5482, %v5454, 0.0
      %v5491 = vsel %vm5483, %v5452, 0.0
      %v5492 = vsel %vm5476, %v5467, 0.0
      %v5493 = vsel %vm5477, %v5465, 0.0
      %v5494 = vsel %vm5478, %v5463, 0.0
      %v5495 = vsel %vm5479, %v5461, 0.0
      %v5496 = vsel %vm5480, %v5459, 0.0
      %v5497 = vsel %vm5481, %v5457, 0.0
      %v5498 = vsel %vm5482, %v5455, 0.0
      %v5499 = vsel %vm5483, %v5453, 0.0
      %s5500 = scalar_lea.vmem %s11, 2
      %v5501 = vld [vmem:[%s5500] sm:$0x3]
      %v5502 = vpack.c.bf16 %v5492, %v5484
      %v5503 = vpack.c.bf16 %v5493, %v5485
      %v5504 = vpack.c.bf16 %v5494, %v5486
      %v5505 = vpack.c.bf16 %v5495, %v5487
      %v5506 = vpack.c.bf16 %v5496, %v5488
      %v5507 = vpack.c.bf16 %v5497, %v5489
      %v5508 = vpack.c.bf16 %v5498, %v5490
      %v5509 = vpack.c.bf16 %v5499, %v5491
      %vm5510 = vcmask 97280
      %v5512 = vsel %vm5510, %v5501, 0
      %vm5514 = vcmask 1045504
      %v5516 = vsel %vm5514, %v5502, 0
      %v5519 = vsel %vm5514, %v5503, 0
      %v5522 = vsel %vm5514, %v5504, 0
      %v5525 = vsel %vm5514, %v5505, 0
      %v5528 = vsel %vm5514, %v5506, 0
      %v5531 = vsel %vm5514, %v5507, 0
      %v5534 = vsel %vm5514, %v5508, 0
      %v5537 = vsel %vm5514, %v5509, 0
      %5539 = vmatprep.subr.bf16.mxu0 0
      %5540 = vmatpush1.bf16.msra.mxu0 0
      %5541 = vmatprep.subr.bf16.mxu0 0
      %5542 = vmatpush1.bf16.msra.mxu0 0
      %5543 = vmatprep.subr.bf16.mxu0 0
      %5544 = vmatpush1.bf16.msra.mxu0 0
      %5545 = vmatprep.subr.bf16.mxu0 0
      %5546 = vmatpush1.bf16.msra.mxu0 0
      %5547 = vmatprep.subr.bf16.mxu0 0
      %5548 = vmatpush1.bf16.msra.mxu0 0
      %5549 = vmatprep.subr.bf16.mxu0 0
      %5550 = vmatpush1.bf16.msra.mxu0 0
      %5551 = vmatprep.subr.bf16.mxu0 0
      %5552 = vmatpush1.bf16.msra.mxu0 0
      %5553 = vmatprep.subr.bf16.mxu0 %v5519
      %5554 = vmatpush1.bf16.msra.mxu0 %v5516
      %5555 = vmatprep.subr.bf16.mxu0 0
      %5556 = vmatpush2.bf16.msra.mxu0 0
      %5557 = vmatprep.subr.bf16.mxu0 0
      %5558 = vmatpush2.bf16.msra.mxu0 0
      %5559 = vmatprep.subr.bf16.mxu0 0
      %5560 = vmatpush2.bf16.msra.mxu0 0
      %5561 = vmatprep.subr.bf16.mxu0 0
      %5562 = vmatpush2.bf16.msra.mxu0 0
      %5563 = vmatprep.subr.bf16.mxu0 0
      %5564 = vmatpush2.bf16.msra.mxu0 0
      %5565 = vmatprep.subr.bf16.mxu0 0
      %5566 = vmatpush2.bf16.msra.mxu0 0
      %5567 = vmatprep.subr.bf16.mxu0 0
      %5568 = vmatpush2.bf16.msra.mxu0 0
      %5569 = vmatprep.subr.bf16.mxu0 0
      %5570 = vmatpush2.bf16.msra.mxu0 0
      %5571 = vmatprep.mubr.bf16.mxu0 0
      %5572 = vmatmul.mubr.bf16.gmra.mxu0 %v5512
      %v5573 = vpop.f32.mrf.mxu0
      %v5574 = vadd.f32 0.0, %v5573
      %v5575 = vpop.f32.mrf.mxu0
      %v5576 = vadd.f32 0.0, %v5575
      %v5577 = vpop.f32.mrf.mxu0
      %v5578 = vpop.f32.mrf.mxu0
      %5579 = vdwg.mxu0
      %5580 = vmatprep.subr.bf16.mxu0 0
      %5581 = vmatpush1.bf16.msra.mxu0 0
      %5582 = vmatprep.subr.bf16.mxu0 0
      %5583 = vmatpush1.bf16.msra.mxu0 0
      %5584 = vmatprep.subr.bf16.mxu0 0
      %5585 = vmatpush1.bf16.msra.mxu0 0
      %5586 = vmatprep.subr.bf16.mxu0 0
      %5587 = vmatpush1.bf16.msra.mxu0 0
      %5588 = vmatprep.subr.bf16.mxu0 0
      %5589 = vmatpush1.bf16.msra.mxu0 0
      %5590 = vmatprep.subr.bf16.mxu0 0
      %5591 = vmatpush1.bf16.msra.mxu0 0
      %5592 = vmatprep.subr.bf16.mxu0 0
      %5593 = vmatpush1.bf16.msra.mxu0 0
      %5594 = vmatprep.subr.bf16.mxu0 %v5525
      %5595 = vmatpush1.bf16.msra.mxu0 %v5522
      %5596 = vmatprep.subr.bf16.mxu0 0
      %5597 = vmatpush2.bf16.msra.mxu0 0
      %5598 = vmatprep.subr.bf16.mxu0 0
      %5599 = vmatpush2.bf16.msra.mxu0 0
      %5600 = vmatprep.subr.bf16.mxu0 0
      %5601 = vmatpush2.bf16.msra.mxu0 0
      %5602 = vmatprep.subr.bf16.mxu0 0
      %5603 = vmatpush2.bf16.msra.mxu0 0
      %5604 = vmatprep.subr.bf16.mxu0 0
      %5605 = vmatpush2.bf16.msra.mxu0 0
      %5606 = vmatprep.subr.bf16.mxu0 0
      %5607 = vmatpush2.bf16.msra.mxu0 0
      %5608 = vmatprep.subr.bf16.mxu0 0
      %5609 = vmatpush2.bf16.msra.mxu0 0
      %5610 = vmatprep.subr.bf16.mxu0 0
      %5611 = vmatpush2.bf16.msra.mxu0 0
      %5612 = vmatprep.mubr.bf16.mxu0 0
      %5613 = vmatmul.mubr.bf16.gmra.mxu0 %v5512
      %v5614 = vpop.f32.mrf.mxu0
      %v5615 = vadd.f32 0.0, %v5614
      %v5616 = vpop.f32.mrf.mxu0
      %v5617 = vadd.f32 0.0, %v5616
      %v5618 = vpop.f32.mrf.mxu0
      %v5619 = vpop.f32.mrf.mxu0
      %5620 = vdwg.mxu0
      %5621 = vmatprep.subr.bf16.mxu0 0
      %5622 = vmatpush1.bf16.msra.mxu0 0
      %5623 = vmatprep.subr.bf16.mxu0 0
      %5624 = vmatpush1.bf16.msra.mxu0 0
      %5625 = vmatprep.subr.bf16.mxu0 0
      %5626 = vmatpush1.bf16.msra.mxu0 0
      %5627 = vmatprep.subr.bf16.mxu0 0
      %5628 = vmatpush1.bf16.msra.mxu0 0
      %5629 = vmatprep.subr.bf16.mxu0 0
      %5630 = vmatpush1.bf16.msra.mxu0 0
      %5631 = vmatprep.subr.bf16.mxu0 0
      %5632 = vmatpush1.bf16.msra.mxu0 0
      %5633 = vmatprep.subr.bf16.mxu0 0
      %5634 = vmatpush1.bf16.msra.mxu0 0
      %5635 = vmatprep.subr.bf16.mxu0 %v5531
      %5636 = vmatpush1.bf16.msra.mxu0 %v5528
      %5637 = vmatprep.subr.bf16.mxu0 0
      %5638 = vmatpush2.bf16.msra.mxu0 0
      %5639 = vmatprep.subr.bf16.mxu0 0
      %5640 = vmatpush2.bf16.msra.mxu0 0
      %5641 = vmatprep.subr.bf16.mxu0 0
      %5642 = vmatpush2.bf16.msra.mxu0 0
      %5643 = vmatprep.subr.bf16.mxu0 0
      %5644 = vmatpush2.bf16.msra.mxu0 0
      %5645 = vmatprep.subr.bf16.mxu0 0
      %5646 = vmatpush2.bf16.msra.mxu0 0
      %5647 = vmatprep.subr.bf16.mxu0 0
      %5648 = vmatpush2.bf16.msra.mxu0 0
      %5649 = vmatprep.subr.bf16.mxu0 0
      %5650 = vmatpush2.bf16.msra.mxu0 0
      %5651 = vmatprep.subr.bf16.mxu0 0
      %5652 = vmatpush2.bf16.msra.mxu0 0
      %5653 = vmatprep.mubr.bf16.mxu0 0
      %5654 = vmatmul.mubr.bf16.gmra.mxu0 %v5512
      %v5655 = vpop.f32.mrf.mxu0
      %v5656 = vadd.f32 0.0, %v5655
      %v5657 = vpop.f32.mrf.mxu0
      %v5658 = vadd.f32 0.0, %v5657
      %v5659 = vpop.f32.mrf.mxu0
      %v5660 = vpop.f32.mrf.mxu0
      %5661 = vdwg.mxu0
      %5662 = vmatprep.subr.bf16.mxu0 0
      %5663 = vmatpush1.bf16.msra.mxu0 0
      %5664 = vmatprep.subr.bf16.mxu0 0
      %5665 = vmatpush1.bf16.msra.mxu0 0
      %5666 = vmatprep.subr.bf16.mxu0 0
      %5667 = vmatpush1.bf16.msra.mxu0 0
      %5668 = vmatprep.subr.bf16.mxu0 0
      %5669 = vmatpush1.bf16.msra.mxu0 0
      %5670 = vmatprep.subr.bf16.mxu0 0
      %5671 = vmatpush1.bf16.msra.mxu0 0
      %5672 = vmatprep.subr.bf16.mxu0 0
      %5673 = vmatpush1.bf16.msra.mxu0 0
      %5674 = vmatprep.subr.bf16.mxu0 0
      %5675 = vmatpush1.bf16.msra.mxu0 0
      %5676 = vmatprep.subr.bf16.mxu0 %v5537
      %5677 = vmatpush1.bf16.msra.mxu0 %v5534
      %5678 = vmatprep.subr.bf16.mxu0 0
      %5679 = vmatpush2.bf16.msra.mxu0 0
      %5680 = vmatprep.subr.bf16.mxu0 0
      %5681 = vmatpush2.bf16.msra.mxu0 0
      %5682 = vmatprep.subr.bf16.mxu0 0
      %5683 = vmatpush2.bf16.msra.mxu0 0
      %5684 = vmatprep.subr.bf16.mxu0 0
      %5685 = vmatpush2.bf16.msra.mxu0 0
      %5686 = vmatprep.subr.bf16.mxu0 0
      %5687 = vmatpush2.bf16.msra.mxu0 0
      %5688 = vmatprep.subr.bf16.mxu0 0
      %5689 = vmatpush2.bf16.msra.mxu0 0
      %5690 = vmatprep.subr.bf16.mxu0 0
      %5691 = vmatpush2.bf16.msra.mxu0 0
      %5692 = vmatprep.subr.bf16.mxu0 0
      %5693 = vmatpush2.bf16.msra.mxu0 0
      %5694 = vmatprep.mubr.bf16.mxu0 0
      %5695 = vmatmul.mubr.bf16.gmra.mxu0 %v5512
      %v5696 = vpop.f32.mrf.mxu0
      %v5697 = vadd.f32 0.0, %v5696
      %v5698 = vpop.f32.mrf.mxu0
      %v5699 = vadd.f32 0.0, %v5698
      %v5700 = vpop.f32.mrf.mxu0
      %v5701 = vpop.f32.mrf.mxu0
      %5702 = vdwg.mxu0
      %v5704 = vsel %vm5510, %v5410, 0
      %v5707 = vsel %vm5514, %v5411, 0
      %v5710 = vsel %vm5514, %v5412, 0
      %v5713 = vsel %vm5514, %v5413, 0
      %v5716 = vsel %vm5514, %v5414, 0
      %v5719 = vsel %vm5514, %v5415, 0
      %v5722 = vsel %vm5514, %v5416, 0
      %v5725 = vsel %vm5514, %v5417, 0
      %v5728 = vsel %vm5514, %v5418, 0
      %5730 = vmatprep.subr.bf16.mxu0 0
      %5731 = vmatpush1.bf16.msra.mxu0 0
      %5732 = vmatprep.subr.bf16.mxu0 0
      %5733 = vmatpush1.bf16.msra.mxu0 0
      %5734 = vmatprep.subr.bf16.mxu0 0
      %5735 = vmatpush1.bf16.msra.mxu0 0
      %5736 = vmatprep.subr.bf16.mxu0 0
      %5737 = vmatpush1.bf16.msra.mxu0 0
      %5738 = vmatprep.subr.bf16.mxu0 0
      %5739 = vmatpush1.bf16.msra.mxu0 0
      %5740 = vmatprep.subr.bf16.mxu0 0
      %5741 = vmatpush1.bf16.msra.mxu0 0
      %5742 = vmatprep.subr.bf16.mxu0 0
      %5743 = vmatpush1.bf16.msra.mxu0 0
      %5744 = vmatprep.subr.bf16.mxu0 %v5710
      %5745 = vmatpush1.bf16.msra.mxu0 %v5707
      %5746 = vmatprep.subr.bf16.mxu0 0
      %5747 = vmatpush2.bf16.msra.mxu0 0
      %5748 = vmatprep.subr.bf16.mxu0 0
      %5749 = vmatpush2.bf16.msra.mxu0 0
      %5750 = vmatprep.subr.bf16.mxu0 0
      %5751 = vmatpush2.bf16.msra.mxu0 0
      %5752 = vmatprep.subr.bf16.mxu0 0
      %5753 = vmatpush2.bf16.msra.mxu0 0
      %5754 = vmatprep.subr.bf16.mxu0 0
      %5755 = vmatpush2.bf16.msra.mxu0 0
      %5756 = vmatprep.subr.bf16.mxu0 0
      %5757 = vmatpush2.bf16.msra.mxu0 0
      %5758 = vmatprep.subr.bf16.mxu0 0
      %5759 = vmatpush2.bf16.msra.mxu0 0
      %5760 = vmatprep.subr.bf16.mxu0 0
      %5761 = vmatpush2.bf16.msra.mxu0 0
      %5762 = vmatprep.mubr.bf16.mxu0 0
      %5763 = vmatmul.mubr.bf16.gmra.mxu0 %v5704
      %v5764 = vpop.f32.mrf.mxu0
      %v5765 = vadd.f32 %v5574, %v5764
      %v5766 = vpop.f32.mrf.mxu0
      %v5767 = vadd.f32 %v5576, %v5766
      %v5768 = vpop.f32.mrf.mxu0
      %v5769 = vpop.f32.mrf.mxu0
      %5770 = vdwg.mxu0
      %5771 = vmatprep.subr.bf16.mxu0 0
      %5772 = vmatpush1.bf16.msra.mxu0 0
      %5773 = vmatprep.subr.bf16.mxu0 0
      %5774 = vmatpush1.bf16.msra.mxu0 0
      %5775 = vmatprep.subr.bf16.mxu0 0
      %5776 = vmatpush1.bf16.msra.mxu0 0
      %5777 = vmatprep.subr.bf16.mxu0 0
      %5778 = vmatpush1.bf16.msra.mxu0 0
      %5779 = vmatprep.subr.bf16.mxu0 0
      %5780 = vmatpush1.bf16.msra.mxu0 0
      %5781 = vmatprep.subr.bf16.mxu0 0
      %5782 = vmatpush1.bf16.msra.mxu0 0
      %5783 = vmatprep.subr.bf16.mxu0 0
      %5784 = vmatpush1.bf16.msra.mxu0 0
      %5785 = vmatprep.subr.bf16.mxu0 %v5716
      %5786 = vmatpush1.bf16.msra.mxu0 %v5713
      %5787 = vmatprep.subr.bf16.mxu0 0
      %5788 = vmatpush2.bf16.msra.mxu0 0
      %5789 = vmatprep.subr.bf16.mxu0 0
      %5790 = vmatpush2.bf16.msra.mxu0 0
      %5791 = vmatprep.subr.bf16.mxu0 0
      %5792 = vmatpush2.bf16.msra.mxu0 0
      %5793 = vmatprep.subr.bf16.mxu0 0
      %5794 = vmatpush2.bf16.msra.mxu0 0
      %5795 = vmatprep.subr.bf16.mxu0 0
      %5796 = vmatpush2.bf16.msra.mxu0 0
      %5797 = vmatprep.subr.bf16.mxu0 0
      %5798 = vmatpush2.bf16.msra.mxu0 0
      %5799 = vmatprep.subr.bf16.mxu0 0
      %5800 = vmatpush2.bf16.msra.mxu0 0
      %5801 = vmatprep.subr.bf16.mxu0 0
      %5802 = vmatpush2.bf16.msra.mxu0 0
      %5803 = vmatprep.mubr.bf16.mxu0 0
      %5804 = vmatmul.mubr.bf16.gmra.mxu0 %v5704
      %v5805 = vpop.f32.mrf.mxu0
      %v5806 = vadd.f32 %v5615, %v5805
      %v5807 = vpop.f32.mrf.mxu0
      %v5808 = vadd.f32 %v5617, %v5807
      %v5809 = vpop.f32.mrf.mxu0
      %v5810 = vpop.f32.mrf.mxu0
      %5811 = vdwg.mxu0
      %5812 = vmatprep.subr.bf16.mxu0 0
      %5813 = vmatpush1.bf16.msra.mxu0 0
      %5814 = vmatprep.subr.bf16.mxu0 0
      %5815 = vmatpush1.bf16.msra.mxu0 0
      %5816 = vmatprep.subr.bf16.mxu0 0
      %5817 = vmatpush1.bf16.msra.mxu0 0
      %5818 = vmatprep.subr.bf16.mxu0 0
      %5819 = vmatpush1.bf16.msra.mxu0 0
      %5820 = vmatprep.subr.bf16.mxu0 0
      %5821 = vmatpush1.bf16.msra.mxu0 0
      %5822 = vmatprep.subr.bf16.mxu0 0
      %5823 = vmatpush1.bf16.msra.mxu0 0
      %5824 = vmatprep.subr.bf16.mxu0 0
      %5825 = vmatpush1.bf16.msra.mxu0 0
      %5826 = vmatprep.subr.bf16.mxu0 %v5722
      %5827 = vmatpush1.bf16.msra.mxu0 %v5719
      %5828 = vmatprep.subr.bf16.mxu0 0
      %5829 = vmatpush2.bf16.msra.mxu0 0
      %5830 = vmatprep.subr.bf16.mxu0 0
      %5831 = vmatpush2.bf16.msra.mxu0 0
      %5832 = vmatprep.subr.bf16.mxu0 0
      %5833 = vmatpush2.bf16.msra.mxu0 0
      %5834 = vmatprep.subr.bf16.mxu0 0
      %5835 = vmatpush2.bf16.msra.mxu0 0
      %5836 = vmatprep.subr.bf16.mxu0 0
      %5837 = vmatpush2.bf16.msra.mxu0 0
      %5838 = vmatprep.subr.bf16.mxu0 0
      %5839 = vmatpush2.bf16.msra.mxu0 0
      %5840 = vmatprep.subr.bf16.mxu0 0
      %5841 = vmatpush2.bf16.msra.mxu0 0
      %5842 = vmatprep.subr.bf16.mxu0 0
      %5843 = vmatpush2.bf16.msra.mxu0 0
      %5844 = vmatprep.mubr.bf16.mxu0 0
      %5845 = vmatmul.mubr.bf16.gmra.mxu0 %v5704
      %v5846 = vpop.f32.mrf.mxu0
      %v5847 = vadd.f32 %v5656, %v5846
      %v5848 = vpop.f32.mrf.mxu0
      %v5849 = vadd.f32 %v5658, %v5848
      %v5850 = vpop.f32.mrf.mxu0
      %v5851 = vpop.f32.mrf.mxu0
      %5852 = vdwg.mxu0
      %5853 = vmatprep.subr.bf16.mxu0 0
      %5854 = vmatpush1.bf16.msra.mxu0 0
      %5855 = vmatprep.subr.bf16.mxu0 0
      %5856 = vmatpush1.bf16.msra.mxu0 0
      %5857 = vmatprep.subr.bf16.mxu0 0
      %5858 = vmatpush1.bf16.msra.mxu0 0
      %5859 = vmatprep.subr.bf16.mxu0 0
      %5860 = vmatpush1.bf16.msra.mxu0 0
      %5861 = vmatprep.subr.bf16.mxu0 0
      %5862 = vmatpush1.bf16.msra.mxu0 0
      %5863 = vmatprep.subr.bf16.mxu0 0
      %5864 = vmatpush1.bf16.msra.mxu0 0
      %5865 = vmatprep.subr.bf16.mxu0 0
      %5866 = vmatpush1.bf16.msra.mxu0 0
      %5867 = vmatprep.subr.bf16.mxu0 %v5728
      %5868 = vmatpush1.bf16.msra.mxu0 %v5725
      %5869 = vmatprep.subr.bf16.mxu0 0
      %5870 = vmatpush2.bf16.msra.mxu0 0
      %5871 = vmatprep.subr.bf16.mxu0 0
      %5872 = vmatpush2.bf16.msra.mxu0 0
      %5873 = vmatprep.subr.bf16.mxu0 0
      %5874 = vmatpush2.bf16.msra.mxu0 0
      %5875 = vmatprep.subr.bf16.mxu0 0
      %5876 = vmatpush2.bf16.msra.mxu0 0
      %5877 = vmatprep.subr.bf16.mxu0 0
      %5878 = vmatpush2.bf16.msra.mxu0 0
      %5879 = vmatprep.subr.bf16.mxu0 0
      %5880 = vmatpush2.bf16.msra.mxu0 0
      %5881 = vmatprep.subr.bf16.mxu0 0
      %5882 = vmatpush2.bf16.msra.mxu0 0
      %5883 = vmatprep.subr.bf16.mxu0 0
      %5884 = vmatpush2.bf16.msra.mxu0 0
      %5885 = vmatprep.mubr.bf16.mxu0 0
      %5886 = vmatmul.mubr.bf16.gmra.mxu0 %v5704
      %v5887 = vpop.f32.mrf.mxu0
      %v5888 = vadd.f32 %v5697, %v5887
      %v5889 = vpop.f32.mrf.mxu0
      %v5890 = vadd.f32 %v5699, %v5889
      %v5891 = vpop.f32.mrf.mxu0
      %v5892 = vpop.f32.mrf.mxu0
      %5893 = vdwg.mxu0
      %5894 = vrot.lane.b32.xlu0 %v5179, 31
      %v5895 = vpop.permute.xlu0 %5894
      %5896 = vrot.lane.b32.xlu0 %v5163, 31
      %v5897 = vpop.permute.xlu0 %5896
      %5898 = vrot.lane.b32.xlu0 %v5180, 31
      %v5899 = vpop.permute.xlu0 %5898
      %5900 = vrot.lane.b32.xlu0 %v5164, 31
      %v5901 = vpop.permute.xlu0 %5900
      %5902 = vrot.lane.b32.xlu0 %v5181, 31
      %v5903 = vpop.permute.xlu0 %5902
      %5904 = vrot.lane.b32.xlu0 %v5165, 31
      %v5905 = vpop.permute.xlu0 %5904
      %5906 = vrot.lane.b32.xlu0 %v5182, 31
      %v5907 = vpop.permute.xlu0 %5906
      %5908 = vrot.lane.b32.xlu0 %v5166, 31
      %v5909 = vpop.permute.xlu0 %5908
      %5910 = vrot.lane.b32.xlu0 %v5183, 31
      %v5911 = vpop.permute.xlu0 %5910
      %5912 = vrot.lane.b32.xlu0 %v5167, 31
      %v5913 = vpop.permute.xlu0 %5912
      %5914 = vrot.lane.b32.xlu0 %v5184, 31
      %v5915 = vpop.permute.xlu0 %5914
      %5916 = vrot.lane.b32.xlu0 %v5168, 31
      %v5917 = vpop.permute.xlu0 %5916
      %5918 = vrot.lane.b32.xlu0 %v5185, 31
      %v5919 = vpop.permute.xlu0 %5918
      %5920 = vrot.lane.b32.xlu0 %v5169, 31
      %v5921 = vpop.permute.xlu0 %5920
      %5922 = vrot.lane.b32.xlu0 %v5186, 31
      %v5923 = vpop.permute.xlu0 %5922
      %5924 = vrot.lane.b32.xlu0 %v5170, 31
      %v5925 = vpop.permute.xlu0 %5924
      %vm5926 = vcmp.lt.s32.totalorder %v1223, 31
      %v5927 = vsel %vm5926, %v5919, %v5923
      %v5928 = vsel %vm5926, %v5921, %v5925
      %v5929 = vsel %vm5926, %v5915, %v5919
      %v5930 = vsel %vm5926, %v5917, %v5921
      %v5931 = vsel %vm5926, %v5911, %v5915
      %v5932 = vsel %vm5926, %v5913, %v5917
      %v5933 = vsel %vm5926, %v5907, %v5911
      %v5934 = vsel %vm5926, %v5909, %v5913
      %v5935 = vsel %vm5926, %v5903, %v5907
      %v5936 = vsel %vm5926, %v5905, %v5909
      %v5937 = vsel %vm5926, %v5899, %v5903
      %v5938 = vsel %vm5926, %v5901, %v5905
      %v5939 = vsel %vm5926, %v5895, %v5899
      %v5940 = vsel %vm5926, %v5897, %v5901
      %v5941 = vsel %vm5926, %v5923, %v5895
      %v5942 = vsel %vm5926, %v5925, %v5897
      %vm5943 = vmand %vm5297, %vm5305
      %vm5944 = vmand %vm5298, %vm5306
      %vm5945 = vmand %vm5299, %vm5307
      %vm5946 = vmand %vm5300, %vm5308
      %vm5947 = vmand %vm5301, %vm5309
      %vm5948 = vmand %vm5302, %vm5310
      %vm5949 = vmand %vm5303, %vm5311
      %vm5950 = vmand %vm5304, %vm5312
      %v5951 = vsel %vm5943, 1, 0
      %v5952 = vsel %vm5944, 1, 0
      %v5953 = vsel %vm5945, 1, 0
      %v5954 = vsel %vm5946, 1, 0
      %v5955 = vsel %vm5947, 1, 0
      %v5956 = vsel %vm5948, 1, 0
      %v5957 = vsel %vm5949, 1, 0
      %v5958 = vsel %vm5950, 1, 0
      %vm5959 = vcmp.eq.s32.totalorder %v5951, 1
      %vm5960 = vcmp.eq.s32.totalorder %v5952, 1
      %vm5961 = vcmp.eq.s32.totalorder %v5953, 1
      %vm5962 = vcmp.eq.s32.totalorder %v5954, 1
      %vm5963 = vcmp.eq.s32.totalorder %v5955, 1
      %vm5964 = vcmp.eq.s32.totalorder %v5956, 1
      %vm5965 = vcmp.eq.s32.totalorder %v5957, 1
      %vm5966 = vcmp.eq.s32.totalorder %v5958, 1
      %v5967 = vsel %vm5959, %v5941, 0.0
      %v5968 = vsel %vm5960, %v5939, 0.0
      %v5969 = vsel %vm5961, %v5937, 0.0
      %v5970 = vsel %vm5962, %v5935, 0.0
      %v5971 = vsel %vm5963, %v5933, 0.0
      %v5972 = vsel %vm5964, %v5931, 0.0
      %v5973 = vsel %vm5965, %v5929, 0.0
      %v5974 = vsel %vm5966, %v5927, 0.0
      %v5975 = vsel %vm5959, %v5942, 0.0
      %v5976 = vsel %vm5960, %v5940, 0.0
      %v5977 = vsel %vm5961, %v5938, 0.0
      %v5978 = vsel %vm5962, %v5936, 0.0
      %v5979 = vsel %vm5963, %v5934, 0.0
      %v5980 = vsel %vm5964, %v5932, 0.0
      %v5981 = vsel %vm5965, %v5930, 0.0
      %v5982 = vsel %vm5966, %v5928, 0.0
      %s5983 = scalar_lea.vmem %s11, 4
      %v5984 = vld [vmem:[%s5983] sm:$0x3]
      %v5985 = vpack.c.bf16 %v5975, %v5967
      %v5986 = vpack.c.bf16 %v5976, %v5968
      %v5987 = vpack.c.bf16 %v5977, %v5969
      %v5988 = vpack.c.bf16 %v5978, %v5970
      %v5989 = vpack.c.bf16 %v5979, %v5971
      %v5990 = vpack.c.bf16 %v5980, %v5972
      %v5991 = vpack.c.bf16 %v5981, %v5973
      %v5992 = vpack.c.bf16 %v5982, %v5974
      %v5994 = vsel %vm5510, %v5984, 0
      %v5997 = vsel %vm5514, %v5985, 0
      %v6000 = vsel %vm5514, %v5986, 0
      %v6003 = vsel %vm5514, %v5987, 0
      %v6006 = vsel %vm5514, %v5988, 0
      %v6009 = vsel %vm5514, %v5989, 0
      %v6012 = vsel %vm5514, %v5990, 0
      %v6015 = vsel %vm5514, %v5991, 0
      %v6018 = vsel %vm5514, %v5992, 0
      %6020 = vmatprep.subr.bf16.mxu0 0
      %6021 = vmatpush1.bf16.msra.mxu0 0
      %6022 = vmatprep.subr.bf16.mxu0 0
      %6023 = vmatpush1.bf16.msra.mxu0 0
      %6024 = vmatprep.subr.bf16.mxu0 0
      %6025 = vmatpush1.bf16.msra.mxu0 0
      %6026 = vmatprep.subr.bf16.mxu0 0
      %6027 = vmatpush1.bf16.msra.mxu0 0
      %6028 = vmatprep.subr.bf16.mxu0 0
      %6029 = vmatpush1.bf16.msra.mxu0 0
      %6030 = vmatprep.subr.bf16.mxu0 0
      %6031 = vmatpush1.bf16.msra.mxu0 0
      %6032 = vmatprep.subr.bf16.mxu0 0
      %6033 = vmatpush1.bf16.msra.mxu0 0
      %6034 = vmatprep.subr.bf16.mxu0 %v6000
      %6035 = vmatpush1.bf16.msra.mxu0 %v5997
      %6036 = vmatprep.subr.bf16.mxu0 0
      %6037 = vmatpush2.bf16.msra.mxu0 0
      %6038 = vmatprep.subr.bf16.mxu0 0
      %6039 = vmatpush2.bf16.msra.mxu0 0
      %6040 = vmatprep.subr.bf16.mxu0 0
      %6041 = vmatpush2.bf16.msra.mxu0 0
      %6042 = vmatprep.subr.bf16.mxu0 0
      %6043 = vmatpush2.bf16.msra.mxu0 0
      %6044 = vmatprep.subr.bf16.mxu0 0
      %6045 = vmatpush2.bf16.msra.mxu0 0
      %6046 = vmatprep.subr.bf16.mxu0 0
      %6047 = vmatpush2.bf16.msra.mxu0 0
      %6048 = vmatprep.subr.bf16.mxu0 0
      %6049 = vmatpush2.bf16.msra.mxu0 0
      %6050 = vmatprep.subr.bf16.mxu0 0
      %6051 = vmatpush2.bf16.msra.mxu0 0
      %6052 = vmatprep.mubr.bf16.mxu0 0
      %6053 = vmatmul.mubr.bf16.gmra.mxu0 %v5994
      %v6054 = vpop.f32.mrf.mxu0
      %v6055 = vadd.f32 0.0, %v6054
      %v6056 = vpop.f32.mrf.mxu0
      %v6057 = vadd.f32 0.0, %v6056
      %v6058 = vpop.f32.mrf.mxu0
      %v6059 = vpop.f32.mrf.mxu0
      %6060 = vdwg.mxu0
      %6061 = vmatprep.subr.bf16.mxu0 0
      %6062 = vmatpush1.bf16.msra.mxu0 0
      %6063 = vmatprep.subr.bf16.mxu0 0
      %6064 = vmatpush1.bf16.msra.mxu0 0
      %6065 = vmatprep.subr.bf16.mxu0 0
      %6066 = vmatpush1.bf16.msra.mxu0 0
      %6067 = vmatprep.subr.bf16.mxu0 0
      %6068 = vmatpush1.bf16.msra.mxu0 0
      %6069 = vmatprep.subr.bf16.mxu0 0
      %6070 = vmatpush1.bf16.msra.mxu0 0
      %6071 = vmatprep.subr.bf16.mxu0 0
      %6072 = vmatpush1.bf16.msra.mxu0 0
      %6073 = vmatprep.subr.bf16.mxu0 0
      %6074 = vmatpush1.bf16.msra.mxu0 0
      %6075 = vmatprep.subr.bf16.mxu0 %v6006
      %6076 = vmatpush1.bf16.msra.mxu0 %v6003
      %6077 = vmatprep.subr.bf16.mxu0 0
      %6078 = vmatpush2.bf16.msra.mxu0 0
      %6079 = vmatprep.subr.bf16.mxu0 0
      %6080 = vmatpush2.bf16.msra.mxu0 0
      %6081 = vmatprep.subr.bf16.mxu0 0
      %6082 = vmatpush2.bf16.msra.mxu0 0
      %6083 = vmatprep.subr.bf16.mxu0 0
      %6084 = vmatpush2.bf16.msra.mxu0 0
      %6085 = vmatprep.subr.bf16.mxu0 0
      %6086 = vmatpush2.bf16.msra.mxu0 0
      %6087 = vmatprep.subr.bf16.mxu0 0
      %6088 = vmatpush2.bf16.msra.mxu0 0
      %6089 = vmatprep.subr.bf16.mxu0 0
      %6090 = vmatpush2.bf16.msra.mxu0 0
      %6091 = vmatprep.subr.bf16.mxu0 0
      %6092 = vmatpush2.bf16.msra.mxu0 0
      %6093 = vmatprep.mubr.bf16.mxu0 0
      %6094 = vmatmul.mubr.bf16.gmra.mxu0 %v5994
      %v6095 = vpop.f32.mrf.mxu0
      %v6096 = vadd.f32 0.0, %v6095
      %v6097 = vpop.f32.mrf.mxu0
      %v6098 = vadd.f32 0.0, %v6097
      %v6099 = vpop.f32.mrf.mxu0
      %v6100 = vpop.f32.mrf.mxu0
      %6101 = vdwg.mxu0
      %6102 = vmatprep.subr.bf16.mxu0 0
      %6103 = vmatpush1.bf16.msra.mxu0 0
      %6104 = vmatprep.subr.bf16.mxu0 0
      %6105 = vmatpush1.bf16.msra.mxu0 0
      %6106 = vmatprep.subr.bf16.mxu0 0
      %6107 = vmatpush1.bf16.msra.mxu0 0
      %6108 = vmatprep.subr.bf16.mxu0 0
      %6109 = vmatpush1.bf16.msra.mxu0 0
      %6110 = vmatprep.subr.bf16.mxu0 0
      %6111 = vmatpush1.bf16.msra.mxu0 0
      %6112 = vmatprep.subr.bf16.mxu0 0
      %6113 = vmatpush1.bf16.msra.mxu0 0
      %6114 = vmatprep.subr.bf16.mxu0 0
      %6115 = vmatpush1.bf16.msra.mxu0 0
      %6116 = vmatprep.subr.bf16.mxu0 %v6012
      %6117 = vmatpush1.bf16.msra.mxu0 %v6009
      %6118 = vmatprep.subr.bf16.mxu0 0
      %6119 = vmatpush2.bf16.msra.mxu0 0
      %6120 = vmatprep.subr.bf16.mxu0 0
      %6121 = vmatpush2.bf16.msra.mxu0 0
      %6122 = vmatprep.subr.bf16.mxu0 0
      %6123 = vmatpush2.bf16.msra.mxu0 0
      %6124 = vmatprep.subr.bf16.mxu0 0
      %6125 = vmatpush2.bf16.msra.mxu0 0
      %6126 = vmatprep.subr.bf16.mxu0 0
      %6127 = vmatpush2.bf16.msra.mxu0 0
      %6128 = vmatprep.subr.bf16.mxu0 0
      %6129 = vmatpush2.bf16.msra.mxu0 0
      %6130 = vmatprep.subr.bf16.mxu0 0
      %6131 = vmatpush2.bf16.msra.mxu0 0
      %6132 = vmatprep.subr.bf16.mxu0 0
      %6133 = vmatpush2.bf16.msra.mxu0 0
      %6134 = vmatprep.mubr.bf16.mxu0 0
      %6135 = vmatmul.mubr.bf16.gmra.mxu0 %v5994
      %v6136 = vpop.f32.mrf.mxu0
      %v6137 = vadd.f32 0.0, %v6136
      %v6138 = vpop.f32.mrf.mxu0
      %v6139 = vadd.f32 0.0, %v6138
      %v6140 = vpop.f32.mrf.mxu0
      %v6141 = vpop.f32.mrf.mxu0
      %6142 = vdwg.mxu0
      %6143 = vmatprep.subr.bf16.mxu0 0
      %6144 = vmatpush1.bf16.msra.mxu0 0
      %6145 = vmatprep.subr.bf16.mxu0 0
      %6146 = vmatpush1.bf16.msra.mxu0 0
      %6147 = vmatprep.subr.bf16.mxu0 0
      %6148 = vmatpush1.bf16.msra.mxu0 0
      %6149 = vmatprep.subr.bf16.mxu0 0
      %6150 = vmatpush1.bf16.msra.mxu0 0
      %6151 = vmatprep.subr.bf16.mxu0 0
      %6152 = vmatpush1.bf16.msra.mxu0 0
      %6153 = vmatprep.subr.bf16.mxu0 0
      %6154 = vmatpush1.bf16.msra.mxu0 0
      %6155 = vmatprep.subr.bf16.mxu0 0
      %6156 = vmatpush1.bf16.msra.mxu0 0
      %6157 = vmatprep.subr.bf16.mxu0 %v6018
      %6158 = vmatpush1.bf16.msra.mxu0 %v6015
      %6159 = vmatprep.subr.bf16.mxu0 0
      %6160 = vmatpush2.bf16.msra.mxu0 0
      %6161 = vmatprep.subr.bf16.mxu0 0
      %6162 = vmatpush2.bf16.msra.mxu0 0
      %6163 = vmatprep.subr.bf16.mxu0 0
      %6164 = vmatpush2.bf16.msra.mxu0 0
      %6165 = vmatprep.subr.bf16.mxu0 0
      %6166 = vmatpush2.bf16.msra.mxu0 0
      %6167 = vmatprep.subr.bf16.mxu0 0
      %6168 = vmatpush2.bf16.msra.mxu0 0
      %6169 = vmatprep.subr.bf16.mxu0 0
      %6170 = vmatpush2.bf16.msra.mxu0 0
      %6171 = vmatprep.subr.bf16.mxu0 0
      %6172 = vmatpush2.bf16.msra.mxu0 0
      %6173 = vmatprep.subr.bf16.mxu0 0
      %6174 = vmatpush2.bf16.msra.mxu0 0
      %6175 = vmatprep.mubr.bf16.mxu0 0
      %6176 = vmatmul.mubr.bf16.gmra.mxu0 %v5994
      %v6177 = vpop.f32.mrf.mxu0
      %v6178 = vadd.f32 0.0, %v6177
      %v6179 = vpop.f32.mrf.mxu0
      %v6180 = vadd.f32 0.0, %v6179
      %v6181 = vpop.f32.mrf.mxu0
      %v6182 = vpop.f32.mrf.mxu0
      %6183 = vdwg.mxu0
      %v6184 = vadd.f32 %v5765, %v6055
      %v6185 = vadd.f32 %v5767, %v6057
      %v6186 = vadd.f32 %v5806, %v6096
      %v6187 = vadd.f32 %v5808, %v6098
      %v6188 = vadd.f32 %v5847, %v6137
      %v6189 = vadd.f32 %v5849, %v6139
      %v6190 = vadd.f32 %v5888, %v6178
      %v6191 = vadd.f32 %v5890, %v6180
      %6192 = vrot.lane.b32.xlu0 %v5179, 1
      %v6193 = vpop.permute.xlu0 %6192
      %6194 = vrot.lane.b32.xlu0 %v5163, 1
      %v6195 = vpop.permute.xlu0 %6194
      %6196 = vrot.lane.b32.xlu0 %v5180, 1
      %v6197 = vpop.permute.xlu0 %6196
      %6198 = vrot.lane.b32.xlu0 %v5164, 1
      %v6199 = vpop.permute.xlu0 %6198
      %6200 = vrot.lane.b32.xlu0 %v5181, 1
      %v6201 = vpop.permute.xlu0 %6200
      %6202 = vrot.lane.b32.xlu0 %v5165, 1
      %v6203 = vpop.permute.xlu0 %6202
      %6204 = vrot.lane.b32.xlu0 %v5182, 1
      %v6205 = vpop.permute.xlu0 %6204
      %6206 = vrot.lane.b32.xlu0 %v5166, 1
      %v6207 = vpop.permute.xlu0 %6206
      %6208 = vrot.lane.b32.xlu0 %v5183, 1
      %v6209 = vpop.permute.xlu0 %6208
      %6210 = vrot.lane.b32.xlu0 %v5167, 1
      %v6211 = vpop.permute.xlu0 %6210
      %6212 = vrot.lane.b32.xlu0 %v5184, 1
      %v6213 = vpop.permute.xlu0 %6212
      %6214 = vrot.lane.b32.xlu0 %v5168, 1
      %v6215 = vpop.permute.xlu0 %6214
      %6216 = vrot.lane.b32.xlu0 %v5185, 1
      %v6217 = vpop.permute.xlu0 %6216
      %6218 = vrot.lane.b32.xlu0 %v5169, 1
      %v6219 = vpop.permute.xlu0 %6218
      %6220 = vrot.lane.b32.xlu0 %v5186, 1
      %v6221 = vpop.permute.xlu0 %6220
      %6222 = vrot.lane.b32.xlu0 %v5170, 1
      %v6223 = vpop.permute.xlu0 %6222
      %v6224 = vsel %vm3234, %v6217, %v6221
      %v6225 = vsel %vm3234, %v6219, %v6223
      %v6226 = vsel %vm3234, %v6213, %v6217
      %v6227 = vsel %vm3234, %v6215, %v6219
      %v6228 = vsel %vm3234, %v6209, %v6213
      %v6229 = vsel %vm3234, %v6211, %v6215
      %v6230 = vsel %vm3234, %v6205, %v6209
      %v6231 = vsel %vm3234, %v6207, %v6211
      %v6232 = vsel %vm3234, %v6201, %v6205
      %v6233 = vsel %vm3234, %v6203, %v6207
      %v6234 = vsel %vm3234, %v6197, %v6201
      %v6235 = vsel %vm3234, %v6199, %v6203
      %v6236 = vsel %vm3234, %v6193, %v6197
      %v6237 = vsel %vm3234, %v6195, %v6199
      %v6238 = vsel %vm3234, %v6221, %v6193
      %v6239 = vsel %vm3234, %v6223, %v6195
      %v6240 = vsel %vm5289, 1, 0
      %v6241 = vsel %vm5290, 1, 0
      %v6242 = vsel %vm5291, 1, 0
      %v6243 = vsel %vm5292, 1, 0
      %v6244 = vsel %vm5293, 1, 0
      %v6245 = vsel %vm5294, 1, 0
      %v6246 = vsel %vm5295, 1, 0
      %v6247 = vsel %vm5296, 1, 0
      %vm6248 = vcmp.eq.s32.totalorder %v6240, 1
      %vm6249 = vcmp.eq.s32.totalorder %v6241, 1
      %vm6250 = vcmp.eq.s32.totalorder %v6242, 1
      %vm6251 = vcmp.eq.s32.totalorder %v6243, 1
      %vm6252 = vcmp.eq.s32.totalorder %v6244, 1
      %vm6253 = vcmp.eq.s32.totalorder %v6245, 1
      %vm6254 = vcmp.eq.s32.totalorder %v6246, 1
      %vm6255 = vcmp.eq.s32.totalorder %v6247, 1
      %v6256 = vsel %vm6248, %v6238, 0.0
      %v6257 = vsel %vm6249, %v6236, 0.0
      %v6258 = vsel %vm6250, %v6234, 0.0
      %v6259 = vsel %vm6251, %v6232, 0.0
      %v6260 = vsel %vm6252, %v6230, 0.0
      %v6261 = vsel %vm6253, %v6228, 0.0
      %v6262 = vsel %vm6254, %v6226, 0.0
      %v6263 = vsel %vm6255, %v6224, 0.0
      %v6264 = vsel %vm6248, %v6239, 0.0
      %v6265 = vsel %vm6249, %v6237, 0.0
      %v6266 = vsel %vm6250, %v6235, 0.0
      %v6267 = vsel %vm6251, %v6233, 0.0
      %v6268 = vsel %vm6252, %v6231, 0.0
      %v6269 = vsel %vm6253, %v6229, 0.0
      %v6270 = vsel %vm6254, %v6227, 0.0
      %v6271 = vsel %vm6255, %v6225, 0.0
      %s6272 = scalar_lea.vmem %s11, 6
      %v6273 = vld [vmem:[%s6272] sm:$0x3]
      %v6274 = vpack.c.bf16 %v6264, %v6256
      %v6275 = vpack.c.bf16 %v6265, %v6257
      %v6276 = vpack.c.bf16 %v6266, %v6258
      %v6277 = vpack.c.bf16 %v6267, %v6259
      %v6278 = vpack.c.bf16 %v6268, %v6260
      %v6279 = vpack.c.bf16 %v6269, %v6261
      %v6280 = vpack.c.bf16 %v6270, %v6262
      %v6281 = vpack.c.bf16 %v6271, %v6263
      %v6283 = vsel %vm5510, %v6273, 0
      %v6286 = vsel %vm5514, %v6274, 0
      %v6289 = vsel %vm5514, %v6275, 0
      %v6292 = vsel %vm5514, %v6276, 0
      %v6295 = vsel %vm5514, %v6277, 0
      %v6298 = vsel %vm5514, %v6278, 0
      %v6301 = vsel %vm5514, %v6279, 0
      %v6304 = vsel %vm5514, %v6280, 0
      %v6307 = vsel %vm5514, %v6281, 0
      %6309 = vmatprep.subr.bf16.mxu0 0
      %6310 = vmatpush1.bf16.msra.mxu0 0
      %6311 = vmatprep.subr.bf16.mxu0 0
      %6312 = vmatpush1.bf16.msra.mxu0 0
      %6313 = vmatprep.subr.bf16.mxu0 0
      %6314 = vmatpush1.bf16.msra.mxu0 0
      %6315 = vmatprep.subr.bf16.mxu0 0
      %6316 = vmatpush1.bf16.msra.mxu0 0
      %6317 = vmatprep.subr.bf16.mxu0 0
      %6318 = vmatpush1.bf16.msra.mxu0 0
      %6319 = vmatprep.subr.bf16.mxu0 0
      %6320 = vmatpush1.bf16.msra.mxu0 0
      %6321 = vmatprep.subr.bf16.mxu0 0
      %6322 = vmatpush1.bf16.msra.mxu0 0
      %6323 = vmatprep.subr.bf16.mxu0 %v6289
      %6324 = vmatpush1.bf16.msra.mxu0 %v6286
      %6325 = vmatprep.subr.bf16.mxu0 0
      %6326 = vmatpush2.bf16.msra.mxu0 0
      %6327 = vmatprep.subr.bf16.mxu0 0
      %6328 = vmatpush2.bf16.msra.mxu0 0
      %6329 = vmatprep.subr.bf16.mxu0 0
      %6330 = vmatpush2.bf16.msra.mxu0 0
      %6331 = vmatprep.subr.bf16.mxu0 0
      %6332 = vmatpush2.bf16.msra.mxu0 0
      %6333 = vmatprep.subr.bf16.mxu0 0
      %6334 = vmatpush2.bf16.msra.mxu0 0
      %6335 = vmatprep.subr.bf16.mxu0 0
      %6336 = vmatpush2.bf16.msra.mxu0 0
      %6337 = vmatprep.subr.bf16.mxu0 0
      %6338 = vmatpush2.bf16.msra.mxu0 0
      %6339 = vmatprep.subr.bf16.mxu0 0
      %6340 = vmatpush2.bf16.msra.mxu0 0
      %6341 = vmatprep.mubr.bf16.mxu0 0
      %6342 = vmatmul.mubr.bf16.gmra.mxu0 %v6283
      %v6343 = vpop.f32.mrf.mxu0
      %v6344 = vadd.f32 0.0, %v6343
      %v6345 = vpop.f32.mrf.mxu0
      %v6346 = vadd.f32 0.0, %v6345
      %v6347 = vpop.f32.mrf.mxu0
      %v6348 = vpop.f32.mrf.mxu0
      %6349 = vdwg.mxu0
      %6350 = vmatprep.subr.bf16.mxu0 0
      %6351 = vmatpush1.bf16.msra.mxu0 0
      %6352 = vmatprep.subr.bf16.mxu0 0
      %6353 = vmatpush1.bf16.msra.mxu0 0
      %6354 = vmatprep.subr.bf16.mxu0 0
      %6355 = vmatpush1.bf16.msra.mxu0 0
      %6356 = vmatprep.subr.bf16.mxu0 0
      %6357 = vmatpush1.bf16.msra.mxu0 0
      %6358 = vmatprep.subr.bf16.mxu0 0
      %6359 = vmatpush1.bf16.msra.mxu0 0
      %6360 = vmatprep.subr.bf16.mxu0 0
      %6361 = vmatpush1.bf16.msra.mxu0 0
      %6362 = vmatprep.subr.bf16.mxu0 0
      %6363 = vmatpush1.bf16.msra.mxu0 0
      %6364 = vmatprep.subr.bf16.mxu0 %v6295
      %6365 = vmatpush1.bf16.msra.mxu0 %v6292
      %6366 = vmatprep.subr.bf16.mxu0 0
      %6367 = vmatpush2.bf16.msra.mxu0 0
      %6368 = vmatprep.subr.bf16.mxu0 0
      %6369 = vmatpush2.bf16.msra.mxu0 0
      %6370 = vmatprep.subr.bf16.mxu0 0
      %6371 = vmatpush2.bf16.msra.mxu0 0
      %6372 = vmatprep.subr.bf16.mxu0 0
      %6373 = vmatpush2.bf16.msra.mxu0 0
      %6374 = vmatprep.subr.bf16.mxu0 0
      %6375 = vmatpush2.bf16.msra.mxu0 0
      %6376 = vmatprep.subr.bf16.mxu0 0
      %6377 = vmatpush2.bf16.msra.mxu0 0
      %6378 = vmatprep.subr.bf16.mxu0 0
      %6379 = vmatpush2.bf16.msra.mxu0 0
      %6380 = vmatprep.subr.bf16.mxu0 0
      %6381 = vmatpush2.bf16.msra.mxu0 0
      %6382 = vmatprep.mubr.bf16.mxu0 0
      %6383 = vmatmul.mubr.bf16.gmra.mxu0 %v6283
      %v6384 = vpop.f32.mrf.mxu0
      %v6385 = vadd.f32 0.0, %v6384
      %v6386 = vpop.f32.mrf.mxu0
      %v6387 = vadd.f32 0.0, %v6386
      %v6388 = vpop.f32.mrf.mxu0
      %v6389 = vpop.f32.mrf.mxu0
      %6390 = vdwg.mxu0
      %6391 = vmatprep.subr.bf16.mxu0 0
      %6392 = vmatpush1.bf16.msra.mxu0 0
      %6393 = vmatprep.subr.bf16.mxu0 0
      %6394 = vmatpush1.bf16.msra.mxu0 0
      %6395 = vmatprep.subr.bf16.mxu0 0
      %6396 = vmatpush1.bf16.msra.mxu0 0
      %6397 = vmatprep.subr.bf16.mxu0 0
      %6398 = vmatpush1.bf16.msra.mxu0 0
      %6399 = vmatprep.subr.bf16.mxu0 0
      %6400 = vmatpush1.bf16.msra.mxu0 0
      %6401 = vmatprep.subr.bf16.mxu0 0
      %6402 = vmatpush1.bf16.msra.mxu0 0
      %6403 = vmatprep.subr.bf16.mxu0 0
      %6404 = vmatpush1.bf16.msra.mxu0 0
      %6405 = vmatprep.subr.bf16.mxu0 %v6301
      %6406 = vmatpush1.bf16.msra.mxu0 %v6298
      %6407 = vmatprep.subr.bf16.mxu0 0
      %6408 = vmatpush2.bf16.msra.mxu0 0
      %6409 = vmatprep.subr.bf16.mxu0 0
      %6410 = vmatpush2.bf16.msra.mxu0 0
      %6411 = vmatprep.subr.bf16.mxu0 0
      %6412 = vmatpush2.bf16.msra.mxu0 0
      %6413 = vmatprep.subr.bf16.mxu0 0
      %6414 = vmatpush2.bf16.msra.mxu0 0
      %6415 = vmatprep.subr.bf16.mxu0 0
      %6416 = vmatpush2.bf16.msra.mxu0 0
      %6417 = vmatprep.subr.bf16.mxu0 0
      %6418 = vmatpush2.bf16.msra.mxu0 0
      %6419 = vmatprep.subr.bf16.mxu0 0
      %6420 = vmatpush2.bf16.msra.mxu0 0
      %6421 = vmatprep.subr.bf16.mxu0 0
      %6422 = vmatpush2.bf16.msra.mxu0 0
      %6423 = vmatprep.mubr.bf16.mxu0 0
      %6424 = vmatmul.mubr.bf16.gmra.mxu0 %v6283
      %v6425 = vpop.f32.mrf.mxu0
      %v6426 = vadd.f32 0.0, %v6425
      %v6427 = vpop.f32.mrf.mxu0
      %v6428 = vadd.f32 0.0, %v6427
      %v6429 = vpop.f32.mrf.mxu0
      %v6430 = vpop.f32.mrf.mxu0
      %6431 = vdwg.mxu0
      %6432 = vmatprep.subr.bf16.mxu0 0
      %6433 = vmatpush1.bf16.msra.mxu0 0
      %6434 = vmatprep.subr.bf16.mxu0 0
      %6435 = vmatpush1.bf16.msra.mxu0 0
      %6436 = vmatprep.subr.bf16.mxu0 0
      %6437 = vmatpush1.bf16.msra.mxu0 0
      %6438 = vmatprep.subr.bf16.mxu0 0
      %6439 = vmatpush1.bf16.msra.mxu0 0
      %6440 = vmatprep.subr.bf16.mxu0 0
      %6441 = vmatpush1.bf16.msra.mxu0 0
      %6442 = vmatprep.subr.bf16.mxu0 0
      %6443 = vmatpush1.bf16.msra.mxu0 0
      %6444 = vmatprep.subr.bf16.mxu0 0
      %6445 = vmatpush1.bf16.msra.mxu0 0
      %6446 = vmatprep.subr.bf16.mxu0 %v6307
      %6447 = vmatpush1.bf16.msra.mxu0 %v6304
      %6448 = vmatprep.subr.bf16.mxu0 0
      %6449 = vmatpush2.bf16.msra.mxu0 0
      %6450 = vmatprep.subr.bf16.mxu0 0
      %6451 = vmatpush2.bf16.msra.mxu0 0
      %6452 = vmatprep.subr.bf16.mxu0 0
      %6453 = vmatpush2.bf16.msra.mxu0 0
      %6454 = vmatprep.subr.bf16.mxu0 0
      %6455 = vmatpush2.bf16.msra.mxu0 0
      %6456 = vmatprep.subr.bf16.mxu0 0
      %6457 = vmatpush2.bf16.msra.mxu0 0
      %6458 = vmatprep.subr.bf16.mxu0 0
      %6459 = vmatpush2.bf16.msra.mxu0 0
      %6460 = vmatprep.subr.bf16.mxu0 0
      %6461 = vmatpush2.bf16.msra.mxu0 0
      %6462 = vmatprep.subr.bf16.mxu0 0
      %6463 = vmatpush2.bf16.msra.mxu0 0
      %6464 = vmatprep.mubr.bf16.mxu0 0
      %6465 = vmatmul.mubr.bf16.gmra.mxu0 %v6283
      %v6466 = vpop.f32.mrf.mxu0
      %v6467 = vadd.f32 0.0, %v6466
      %v6468 = vpop.f32.mrf.mxu0
      %v6469 = vadd.f32 0.0, %v6468
      %v6470 = vpop.f32.mrf.mxu0
      %v6471 = vpop.f32.mrf.mxu0
      %6472 = vdwg.mxu0
      %v6473 = vadd.f32 %v6184, %v6344
      %v6474 = vadd.f32 %v6185, %v6346
      %v6475 = vadd.f32 %v6186, %v6385
      %v6476 = vadd.f32 %v6187, %v6387
      %v6477 = vadd.f32 %v6188, %v6426
      %v6478 = vadd.f32 %v6189, %v6428
      %v6479 = vadd.f32 %v6190, %v6467
      %v6480 = vadd.f32 %v6191, %v6469
      %s6481 = scalar_lea.vmem %s11, 8
      %v6482 = vld [vmem:[%s6481] sm:$0x3]
      %v6483 = vpack.c.bf16 %v5163, %v5179
      %v6484 = vpack.c.bf16 %v5164, %v5180
      %v6485 = vpack.c.bf16 %v5165, %v5181
      %v6486 = vpack.c.bf16 %v5166, %v5182
      %v6487 = vpack.c.bf16 %v5167, %v5183
      %v6488 = vpack.c.bf16 %v5168, %v5184
      %v6489 = vpack.c.bf16 %v5169, %v5185
      %v6490 = vpack.c.bf16 %v5170, %v5186
      %v6492 = vsel %vm5510, %v6482, 0
      %v6495 = vsel %vm5514, %v6483, 0
      %v6498 = vsel %vm5514, %v6484, 0
      %v6501 = vsel %vm5514, %v6485, 0
      %v6504 = vsel %vm5514, %v6486, 0
      %v6507 = vsel %vm5514, %v6487, 0
      %v6510 = vsel %vm5514, %v6488, 0
      %v6513 = vsel %vm5514, %v6489, 0
      %v6516 = vsel %vm5514, %v6490, 0
      %6518 = vmatprep.subr.bf16.mxu0 0
      %6519 = vmatpush1.bf16.msra.mxu0 0
      %6520 = vmatprep.subr.bf16.mxu0 0
      %6521 = vmatpush1.bf16.msra.mxu0 0
      %6522 = vmatprep.subr.bf16.mxu0 0
      %6523 = vmatpush1.bf16.msra.mxu0 0
      %6524 = vmatprep.subr.bf16.mxu0 0
      %6525 = vmatpush1.bf16.msra.mxu0 0
      %6526 = vmatprep.subr.bf16.mxu0 0
      %6527 = vmatpush1.bf16.msra.mxu0 0
      %6528 = vmatprep.subr.bf16.mxu0 0
      %6529 = vmatpush1.bf16.msra.mxu0 0
      %6530 = vmatprep.subr.bf16.mxu0 0
      %6531 = vmatpush1.bf16.msra.mxu0 0
      %6532 = vmatprep.subr.bf16.mxu0 %v6498
      %6533 = vmatpush1.bf16.msra.mxu0 %v6495
      %6534 = vmatprep.subr.bf16.mxu0 0
      %6535 = vmatpush2.bf16.msra.mxu0 0
      %6536 = vmatprep.subr.bf16.mxu0 0
      %6537 = vmatpush2.bf16.msra.mxu0 0
      %6538 = vmatprep.subr.bf16.mxu0 0
      %6539 = vmatpush2.bf16.msra.mxu0 0
      %6540 = vmatprep.subr.bf16.mxu0 0
      %6541 = vmatpush2.bf16.msra.mxu0 0
      %6542 = vmatprep.subr.bf16.mxu0 0
      %6543 = vmatpush2.bf16.msra.mxu0 0
      %6544 = vmatprep.subr.bf16.mxu0 0
      %6545 = vmatpush2.bf16.msra.mxu0 0
      %6546 = vmatprep.subr.bf16.mxu0 0
      %6547 = vmatpush2.bf16.msra.mxu0 0
      %6548 = vmatprep.subr.bf16.mxu0 0
      %6549 = vmatpush2.bf16.msra.mxu0 0
      %6550 = vmatprep.mubr.bf16.mxu0 0
      %6551 = vmatmul.mubr.bf16.gmra.mxu0 %v6492
      %v6552 = vpop.f32.mrf.mxu0
      %v6553 = vadd.f32 0.0, %v6552
      %v6554 = vpop.f32.mrf.mxu0
      %v6555 = vadd.f32 0.0, %v6554
      %v6556 = vpop.f32.mrf.mxu0
      %v6557 = vpop.f32.mrf.mxu0
      %6558 = vdwg.mxu0
      %6559 = vmatprep.subr.bf16.mxu0 0
      %6560 = vmatpush1.bf16.msra.mxu0 0
      %6561 = vmatprep.subr.bf16.mxu0 0
      %6562 = vmatpush1.bf16.msra.mxu0 0
      %6563 = vmatprep.subr.bf16.mxu0 0
      %6564 = vmatpush1.bf16.msra.mxu0 0
      %6565 = vmatprep.subr.bf16.mxu0 0
      %6566 = vmatpush1.bf16.msra.mxu0 0
      %6567 = vmatprep.subr.bf16.mxu0 0
      %6568 = vmatpush1.bf16.msra.mxu0 0
      %6569 = vmatprep.subr.bf16.mxu0 0
      %6570 = vmatpush1.bf16.msra.mxu0 0
      %6571 = vmatprep.subr.bf16.mxu0 0
      %6572 = vmatpush1.bf16.msra.mxu0 0
      %6573 = vmatprep.subr.bf16.mxu0 %v6504
      %6574 = vmatpush1.bf16.msra.mxu0 %v6501
      %6575 = vmatprep.subr.bf16.mxu0 0
      %6576 = vmatpush2.bf16.msra.mxu0 0
      %6577 = vmatprep.subr.bf16.mxu0 0
      %6578 = vmatpush2.bf16.msra.mxu0 0
      %6579 = vmatprep.subr.bf16.mxu0 0
      %6580 = vmatpush2.bf16.msra.mxu0 0
      %6581 = vmatprep.subr.bf16.mxu0 0
      %6582 = vmatpush2.bf16.msra.mxu0 0
      %6583 = vmatprep.subr.bf16.mxu0 0
      %6584 = vmatpush2.bf16.msra.mxu0 0
      %6585 = vmatprep.subr.bf16.mxu0 0
      %6586 = vmatpush2.bf16.msra.mxu0 0
      %6587 = vmatprep.subr.bf16.mxu0 0
      %6588 = vmatpush2.bf16.msra.mxu0 0
      %6589 = vmatprep.subr.bf16.mxu0 0
      %6590 = vmatpush2.bf16.msra.mxu0 0
      %6591 = vmatprep.mubr.bf16.mxu0 0
      %6592 = vmatmul.mubr.bf16.gmra.mxu0 %v6492
      %v6593 = vpop.f32.mrf.mxu0
      %v6594 = vadd.f32 0.0, %v6593
      %v6595 = vpop.f32.mrf.mxu0
      %v6596 = vadd.f32 0.0, %v6595
      %v6597 = vpop.f32.mrf.mxu0
      %v6598 = vpop.f32.mrf.mxu0
      %6599 = vdwg.mxu0
      %6600 = vmatprep.subr.bf16.mxu0 0
      %6601 = vmatpush1.bf16.msra.mxu0 0
      %6602 = vmatprep.subr.bf16.mxu0 0
      %6603 = vmatpush1.bf16.msra.mxu0 0
      %6604 = vmatprep.subr.bf16.mxu0 0
      %6605 = vmatpush1.bf16.msra.mxu0 0
      %6606 = vmatprep.subr.bf16.mxu0 0
      %6607 = vmatpush1.bf16.msra.mxu0 0
      %6608 = vmatprep.subr.bf16.mxu0 0
      %6609 = vmatpush1.bf16.msra.mxu0 0
      %6610 = vmatprep.subr.bf16.mxu0 0
      %6611 = vmatpush1.bf16.msra.mxu0 0
      %6612 = vmatprep.subr.bf16.mxu0 0
      %6613 = vmatpush1.bf16.msra.mxu0 0
      %6614 = vmatprep.subr.bf16.mxu0 %v6510
      %6615 = vmatpush1.bf16.msra.mxu0 %v6507
      %6616 = vmatprep.subr.bf16.mxu0 0
      %6617 = vmatpush2.bf16.msra.mxu0 0
      %6618 = vmatprep.subr.bf16.mxu0 0
      %6619 = vmatpush2.bf16.msra.mxu0 0
      %6620 = vmatprep.subr.bf16.mxu0 0
      %6621 = vmatpush2.bf16.msra.mxu0 0
      %6622 = vmatprep.subr.bf16.mxu0 0
      %6623 = vmatpush2.bf16.msra.mxu0 0
      %6624 = vmatprep.subr.bf16.mxu0 0
      %6625 = vmatpush2.bf16.msra.mxu0 0
      %6626 = vmatprep.subr.bf16.mxu0 0
      %6627 = vmatpush2.bf16.msra.mxu0 0
      %6628 = vmatprep.subr.bf16.mxu0 0
      %6629 = vmatpush2.bf16.msra.mxu0 0
      %6630 = vmatprep.subr.bf16.mxu0 0
      %6631 = vmatpush2.bf16.msra.mxu0 0
      %6632 = vmatprep.mubr.bf16.mxu0 0
      %6633 = vmatmul.mubr.bf16.gmra.mxu0 %v6492
      %v6634 = vpop.f32.mrf.mxu0
      %v6635 = vadd.f32 0.0, %v6634
      %v6636 = vpop.f32.mrf.mxu0
      %v6637 = vadd.f32 0.0, %v6636
      %v6638 = vpop.f32.mrf.mxu0
      %v6639 = vpop.f32.mrf.mxu0
      %6640 = vdwg.mxu0
      %6641 = vmatprep.subr.bf16.mxu0 0
      %6642 = vmatpush1.bf16.msra.mxu0 0
      %6643 = vmatprep.subr.bf16.mxu0 0
      %6644 = vmatpush1.bf16.msra.mxu0 0
      %6645 = vmatprep.subr.bf16.mxu0 0
      %6646 = vmatpush1.bf16.msra.mxu0 0
      %6647 = vmatprep.subr.bf16.mxu0 0
      %6648 = vmatpush1.bf16.msra.mxu0 0
      %6649 = vmatprep.subr.bf16.mxu0 0
      %6650 = vmatpush1.bf16.msra.mxu0 0
      %6651 = vmatprep.subr.bf16.mxu0 0
      %6652 = vmatpush1.bf16.msra.mxu0 0
      %6653 = vmatprep.subr.bf16.mxu0 0
      %6654 = vmatpush1.bf16.msra.mxu0 0
      %6655 = vmatprep.subr.bf16.mxu0 %v6516
      %6656 = vmatpush1.bf16.msra.mxu0 %v6513
      %6657 = vmatprep.subr.bf16.mxu0 0
      %6658 = vmatpush2.bf16.msra.mxu0 0
      %6659 = vmatprep.subr.bf16.mxu0 0
      %6660 = vmatpush2.bf16.msra.mxu0 0
      %6661 = vmatprep.subr.bf16.mxu0 0
      %6662 = vmatpush2.bf16.msra.mxu0 0
      %6663 = vmatprep.subr.bf16.mxu0 0
      %6664 = vmatpush2.bf16.msra.mxu0 0
      %6665 = vmatprep.subr.bf16.mxu0 0
      %6666 = vmatpush2.bf16.msra.mxu0 0
      %6667 = vmatprep.subr.bf16.mxu0 0
      %6668 = vmatpush2.bf16.msra.mxu0 0
      %6669 = vmatprep.subr.bf16.mxu0 0
      %6670 = vmatpush2.bf16.msra.mxu0 0
      %6671 = vmatprep.subr.bf16.mxu0 0
      %6672 = vmatpush2.bf16.msra.mxu0 0
      %6673 = vmatprep.mubr.bf16.mxu0 0
      %6674 = vmatmul.mubr.bf16.gmra.mxu0 %v6492
      %v6675 = vpop.f32.mrf.mxu0
      %v6676 = vadd.f32 0.0, %v6675
      %v6677 = vpop.f32.mrf.mxu0
      %v6678 = vadd.f32 0.0, %v6677
      %v6679 = vpop.f32.mrf.mxu0
      %v6680 = vpop.f32.mrf.mxu0
      %6681 = vdwg.mxu0
      %v6682 = vadd.f32 %v6473, %v6553
      %v6683 = vadd.f32 %v6474, %v6555
      %v6684 = vadd.f32 %v6475, %v6594
      %v6685 = vadd.f32 %v6476, %v6596
      %v6686 = vadd.f32 %v6477, %v6635
      %v6687 = vadd.f32 %v6478, %v6637
      %v6688 = vadd.f32 %v6479, %v6676
      %v6689 = vadd.f32 %v6480, %v6678
      %6690 = vrot.lane.b32.xlu0 %v5179, 127
      %v6691 = vpop.permute.xlu0 %6690
      %6692 = vrot.lane.b32.xlu0 %v5163, 127
      %v6693 = vpop.permute.xlu0 %6692
      %6694 = vrot.lane.b32.xlu0 %v5180, 127
      %v6695 = vpop.permute.xlu0 %6694
      %6696 = vrot.lane.b32.xlu0 %v5164, 127
      %v6697 = vpop.permute.xlu0 %6696
      %6698 = vrot.lane.b32.xlu0 %v5181, 127
      %v6699 = vpop.permute.xlu0 %6698
      %6700 = vrot.lane.b32.xlu0 %v5165, 127
      %v6701 = vpop.permute.xlu0 %6700
      %6702 = vrot.lane.b32.xlu0 %v5182, 127
      %v6703 = vpop.permute.xlu0 %6702
      %6704 = vrot.lane.b32.xlu0 %v5166, 127
      %v6705 = vpop.permute.xlu0 %6704
      %6706 = vrot.lane.b32.xlu0 %v5183, 127
      %v6707 = vpop.permute.xlu0 %6706
      %6708 = vrot.lane.b32.xlu0 %v5167, 127
      %v6709 = vpop.permute.xlu0 %6708
      %6710 = vrot.lane.b32.xlu0 %v5184, 127
      %v6711 = vpop.permute.xlu0 %6710
      %6712 = vrot.lane.b32.xlu0 %v5168, 127
      %v6713 = vpop.permute.xlu0 %6712
      %6714 = vrot.lane.b32.xlu0 %v5185, 127
      %v6715 = vpop.permute.xlu0 %6714
      %6716 = vrot.lane.b32.xlu0 %v5169, 127
      %v6717 = vpop.permute.xlu0 %6716
      %6718 = vrot.lane.b32.xlu0 %v5186, 127
      %v6719 = vpop.permute.xlu0 %6718
      %6720 = vrot.lane.b32.xlu0 %v5170, 127
      %v6721 = vpop.permute.xlu0 %6720
      %v6722 = vsel %vm3379, %v6715, %v6719
      %v6723 = vsel %vm3379, %v6717, %v6721
      %v6724 = vsel %vm3379, %v6711, %v6715
      %v6725 = vsel %vm3379, %v6713, %v6717
      %v6726 = vsel %vm3379, %v6707, %v6711
      %v6727 = vsel %vm3379, %v6709, %v6713
      %v6728 = vsel %vm3379, %v6703, %v6707
      %v6729 = vsel %vm3379, %v6705, %v6709
      %v6730 = vsel %vm3379, %v6699, %v6703
      %v6731 = vsel %vm3379, %v6701, %v6705
      %v6732 = vsel %vm3379, %v6695, %v6699
      %v6733 = vsel %vm3379, %v6697, %v6701
      %v6734 = vsel %vm3379, %v6691, %v6695
      %v6735 = vsel %vm3379, %v6693, %v6697
      %v6736 = vsel %vm3379, %v6719, %v6691
      %v6737 = vsel %vm3379, %v6721, %v6693
      %v6738 = vsel %vm5297, 1, 0
      %v6739 = vsel %vm5298, 1, 0
      %v6740 = vsel %vm5299, 1, 0
      %v6741 = vsel %vm5300, 1, 0
      %v6742 = vsel %vm5301, 1, 0
      %v6743 = vsel %vm5302, 1, 0
      %v6744 = vsel %vm5303, 1, 0
      %v6745 = vsel %vm5304, 1, 0
      %vm6746 = vcmp.eq.s32.totalorder %v6738, 1
      %vm6747 = vcmp.eq.s32.totalorder %v6739, 1
      %vm6748 = vcmp.eq.s32.totalorder %v6740, 1
      %vm6749 = vcmp.eq.s32.totalorder %v6741, 1
      %vm6750 = vcmp.eq.s32.totalorder %v6742, 1
      %vm6751 = vcmp.eq.s32.totalorder %v6743, 1
      %vm6752 = vcmp.eq.s32.totalorder %v6744, 1
      %vm6753 = vcmp.eq.s32.totalorder %v6745, 1
      %v6754 = vsel %vm6746, %v6734, 0.0
      %v6755 = vsel %vm6747, %v6732, 0.0
      %v6756 = vsel %vm6748, %v6730, 0.0
      %v6757 = vsel %vm6749, %v6728, 0.0
      %v6758 = vsel %vm6750, %v6726, 0.0
      %v6759 = vsel %vm6751, %v6724, 0.0
      %v6760 = vsel %vm6752, %v6722, 0.0
      %v6761 = vsel %vm6753, %v6736, 0.0
      %v6762 = vsel %vm6746, %v6735, 0.0
      %v6763 = vsel %vm6747, %v6733, 0.0
      %v6764 = vsel %vm6748, %v6731, 0.0
      %v6765 = vsel %vm6749, %v6729, 0.0
      %v6766 = vsel %vm6750, %v6727, 0.0
      %v6767 = vsel %vm6751, %v6725, 0.0
      %v6768 = vsel %vm6752, %v6723, 0.0
      %v6769 = vsel %vm6753, %v6737, 0.0
      %s6770 = scalar_lea.vmem %s11, 10
      %v6771 = vld [vmem:[%s6770] sm:$0x3]
      %v6772 = vpack.c.bf16 %v6762, %v6754
      %v6773 = vpack.c.bf16 %v6763, %v6755
      %v6774 = vpack.c.bf16 %v6764, %v6756
      %v6775 = vpack.c.bf16 %v6765, %v6757
      %v6776 = vpack.c.bf16 %v6766, %v6758
      %v6777 = vpack.c.bf16 %v6767, %v6759
      %v6778 = vpack.c.bf16 %v6768, %v6760
      %v6779 = vpack.c.bf16 %v6769, %v6761
      %v6781 = vsel %vm5510, %v6771, 0
      %v6784 = vsel %vm5514, %v6772, 0
      %v6787 = vsel %vm5514, %v6773, 0
      %v6790 = vsel %vm5514, %v6774, 0
      %v6793 = vsel %vm5514, %v6775, 0
      %v6796 = vsel %vm5514, %v6776, 0
      %v6799 = vsel %vm5514, %v6777, 0
      %v6802 = vsel %vm5514, %v6778, 0
      %v6805 = vsel %vm5514, %v6779, 0
      %6807 = vmatprep.subr.bf16.mxu0 0
      %6808 = vmatpush1.bf16.msra.mxu0 0
      %6809 = vmatprep.subr.bf16.mxu0 0
      %6810 = vmatpush1.bf16.msra.mxu0 0
      %6811 = vmatprep.subr.bf16.mxu0 0
      %6812 = vmatpush1.bf16.msra.mxu0 0
      %6813 = vmatprep.subr.bf16.mxu0 0
      %6814 = vmatpush1.bf16.msra.mxu0 0
      %6815 = vmatprep.subr.bf16.mxu0 0
      %6816 = vmatpush1.bf16.msra.mxu0 0
      %6817 = vmatprep.subr.bf16.mxu0 0
      %6818 = vmatpush1.bf16.msra.mxu0 0
      %6819 = vmatprep.subr.bf16.mxu0 0
      %6820 = vmatpush1.bf16.msra.mxu0 0
      %6821 = vmatprep.subr.bf16.mxu0 %v6787
      %6822 = vmatpush1.bf16.msra.mxu0 %v6784
      %6823 = vmatprep.subr.bf16.mxu0 0
      %6824 = vmatpush2.bf16.msra.mxu0 0
      %6825 = vmatprep.subr.bf16.mxu0 0
      %6826 = vmatpush2.bf16.msra.mxu0 0
      %6827 = vmatprep.subr.bf16.mxu0 0
      %6828 = vmatpush2.bf16.msra.mxu0 0
      %6829 = vmatprep.subr.bf16.mxu0 0
      %6830 = vmatpush2.bf16.msra.mxu0 0
      %6831 = vmatprep.subr.bf16.mxu0 0
      %6832 = vmatpush2.bf16.msra.mxu0 0
      %6833 = vmatprep.subr.bf16.mxu0 0
      %6834 = vmatpush2.bf16.msra.mxu0 0
      %6835 = vmatprep.subr.bf16.mxu0 0
      %6836 = vmatpush2.bf16.msra.mxu0 0
      %6837 = vmatprep.subr.bf16.mxu0 0
      %6838 = vmatpush2.bf16.msra.mxu0 0
      %6839 = vmatprep.mubr.bf16.mxu0 0
      %6840 = vmatmul.mubr.bf16.gmra.mxu0 %v6781
      %v6841 = vpop.f32.mrf.mxu0
      %v6842 = vadd.f32 0.0, %v6841
      %v6843 = vpop.f32.mrf.mxu0
      %v6844 = vadd.f32 0.0, %v6843
      %v6845 = vpop.f32.mrf.mxu0
      %v6846 = vpop.f32.mrf.mxu0
      %6847 = vdwg.mxu0
      %6848 = vmatprep.subr.bf16.mxu0 0
      %6849 = vmatpush1.bf16.msra.mxu0 0
      %6850 = vmatprep.subr.bf16.mxu0 0
      %6851 = vmatpush1.bf16.msra.mxu0 0
      %6852 = vmatprep.subr.bf16.mxu0 0
      %6853 = vmatpush1.bf16.msra.mxu0 0
      %6854 = vmatprep.subr.bf16.mxu0 0
      %6855 = vmatpush1.bf16.msra.mxu0 0
      %6856 = vmatprep.subr.bf16.mxu0 0
      %6857 = vmatpush1.bf16.msra.mxu0 0
      %6858 = vmatprep.subr.bf16.mxu0 0
      %6859 = vmatpush1.bf16.msra.mxu0 0
      %6860 = vmatprep.subr.bf16.mxu0 0
      %6861 = vmatpush1.bf16.msra.mxu0 0
      %6862 = vmatprep.subr.bf16.mxu0 %v6793
      %6863 = vmatpush1.bf16.msra.mxu0 %v6790
      %6864 = vmatprep.subr.bf16.mxu0 0
      %6865 = vmatpush2.bf16.msra.mxu0 0
      %6866 = vmatprep.subr.bf16.mxu0 0
      %6867 = vmatpush2.bf16.msra.mxu0 0
      %6868 = vmatprep.subr.bf16.mxu0 0
      %6869 = vmatpush2.bf16.msra.mxu0 0
      %6870 = vmatprep.subr.bf16.mxu0 0
      %6871 = vmatpush2.bf16.msra.mxu0 0
      %6872 = vmatprep.subr.bf16.mxu0 0
      %6873 = vmatpush2.bf16.msra.mxu0 0
      %6874 = vmatprep.subr.bf16.mxu0 0
      %6875 = vmatpush2.bf16.msra.mxu0 0
      %6876 = vmatprep.subr.bf16.mxu0 0
      %6877 = vmatpush2.bf16.msra.mxu0 0
      %6878 = vmatprep.subr.bf16.mxu0 0
      %6879 = vmatpush2.bf16.msra.mxu0 0
      %6880 = vmatprep.mubr.bf16.mxu0 0
      %6881 = vmatmul.mubr.bf16.gmra.mxu0 %v6781
      %v6882 = vpop.f32.mrf.mxu0
      %v6883 = vadd.f32 0.0, %v6882
      %v6884 = vpop.f32.mrf.mxu0
      %v6885 = vadd.f32 0.0, %v6884
      %v6886 = vpop.f32.mrf.mxu0
      %v6887 = vpop.f32.mrf.mxu0
      %6888 = vdwg.mxu0
      %6889 = vmatprep.subr.bf16.mxu0 0
      %6890 = vmatpush1.bf16.msra.mxu0 0
      %6891 = vmatprep.subr.bf16.mxu0 0
      %6892 = vmatpush1.bf16.msra.mxu0 0
      %6893 = vmatprep.subr.bf16.mxu0 0
      %6894 = vmatpush1.bf16.msra.mxu0 0
      %6895 = vmatprep.subr.bf16.mxu0 0
      %6896 = vmatpush1.bf16.msra.mxu0 0
      %6897 = vmatprep.subr.bf16.mxu0 0
      %6898 = vmatpush1.bf16.msra.mxu0 0
      %6899 = vmatprep.subr.bf16.mxu0 0
      %6900 = vmatpush1.bf16.msra.mxu0 0
      %6901 = vmatprep.subr.bf16.mxu0 0
      %6902 = vmatpush1.bf16.msra.mxu0 0
      %6903 = vmatprep.subr.bf16.mxu0 %v6799
      %6904 = vmatpush1.bf16.msra.mxu0 %v6796
      %6905 = vmatprep.subr.bf16.mxu0 0
      %6906 = vmatpush2.bf16.msra.mxu0 0
      %6907 = vmatprep.subr.bf16.mxu0 0
      %6908 = vmatpush2.bf16.msra.mxu0 0
      %6909 = vmatprep.subr.bf16.mxu0 0
      %6910 = vmatpush2.bf16.msra.mxu0 0
      %6911 = vmatprep.subr.bf16.mxu0 0
      %6912 = vmatpush2.bf16.msra.mxu0 0
      %6913 = vmatprep.subr.bf16.mxu0 0
      %6914 = vmatpush2.bf16.msra.mxu0 0
      %6915 = vmatprep.subr.bf16.mxu0 0
      %6916 = vmatpush2.bf16.msra.mxu0 0
      %6917 = vmatprep.subr.bf16.mxu0 0
      %6918 = vmatpush2.bf16.msra.mxu0 0
      %6919 = vmatprep.subr.bf16.mxu0 0
      %6920 = vmatpush2.bf16.msra.mxu0 0
      %6921 = vmatprep.mubr.bf16.mxu0 0
      %6922 = vmatmul.mubr.bf16.gmra.mxu0 %v6781
      %v6923 = vpop.f32.mrf.mxu0
      %v6924 = vadd.f32 0.0, %v6923
      %v6925 = vpop.f32.mrf.mxu0
      %v6926 = vadd.f32 0.0, %v6925
      %v6927 = vpop.f32.mrf.mxu0
      %v6928 = vpop.f32.mrf.mxu0
      %6929 = vdwg.mxu0
      %6930 = vmatprep.subr.bf16.mxu0 0
      %6931 = vmatpush1.bf16.msra.mxu0 0
      %6932 = vmatprep.subr.bf16.mxu0 0
      %6933 = vmatpush1.bf16.msra.mxu0 0
      %6934 = vmatprep.subr.bf16.mxu0 0
      %6935 = vmatpush1.bf16.msra.mxu0 0
      %6936 = vmatprep.subr.bf16.mxu0 0
      %6937 = vmatpush1.bf16.msra.mxu0 0
      %6938 = vmatprep.subr.bf16.mxu0 0
      %6939 = vmatpush1.bf16.msra.mxu0 0
      %6940 = vmatprep.subr.bf16.mxu0 0
      %6941 = vmatpush1.bf16.msra.mxu0 0
      %6942 = vmatprep.subr.bf16.mxu0 0
      %6943 = vmatpush1.bf16.msra.mxu0 0
      %6944 = vmatprep.subr.bf16.mxu0 %v6805
      %6945 = vmatpush1.bf16.msra.mxu0 %v6802
      %6946 = vmatprep.subr.bf16.mxu0 0
      %6947 = vmatpush2.bf16.msra.mxu0 0
      %6948 = vmatprep.subr.bf16.mxu0 0
      %6949 = vmatpush2.bf16.msra.mxu0 0
      %6950 = vmatprep.subr.bf16.mxu0 0
      %6951 = vmatpush2.bf16.msra.mxu0 0
      %6952 = vmatprep.subr.bf16.mxu0 0
      %6953 = vmatpush2.bf16.msra.mxu0 0
      %6954 = vmatprep.subr.bf16.mxu0 0
      %6955 = vmatpush2.bf16.msra.mxu0 0
      %6956 = vmatprep.subr.bf16.mxu0 0
      %6957 = vmatpush2.bf16.msra.mxu0 0
      %6958 = vmatprep.subr.bf16.mxu0 0
      %6959 = vmatpush2.bf16.msra.mxu0 0
      %6960 = vmatprep.subr.bf16.mxu0 0
      %6961 = vmatpush2.bf16.msra.mxu0 0
      %6962 = vmatprep.mubr.bf16.mxu0 0
      %6963 = vmatmul.mubr.bf16.gmra.mxu0 %v6781
      %v6964 = vpop.f32.mrf.mxu0
      %v6965 = vadd.f32 0.0, %v6964
      %v6966 = vpop.f32.mrf.mxu0
      %v6967 = vadd.f32 0.0, %v6966
      %v6968 = vpop.f32.mrf.mxu0
      %v6969 = vpop.f32.mrf.mxu0
      %6970 = vdwg.mxu0
      %v6971 = vadd.f32 %v6682, %v6842
      %v6972 = vadd.f32 %v6683, %v6844
      %v6973 = vadd.f32 %v6684, %v6883
      %v6974 = vadd.f32 %v6685, %v6885
      %v6975 = vadd.f32 %v6686, %v6924
      %v6976 = vadd.f32 %v6687, %v6926
      %v6977 = vadd.f32 %v6688, %v6965
      %v6978 = vadd.f32 %v6689, %v6967
      %6979 = vrot.lane.b32.xlu0 %v5179, 97
      %v6980 = vpop.permute.xlu0 %6979
      %6981 = vrot.lane.b32.xlu0 %v5163, 97
      %v6982 = vpop.permute.xlu0 %6981
      %6983 = vrot.lane.b32.xlu0 %v5180, 97
      %v6984 = vpop.permute.xlu0 %6983
      %6985 = vrot.lane.b32.xlu0 %v5164, 97
      %v6986 = vpop.permute.xlu0 %6985
      %6987 = vrot.lane.b32.xlu0 %v5181, 97
      %v6988 = vpop.permute.xlu0 %6987
      %6989 = vrot.lane.b32.xlu0 %v5165, 97
      %v6990 = vpop.permute.xlu0 %6989
      %6991 = vrot.lane.b32.xlu0 %v5182, 97
      %v6992 = vpop.permute.xlu0 %6991
      %6993 = vrot.lane.b32.xlu0 %v5166, 97
      %v6994 = vpop.permute.xlu0 %6993
      %6995 = vrot.lane.b32.xlu0 %v5183, 97
      %v6996 = vpop.permute.xlu0 %6995
      %6997 = vrot.lane.b32.xlu0 %v5167, 97
      %v6998 = vpop.permute.xlu0 %6997
      %6999 = vrot.lane.b32.xlu0 %v5184, 97
      %v7000 = vpop.permute.xlu0 %6999
      %7001 = vrot.lane.b32.xlu0 %v5168, 97
      %v7002 = vpop.permute.xlu0 %7001
      %7003 = vrot.lane.b32.xlu0 %v5185, 97
      %v7004 = vpop.permute.xlu0 %7003
      %7005 = vrot.lane.b32.xlu0 %v5169, 97
      %v7006 = vpop.permute.xlu0 %7005
      %7007 = vrot.lane.b32.xlu0 %v5186, 97
      %v7008 = vpop.permute.xlu0 %7007
      %7009 = vrot.lane.b32.xlu0 %v5170, 97
      %v7010 = vpop.permute.xlu0 %7009
      %vm7011 = vcmp.lt.s32.totalorder %v1223, 97
      %v7012 = vsel %vm7011, %v7004, %v7008
      %v7013 = vsel %vm7011, %v7006, %v7010
      %v7014 = vsel %vm7011, %v7000, %v7004
      %v7015 = vsel %vm7011, %v7002, %v7006
      %v7016 = vsel %vm7011, %v6996, %v7000
      %v7017 = vsel %vm7011, %v6998, %v7002
      %v7018 = vsel %vm7011, %v6992, %v6996
      %v7019 = vsel %vm7011, %v6994, %v6998
      %v7020 = vsel %vm7011, %v6988, %v6992
      %v7021 = vsel %vm7011, %v6990, %v6994
      %v7022 = vsel %vm7011, %v6984, %v6988
      %v7023 = vsel %vm7011, %v6986, %v6990
      %v7024 = vsel %vm7011, %v6980, %v6984
      %v7025 = vsel %vm7011, %v6982, %v6986
      %v7026 = vsel %vm7011, %v7008, %v6980
      %v7027 = vsel %vm7011, %v7010, %v6982
      %vm7028 = vmand %vm5289, %vm5313
      %vm7029 = vmand %vm5290, %vm5314
      %vm7030 = vmand %vm5291, %vm5315
      %vm7031 = vmand %vm5292, %vm5316
      %vm7032 = vmand %vm5293, %vm5317
      %vm7033 = vmand %vm5294, %vm5318
      %vm7034 = vmand %vm5295, %vm5319
      %vm7035 = vmand %vm5296, %vm5320
      %v7036 = vsel %vm7028, 1, 0
      %v7037 = vsel %vm7029, 1, 0
      %v7038 = vsel %vm7030, 1, 0
      %v7039 = vsel %vm7031, 1, 0
      %v7040 = vsel %vm7032, 1, 0
      %v7041 = vsel %vm7033, 1, 0
      %v7042 = vsel %vm7034, 1, 0
      %v7043 = vsel %vm7035, 1, 0
      %vm7044 = vcmp.eq.s32.totalorder %v7036, 1
      %vm7045 = vcmp.eq.s32.totalorder %v7037, 1
      %vm7046 = vcmp.eq.s32.totalorder %v7038, 1
      %vm7047 = vcmp.eq.s32.totalorder %v7039, 1
      %vm7048 = vcmp.eq.s32.totalorder %v7040, 1
      %vm7049 = vcmp.eq.s32.totalorder %v7041, 1
      %vm7050 = vcmp.eq.s32.totalorder %v7042, 1
      %vm7051 = vcmp.eq.s32.totalorder %v7043, 1
      %v7052 = vsel %vm7044, %v7024, 0.0
      %v7053 = vsel %vm7045, %v7022, 0.0
      %v7054 = vsel %vm7046, %v7020, 0.0
      %v7055 = vsel %vm7047, %v7018, 0.0
      %v7056 = vsel %vm7048, %v7016, 0.0
      %v7057 = vsel %vm7049, %v7014, 0.0
      %v7058 = vsel %vm7050, %v7012, 0.0
      %v7059 = vsel %vm7051, %v7026, 0.0
      %v7060 = vsel %vm7044, %v7025, 0.0
      %v7061 = vsel %vm7045, %v7023, 0.0
      %v7062 = vsel %vm7046, %v7021, 0.0
      %v7063 = vsel %vm7047, %v7019, 0.0
      %v7064 = vsel %vm7048, %v7017, 0.0
      %v7065 = vsel %vm7049, %v7015, 0.0
      %v7066 = vsel %vm7050, %v7013, 0.0
      %v7067 = vsel %vm7051, %v7027, 0.0
      %s7068 = scalar_lea.vmem %s11, 12
      %v7069 = vld [vmem:[%s7068] sm:$0x3]
      %v7070 = vpack.c.bf16 %v7060, %v7052
      %v7071 = vpack.c.bf16 %v7061, %v7053
      %v7072 = vpack.c.bf16 %v7062, %v7054
      %v7073 = vpack.c.bf16 %v7063, %v7055
      %v7074 = vpack.c.bf16 %v7064, %v7056
      %v7075 = vpack.c.bf16 %v7065, %v7057
      %v7076 = vpack.c.bf16 %v7066, %v7058
      %v7077 = vpack.c.bf16 %v7067, %v7059
      %v7079 = vsel %vm5510, %v7069, 0
      %v7082 = vsel %vm5514, %v7070, 0
      %v7085 = vsel %vm5514, %v7071, 0
      %v7088 = vsel %vm5514, %v7072, 0
      %v7091 = vsel %vm5514, %v7073, 0
      %v7094 = vsel %vm5514, %v7074, 0
      %v7097 = vsel %vm5514, %v7075, 0
      %v7100 = vsel %vm5514, %v7076, 0
      %v7103 = vsel %vm5514, %v7077, 0
      %7105 = vmatprep.subr.bf16.mxu0 0
      %7106 = vmatpush1.bf16.msra.mxu0 0
      %7107 = vmatprep.subr.bf16.mxu0 0
      %7108 = vmatpush1.bf16.msra.mxu0 0
      %7109 = vmatprep.subr.bf16.mxu0 0
      %7110 = vmatpush1.bf16.msra.mxu0 0
      %7111 = vmatprep.subr.bf16.mxu0 0
      %7112 = vmatpush1.bf16.msra.mxu0 0
      %7113 = vmatprep.subr.bf16.mxu0 0
      %7114 = vmatpush1.bf16.msra.mxu0 0
      %7115 = vmatprep.subr.bf16.mxu0 0
      %7116 = vmatpush1.bf16.msra.mxu0 0
      %7117 = vmatprep.subr.bf16.mxu0 0
      %7118 = vmatpush1.bf16.msra.mxu0 0
      %7119 = vmatprep.subr.bf16.mxu0 %v7085
      %7120 = vmatpush1.bf16.msra.mxu0 %v7082
      %7121 = vmatprep.subr.bf16.mxu0 0
      %7122 = vmatpush2.bf16.msra.mxu0 0
      %7123 = vmatprep.subr.bf16.mxu0 0
      %7124 = vmatpush2.bf16.msra.mxu0 0
      %7125 = vmatprep.subr.bf16.mxu0 0
      %7126 = vmatpush2.bf16.msra.mxu0 0
      %7127 = vmatprep.subr.bf16.mxu0 0
      %7128 = vmatpush2.bf16.msra.mxu0 0
      %7129 = vmatprep.subr.bf16.mxu0 0
      %7130 = vmatpush2.bf16.msra.mxu0 0
      %7131 = vmatprep.subr.bf16.mxu0 0
      %7132 = vmatpush2.bf16.msra.mxu0 0
      %7133 = vmatprep.subr.bf16.mxu0 0
      %7134 = vmatpush2.bf16.msra.mxu0 0
      %7135 = vmatprep.subr.bf16.mxu0 0
      %7136 = vmatpush2.bf16.msra.mxu0 0
      %7137 = vmatprep.mubr.bf16.mxu0 0
      %7138 = vmatmul.mubr.bf16.gmra.mxu0 %v7079
      %v7139 = vpop.f32.mrf.mxu0
      %v7140 = vadd.f32 0.0, %v7139
      %v7141 = vpop.f32.mrf.mxu0
      %v7142 = vadd.f32 0.0, %v7141
      %v7143 = vpop.f32.mrf.mxu0
      %v7144 = vpop.f32.mrf.mxu0
      %7145 = vdwg.mxu0
      %7146 = vmatprep.subr.bf16.mxu0 0
      %7147 = vmatpush1.bf16.msra.mxu0 0
      %7148 = vmatprep.subr.bf16.mxu0 0
      %7149 = vmatpush1.bf16.msra.mxu0 0
      %7150 = vmatprep.subr.bf16.mxu0 0
      %7151 = vmatpush1.bf16.msra.mxu0 0
      %7152 = vmatprep.subr.bf16.mxu0 0
      %7153 = vmatpush1.bf16.msra.mxu0 0
      %7154 = vmatprep.subr.bf16.mxu0 0
      %7155 = vmatpush1.bf16.msra.mxu0 0
      %7156 = vmatprep.subr.bf16.mxu0 0
      %7157 = vmatpush1.bf16.msra.mxu0 0
      %7158 = vmatprep.subr.bf16.mxu0 0
      %7159 = vmatpush1.bf16.msra.mxu0 0
      %7160 = vmatprep.subr.bf16.mxu0 %v7091
      %7161 = vmatpush1.bf16.msra.mxu0 %v7088
      %7162 = vmatprep.subr.bf16.mxu0 0
      %7163 = vmatpush2.bf16.msra.mxu0 0
      %7164 = vmatprep.subr.bf16.mxu0 0
      %7165 = vmatpush2.bf16.msra.mxu0 0
      %7166 = vmatprep.subr.bf16.mxu0 0
      %7167 = vmatpush2.bf16.msra.mxu0 0
      %7168 = vmatprep.subr.bf16.mxu0 0
      %7169 = vmatpush2.bf16.msra.mxu0 0
      %7170 = vmatprep.subr.bf16.mxu0 0
      %7171 = vmatpush2.bf16.msra.mxu0 0
      %7172 = vmatprep.subr.bf16.mxu0 0
      %7173 = vmatpush2.bf16.msra.mxu0 0
      %7174 = vmatprep.subr.bf16.mxu0 0
      %7175 = vmatpush2.bf16.msra.mxu0 0
      %7176 = vmatprep.subr.bf16.mxu0 0
      %7177 = vmatpush2.bf16.msra.mxu0 0
      %7178 = vmatprep.mubr.bf16.mxu0 0
      %7179 = vmatmul.mubr.bf16.gmra.mxu0 %v7079
      %v7180 = vpop.f32.mrf.mxu0
      %v7181 = vadd.f32 0.0, %v7180
      %v7182 = vpop.f32.mrf.mxu0
      %v7183 = vadd.f32 0.0, %v7182
      %v7184 = vpop.f32.mrf.mxu0
      %v7185 = vpop.f32.mrf.mxu0
      %7186 = vdwg.mxu0
      %7187 = vmatprep.subr.bf16.mxu0 0
      %7188 = vmatpush1.bf16.msra.mxu0 0
      %7189 = vmatprep.subr.bf16.mxu0 0
      %7190 = vmatpush1.bf16.msra.mxu0 0
      %7191 = vmatprep.subr.bf16.mxu0 0
      %7192 = vmatpush1.bf16.msra.mxu0 0
      %7193 = vmatprep.subr.bf16.mxu0 0
      %7194 = vmatpush1.bf16.msra.mxu0 0
      %7195 = vmatprep.subr.bf16.mxu0 0
      %7196 = vmatpush1.bf16.msra.mxu0 0
      %7197 = vmatprep.subr.bf16.mxu0 0
      %7198 = vmatpush1.bf16.msra.mxu0 0
      %7199 = vmatprep.subr.bf16.mxu0 0
      %7200 = vmatpush1.bf16.msra.mxu0 0
      %7201 = vmatprep.subr.bf16.mxu0 %v7097
      %7202 = vmatpush1.bf16.msra.mxu0 %v7094
      %7203 = vmatprep.subr.bf16.mxu0 0
      %7204 = vmatpush2.bf16.msra.mxu0 0
      %7205 = vmatprep.subr.bf16.mxu0 0
      %7206 = vmatpush2.bf16.msra.mxu0 0
      %7207 = vmatprep.subr.bf16.mxu0 0
      %7208 = vmatpush2.bf16.msra.mxu0 0
      %7209 = vmatprep.subr.bf16.mxu0 0
      %7210 = vmatpush2.bf16.msra.mxu0 0
      %7211 = vmatprep.subr.bf16.mxu0 0
      %7212 = vmatpush2.bf16.msra.mxu0 0
      %7213 = vmatprep.subr.bf16.mxu0 0
      %7214 = vmatpush2.bf16.msra.mxu0 0
      %7215 = vmatprep.subr.bf16.mxu0 0
      %7216 = vmatpush2.bf16.msra.mxu0 0
      %7217 = vmatprep.subr.bf16.mxu0 0
      %7218 = vmatpush2.bf16.msra.mxu0 0
      %7219 = vmatprep.mubr.bf16.mxu0 0
      %7220 = vmatmul.mubr.bf16.gmra.mxu0 %v7079
      %v7221 = vpop.f32.mrf.mxu0
      %v7222 = vadd.f32 0.0, %v7221
      %v7223 = vpop.f32.mrf.mxu0
      %v7224 = vadd.f32 0.0, %v7223
      %v7225 = vpop.f32.mrf.mxu0
      %v7226 = vpop.f32.mrf.mxu0
      %7227 = vdwg.mxu0
      %7228 = vmatprep.subr.bf16.mxu0 0
      %7229 = vmatpush1.bf16.msra.mxu0 0
      %7230 = vmatprep.subr.bf16.mxu0 0
      %7231 = vmatpush1.bf16.msra.mxu0 0
      %7232 = vmatprep.subr.bf16.mxu0 0
      %7233 = vmatpush1.bf16.msra.mxu0 0
      %7234 = vmatprep.subr.bf16.mxu0 0
      %7235 = vmatpush1.bf16.msra.mxu0 0
      %7236 = vmatprep.subr.bf16.mxu0 0
      %7237 = vmatpush1.bf16.msra.mxu0 0
      %7238 = vmatprep.subr.bf16.mxu0 0
      %7239 = vmatpush1.bf16.msra.mxu0 0
      %7240 = vmatprep.subr.bf16.mxu0 0
      %7241 = vmatpush1.bf16.msra.mxu0 0
      %7242 = vmatprep.subr.bf16.mxu0 %v7103
      %7243 = vmatpush1.bf16.msra.mxu0 %v7100
      %7244 = vmatprep.subr.bf16.mxu0 0
      %7245 = vmatpush2.bf16.msra.mxu0 0
      %7246 = vmatprep.subr.bf16.mxu0 0
      %7247 = vmatpush2.bf16.msra.mxu0 0
      %7248 = vmatprep.subr.bf16.mxu0 0
      %7249 = vmatpush2.bf16.msra.mxu0 0
      %7250 = vmatprep.subr.bf16.mxu0 0
      %7251 = vmatpush2.bf16.msra.mxu0 0
      %7252 = vmatprep.subr.bf16.mxu0 0
      %7253 = vmatpush2.bf16.msra.mxu0 0
      %7254 = vmatprep.subr.bf16.mxu0 0
      %7255 = vmatpush2.bf16.msra.mxu0 0
      %7256 = vmatprep.subr.bf16.mxu0 0
      %7257 = vmatpush2.bf16.msra.mxu0 0
      %7258 = vmatprep.subr.bf16.mxu0 0
      %7259 = vmatpush2.bf16.msra.mxu0 0
      %7260 = vmatprep.mubr.bf16.mxu0 0
      %7261 = vmatmul.mubr.bf16.gmra.mxu0 %v7079
      %v7262 = vpop.f32.mrf.mxu0
      %v7263 = vadd.f32 0.0, %v7262
      %v7264 = vpop.f32.mrf.mxu0
      %v7265 = vadd.f32 0.0, %v7264
      %v7266 = vpop.f32.mrf.mxu0
      %v7267 = vpop.f32.mrf.mxu0
      %7268 = vdwg.mxu0
      %v7269 = vadd.f32 %v6971, %v7140
      %v7270 = vadd.f32 %v6972, %v7142
      %v7271 = vadd.f32 %v6973, %v7181
      %v7272 = vadd.f32 %v6974, %v7183
      %v7273 = vadd.f32 %v6975, %v7222
      %v7274 = vadd.f32 %v6976, %v7224
      %v7275 = vadd.f32 %v6977, %v7263
      %v7276 = vadd.f32 %v6978, %v7265
      %7277 = vrot.lane.b32.xlu0 %v5179, 96
      %v7278 = vpop.permute.xlu0 %7277
      %7279 = vrot.lane.b32.xlu0 %v5163, 96
      %v7280 = vpop.permute.xlu0 %7279
      %7281 = vrot.lane.b32.xlu0 %v5180, 96
      %v7282 = vpop.permute.xlu0 %7281
      %7283 = vrot.lane.b32.xlu0 %v5164, 96
      %v7284 = vpop.permute.xlu0 %7283
      %7285 = vrot.lane.b32.xlu0 %v5181, 96
      %v7286 = vpop.permute.xlu0 %7285
      %7287 = vrot.lane.b32.xlu0 %v5165, 96
      %v7288 = vpop.permute.xlu0 %7287
      %7289 = vrot.lane.b32.xlu0 %v5182, 96
      %v7290 = vpop.permute.xlu0 %7289
      %7291 = vrot.lane.b32.xlu0 %v5166, 96
      %v7292 = vpop.permute.xlu0 %7291
      %7293 = vrot.lane.b32.xlu0 %v5183, 96
      %v7294 = vpop.permute.xlu0 %7293
      %7295 = vrot.lane.b32.xlu0 %v5167, 96
      %v7296 = vpop.permute.xlu0 %7295
      %7297 = vrot.lane.b32.xlu0 %v5184, 96
      %v7298 = vpop.permute.xlu0 %7297
      %7299 = vrot.lane.b32.xlu0 %v5168, 96
      %v7300 = vpop.permute.xlu0 %7299
      %7301 = vrot.lane.b32.xlu0 %v5185, 96
      %v7302 = vpop.permute.xlu0 %7301
      %7303 = vrot.lane.b32.xlu0 %v5169, 96
      %v7304 = vpop.permute.xlu0 %7303
      %7305 = vrot.lane.b32.xlu0 %v5186, 96
      %v7306 = vpop.permute.xlu0 %7305
      %7307 = vrot.lane.b32.xlu0 %v5170, 96
      %v7308 = vpop.permute.xlu0 %7307
      %vm7309 = vcmp.lt.s32.totalorder %v1223, 96
      %v7310 = vsel %vm7309, %v7302, %v7306
      %v7311 = vsel %vm7309, %v7304, %v7308
      %v7312 = vsel %vm7309, %v7298, %v7302
      %v7313 = vsel %vm7309, %v7300, %v7304
      %v7314 = vsel %vm7309, %v7294, %v7298
      %v7315 = vsel %vm7309, %v7296, %v7300
      %v7316 = vsel %vm7309, %v7290, %v7294
      %v7317 = vsel %vm7309, %v7292, %v7296
      %v7318 = vsel %vm7309, %v7286, %v7290
      %v7319 = vsel %vm7309, %v7288, %v7292
      %v7320 = vsel %vm7309, %v7282, %v7286
      %v7321 = vsel %vm7309, %v7284, %v7288
      %v7322 = vsel %vm7309, %v7278, %v7282
      %v7323 = vsel %vm7309, %v7280, %v7284
      %v7324 = vsel %vm7309, %v7306, %v7278
      %v7325 = vsel %vm7309, %v7308, %v7280
      %v7326 = vsel %vm5313, 1, 0
      %v7327 = vsel %vm5314, 1, 0
      %v7328 = vsel %vm5315, 1, 0
      %v7329 = vsel %vm5316, 1, 0
      %v7330 = vsel %vm5317, 1, 0
      %v7331 = vsel %vm5318, 1, 0
      %v7332 = vsel %vm5319, 1, 0
      %v7333 = vsel %vm5320, 1, 0
      %vm7334 = vcmp.eq.s32.totalorder %v7326, 1
      %vm7335 = vcmp.eq.s32.totalorder %v7327, 1
      %vm7336 = vcmp.eq.s32.totalorder %v7328, 1
      %vm7337 = vcmp.eq.s32.totalorder %v7329, 1
      %vm7338 = vcmp.eq.s32.totalorder %v7330, 1
      %vm7339 = vcmp.eq.s32.totalorder %v7331, 1
      %vm7340 = vcmp.eq.s32.totalorder %v7332, 1
      %vm7341 = vcmp.eq.s32.totalorder %v7333, 1
      %v7342 = vsel %vm7334, %v7322, 0.0
      %v7343 = vsel %vm7335, %v7320, 0.0
      %v7344 = vsel %vm7336, %v7318, 0.0
      %v7345 = vsel %vm7337, %v7316, 0.0
      %v7346 = vsel %vm7338, %v7314, 0.0
      %v7347 = vsel %vm7339, %v7312, 0.0
      %v7348 = vsel %vm7340, %v7310, 0.0
      %v7349 = vsel %vm7341, %v7324, 0.0
      %v7350 = vsel %vm7334, %v7323, 0.0
      %v7351 = vsel %vm7335, %v7321, 0.0
      %v7352 = vsel %vm7336, %v7319, 0.0
      %v7353 = vsel %vm7337, %v7317, 0.0
      %v7354 = vsel %vm7338, %v7315, 0.0
      %v7355 = vsel %vm7339, %v7313, 0.0
      %v7356 = vsel %vm7340, %v7311, 0.0
      %v7357 = vsel %vm7341, %v7325, 0.0
      %s7358 = scalar_lea.vmem %s11, 14
      %v7359 = vld [vmem:[%s7358] sm:$0x3]
      %v7360 = vpack.c.bf16 %v7350, %v7342
      %v7361 = vpack.c.bf16 %v7351, %v7343
      %v7362 = vpack.c.bf16 %v7352, %v7344
      %v7363 = vpack.c.bf16 %v7353, %v7345
      %v7364 = vpack.c.bf16 %v7354, %v7346
      %v7365 = vpack.c.bf16 %v7355, %v7347
      %v7366 = vpack.c.bf16 %v7356, %v7348
      %v7367 = vpack.c.bf16 %v7357, %v7349
      %v7369 = vsel %vm5510, %v7359, 0
      %v7372 = vsel %vm5514, %v7360, 0
      %v7375 = vsel %vm5514, %v7361, 0
      %v7378 = vsel %vm5514, %v7362, 0
      %v7381 = vsel %vm5514, %v7363, 0
      %v7384 = vsel %vm5514, %v7364, 0
      %v7387 = vsel %vm5514, %v7365, 0
      %v7390 = vsel %vm5514, %v7366, 0
      %v7393 = vsel %vm5514, %v7367, 0
      %7395 = vmatprep.subr.bf16.mxu0 0
      %7396 = vmatpush1.bf16.msra.mxu0 0
      %7397 = vmatprep.subr.bf16.mxu0 0
      %7398 = vmatpush1.bf16.msra.mxu0 0
      %7399 = vmatprep.subr.bf16.mxu0 0
      %7400 = vmatpush1.bf16.msra.mxu0 0
      %7401 = vmatprep.subr.bf16.mxu0 0
      %7402 = vmatpush1.bf16.msra.mxu0 0
      %7403 = vmatprep.subr.bf16.mxu0 0
      %7404 = vmatpush1.bf16.msra.mxu0 0
      %7405 = vmatprep.subr.bf16.mxu0 0
      %7406 = vmatpush1.bf16.msra.mxu0 0
      %7407 = vmatprep.subr.bf16.mxu0 0
      %7408 = vmatpush1.bf16.msra.mxu0 0
      %7409 = vmatprep.subr.bf16.mxu0 %v7375
      %7410 = vmatpush1.bf16.msra.mxu0 %v7372
      %7411 = vmatprep.subr.bf16.mxu0 0
      %7412 = vmatpush2.bf16.msra.mxu0 0
      %7413 = vmatprep.subr.bf16.mxu0 0
      %7414 = vmatpush2.bf16.msra.mxu0 0
      %7415 = vmatprep.subr.bf16.mxu0 0
      %7416 = vmatpush2.bf16.msra.mxu0 0
      %7417 = vmatprep.subr.bf16.mxu0 0
      %7418 = vmatpush2.bf16.msra.mxu0 0
      %7419 = vmatprep.subr.bf16.mxu0 0
      %7420 = vmatpush2.bf16.msra.mxu0 0
      %7421 = vmatprep.subr.bf16.mxu0 0
      %7422 = vmatpush2.bf16.msra.mxu0 0
      %7423 = vmatprep.subr.bf16.mxu0 0
      %7424 = vmatpush2.bf16.msra.mxu0 0
      %7425 = vmatprep.subr.bf16.mxu0 0
      %7426 = vmatpush2.bf16.msra.mxu0 0
      %7427 = vmatprep.mubr.bf16.mxu0 0
      %7428 = vmatmul.mubr.bf16.gmra.mxu0 %v7369
      %v7429 = vpop.f32.mrf.mxu0
      %v7430 = vadd.f32 0.0, %v7429
      %v7431 = vpop.f32.mrf.mxu0
      %v7432 = vadd.f32 0.0, %v7431
      %v7433 = vpop.f32.mrf.mxu0
      %v7434 = vpop.f32.mrf.mxu0
      %7435 = vdwg.mxu0
      %7436 = vmatprep.subr.bf16.mxu0 0
      %7437 = vmatpush1.bf16.msra.mxu0 0
      %7438 = vmatprep.subr.bf16.mxu0 0
      %7439 = vmatpush1.bf16.msra.mxu0 0
      %7440 = vmatprep.subr.bf16.mxu0 0
      %7441 = vmatpush1.bf16.msra.mxu0 0
      %7442 = vmatprep.subr.bf16.mxu0 0
      %7443 = vmatpush1.bf16.msra.mxu0 0
      %7444 = vmatprep.subr.bf16.mxu0 0
      %7445 = vmatpush1.bf16.msra.mxu0 0
      %7446 = vmatprep.subr.bf16.mxu0 0
      %7447 = vmatpush1.bf16.msra.mxu0 0
      %7448 = vmatprep.subr.bf16.mxu0 0
      %7449 = vmatpush1.bf16.msra.mxu0 0
      %7450 = vmatprep.subr.bf16.mxu0 %v7381
      %7451 = vmatpush1.bf16.msra.mxu0 %v7378
      %7452 = vmatprep.subr.bf16.mxu0 0
      %7453 = vmatpush2.bf16.msra.mxu0 0
      %7454 = vmatprep.subr.bf16.mxu0 0
      %7455 = vmatpush2.bf16.msra.mxu0 0
      %7456 = vmatprep.subr.bf16.mxu0 0
      %7457 = vmatpush2.bf16.msra.mxu0 0
      %7458 = vmatprep.subr.bf16.mxu0 0
      %7459 = vmatpush2.bf16.msra.mxu0 0
      %7460 = vmatprep.subr.bf16.mxu0 0
      %7461 = vmatpush2.bf16.msra.mxu0 0
      %7462 = vmatprep.subr.bf16.mxu0 0
      %7463 = vmatpush2.bf16.msra.mxu0 0
      %7464 = vmatprep.subr.bf16.mxu0 0
      %7465 = vmatpush2.bf16.msra.mxu0 0
      %7466 = vmatprep.subr.bf16.mxu0 0
      %7467 = vmatpush2.bf16.msra.mxu0 0
      %7468 = vmatprep.mubr.bf16.mxu0 0
      %7469 = vmatmul.mubr.bf16.gmra.mxu0 %v7369
      %v7470 = vpop.f32.mrf.mxu0
      %v7471 = vadd.f32 0.0, %v7470
      %v7472 = vpop.f32.mrf.mxu0
      %v7473 = vadd.f32 0.0, %v7472
      %v7474 = vpop.f32.mrf.mxu0
      %v7475 = vpop.f32.mrf.mxu0
      %7476 = vdwg.mxu0
      %7477 = vmatprep.subr.bf16.mxu0 0
      %7478 = vmatpush1.bf16.msra.mxu0 0
      %7479 = vmatprep.subr.bf16.mxu0 0
      %7480 = vmatpush1.bf16.msra.mxu0 0
      %7481 = vmatprep.subr.bf16.mxu0 0
      %7482 = vmatpush1.bf16.msra.mxu0 0
      %7483 = vmatprep.subr.bf16.mxu0 0
      %7484 = vmatpush1.bf16.msra.mxu0 0
      %7485 = vmatprep.subr.bf16.mxu0 0
      %7486 = vmatpush1.bf16.msra.mxu0 0
      %7487 = vmatprep.subr.bf16.mxu0 0
      %7488 = vmatpush1.bf16.msra.mxu0 0
      %7489 = vmatprep.subr.bf16.mxu0 0
      %7490 = vmatpush1.bf16.msra.mxu0 0
      %7491 = vmatprep.subr.bf16.mxu0 %v7387
      %7492 = vmatpush1.bf16.msra.mxu0 %v7384
      %7493 = vmatprep.subr.bf16.mxu0 0
      %7494 = vmatpush2.bf16.msra.mxu0 0
      %7495 = vmatprep.subr.bf16.mxu0 0
      %7496 = vmatpush2.bf16.msra.mxu0 0
      %7497 = vmatprep.subr.bf16.mxu0 0
      %7498 = vmatpush2.bf16.msra.mxu0 0
      %7499 = vmatprep.subr.bf16.mxu0 0
      %7500 = vmatpush2.bf16.msra.mxu0 0
      %7501 = vmatprep.subr.bf16.mxu0 0
      %7502 = vmatpush2.bf16.msra.mxu0 0
      %7503 = vmatprep.subr.bf16.mxu0 0
      %7504 = vmatpush2.bf16.msra.mxu0 0
      %7505 = vmatprep.subr.bf16.mxu0 0
      %7506 = vmatpush2.bf16.msra.mxu0 0
      %7507 = vmatprep.subr.bf16.mxu0 0
      %7508 = vmatpush2.bf16.msra.mxu0 0
      %7509 = vmatprep.mubr.bf16.mxu0 0
      %7510 = vmatmul.mubr.bf16.gmra.mxu0 %v7369
      %v7511 = vpop.f32.mrf.mxu0
      %v7512 = vadd.f32 0.0, %v7511
      %v7513 = vpop.f32.mrf.mxu0
      %v7514 = vadd.f32 0.0, %v7513
      %v7515 = vpop.f32.mrf.mxu0
      %v7516 = vpop.f32.mrf.mxu0
      %7517 = vdwg.mxu0
      %7518 = vmatprep.subr.bf16.mxu0 0
      %7519 = vmatpush1.bf16.msra.mxu0 0
      %7520 = vmatprep.subr.bf16.mxu0 0
      %7521 = vmatpush1.bf16.msra.mxu0 0
      %7522 = vmatprep.subr.bf16.mxu0 0
      %7523 = vmatpush1.bf16.msra.mxu0 0
      %7524 = vmatprep.subr.bf16.mxu0 0
      %7525 = vmatpush1.bf16.msra.mxu0 0
      %7526 = vmatprep.subr.bf16.mxu0 0
      %7527 = vmatpush1.bf16.msra.mxu0 0
      %7528 = vmatprep.subr.bf16.mxu0 0
      %7529 = vmatpush1.bf16.msra.mxu0 0
      %7530 = vmatprep.subr.bf16.mxu0 0
      %7531 = vmatpush1.bf16.msra.mxu0 0
      %7532 = vmatprep.subr.bf16.mxu0 %v7393
      %7533 = vmatpush1.bf16.msra.mxu0 %v7390
      %7534 = vmatprep.subr.bf16.mxu0 0
      %7535 = vmatpush2.bf16.msra.mxu0 0
      %7536 = vmatprep.subr.bf16.mxu0 0
      %7537 = vmatpush2.bf16.msra.mxu0 0
      %7538 = vmatprep.subr.bf16.mxu0 0
      %7539 = vmatpush2.bf16.msra.mxu0 0
      %7540 = vmatprep.subr.bf16.mxu0 0
      %7541 = vmatpush2.bf16.msra.mxu0 0
      %7542 = vmatprep.subr.bf16.mxu0 0
      %7543 = vmatpush2.bf16.msra.mxu0 0
      %7544 = vmatprep.subr.bf16.mxu0 0
      %7545 = vmatpush2.bf16.msra.mxu0 0
      %7546 = vmatprep.subr.bf16.mxu0 0
      %7547 = vmatpush2.bf16.msra.mxu0 0
      %7548 = vmatprep.subr.bf16.mxu0 0
      %7549 = vmatpush2.bf16.msra.mxu0 0
      %7550 = vmatprep.mubr.bf16.mxu0 0
      %7551 = vmatmul.mubr.bf16.gmra.mxu0 %v7369
      %v7552 = vpop.f32.mrf.mxu0
      %v7553 = vadd.f32 0.0, %v7552
      %v7554 = vpop.f32.mrf.mxu0
      %v7555 = vadd.f32 0.0, %v7554
      %v7556 = vpop.f32.mrf.mxu0
      %v7557 = vpop.f32.mrf.mxu0
      %7558 = vdwg.mxu0
      %v7559 = vadd.f32 %v7269, %v7430
      %v7560 = vadd.f32 %v7270, %v7432
      %v7561 = vadd.f32 %v7271, %v7471
      %v7562 = vadd.f32 %v7272, %v7473
      %v7563 = vadd.f32 %v7273, %v7512
      %v7564 = vadd.f32 %v7274, %v7514
      %v7565 = vadd.f32 %v7275, %v7553
      %v7566 = vadd.f32 %v7276, %v7555
      %7567 = vrot.lane.b32.xlu0 %v5179, 95
      %v7568 = vpop.permute.xlu0 %7567
      %7569 = vrot.lane.b32.xlu0 %v5163, 95
      %v7570 = vpop.permute.xlu0 %7569
      %7571 = vrot.lane.b32.xlu0 %v5180, 95
      %v7572 = vpop.permute.xlu0 %7571
      %7573 = vrot.lane.b32.xlu0 %v5164, 95
      %v7574 = vpop.permute.xlu0 %7573
      %7575 = vrot.lane.b32.xlu0 %v5181, 95
      %v7576 = vpop.permute.xlu0 %7575
      %7577 = vrot.lane.b32.xlu0 %v5165, 95
      %v7578 = vpop.permute.xlu0 %7577
      %7579 = vrot.lane.b32.xlu0 %v5182, 95
      %v7580 = vpop.permute.xlu0 %7579
      %7581 = vrot.lane.b32.xlu0 %v5166, 95
      %v7582 = vpop.permute.xlu0 %7581
      %7583 = vrot.lane.b32.xlu0 %v5183, 95
      %v7584 = vpop.permute.xlu0 %7583
      %7585 = vrot.lane.b32.xlu0 %v5167, 95
      %v7586 = vpop.permute.xlu0 %7585
      %7587 = vrot.lane.b32.xlu0 %v5184, 95
      %v7588 = vpop.permute.xlu0 %7587
      %7589 = vrot.lane.b32.xlu0 %v5168, 95
      %v7590 = vpop.permute.xlu0 %7589
      %7591 = vrot.lane.b32.xlu0 %v5185, 95
      %v7592 = vpop.permute.xlu0 %7591
      %7593 = vrot.lane.b32.xlu0 %v5169, 95
      %v7594 = vpop.permute.xlu0 %7593
      %7595 = vrot.lane.b32.xlu0 %v5186, 95
      %v7596 = vpop.permute.xlu0 %7595
      %7597 = vrot.lane.b32.xlu0 %v5170, 95
      %v7598 = vpop.permute.xlu0 %7597
      %vm7599 = vcmp.lt.s32.totalorder %v1223, 95
      %v7600 = vsel %vm7599, %v7592, %v7596
      %v7601 = vsel %vm7599, %v7594, %v7598
      %v7602 = vsel %vm7599, %v7588, %v7592
      %v7603 = vsel %vm7599, %v7590, %v7594
      %v7604 = vsel %vm7599, %v7584, %v7588
      %v7605 = vsel %vm7599, %v7586, %v7590
      %v7606 = vsel %vm7599, %v7580, %v7584
      %v7607 = vsel %vm7599, %v7582, %v7586
      %v7608 = vsel %vm7599, %v7576, %v7580
      %v7609 = vsel %vm7599, %v7578, %v7582
      %v7610 = vsel %vm7599, %v7572, %v7576
      %v7611 = vsel %vm7599, %v7574, %v7578
      %v7612 = vsel %vm7599, %v7568, %v7572
      %v7613 = vsel %vm7599, %v7570, %v7574
      %v7614 = vsel %vm7599, %v7596, %v7568
      %v7615 = vsel %vm7599, %v7598, %v7570
      %vm7616 = vmand %vm5297, %vm5313
      %vm7617 = vmand %vm5298, %vm5314
      %vm7618 = vmand %vm5299, %vm5315
      %vm7619 = vmand %vm5300, %vm5316
      %vm7620 = vmand %vm5301, %vm5317
      %vm7621 = vmand %vm5302, %vm5318
      %vm7622 = vmand %vm5303, %vm5319
      %vm7623 = vmand %vm5304, %vm5320
      %v7624 = vsel %vm7616, 1, 0
      %v7625 = vsel %vm7617, 1, 0
      %v7626 = vsel %vm7618, 1, 0
      %v7627 = vsel %vm7619, 1, 0
      %v7628 = vsel %vm7620, 1, 0
      %v7629 = vsel %vm7621, 1, 0
      %v7630 = vsel %vm7622, 1, 0
      %v7631 = vsel %vm7623, 1, 0
      %vm7632 = vcmp.eq.s32.totalorder %v7624, 1
      %vm7633 = vcmp.eq.s32.totalorder %v7625, 1
      %vm7634 = vcmp.eq.s32.totalorder %v7626, 1
      %vm7635 = vcmp.eq.s32.totalorder %v7627, 1
      %vm7636 = vcmp.eq.s32.totalorder %v7628, 1
      %vm7637 = vcmp.eq.s32.totalorder %v7629, 1
      %vm7638 = vcmp.eq.s32.totalorder %v7630, 1
      %vm7639 = vcmp.eq.s32.totalorder %v7631, 1
      %v7640 = vsel %vm7632, %v7612, 0.0
      %v7641 = vsel %vm7633, %v7610, 0.0
      %v7642 = vsel %vm7634, %v7608, 0.0
      %v7643 = vsel %vm7635, %v7606, 0.0
      %v7644 = vsel %vm7636, %v7604, 0.0
      %v7645 = vsel %vm7637, %v7602, 0.0
      %v7646 = vsel %vm7638, %v7600, 0.0
      %v7647 = vsel %vm7639, %v7614, 0.0
      %v7648 = vsel %vm7632, %v7613, 0.0
      %v7649 = vsel %vm7633, %v7611, 0.0
      %v7650 = vsel %vm7634, %v7609, 0.0
      %v7651 = vsel %vm7635, %v7607, 0.0
      %v7652 = vsel %vm7636, %v7605, 0.0
      %v7653 = vsel %vm7637, %v7603, 0.0
      %v7654 = vsel %vm7638, %v7601, 0.0
      %v7655 = vsel %vm7639, %v7615, 0.0
      %s7656 = scalar_lea.vmem %s11, 16
      %v7657 = vld [vmem:[%s7656] sm:$0x3]
      %v7658 = vpack.c.bf16 %v7648, %v7640
      %v7659 = vpack.c.bf16 %v7649, %v7641
      %v7660 = vpack.c.bf16 %v7650, %v7642
      %v7661 = vpack.c.bf16 %v7651, %v7643
      %v7662 = vpack.c.bf16 %v7652, %v7644
      %v7663 = vpack.c.bf16 %v7653, %v7645
      %v7664 = vpack.c.bf16 %v7654, %v7646
      %v7665 = vpack.c.bf16 %v7655, %v7647
      %v7667 = vsel %vm5510, %v7657, 0
      %v7670 = vsel %vm5514, %v7658, 0
      %v7673 = vsel %vm5514, %v7659, 0
      %v7676 = vsel %vm5514, %v7660, 0
      %v7679 = vsel %vm5514, %v7661, 0
      %v7682 = vsel %vm5514, %v7662, 0
      %v7685 = vsel %vm5514, %v7663, 0
      %v7688 = vsel %vm5514, %v7664, 0
      %v7691 = vsel %vm5514, %v7665, 0
      %7693 = vmatprep.subr.bf16.mxu0 0
      %7694 = vmatpush1.bf16.msra.mxu0 0
      %7695 = vmatprep.subr.bf16.mxu0 0
      %7696 = vmatpush1.bf16.msra.mxu0 0
      %7697 = vmatprep.subr.bf16.mxu0 0
      %7698 = vmatpush1.bf16.msra.mxu0 0
      %7699 = vmatprep.subr.bf16.mxu0 0
      %7700 = vmatpush1.bf16.msra.mxu0 0
      %7701 = vmatprep.subr.bf16.mxu0 0
      %7702 = vmatpush1.bf16.msra.mxu0 0
      %7703 = vmatprep.subr.bf16.mxu0 0
      %7704 = vmatpush1.bf16.msra.mxu0 0
      %7705 = vmatprep.subr.bf16.mxu0 0
      %7706 = vmatpush1.bf16.msra.mxu0 0
      %7707 = vmatprep.subr.bf16.mxu0 %v7673
      %7708 = vmatpush1.bf16.msra.mxu0 %v7670
      %7709 = vmatprep.subr.bf16.mxu0 0
      %7710 = vmatpush2.bf16.msra.mxu0 0
      %7711 = vmatprep.subr.bf16.mxu0 0
      %7712 = vmatpush2.bf16.msra.mxu0 0
      %7713 = vmatprep.subr.bf16.mxu0 0
      %7714 = vmatpush2.bf16.msra.mxu0 0
      %7715 = vmatprep.subr.bf16.mxu0 0
      %7716 = vmatpush2.bf16.msra.mxu0 0
      %7717 = vmatprep.subr.bf16.mxu0 0
      %7718 = vmatpush2.bf16.msra.mxu0 0
      %7719 = vmatprep.subr.bf16.mxu0 0
      %7720 = vmatpush2.bf16.msra.mxu0 0
      %7721 = vmatprep.subr.bf16.mxu0 0
      %7722 = vmatpush2.bf16.msra.mxu0 0
      %7723 = vmatprep.subr.bf16.mxu0 0
      %7724 = vmatpush2.bf16.msra.mxu0 0
      %7725 = vmatprep.mubr.bf16.mxu0 0
      %7726 = vmatmul.mubr.bf16.gmra.mxu0 %v7667
      %v7727 = vpop.f32.mrf.mxu0
      %v7728 = vadd.f32 0.0, %v7727
      %v7729 = vpop.f32.mrf.mxu0
      %v7730 = vadd.f32 0.0, %v7729
      %v7731 = vpop.f32.mrf.mxu0
      %v7732 = vpop.f32.mrf.mxu0
      %7733 = vdwg.mxu0
      %7734 = vmatprep.subr.bf16.mxu0 0
      %7735 = vmatpush1.bf16.msra.mxu0 0
      %7736 = vmatprep.subr.bf16.mxu0 0
      %7737 = vmatpush1.bf16.msra.mxu0 0
      %7738 = vmatprep.subr.bf16.mxu0 0
      %7739 = vmatpush1.bf16.msra.mxu0 0
      %7740 = vmatprep.subr.bf16.mxu0 0
      %7741 = vmatpush1.bf16.msra.mxu0 0
      %7742 = vmatprep.subr.bf16.mxu0 0
      %7743 = vmatpush1.bf16.msra.mxu0 0
      %7744 = vmatprep.subr.bf16.mxu0 0
      %7745 = vmatpush1.bf16.msra.mxu0 0
      %7746 = vmatprep.subr.bf16.mxu0 0
      %7747 = vmatpush1.bf16.msra.mxu0 0
      %7748 = vmatprep.subr.bf16.mxu0 %v7679
      %7749 = vmatpush1.bf16.msra.mxu0 %v7676
      %7750 = vmatprep.subr.bf16.mxu0 0
      %7751 = vmatpush2.bf16.msra.mxu0 0
      %7752 = vmatprep.subr.bf16.mxu0 0
      %7753 = vmatpush2.bf16.msra.mxu0 0
      %7754 = vmatprep.subr.bf16.mxu0 0
      %7755 = vmatpush2.bf16.msra.mxu0 0
      %7756 = vmatprep.subr.bf16.mxu0 0
      %7757 = vmatpush2.bf16.msra.mxu0 0
      %7758 = vmatprep.subr.bf16.mxu0 0
      %7759 = vmatpush2.bf16.msra.mxu0 0
      %7760 = vmatprep.subr.bf16.mxu0 0
      %7761 = vmatpush2.bf16.msra.mxu0 0
      %7762 = vmatprep.subr.bf16.mxu0 0
      %7763 = vmatpush2.bf16.msra.mxu0 0
      %7764 = vmatprep.subr.bf16.mxu0 0
      %7765 = vmatpush2.bf16.msra.mxu0 0
      %7766 = vmatprep.mubr.bf16.mxu0 0
      %7767 = vmatmul.mubr.bf16.gmra.mxu0 %v7667
      %v7768 = vpop.f32.mrf.mxu0
      %v7769 = vadd.f32 0.0, %v7768
      %v7770 = vpop.f32.mrf.mxu0
      %v7771 = vadd.f32 0.0, %v7770
      %v7772 = vpop.f32.mrf.mxu0
      %v7773 = vpop.f32.mrf.mxu0
      %7774 = vdwg.mxu0
      %7775 = vmatprep.subr.bf16.mxu0 0
      %7776 = vmatpush1.bf16.msra.mxu0 0
      %7777 = vmatprep.subr.bf16.mxu0 0
      %7778 = vmatpush1.bf16.msra.mxu0 0
      %7779 = vmatprep.subr.bf16.mxu0 0
      %7780 = vmatpush1.bf16.msra.mxu0 0
      %7781 = vmatprep.subr.bf16.mxu0 0
      %7782 = vmatpush1.bf16.msra.mxu0 0
      %7783 = vmatprep.subr.bf16.mxu0 0
      %7784 = vmatpush1.bf16.msra.mxu0 0
      %7785 = vmatprep.subr.bf16.mxu0 0
      %7786 = vmatpush1.bf16.msra.mxu0 0
      %7787 = vmatprep.subr.bf16.mxu0 0
      %7788 = vmatpush1.bf16.msra.mxu0 0
      %7789 = vmatprep.subr.bf16.mxu0 %v7685
      %7790 = vmatpush1.bf16.msra.mxu0 %v7682
      %7791 = vmatprep.subr.bf16.mxu0 0
      %7792 = vmatpush2.bf16.msra.mxu0 0
      %7793 = vmatprep.subr.bf16.mxu0 0
      %7794 = vmatpush2.bf16.msra.mxu0 0
      %7795 = vmatprep.subr.bf16.mxu0 0
      %7796 = vmatpush2.bf16.msra.mxu0 0
      %7797 = vmatprep.subr.bf16.mxu0 0
      %7798 = vmatpush2.bf16.msra.mxu0 0
      %7799 = vmatprep.subr.bf16.mxu0 0
      %7800 = vmatpush2.bf16.msra.mxu0 0
      %7801 = vmatprep.subr.bf16.mxu0 0
      %7802 = vmatpush2.bf16.msra.mxu0 0
      %7803 = vmatprep.subr.bf16.mxu0 0
      %7804 = vmatpush2.bf16.msra.mxu0 0
      %7805 = vmatprep.subr.bf16.mxu0 0
      %7806 = vmatpush2.bf16.msra.mxu0 0
      %7807 = vmatprep.mubr.bf16.mxu0 0
      %7808 = vmatmul.mubr.bf16.gmra.mxu0 %v7667
      %v7809 = vpop.f32.mrf.mxu0
      %v7810 = vadd.f32 0.0, %v7809
      %v7811 = vpop.f32.mrf.mxu0
      %v7812 = vadd.f32 0.0, %v7811
      %v7813 = vpop.f32.mrf.mxu0
      %v7814 = vpop.f32.mrf.mxu0
      %7815 = vdwg.mxu0
      %7816 = vmatprep.subr.bf16.mxu0 0
      %7817 = vmatpush1.bf16.msra.mxu0 0
      %7818 = vmatprep.subr.bf16.mxu0 0
      %7819 = vmatpush1.bf16.msra.mxu0 0
      %7820 = vmatprep.subr.bf16.mxu0 0
      %7821 = vmatpush1.bf16.msra.mxu0 0
      %7822 = vmatprep.subr.bf16.mxu0 0
      %7823 = vmatpush1.bf16.msra.mxu0 0
      %7824 = vmatprep.subr.bf16.mxu0 0
      %7825 = vmatpush1.bf16.msra.mxu0 0
      %7826 = vmatprep.subr.bf16.mxu0 0
      %7827 = vmatpush1.bf16.msra.mxu0 0
      %7828 = vmatprep.subr.bf16.mxu0 0
      %7829 = vmatpush1.bf16.msra.mxu0 0
      %7830 = vmatprep.subr.bf16.mxu0 %v7691
      %7831 = vmatpush1.bf16.msra.mxu0 %v7688
      %7832 = vmatprep.subr.bf16.mxu0 0
      %7833 = vmatpush2.bf16.msra.mxu0 0
      %7834 = vmatprep.subr.bf16.mxu0 0
      %7835 = vmatpush2.bf16.msra.mxu0 0
      %7836 = vmatprep.subr.bf16.mxu0 0
      %7837 = vmatpush2.bf16.msra.mxu0 0
      %7838 = vmatprep.subr.bf16.mxu0 0
      %7839 = vmatpush2.bf16.msra.mxu0 0
      %7840 = vmatprep.subr.bf16.mxu0 0
      %7841 = vmatpush2.bf16.msra.mxu0 0
      %7842 = vmatprep.subr.bf16.mxu0 0
      %7843 = vmatpush2.bf16.msra.mxu0 0
      %7844 = vmatprep.subr.bf16.mxu0 0
      %7845 = vmatpush2.bf16.msra.mxu0 0
      %7846 = vmatprep.subr.bf16.mxu0 0
      %7847 = vmatpush2.bf16.msra.mxu0 0
      %7848 = vmatprep.mubr.bf16.mxu0 0
      %7849 = vmatmul.mubr.bf16.gmra.mxu0 %v7667
      %v7850 = vpop.f32.mrf.mxu0
      %v7851 = vadd.f32 0.0, %v7850
      %v7852 = vpop.f32.mrf.mxu0
      %v7853 = vadd.f32 0.0, %v7852
      %v7854 = vpop.f32.mrf.mxu0
      %v7855 = vpop.f32.mrf.mxu0
      %7856 = vdwg.mxu0
      %v7857 = vadd.f32 %v7559, %v7728
      %v7858 = vadd.f32 %v7560, %v7730
      %v7859 = vadd.f32 %v7561, %v7769
      %v7860 = vadd.f32 %v7562, %v7771
      %v7861 = vadd.f32 %v7563, %v7810
      %v7862 = vadd.f32 %v7564, %v7812
      %v7863 = vadd.f32 %v7565, %v7851
      %v7864 = vadd.f32 %v7566, %v7853
      %7866 = vset.pattern.permute.xlu0 0
      %7867 = vperm.xlu0 %7866, %v3748
      %v7868 = vpop.permute.xlu0 %7867
      %v7870 = vadd.f32 %v7857, %v7868
      %v7871 = vadd.f32 %v7858, %v7868
      %v7872 = vadd.f32 %v7859, %v7868
      %v7873 = vadd.f32 %v7860, %v7868
      %v7874 = vadd.f32 %v7861, %v7868
      %v7875 = vadd.f32 %v7862, %v7868
      %v7876 = vadd.f32 %v7863, %v7868
      %v7877 = vadd.f32 %v7864, %v7868
      %v7878 = vxor.u32 %v7870, 2147483648
      %v7879 = vxor.u32 %v7871, 2147483648
      %v7880 = vxor.u32 %v7872, 2147483648
      %v7881 = vxor.u32 %v7873, 2147483648
      %v7882 = vxor.u32 %v7874, 2147483648
      %v7883 = vxor.u32 %v7875, 2147483648
      %v7884 = vxor.u32 %v7876, 2147483648
      %v7885 = vxor.u32 %v7877, 2147483648
      %v7886 = vmul.f32 %v7878, 1.442695
      %v7887 = vpow.pop %v7886
      %v7888 = vmul.f32 %v7879, 1.442695
      %v7889 = vpow.pop %v7888
      %v7890 = vmul.f32 %v7880, 1.442695
      %v7891 = vpow.pop %v7890
      %v7892 = vmul.f32 %v7881, 1.442695
      %v7893 = vpow.pop %v7892
      %v7894 = vmul.f32 %v7882, 1.442695
      %v7895 = vpow.pop %v7894
      %v7896 = vmul.f32 %v7883, 1.442695
      %v7897 = vpow.pop %v7896
      %v7898 = vmul.f32 %v7884, 1.442695
      %v7899 = vpow.pop %v7898
      %v7900 = vmul.f32 %v7885, 1.442695
      %v7901 = vpow.pop %v7900
      %v7902 = vadd.f32 %v7887, 1.0
      %v7903 = vadd.f32 %v7889, 1.0
      %v7904 = vadd.f32 %v7891, 1.0
      %v7905 = vadd.f32 %v7893, 1.0
      %v7906 = vadd.f32 %v7895, 1.0
      %v7907 = vadd.f32 %v7897, 1.0
      %v7908 = vadd.f32 %v7899, 1.0
      %v7909 = vadd.f32 %v7901, 1.0
      %v7910 = vrcp.pop %v7902
      %v7911 = vmul.f32 1.0, %v7910
      %v7912 = vrcp.pop %v7903
      %v7913 = vmul.f32 1.0, %v7912
      %v7914 = vrcp.pop %v7904
      %v7915 = vmul.f32 1.0, %v7914
      %v7916 = vrcp.pop %v7905
      %v7917 = vmul.f32 1.0, %v7916
      %v7918 = vrcp.pop %v7906
      %v7919 = vmul.f32 1.0, %v7918
      %v7920 = vrcp.pop %v7907
      %v7921 = vmul.f32 1.0, %v7920
      %v7922 = vrcp.pop %v7908
      %v7923 = vmul.f32 1.0, %v7922
      %v7924 = vrcp.pop %v7909
      %v7925 = vmul.f32 1.0, %v7924
      %v7926 = vmul.f32 %v7870, %v7911
      %v7927 = vmul.f32 %v7871, %v7913
      %v7928 = vmul.f32 %v7872, %v7915
      %v7929 = vmul.f32 %v7873, %v7917
      %v7930 = vmul.f32 %v7874, %v7919
      %v7931 = vmul.f32 %v7875, %v7921
      %v7932 = vmul.f32 %v7876, %v7923
      %v7933 = vmul.f32 %v7877, %v7925
      %v7942 = vcombine.low %v7926, %v7927
      %v7943 = vcombine.low %v7928, %v7929
      %v7944 = vcombine.low %v7930, %v7931
      %v7945 = vcombine.low %v7932, %v7933
      %7950 = vst [vmem:[%s579] sm:$0xff] %v7942
      %7951 = vst [vmem:[%s579 + $0x8] sm:$0xff] %v7943
      %7952 = vst [vmem:[%s579 + $0x10] sm:$0xff] %v7944
      %7953 = vst [vmem:[%s579 + $0x18] sm:$0xff] %v7945
      %p7954 = scmp.lt.s32.totalorder %s27, 1
      %s7955 = scalar_select %p7954, %s27, 1
      %s7956 = smul.addr %s7955, 2
      %s7957 = smul.addr %s7956, 8
      %s7958 = scalar_lea.vmem %s13, %s7957
      %p7959 = scmp.lt.s32.totalorder %s27, 1
      %s7960 = scalar_select %p7959, %s27, 1
      %s7961 = smul.addr %s7960, 2
      %s7962 = smul.addr %s7961, 8
      %s7963 = scalar_lea.vmem %s14, %s7962
      %p7964 = scmp.lt.s32.totalorder %s27, 1
      %s7965 = scalar_select %p7964, %s27, 1
      %s7966 = smul.addr %s7965, 8
      %s7967 = smul.addr %s7966, 4
      %s7968 = scalar_lea.vmem %s15, %s7967
      // Predicated region
      $region73: #{decoder_full_forward.1} parent=71 // pred_check
        %p7969 = pneg %p338
      $region74: #{decoder_full_forward.1} parent=71 // pred_check_branch
        %7971 = sbr.rel (%p7969) target = $region76
      $region75: #{decoder_full_forward.1} parent=71 // pred_region
        _
      $region76: #{decoder_full_forward.1} parent=71 // pred_fallthru
        _
      // Predicated region
      $region77: #{decoder_full_forward.1} parent=71 // pred_check
        %p7972 = pneg %p364
      $region78: #{decoder_full_forward.1} parent=71 // pred_check_branch
        %7974 = sbr.rel (%p7972) target = $region80
      $region79: #{decoder_full_forward.1} parent=71 // pred_region
        _
      $region80: #{decoder_full_forward.1} parent=71 // pred_fallthru
        _
      // Predicated region
      $region81: #{decoder_full_forward.1} parent=71 // pred_check
        %p7975 = pneg %p390
      $region82: #{decoder_full_forward.1} parent=71 // pred_check_branch
        %7977 = sbr.rel (%p7975) target = $region84
      $region83: #{decoder_full_forward.1} parent=71 // pred_region
        _
      $region84: #{decoder_full_forward.1} parent=71 // pred_fallthru
        _
    $region72: #{decoder_full_forward.1} parent=5 // pred_fallthru
      _
    %p7978 = scmp.le.s32.totalorder 2, %s22
    // Predicated region
    $region85: #{decoder_full_forward.1} parent=5 // pred_check
      %p7979 = pneg %p7978
    $region86: #{decoder_full_forward.1} parent=5 // pred_check_branch
      %7981 = sbr.rel (%p7979) target = $region88
    $region87: #{decoder_full_forward.1} parent=5 // pred_region
      %s7982 = ssub.s32 %s22, 2
      // Predicated region
      $region89: #{decoder_full_forward.1} parent=87 // pred_check
        %p7983 = pneg %p344
      $region90: #{decoder_full_forward.1} parent=87 // pred_check_branch
        %7985 = sbr.rel (%p7983) target = $region92
      $region91: #{decoder_full_forward.1} parent=87 // pred_region
        %p7986 = scmp.lt.s32.totalorder %s28, 1
        %s7987 = scalar_select %p7986, %s28, 1
        %s7988 = smul.addr %s7987, 2
        %s7989 = smul.addr %s7988, 8
        %s7990 = scalar_lea.vmem %s13, %s7989
      $region92: #{decoder_full_forward.1} parent=87 // pred_fallthru
        _
      // Predicated region
      $region93: #{decoder_full_forward.1} parent=87 // pred_check
        %p7991 = pneg %p370
      $region94: #{decoder_full_forward.1} parent=87 // pred_check_branch
        %7993 = sbr.rel (%p7991) target = $region96
      $region95: #{decoder_full_forward.1} parent=87 // pred_region
        %p7994 = scmp.lt.s32.totalorder %s28, 1
        %s7995 = scalar_select %p7994, %s28, 1
        %s7996 = smul.addr %s7995, 2
        %s7997 = smul.addr %s7996, 8
        %s7998 = scalar_lea.vmem %s14, %s7997
      $region96: #{decoder_full_forward.1} parent=87 // pred_fallthru
        _
      // Predicated region
      $region97: #{decoder_full_forward.1} parent=87 // pred_check
        %p7999 = pneg %p396
      $region98: #{decoder_full_forward.1} parent=87 // pred_check_branch
        %8001 = sbr.rel (%p7999) target = $region100
      $region99: #{decoder_full_forward.1} parent=87 // pred_region
        %p8002 = scmp.lt.s32.totalorder %s28, 1
        %s8003 = scalar_select %p8002, %s28, 1
        %s8004 = smul.addr %s8003, 8
        %s8005 = smul.addr %s8004, 4
        %s8006 = scalar_lea.vmem %s15, %s8005
      $region100: #{decoder_full_forward.1} parent=87 // pred_fallthru
        _
    $region88: #{decoder_full_forward.1} parent=5 // pred_fallthru
      _
  $region6: #{decoder_full_forward.1} parent=0 // loop_footer
    %s26 = sadd.s32 1, %s22
  $region7: #{decoder_full_forward.1} parent=0 // loop_footer_branch
    %21 = sbr.rel target = $region3
  $region8: #{decoder_full_forward.1} parent=0 // loop_exit
    _

</llo_original>
